<compile_context>
chip_gen: v6e
topology: v6e:2x2x1
jax: 0.10.0
libtpu: 0.0.40
codegen_flags: <defaults>
</compile_context>

<pallas_src>
import functools

import jax
import jax.numpy as jnp
import numpy as np
from jax.experimental import pallas as pl
from jax.experimental.pallas import tpu as pltpu

_LANE = 128
_SUBLANE = 8


def _ceil_to(x, m):
    return ((x + m - 1) // m) * m


# ----------------------------------------------------------------------------
# Fused 2-layer bidirectional LSTM kernel (single grid step, everything in VMEM)
# ----------------------------------------------------------------------------
def _bilstm2_kernel(x_ref, len_ref,
                    wih1_ref, whh1f_ref, whh1b_ref, b1_ref,
                    wih2_ref, whh2f_ref, whh2b_ref, b2_ref,
                    y_ref,
                    gxf_sc, gxb_sc, yf_sc, yb_sc,
                    *, T, Bp, Hp):
    len_v = len_ref[...]                       # (Bp, Hp) int32, loaded once

    def lstm_cell(gates, c_prev):
        # gate order [i, f, g, o]; every gate block is 128-lane aligned (width Hp)
        i_g = jax.nn.sigmoid(gates[:, 0 * Hp:1 * Hp])
        f_g = jax.nn.sigmoid(gates[:, 1 * Hp:2 * Hp])
        g_g = jnp.tanh(gates[:, 2 * Hp:3 * Hp])
        o_g = jax.nn.sigmoid(gates[:, 3 * Hp:4 * Hp])
        c_new = f_g * c_prev + i_g * g_g
        h_new = o_g * jnp.tanh(c_new)
        return h_new, c_new

    def run_layer(x_flat, wih_ref, whhf_ref, whhb_ref, b_ref):
        # Hoisted input projection: one big matmul for all T steps, both dirs.
        gx = (jnp.dot(x_flat, wih_ref[...],
                      preferred_element_type=jnp.float32)
              + b_ref[...])                                    # (T*Bp, 8*Hp)
        gxf_sc[...] = gx[:, :4 * Hp].reshape(T, Bp, 4 * Hp)    # fwd pre-gates
        gxb_sc[...] = gx[:, 4 * Hp:].reshape(T, Bp, 4 * Hp)    # bwd pre-gates

        whhf = whhf_ref[...]
        whhb = whhb_ref[...]

        def step(t, carry):
            h_f, c_f, h_b, c_b = carry
            tb = T - 1 - t

            # forward direction, time t
            gates_f = gxf_sc[t] + jnp.dot(h_f, whhf,
                                          preferred_element_type=jnp.float32)
            h_fn, c_fn = lstm_cell(gates_f, c_f)
            valid_f = t < len_v                                # (Bp, Hp) bool
            h_f = jnp.where(valid_f, h_fn, h_f)
            c_f = jnp.where(valid_f, c_fn, c_f)
            yf_sc[t] = jnp.where(valid_f, h_fn, 0.0)           # pad_packed zeros

            # backward direction, time T-1-t (starts at last valid token)
            gates_b = gxb_sc[tb] + jnp.dot(h_b, whhb,
                                           preferred_element_type=jnp.float32)
            h_bn, c_bn = lstm_cell(gates_b, c_b)
            valid_b = tb < len_v
            h_b = jnp.where(valid_b, h_bn, h_b)
            c_b = jnp.where(valid_b, c_bn, c_b)
            yb_sc[tb] = jnp.where(valid_b, h_bn, 0.0)

            return h_f, c_f, h_b, c_b

        z = jnp.zeros((Bp, Hp), jnp.float32)
        jax.lax.fori_loop(0, T, step, (z, z, z, z), unroll=(T <= 16))

    # ---- Layer 1 -------------------------------------------------------------
    x1 = x_ref[...].reshape(T * Bp, -1)                        # (T*Bp, Ep)
    run_layer(x1, wih1_ref, whh1f_ref, whh1b_ref, b1_ref)

    # ---- Layer 2 (input = concat(fwd, bwd) of layer-1 outputs, all in VMEM) ---
    x2 = jnp.concatenate([yf_sc[...], yb_sc[...]],
                         axis=-1).reshape(T * Bp, 2 * Hp)
    run_layer(x2, wih2_ref, whh2f_ref, whh2b_ref, b2_ref)

    # Single lane-dense writeback of the whole (T, Bp, 2*Hp) output.
    y_ref[...] = jnp.concatenate([yf_sc[...], yb_sc[...]], axis=-1)


def bilstm2(x, len_v, wih1, whh1f, whh1b, b1, wih2, whh2f, whh2b, b2):
    T, Bp, Ep = x.shape
    Hp = whh1f.shape[0]

    def fullspec(shape):
        zeros = (0,) * len(shape)
        return pl.BlockSpec(shape, lambda i: zeros)

    kernel = functools.partial(_bilstm2_kernel, T=T, Bp=Bp, Hp=Hp)
    # NOTE: at serving scale (large T/B) re-check the VMEM plan against 64 MiB on
    # v7x and set pltpu.CompilerParams(vmem_limit_bytes=...) / chunk T if needed.
    return pl.pallas_call(
        kernel,
        out_shape=jax.ShapeDtypeStruct((T, Bp, 2 * Hp), jnp.float32),
        grid=(1,),
        in_specs=[fullspec(x.shape), fullspec(len_v.shape),
                  fullspec(wih1.shape), fullspec(whh1f.shape),
                  fullspec(whh1b.shape), fullspec(b1.shape),
                  fullspec(wih2.shape), fullspec(whh2f.shape),
                  fullspec(whh2b.shape), fullspec(b2.shape)],
        out_specs=fullspec((T, Bp, 2 * Hp)),
        scratch_shapes=[pltpu.VMEM((T, Bp, 4 * Hp), jnp.float32),   # fwd pre-gates
                        pltpu.VMEM((T, Bp, 4 * Hp), jnp.float32),   # bwd pre-gates
                        pltpu.VMEM((T, Bp, Hp), jnp.float32),       # y fwd
                        pltpu.VMEM((T, Bp, Hp), jnp.float32)],      # y bwd
        compiler_params=pltpu.CompilerParams(
            dimension_semantics=("arbitrary",)),     # single sequential step
    )(x, len_v, wih1, whh1f, whh1b, b1, wih2, whh2f, whh2b, b2)


# ----------------------------------------------------------------------------
# Parameter init (torch-style layout) and packing into the padded kernel layout
# ----------------------------------------------------------------------------
def init_params(key, vocab, emb_dim, hidden, nclasses, num_layers=2):
    keys = iter(jax.random.split(key, 64))
    params = {}
    params["embeddings"] = 0.1 * jax.random.normal(
        next(keys), (vocab, emb_dim), jnp.float32)

    k = hidden ** -0.5   # torch.nn.LSTM default init bound
    lstm = []
    for layer in range(num_layers):
        in_dim = emb_dim if layer == 0 else 2 * hidden
        layer_p = {}
        for d in ("fwd", "bwd"):
            w_ih = jax.random.uniform(next(keys), (in_dim, 4 * hidden),
                                      jnp.float32, -k, k)
            w_hh = jax.random.uniform(next(keys), (hidden, 4 * hidden),
                                      jnp.float32, -k, k)
            b_ih = jax.random.uniform(next(keys), (4 * hidden,),
                                      jnp.float32, -k, k)
            b_hh = jax.random.uniform(next(keys), (4 * hidden,),
                                      jnp.float32, -k, k)
            layer_p[d] = (w_ih, w_hh, b_ih + b_hh)   # torch uses b_ih + b_hh
        lstm.append(layer_p)
    params["lstm"] = lstm

    kf = (2 * hidden) ** -0.5
    params["fc_w"] = jax.random.uniform(next(keys), (2 * hidden, nclasses),
                                        jnp.float32, -kf, kf)
    params["fc_b"] = jax.random.uniform(next(keys), (nclasses,),
                                        jnp.float32, -kf, kf)
    return params


def _pad_gate_cols(w, Hp):
    """(rows, 4H) with gate blocks [i|f|g|o] -> (rows, 4*Hp), each gate 128-aligned."""
    rows, four_h = w.shape
    H = four_h // 4
    w4 = jnp.pad(w.reshape(rows, 4, H), ((0, 0), (0, 0), (0, Hp - H)))
    return w4.reshape(rows, 4 * Hp)


def _pad_dir_rows(w, Hp):
    """(2H, cols) with rows [fwd H | bwd H] -> (2*Hp, cols), dir d at rows d*Hp."""
    two_h, cols = w.shape
    H = two_h // 2
    w2 = jnp.pad(w.reshape(2, H, cols), ((0, 0), (0, Hp - H), (0, 0)))
    return w2.reshape(2 * Hp, cols)


def pack_params(raw):
    H = raw["lstm"][0]["fwd"][1].shape[0]
    E = raw["embeddings"].shape[1]
    Hp = _ceil_to(H, _LANE)
    Ep = _ceil_to(E, _LANE)

    packed = {"embeddings": jnp.pad(raw["embeddings"], ((0, 0), (0, Ep - E)))}
    for li, layer_p in enumerate(raw["lstm"]):
        parts_ih, parts_b, whhs = [], [], []
        for d in ("fwd", "bwd"):
            w_ih, w_hh, b = layer_p[d]
            w_ih_c = _pad_gate_cols(w_ih, Hp)
            if li == 0:
                w_ih_c = jnp.pad(w_ih_c, ((0, Ep - E), (0, 0)))
            else:
                w_ih_c = _pad_dir_rows(w_ih_c, Hp)
            parts_ih.append(w_ih_c)
            whhs.append(jnp.pad(_pad_gate_cols(w_hh, Hp), ((0, Hp - H), (0, 0))))
            parts_b.append(_pad_gate_cols(b[None, :], Hp))
        packed[f"l{li + 1}"] = (jnp.concatenate(parts_ih, axis=1),   # (Ip, 8Hp)
                                whhs[0], whhs[1],                    # (Hp, 4Hp)
                                jnp.concatenate(parts_b, axis=1))    # (1, 8Hp)
    packed["fc_w"] = _pad_dir_rows(raw["fc_w"], Hp)                  # (2Hp, ncls)
    packed["fc_b"] = raw["fc_b"][None, :]                            # (1, ncls)
    return packed


# ----------------------------------------------------------------------------
# Forward pass (kernel) and pure-JAX reference
# ----------------------------------------------------------------------------
def lstm_forward(packed, x_tokens, cpos, padding_idx):
    """Equivalent to medcat LSTM.forward(x, cpos) in eval mode (dropouts = id)."""
    B, T = x_tokens.shape
    Hp = packed["l1"][1].shape[0]

    lengths = (x_tokens != padding_idx).sum(axis=1).astype(jnp.int32)   # (B,)
    emb = jnp.take(packed["embeddings"], x_tokens, axis=0)              # (B,T,Ep)
    x = jnp.transpose(emb, (1, 0, 2)).astype(jnp.float32)               # (T,B,Ep)

    Bp = _ceil_to(max(B, _SUBLANE), _SUBLANE)
    x = jnp.pad(x, ((0, 0), (0, Bp - B), (0, 0)))
    len_v = jnp.broadcast_to(jnp.pad(lengths, (0, Bp - B))[:, None],
                             (Bp, Hp)).astype(jnp.int32)                # lane-dense

    y = bilstm2(x, len_v, *packed["l1"], *packed["l2"])                 # (T,Bp,2Hp)

    sel = y[cpos, jnp.arange(B), :]                     # == x[row, cpos, :] (B,2Hp)
    # Tiny fc1 (lane width nclasses=2) kept in plain JAX per perf review; padded
    # lanes of sel hit zero rows of fc_w so the result equals the unpadded fc.
    return jnp.dot(sel, packed["fc_w"],
                   precision=jax.lax.Precision.HIGHEST) + packed["fc_b"]


def lstm_reference(raw, x_tokens, cpos, padding_idx):
    """Pure-JAX reference mirroring pack_padded + bidirectional LSTM (eval)."""
    B, T = x_tokens.shape
    H = raw["lstm"][0]["fwd"][1].shape[0]
    hi = jax.lax.Precision.HIGHEST
    lengths = (x_tokens != padding_idx).sum(axis=1).astype(jnp.int32)
    x = jnp.transpose(jnp.take(raw["embeddings"], x_tokens, axis=0),
                      (1, 0, 2)).astype(jnp.float32)                   # (T,B,E)

    def run_dir(x_tb, w_ih, w_hh, b, reverse):
        xs = x_tb[::-1] if reverse else x_tb
        tids = jnp.arange(T)[::-1] if reverse else jnp.arange(T)

        def step(carry, inp):
            h, c = carry
            x_t, idx = inp
            g = (jnp.dot(x_t, w_ih, precision=hi)
                 + jnp.dot(h, w_hh, precision=hi) + b[None, :])
            i = jax.nn.sigmoid(g[:, :H]); f = jax.nn.sigmoid(g[:, H:2 * H])
            gg = jnp.tanh(g[:, 2 * H:3 * H]); o = jax.nn.sigmoid(g[:, 3 * H:])
            c_new = f * c + i * gg
            h_new = o * jnp.tanh(c_new)
            valid = (idx < lengths)[:, None]
            h = jnp.where(valid, h_new, h)
            c = jnp.where(valid, c_new, c)
            return (h, c), jnp.where(valid, h_new, 0.0)

        z = jnp.zeros((B, H), jnp.float32)
        _, ys = jax.lax.scan(step, (z, z), (xs, tids))
        return ys[::-1] if reverse else ys

    h = x
    for layer_p in raw["lstm"]:
        yf = run_dir(h, *layer_p["fwd"], reverse=False)
        yb = run_dir(h, *layer_p["bwd"], reverse=True)
        h = jnp.concatenate([yf, yb], axis=-1)
    sel = h[cpos, jnp.arange(B), :]
    return jnp.dot(sel, raw["fc_w"], precision=hi) + raw["fc_b"][None, :]


if __name__ == "__main__":
    PAD = 0
    VOCAB, EMB, HID, NCLS = 50, 64, 32, 2   # real module: EMB=300, HID=150/direction
    B, T = 2, 8

    key = jax.random.PRNGKey(0)
    pkey, tkey = jax.random.split(key)
    raw = init_params(pkey, VOCAB, EMB, HID, NCLS)
    packed = pack_params(raw)

    # Tokens padded at the tail (pack_padded_sequence assumes suffix padding).
    toks = jax.random.randint(tkey, (B, T), 1, VOCAB, dtype=jnp.int32)
    seq_lens = jnp.array([6, 3], jnp.int32)
    toks = jnp.where(jnp.arange(T)[None, :] < seq_lens[:, None], toks, PAD)
    cpos = jnp.array([2, 1], jnp.int32)

    fwd = jax.jit(functools.partial(lstm_forward, padding_idx=PAD))
    out = fwd(packed, toks, cpos)
    jax.block_until_ready(out)
    assert out.shape == (B, NCLS) and out.dtype == jnp.float32

    ref = lstm_reference(raw, toks, cpos, PAD)
    np.testing.assert_allclose(np.asarray(out), np.asarray(ref),
                               atol=2e-2, rtol=2e-2)
    print("KERNEL_OK")
</pallas_src>

<mosaic_0001>
module attributes {stable_mosaic.version = 11 : i64} {
  func.func @_bilstm2_kernel(%arg0: i32, %arg1: memref<8x8x128xf32, #tpu.memory_space<vmem>>, %arg2: memref<8x128xi32, #tpu.memory_space<vmem>>, %arg3: memref<128x1024xf32, #tpu.memory_space<vmem>>, %arg4: memref<128x512xf32, #tpu.memory_space<vmem>>, %arg5: memref<128x512xf32, #tpu.memory_space<vmem>>, %arg6: memref<1x1024xf32, #tpu.memory_space<vmem>>, %arg7: memref<256x1024xf32, #tpu.memory_space<vmem>>, %arg8: memref<128x512xf32, #tpu.memory_space<vmem>>, %arg9: memref<128x512xf32, #tpu.memory_space<vmem>>, %arg10: memref<1x1024xf32, #tpu.memory_space<vmem>>, %arg11: memref<8x8x256xf32, #tpu.memory_space<vmem>>, %arg12: memref<8x8x512xf32, #tpu.memory_space<vmem>>, %arg13: memref<8x8x512xf32, #tpu.memory_space<vmem>>, %arg14: memref<8x8x128xf32, #tpu.memory_space<vmem>>, %arg15: memref<8x8x128xf32, #tpu.memory_space<vmem>>) attributes {dimension_semantics = [#tpu.dimension_semantics<arbitrary>], iteration_bounds = array<i64: 1>, scalar_prefetch = 0 : i64, scratch_operands = 4 : i64, tpu.core_type = #tpu.core_type<tc>, window_params = [{pipeline_mode = #tpu.pipeline_mode<synchronous>, transform_indices = @transform_0, window_bounds = array<i64: 8, 8, 128>}, {pipeline_mode = #tpu.pipeline_mode<synchronous>, transform_indices = @transform_1, window_bounds = array<i64: 8, 128>}, {pipeline_mode = #tpu.pipeline_mode<synchronous>, transform_indices = @transform_2, window_bounds = array<i64: 128, 1024>}, {pipeline_mode = #tpu.pipeline_mode<synchronous>, transform_indices = @transform_3, window_bounds = array<i64: 128, 512>}, {pipeline_mode = #tpu.pipeline_mode<synchronous>, transform_indices = @transform_4, window_bounds = array<i64: 128, 512>}, {pipeline_mode = #tpu.pipeline_mode<synchronous>, transform_indices = @transform_5, window_bounds = array<i64: 1, 1024>}, {pipeline_mode = #tpu.pipeline_mode<synchronous>, transform_indices = @transform_6, window_bounds = array<i64: 256, 1024>}, {pipeline_mode = #tpu.pipeline_mode<synchronous>, transform_indices = @transform_7, window_bounds = array<i64: 128, 512>}, {pipeline_mode = #tpu.pipeline_mode<synchronous>, transform_indices = @transform_8, window_bounds = array<i64: 128, 512>}, {pipeline_mode = #tpu.pipeline_mode<synchronous>, transform_indices = @transform_9, window_bounds = array<i64: 1, 1024>}, {pipeline_mode = #tpu.pipeline_mode<synchronous>, transform_indices = @transform_10, window_bounds = array<i64: 8, 8, 256>}]} {
    %c0 = arith.constant 0 : index
    %c0_0 = arith.constant 0 : index
    %0 = vector.load %arg2[%c0, %c0_0] : memref<8x128xi32, #tpu.memory_space<vmem>>, vector<8x128xi32>
    %c0_1 = arith.constant 0 : index
    %c0_2 = arith.constant 0 : index
    %c0_3 = arith.constant 0 : index
    %1 = vector.load %arg1[%c0_1, %c0_2, %c0_3] : memref<8x8x128xf32, #tpu.memory_space<vmem>>, vector<8x8x128xf32>
    %2 = vector.shape_cast %1 : vector<8x8x128xf32> to vector<64x128xf32>
    %c0_4 = arith.constant 0 : index
    %c0_5 = arith.constant 0 : index
    %3 = vector.load %arg3[%c0_4, %c0_5] : memref<128x1024xf32, #tpu.memory_space<vmem>>, vector<128x1024xf32>
    %cst = arith.constant dense<0.000000e+00> : vector<64x1024xf32>
    %4 = tpu.matmul %2, %3, %cst {dimension_numbers = #tpu.dot_dimension_numbers<[1], [0], [0], [1], [0, 0, 1, 1], [], []>} : vector<64x128xf32>, vector<128x1024xf32>, vector<64x1024xf32> -> vector<64x1024xf32>
    %c0_6 = arith.constant 0 : index
    %c0_7 = arith.constant 0 : index
    %5 = vector.load %arg6[%c0_6, %c0_7] : memref<1x1024xf32, #tpu.memory_space<vmem>>, vector<1x1024xf32>
    %6 = vector.broadcast %5 : vector<1x1024xf32> to vector<64x1024xf32>
    %7 = arith.addf %4, %6 : vector<64x1024xf32>
    %8 = vector.extract_strided_slice %7 {offsets = [0, 0], sizes = [64, 512], strides = [1, 1]} : vector<64x1024xf32> to vector<64x512xf32>
    %9 = vector.shape_cast %8 : vector<64x512xf32> to vector<8x8x512xf32>
    %c0_8 = arith.constant 0 : index
    %c0_9 = arith.constant 0 : index
    %c0_10 = arith.constant 0 : index
    %10 = vector.load %arg12[%c0_8, %c0_9, %c0_10] : memref<8x8x512xf32, #tpu.memory_space<vmem>>, vector<8x8x512xf32>
    tpu.vector_store %arg12[%c0_8, %c0_9, %c0_10], %9 {strides = array<i32>} : memref<8x8x512xf32, #tpu.memory_space<vmem>>, vector<8x8x512xf32>,
    %11 = vector.extract_strided_slice %7 {offsets = [0, 512], sizes = [64, 512], strides = [1, 1]} : vector<64x1024xf32> to vector<64x512xf32>
    %12 = vector.shape_cast %11 : vector<64x512xf32> to vector<8x8x512xf32>
    %c0_11 = arith.constant 0 : index
    %c0_12 = arith.constant 0 : index
    %c0_13 = arith.constant 0 : index
    %13 = vector.load %arg13[%c0_11, %c0_12, %c0_13] : memref<8x8x512xf32, #tpu.memory_space<vmem>>, vector<8x8x512xf32>
    tpu.vector_store %arg13[%c0_11, %c0_12, %c0_13], %12 {strides = array<i32>} : memref<8x8x512xf32, #tpu.memory_space<vmem>>, vector<8x8x512xf32>,
    %c0_14 = arith.constant 0 : index
    %c0_15 = arith.constant 0 : index
    %14 = vector.load %arg4[%c0_14, %c0_15] : memref<128x512xf32, #tpu.memory_space<vmem>>, vector<128x512xf32>
    %c0_16 = arith.constant 0 : index
    %c0_17 = arith.constant 0 : index
    %15 = vector.load %arg5[%c0_16, %c0_17] : memref<128x512xf32, #tpu.memory_space<vmem>>, vector<128x512xf32>
    %cst_18 = arith.constant 0.000000e+00 : f32
    %16 = vector.broadcast %cst_18 : f32 to vector<8x128xf32>
    %c0_i32 = arith.constant 0 : i32
    %c7_i32 = arith.constant 7 : i32
    %17 = arith.subi %c7_i32, %c0_i32 : i32
    %18 = arith.index_cast %c0_i32 : i32 to index
    %c0_19 = arith.constant 0 : index
    %c0_20 = arith.constant 0 : index
    %19 = vector.load %arg12[%18, %c0_19, %c0_20] : memref<8x8x512xf32, #tpu.memory_space<vmem>>, vector<1x8x512xf32>
    %20 = vector.shape_cast %19 : vector<1x8x512xf32> to vector<8x512xf32>
    %cst_21 = arith.constant dense<0.000000e+00> : vector<8x512xf32>
    %21 = tpu.matmul %16, %14, %cst_21 {dimension_numbers = #tpu.dot_dimension_numbers<[1], [0], [0], [1], [0, 0, 1, 1], [], []>} : vector<8x128xf32>, vector<128x512xf32>, vector<8x512xf32> -> vector<8x512xf32>
    %22 = arith.addf %20, %21 : vector<8x512xf32>
    %23 = vector.extract_strided_slice %22 {offsets = [0, 0], sizes = [8, 128], strides = [1, 1]} : vector<8x512xf32> to vector<8x128xf32>
    %24 = arith.negf %23 : vector<8x128xf32>
    %25 = math.exp %24 : vector<8x128xf32>
    %cst_22 = arith.constant 1.000000e+00 : f32
    %26 = vector.broadcast %cst_22 : f32 to vector<8x128xf32>
    %27 = arith.addf %26, %25 : vector<8x128xf32>
    %28 = arith.divf %26, %27 : vector<8x128xf32>
    %29 = vector.extract_strided_slice %22 {offsets = [0, 128], sizes = [8, 128], strides = [1, 1]} : vector<8x512xf32> to vector<8x128xf32>
    %30 = arith.negf %29 : vector<8x128xf32>
    %31 = math.exp %30 : vector<8x128xf32>
    %cst_23 = arith.constant 1.000000e+00 : f32
    %32 = vector.broadcast %cst_23 : f32 to vector<8x128xf32>
    %33 = arith.addf %32, %31 : vector<8x128xf32>
    %34 = arith.divf %32, %33 : vector<8x128xf32>
    %35 = vector.extract_strided_slice %22 {offsets = [0, 256], sizes = [8, 128], strides = [1, 1]} : vector<8x512xf32> to vector<8x128xf32>
    %36 = math.tanh %35 : vector<8x128xf32>
    %37 = vector.extract_strided_slice %22 {offsets = [0, 384], sizes = [8, 128], strides = [1, 1]} : vector<8x512xf32> to vector<8x128xf32>
    %38 = arith.negf %37 : vector<8x128xf32>
    %39 = math.exp %38 : vector<8x128xf32>
    %cst_24 = arith.constant 1.000000e+00 : f32
    %40 = vector.broadcast %cst_24 : f32 to vector<8x128xf32>
    %41 = arith.addf %40, %39 : vector<8x128xf32>
    %42 = arith.divf %40, %41 : vector<8x128xf32>
    %43 = arith.mulf %34, %16 : vector<8x128xf32>
    %44 = arith.mulf %28, %36 : vector<8x128xf32>
    %45 = arith.addf %43, %44 : vector<8x128xf32>
    %46 = math.tanh %45 : vector<8x128xf32>
    %47 = arith.mulf %42, %46 : vector<8x128xf32>
    %48 = vector.broadcast %c0_i32 : i32 to vector<8x128xi32>
    %49 = arith.cmpi slt, %48, %0 : vector<8x128xi32>
    %50 = arith.select %49, %47, %16 : vector<8x128xi1>, vector<8x128xf32>
    %51 = arith.select %49, %45, %16 : vector<8x128xi1>, vector<8x128xf32>
    %cst_25 = arith.constant 0.000000e+00 : f32
    %52 = vector.broadcast %cst_25 : f32 to vector<8x128xf32>
    %53 = arith.select %49, %47, %52 : vector<8x128xi1>, vector<8x128xf32>
    %54 = arith.index_cast %c0_i32 : i32 to index
    %c0_26 = arith.constant 0 : index
    %c0_27 = arith.constant 0 : index
    %55 = vector.load %arg14[%54, %c0_26, %c0_27] : memref<8x8x128xf32, #tpu.memory_space<vmem>>, vector<1x8x128xf32>
    %56 = vector.shape_cast %55 : vector<1x8x128xf32> to vector<8x128xf32>
    %57 = vector.shape_cast %53 : vector<8x128xf32> to vector<1x8x128xf32>
    tpu.vector_store %arg14[%54, %c0_26, %c0_27], %57 {strides = array<i32>} : memref<8x8x128xf32, #tpu.memory_space<vmem>>, vector<1x8x128xf32>,
    %58 = arith.index_cast %17 : i32 to index
    %c0_28 = arith.constant 0 : index
    %c0_29 = arith.constant 0 : index
    %59 = vector.load %arg13[%58, %c0_28, %c0_29] : memref<8x8x512xf32, #tpu.memory_space<vmem>>, vector<1x8x512xf32>
    %60 = vector.shape_cast %59 : vector<1x8x512xf32> to vector<8x512xf32>
    %cst_30 = arith.constant dense<0.000000e+00> : vector<8x512xf32>
    %61 = tpu.matmul %16, %15, %cst_30 {dimension_numbers = #tpu.dot_dimension_numbers<[1], [0], [0], [1], [0, 0, 1, 1], [], []>} : vector<8x128xf32>, vector<128x512xf32>, vector<8x512xf32> -> vector<8x512xf32>
    %62 = arith.addf %60, %61 : vector<8x512xf32>
    %63 = vector.extract_strided_slice %62 {offsets = [0, 0], sizes = [8, 128], strides = [1, 1]} : vector<8x512xf32> to vector<8x128xf32>
    %64 = arith.negf %63 : vector<8x128xf32>
    %65 = math.exp %64 : vector<8x128xf32>
    %cst_31 = arith.constant 1.000000e+00 : f32
    %66 = vector.broadcast %cst_31 : f32 to vector<8x128xf32>
    %67 = arith.addf %66, %65 : vector<8x128xf32>
    %68 = arith.divf %66, %67 : vector<8x128xf32>
    %69 = vector.extract_strided_slice %62 {offsets = [0, 128], sizes = [8, 128], strides = [1, 1]} : vector<8x512xf32> to vector<8x128xf32>
    %70 = arith.negf %69 : vector<8x128xf32>
    %71 = math.exp %70 : vector<8x128xf32>
    %cst_32 = arith.constant 1.000000e+00 : f32
    %72 = vector.broadcast %cst_32 : f32 to vector<8x128xf32>
    %73 = arith.addf %72, %71 : vector<8x128xf32>
    %74 = arith.divf %72, %73 : vector<8x128xf32>
    %75 = vector.extract_strided_slice %62 {offsets = [0, 256], sizes = [8, 128], strides = [1, 1]} : vector<8x512xf32> to vector<8x128xf32>
    %76 = math.tanh %75 : vector<8x128xf32>
    %77 = vector.extract_strided_slice %62 {offsets = [0, 384], sizes = [8, 128], strides = [1, 1]} : vector<8x512xf32> to vector<8x128xf32>
    %78 = arith.negf %77 : vector<8x128xf32>
    %79 = math.exp %78 : vector<8x128xf32>
    %cst_33 = arith.constant 1.000000e+00 : f32
    %80 = vector.broadcast %cst_33 : f32 to vector<8x128xf32>
    %81 = arith.addf %80, %79 : vector<8x128xf32>
    %82 = arith.divf %80, %81 : vector<8x128xf32>
    %83 = arith.mulf %74, %16 : vector<8x128xf32>
    %84 = arith.mulf %68, %76 : vector<8x128xf32>
    %85 = arith.addf %83, %84 : vector<8x128xf32>
    %86 = math.tanh %85 : vector<8x128xf32>
    %87 = arith.mulf %82, %86 : vector<8x128xf32>
    %88 = vector.broadcast %17 : i32 to vector<8x128xi32>
    %89 = arith.cmpi slt, %88, %0 : vector<8x128xi32>
    %90 = arith.select %89, %87, %16 : vector<8x128xi1>, vector<8x128xf32>
    %91 = arith.select %89, %85, %16 : vector<8x128xi1>, vector<8x128xf32>
    %cst_34 = arith.constant 0.000000e+00 : f32
    %92 = vector.broadcast %cst_34 : f32 to vector<8x128xf32>
    %93 = arith.select %89, %87, %92 : vector<8x128xi1>, vector<8x128xf32>
    %94 = arith.index_cast %17 : i32 to index
    %c0_35 = arith.constant 0 : index
    %c0_36 = arith.constant 0 : index
    %95 = vector.load %arg15[%94, %c0_35, %c0_36] : memref<8x8x128xf32, #tpu.memory_space<vmem>>, vector<1x8x128xf32>
    %96 = vector.shape_cast %95 : vector<1x8x128xf32> to vector<8x128xf32>
    %97 = vector.shape_cast %93 : vector<8x128xf32> to vector<1x8x128xf32>
    tpu.vector_store %arg15[%94, %c0_35, %c0_36], %97 {strides = array<i32>} : memref<8x8x128xf32, #tpu.memory_space<vmem>>, vector<1x8x128xf32>,
    %c1_i32 = arith.constant 1 : i32
    %c7_i32_37 = arith.constant 7 : i32
    %98 = arith.subi %c7_i32_37, %c1_i32 : i32
    %99 = arith.index_cast %c1_i32 : i32 to index
    %c0_38 = arith.constant 0 : index
    %c0_39 = arith.constant 0 : index
    %100 = vector.load %arg12[%99, %c0_38, %c0_39] : memref<8x8x512xf32, #tpu.memory_space<vmem>>, vector<1x8x512xf32>
    %101 = vector.shape_cast %100 : vector<1x8x512xf32> to vector<8x512xf32>
    %cst_40 = arith.constant dense<0.000000e+00> : vector<8x512xf32>
    %102 = tpu.matmul %50, %14, %cst_40 {dimension_numbers = #tpu.dot_dimension_numbers<[1], [0], [0], [1], [0, 0, 1, 1], [], []>} : vector<8x128xf32>, vector<128x512xf32>, vector<8x512xf32> -> vector<8x512xf32>
    %103 = arith.addf %101, %102 : vector<8x512xf32>
    %104 = vector.extract_strided_slice %103 {offsets = [0, 0], sizes = [8, 128], strides = [1, 1]} : vector<8x512xf32> to vector<8x128xf32>
    %105 = arith.negf %104 : vector<8x128xf32>
    %106 = math.exp %105 : vector<8x128xf32>
    %cst_41 = arith.constant 1.000000e+00 : f32
    %107 = vector.broadcast %cst_41 : f32 to vector<8x128xf32>
    %108 = arith.addf %107, %106 : vector<8x128xf32>
    %109 = arith.divf %107, %108 : vector<8x128xf32>
    %110 = vector.extract_strided_slice %103 {offsets = [0, 128], sizes = [8, 128], strides = [1, 1]} : vector<8x512xf32> to vector<8x128xf32>
    %111 = arith.negf %110 : vector<8x128xf32>
    %112 = math.exp %111 : vector<8x128xf32>
    %cst_42 = arith.constant 1.000000e+00 : f32
    %113 = vector.broadcast %cst_42 : f32 to vector<8x128xf32>
    %114 = arith.addf %113, %112 : vector<8x128xf32>
    %115 = arith.divf %113, %114 : vector<8x128xf32>
    %116 = vector.extract_strided_slice %103 {offsets = [0, 256], sizes = [8, 128], strides = [1, 1]} : vector<8x512xf32> to vector<8x128xf32>
    %117 = math.tanh %116 : vector<8x128xf32>
    %118 = vector.extract_strided_slice %103 {offsets = [0, 384], sizes = [8, 128], strides = [1, 1]} : vector<8x512xf32> to vector<8x128xf32>
    %119 = arith.negf %118 : vector<8x128xf32>
    %120 = math.exp %119 : vector<8x128xf32>
    %cst_43 = arith.constant 1.000000e+00 : f32
    %121 = vector.broadcast %cst_43 : f32 to vector<8x128xf32>
    %122 = arith.addf %121, %120 : vector<8x128xf32>
    %123 = arith.divf %121, %122 : vector<8x128xf32>
    %124 = arith.mulf %115, %51 : vector<8x128xf32>
    %125 = arith.mulf %109, %117 : vector<8x128xf32>
    %126 = arith.addf %124, %125 : vector<8x128xf32>
    %127 = math.tanh %126 : vector<8x128xf32>
    %128 = arith.mulf %123, %127 : vector<8x128xf32>
    %129 = vector.broadcast %c1_i32 : i32 to vector<8x128xi32>
    %130 = arith.cmpi slt, %129, %0 : vector<8x128xi32>
    %131 = arith.select %130, %128, %50 : vector<8x128xi1>, vector<8x128xf32>
    %132 = arith.select %130, %126, %51 : vector<8x128xi1>, vector<8x128xf32>
    %cst_44 = arith.constant 0.000000e+00 : f32
    %133 = vector.broadcast %cst_44 : f32 to vector<8x128xf32>
    %134 = arith.select %130, %128, %133 : vector<8x128xi1>, vector<8x128xf32>
    %135 = arith.index_cast %c1_i32 : i32 to index
    %c0_45 = arith.constant 0 : index
    %c0_46 = arith.constant 0 : index
    %136 = vector.load %arg14[%135, %c0_45, %c0_46] : memref<8x8x128xf32, #tpu.memory_space<vmem>>, vector<1x8x128xf32>
    %137 = vector.shape_cast %136 : vector<1x8x128xf32> to vector<8x128xf32>
    %138 = vector.shape_cast %134 : vector<8x128xf32> to vector<1x8x128xf32>
    tpu.vector_store %arg14[%135, %c0_45, %c0_46], %138 {strides = array<i32>} : memref<8x8x128xf32, #tpu.memory_space<vmem>>, vector<1x8x128xf32>,
    %139 = arith.index_cast %98 : i32 to index
    %c0_47 = arith.constant 0 : index
    %c0_48 = arith.constant 0 : index
    %140 = vector.load %arg13[%139, %c0_47, %c0_48] : memref<8x8x512xf32, #tpu.memory_space<vmem>>, vector<1x8x512xf32>
    %141 = vector.shape_cast %140 : vector<1x8x512xf32> to vector<8x512xf32>
    %cst_49 = arith.constant dense<0.000000e+00> : vector<8x512xf32>
    %142 = tpu.matmul %90, %15, %cst_49 {dimension_numbers = #tpu.dot_dimension_numbers<[1], [0], [0], [1], [0, 0, 1, 1], [], []>} : vector<8x128xf32>, vector<128x512xf32>, vector<8x512xf32> -> vector<8x512xf32>
    %143 = arith.addf %141, %142 : vector<8x512xf32>
    %144 = vector.extract_strided_slice %143 {offsets = [0, 0], sizes = [8, 128], strides = [1, 1]} : vector<8x512xf32> to vector<8x128xf32>
    %145 = arith.negf %144 : vector<8x128xf32>
    %146 = math.exp %145 : vector<8x128xf32>
    %cst_50 = arith.constant 1.000000e+00 : f32
    %147 = vector.broadcast %cst_50 : f32 to vector<8x128xf32>
    %148 = arith.addf %147, %146 : vector<8x128xf32>
    %149 = arith.divf %147, %148 : vector<8x128xf32>
    %150 = vector.extract_strided_slice %143 {offsets = [0, 128], sizes = [8, 128], strides = [1, 1]} : vector<8x512xf32> to vector<8x128xf32>
    %151 = arith.negf %150 : vector<8x128xf32>
    %152 = math.exp %151 : vector<8x128xf32>
    %cst_51 = arith.constant 1.000000e+00 : f32
    %153 = vector.broadcast %cst_51 : f32 to vector<8x128xf32>
    %154 = arith.addf %153, %152 : vector<8x128xf32>
    %155 = arith.divf %153, %154 : vector<8x128xf32>
    %156 = vector.extract_strided_slice %143 {offsets = [0, 256], sizes = [8, 128], strides = [1, 1]} : vector<8x512xf32> to vector<8x128xf32>
    %157 = math.tanh %156 : vector<8x128xf32>
    %158 = vector.extract_strided_slice %143 {offsets = [0, 384], sizes = [8, 128], strides = [1, 1]} : vector<8x512xf32> to vector<8x128xf32>
    %159 = arith.negf %158 : vector<8x128xf32>
    %160 = math.exp %159 : vector<8x128xf32>
    %cst_52 = arith.constant 1.000000e+00 : f32
    %161 = vector.broadcast %cst_52 : f32 to vector<8x128xf32>
    %162 = arith.addf %161, %160 : vector<8x128xf32>
    %163 = arith.divf %161, %162 : vector<8x128xf32>
    %164 = arith.mulf %155, %91 : vector<8x128xf32>
    %165 = arith.mulf %149, %157 : vector<8x128xf32>
    %166 = arith.addf %164, %165 : vector<8x128xf32>
    %167 = math.tanh %166 : vector<8x128xf32>
    %168 = arith.mulf %163, %167 : vector<8x128xf32>
    %169 = vector.broadcast %98 : i32 to vector<8x128xi32>
    %170 = arith.cmpi slt, %169, %0 : vector<8x128xi32>
    %171 = arith.select %170, %168, %90 : vector<8x128xi1>, vector<8x128xf32>
    %172 = arith.select %170, %166, %91 : vector<8x128xi1>, vector<8x128xf32>
    %cst_53 = arith.constant 0.000000e+00 : f32
    %173 = vector.broadcast %cst_53 : f32 to vector<8x128xf32>
    %174 = arith.select %170, %168, %173 : vector<8x128xi1>, vector<8x128xf32>
    %175 = arith.index_cast %98 : i32 to index
    %c0_54 = arith.constant 0 : index
    %c0_55 = arith.constant 0 : index
    %176 = vector.load %arg15[%175, %c0_54, %c0_55] : memref<8x8x128xf32, #tpu.memory_space<vmem>>, vector<1x8x128xf32>
    %177 = vector.shape_cast %176 : vector<1x8x128xf32> to vector<8x128xf32>
    %178 = vector.shape_cast %174 : vector<8x128xf32> to vector<1x8x128xf32>
    tpu.vector_store %arg15[%175, %c0_54, %c0_55], %178 {strides = array<i32>} : memref<8x8x128xf32, #tpu.memory_space<vmem>>, vector<1x8x128xf32>,
    %c2_i32 = arith.constant 2 : i32
    %c7_i32_56 = arith.constant 7 : i32
    %179 = arith.subi %c7_i32_56, %c2_i32 : i32
    %180 = arith.index_cast %c2_i32 : i32 to index
    %c0_57 = arith.constant 0 : index
    %c0_58 = arith.constant 0 : index
    %181 = vector.load %arg12[%180, %c0_57, %c0_58] : memref<8x8x512xf32, #tpu.memory_space<vmem>>, vector<1x8x512xf32>
    %182 = vector.shape_cast %181 : vector<1x8x512xf32> to vector<8x512xf32>
    %cst_59 = arith.constant dense<0.000000e+00> : vector<8x512xf32>
    %183 = tpu.matmul %131, %14, %cst_59 {dimension_numbers = #tpu.dot_dimension_numbers<[1], [0], [0], [1], [0, 0, 1, 1], [], []>} : vector<8x128xf32>, vector<128x512xf32>, vector<8x512xf32> -> vector<8x512xf32>
    %184 = arith.addf %182, %183 : vector<8x512xf32>
    %185 = vector.extract_strided_slice %184 {offsets = [0, 0], sizes = [8, 128], strides = [1, 1]} : vector<8x512xf32> to vector<8x128xf32>
    %186 = arith.negf %185 : vector<8x128xf32>
    %187 = math.exp %186 : vector<8x128xf32>
    %cst_60 = arith.constant 1.000000e+00 : f32
    %188 = vector.broadcast %cst_60 : f32 to vector<8x128xf32>
    %189 = arith.addf %188, %187 : vector<8x128xf32>
    %190 = arith.divf %188, %189 : vector<8x128xf32>
    %191 = vector.extract_strided_slice %184 {offsets = [0, 128], sizes = [8, 128], strides = [1, 1]} : vector<8x512xf32> to vector<8x128xf32>
    %192 = arith.negf %191 : vector<8x128xf32>
    %193 = math.exp %192 : vector<8x128xf32>
    %cst_61 = arith.constant 1.000000e+00 : f32
    %194 = vector.broadcast %cst_61 : f32 to vector<8x128xf32>
    %195 = arith.addf %194, %193 : vector<8x128xf32>
    %196 = arith.divf %194, %195 : vector<8x128xf32>
    %197 = vector.extract_strided_slice %184 {offsets = [0, 256], sizes = [8, 128], strides = [1, 1]} : vector<8x512xf32> to vector<8x128xf32>
    %198 = math.tanh %197 : vector<8x128xf32>
    %199 = vector.extract_strided_slice %184 {offsets = [0, 384], sizes = [8, 128], strides = [1, 1]} : vector<8x512xf32> to vector<8x128xf32>
    %200 = arith.negf %199 : vector<8x128xf32>
    %201 = math.exp %200 : vector<8x128xf32>
    %cst_62 = arith.constant 1.000000e+00 : f32
    %202 = vector.broadcast %cst_62 : f32 to vector<8x128xf32>
    %203 = arith.addf %202, %201 : vector<8x128xf32>
    %204 = arith.divf %202, %203 : vector<8x128xf32>
    %205 = arith.mulf %196, %132 : vector<8x128xf32>
    %206 = arith.mulf %190, %198 : vector<8x128xf32>
    %207 = arith.addf %205, %206 : vector<8x128xf32>
    %208 = math.tanh %207 : vector<8x128xf32>
    %209 = arith.mulf %204, %208 : vector<8x128xf32>
    %210 = vector.broadcast %c2_i32 : i32 to vector<8x128xi32>
    %211 = arith.cmpi slt, %210, %0 : vector<8x128xi32>
    %212 = arith.select %211, %209, %131 : vector<8x128xi1>, vector<8x128xf32>
    %213 = arith.select %211, %207, %132 : vector<8x128xi1>, vector<8x128xf32>
    %cst_63 = arith.constant 0.000000e+00 : f32
    %214 = vector.broadcast %cst_63 : f32 to vector<8x128xf32>
    %215 = arith.select %211, %209, %214 : vector<8x128xi1>, vector<8x128xf32>
    %216 = arith.index_cast %c2_i32 : i32 to index
    %c0_64 = arith.constant 0 : index
    %c0_65 = arith.constant 0 : index
    %217 = vector.load %arg14[%216, %c0_64, %c0_65] : memref<8x8x128xf32, #tpu.memory_space<vmem>>, vector<1x8x128xf32>
    %218 = vector.shape_cast %217 : vector<1x8x128xf32> to vector<8x128xf32>
    %219 = vector.shape_cast %215 : vector<8x128xf32> to vector<1x8x128xf32>
    tpu.vector_store %arg14[%216, %c0_64, %c0_65], %219 {strides = array<i32>} : memref<8x8x128xf32, #tpu.memory_space<vmem>>, vector<1x8x128xf32>,
    %220 = arith.index_cast %179 : i32 to index
    %c0_66 = arith.constant 0 : index
    %c0_67 = arith.constant 0 : index
    %221 = vector.load %arg13[%220, %c0_66, %c0_67] : memref<8x8x512xf32, #tpu.memory_space<vmem>>, vector<1x8x512xf32>
    %222 = vector.shape_cast %221 : vector<1x8x512xf32> to vector<8x512xf32>
    %cst_68 = arith.constant dense<0.000000e+00> : vector<8x512xf32>
    %223 = tpu.matmul %171, %15, %cst_68 {dimension_numbers = #tpu.dot_dimension_numbers<[1], [0], [0], [1], [0, 0, 1, 1], [], []>} : vector<8x128xf32>, vector<128x512xf32>, vector<8x512xf32> -> vector<8x512xf32>
    %224 = arith.addf %222, %223 : vector<8x512xf32>
    %225 = vector.extract_strided_slice %224 {offsets = [0, 0], sizes = [8, 128], strides = [1, 1]} : vector<8x512xf32> to vector<8x128xf32>
    %226 = arith.negf %225 : vector<8x128xf32>
    %227 = math.exp %226 : vector<8x128xf32>
    %cst_69 = arith.constant 1.000000e+00 : f32
    %228 = vector.broadcast %cst_69 : f32 to vector<8x128xf32>
    %229 = arith.addf %228, %227 : vector<8x128xf32>
    %230 = arith.divf %228, %229 : vector<8x128xf32>
    %231 = vector.extract_strided_slice %224 {offsets = [0, 128], sizes = [8, 128], strides = [1, 1]} : vector<8x512xf32> to vector<8x128xf32>
    %232 = arith.negf %231 : vector<8x128xf32>
    %233 = math.exp %232 : vector<8x128xf32>
    %cst_70 = arith.constant 1.000000e+00 : f32
    %234 = vector.broadcast %cst_70 : f32 to vector<8x128xf32>
    %235 = arith.addf %234, %233 : vector<8x128xf32>
    %236 = arith.divf %234, %235 : vector<8x128xf32>
    %237 = vector.extract_strided_slice %224 {offsets = [0, 256], sizes = [8, 128], strides = [1, 1]} : vector<8x512xf32> to vector<8x128xf32>
    %238 = math.tanh %237 : vector<8x128xf32>
    %239 = vector.extract_strided_slice %224 {offsets = [0, 384], sizes = [8, 128], strides = [1, 1]} : vector<8x512xf32> to vector<8x128xf32>
    %240 = arith.negf %239 : vector<8x128xf32>
    %241 = math.exp %240 : vector<8x128xf32>
    %cst_71 = arith.constant 1.000000e+00 : f32
    %242 = vector.broadcast %cst_71 : f32 to vector<8x128xf32>
    %243 = arith.addf %242, %241 : vector<8x128xf32>
    %244 = arith.divf %242, %243 : vector<8x128xf32>
    %245 = arith.mulf %236, %172 : vector<8x128xf32>
    %246 = arith.mulf %230, %238 : vector<8x128xf32>
    %247 = arith.addf %245, %246 : vector<8x128xf32>
    %248 = math.tanh %247 : vector<8x128xf32>
    %249 = arith.mulf %244, %248 : vector<8x128xf32>
    %250 = vector.broadcast %179 : i32 to vector<8x128xi32>
    %251 = arith.cmpi slt, %250, %0 : vector<8x128xi32>
    %252 = arith.select %251, %249, %171 : vector<8x128xi1>, vector<8x128xf32>
    %253 = arith.select %251, %247, %172 : vector<8x128xi1>, vector<8x128xf32>
    %cst_72 = arith.constant 0.000000e+00 : f32
    %254 = vector.broadcast %cst_72 : f32 to vector<8x128xf32>
    %255 = arith.select %251, %249, %254 : vector<8x128xi1>, vector<8x128xf32>
    %256 = arith.index_cast %179 : i32 to index
    %c0_73 = arith.constant 0 : index
    %c0_74 = arith.constant 0 : index
    %257 = vector.load %arg15[%256, %c0_73, %c0_74] : memref<8x8x128xf32, #tpu.memory_space<vmem>>, vector<1x8x128xf32>
    %258 = vector.shape_cast %257 : vector<1x8x128xf32> to vector<8x128xf32>
    %259 = vector.shape_cast %255 : vector<8x128xf32> to vector<1x8x128xf32>
    tpu.vector_store %arg15[%256, %c0_73, %c0_74], %259 {strides = array<i32>} : memref<8x8x128xf32, #tpu.memory_space<vmem>>, vector<1x8x128xf32>,
    %c3_i32 = arith.constant 3 : i32
    %c7_i32_75 = arith.constant 7 : i32
    %260 = arith.subi %c7_i32_75, %c3_i32 : i32
    %261 = arith.index_cast %c3_i32 : i32 to index
    %c0_76 = arith.constant 0 : index
    %c0_77 = arith.constant 0 : index
    %262 = vector.load %arg12[%261, %c0_76, %c0_77] : memref<8x8x512xf32, #tpu.memory_space<vmem>>, vector<1x8x512xf32>
    %263 = vector.shape_cast %262 : vector<1x8x512xf32> to vector<8x512xf32>
    %cst_78 = arith.constant dense<0.000000e+00> : vector<8x512xf32>
    %264 = tpu.matmul %212, %14, %cst_78 {dimension_numbers = #tpu.dot_dimension_numbers<[1], [0], [0], [1], [0, 0, 1, 1], [], []>} : vector<8x128xf32>, vector<128x512xf32>, vector<8x512xf32> -> vector<8x512xf32>
    %265 = arith.addf %263, %264 : vector<8x512xf32>
    %266 = vector.extract_strided_slice %265 {offsets = [0, 0], sizes = [8, 128], strides = [1, 1]} : vector<8x512xf32> to vector<8x128xf32>
    %267 = arith.negf %266 : vector<8x128xf32>
    %268 = math.exp %267 : vector<8x128xf32>
    %cst_79 = arith.constant 1.000000e+00 : f32
    %269 = vector.broadcast %cst_79 : f32 to vector<8x128xf32>
    %270 = arith.addf %269, %268 : vector<8x128xf32>
    %271 = arith.divf %269, %270 : vector<8x128xf32>
    %272 = vector.extract_strided_slice %265 {offsets = [0, 128], sizes = [8, 128], strides = [1, 1]} : vector<8x512xf32> to vector<8x128xf32>
    %273 = arith.negf %272 : vector<8x128xf32>
    %274 = math.exp %273 : vector<8x128xf32>
    %cst_80 = arith.constant 1.000000e+00 : f32
    %275 = vector.broadcast %cst_80 : f32 to vector<8x128xf32>
    %276 = arith.addf %275, %274 : vector<8x128xf32>
    %277 = arith.divf %275, %276 : vector<8x128xf32>
    %278 = vector.extract_strided_slice %265 {offsets = [0, 256], sizes = [8, 128], strides = [1, 1]} : vector<8x512xf32> to vector<8x128xf32>
    %279 = math.tanh %278 : vector<8x128xf32>
    %280 = vector.extract_strided_slice %265 {offsets = [0, 384], sizes = [8, 128], strides = [1, 1]} : vector<8x512xf32> to vector<8x128xf32>
    %281 = arith.negf %280 : vector<8x128xf32>
    %282 = math.exp %281 : vector<8x128xf32>
    %cst_81 = arith.constant 1.000000e+00 : f32
    %283 = vector.broadcast %cst_81 : f32 to vector<8x128xf32>
    %284 = arith.addf %283, %282 : vector<8x128xf32>
    %285 = arith.divf %283, %284 : vector<8x128xf32>
    %286 = arith.mulf %277, %213 : vector<8x128xf32>
    %287 = arith.mulf %271, %279 : vector<8x128xf32>
    %288 = arith.addf %286, %287 : vector<8x128xf32>
    %289 = math.tanh %288 : vector<8x128xf32>
    %290 = arith.mulf %285, %289 : vector<8x128xf32>
    %291 = vector.broadcast %c3_i32 : i32 to vector<8x128xi32>
    %292 = arith.cmpi slt, %291, %0 : vector<8x128xi32>
    %293 = arith.select %292, %290, %212 : vector<8x128xi1>, vector<8x128xf32>
    %294 = arith.select %292, %288, %213 : vector<8x128xi1>, vector<8x128xf32>
    %cst_82 = arith.constant 0.000000e+00 : f32
    %295 = vector.broadcast %cst_82 : f32 to vector<8x128xf32>
    %296 = arith.select %292, %290, %295 : vector<8x128xi1>, vector<8x128xf32>
    %297 = arith.index_cast %c3_i32 : i32 to index
    %c0_83 = arith.constant 0 : index
    %c0_84 = arith.constant 0 : index
    %298 = vector.load %arg14[%297, %c0_83, %c0_84] : memref<8x8x128xf32, #tpu.memory_space<vmem>>, vector<1x8x128xf32>
    %299 = vector.shape_cast %298 : vector<1x8x128xf32> to vector<8x128xf32>
    %300 = vector.shape_cast %296 : vector<8x128xf32> to vector<1x8x128xf32>
    tpu.vector_store %arg14[%297, %c0_83, %c0_84], %300 {strides = array<i32>} : memref<8x8x128xf32, #tpu.memory_space<vmem>>, vector<1x8x128xf32>,
    %301 = arith.index_cast %260 : i32 to index
    %c0_85 = arith.constant 0 : index
    %c0_86 = arith.constant 0 : index
    %302 = vector.load %arg13[%301, %c0_85, %c0_86] : memref<8x8x512xf32, #tpu.memory_space<vmem>>, vector<1x8x512xf32>
    %303 = vector.shape_cast %302 : vector<1x8x512xf32> to vector<8x512xf32>
    %cst_87 = arith.constant dense<0.000000e+00> : vector<8x512xf32>
    %304 = tpu.matmul %252, %15, %cst_87 {dimension_numbers = #tpu.dot_dimension_numbers<[1], [0], [0], [1], [0, 0, 1, 1], [], []>} : vector<8x128xf32>, vector<128x512xf32>, vector<8x512xf32> -> vector<8x512xf32>
    %305 = arith.addf %303, %304 : vector<8x512xf32>
    %306 = vector.extract_strided_slice %305 {offsets = [0, 0], sizes = [8, 128], strides = [1, 1]} : vector<8x512xf32> to vector<8x128xf32>
    %307 = arith.negf %306 : vector<8x128xf32>
    %308 = math.exp %307 : vector<8x128xf32>
    %cst_88 = arith.constant 1.000000e+00 : f32
    %309 = vector.broadcast %cst_88 : f32 to vector<8x128xf32>
    %310 = arith.addf %309, %308 : vector<8x128xf32>
    %311 = arith.divf %309, %310 : vector<8x128xf32>
    %312 = vector.extract_strided_slice %305 {offsets = [0, 128], sizes = [8, 128], strides = [1, 1]} : vector<8x512xf32> to vector<8x128xf32>
    %313 = arith.negf %312 : vector<8x128xf32>
    %314 = math.exp %313 : vector<8x128xf32>
    %cst_89 = arith.constant 1.000000e+00 : f32
    %315 = vector.broadcast %cst_89 : f32 to vector<8x128xf32>
    %316 = arith.addf %315, %314 : vector<8x128xf32>
    %317 = arith.divf %315, %316 : vector<8x128xf32>
    %318 = vector.extract_strided_slice %305 {offsets = [0, 256], sizes = [8, 128], strides = [1, 1]} : vector<8x512xf32> to vector<8x128xf32>
    %319 = math.tanh %318 : vector<8x128xf32>
    %320 = vector.extract_strided_slice %305 {offsets = [0, 384], sizes = [8, 128], strides = [1, 1]} : vector<8x512xf32> to vector<8x128xf32>
    %321 = arith.negf %320 : vector<8x128xf32>
    %322 = math.exp %321 : vector<8x128xf32>
    %cst_90 = arith.constant 1.000000e+00 : f32
    %323 = vector.broadcast %cst_90 : f32 to vector<8x128xf32>
    %324 = arith.addf %323, %322 : vector<8x128xf32>
    %325 = arith.divf %323, %324 : vector<8x128xf32>
    %326 = arith.mulf %317, %253 : vector<8x128xf32>
    %327 = arith.mulf %311, %319 : vector<8x128xf32>
    %328 = arith.addf %326, %327 : vector<8x128xf32>
    %329 = math.tanh %328 : vector<8x128xf32>
    %330 = arith.mulf %325, %329 : vector<8x128xf32>
    %331 = vector.broadcast %260 : i32 to vector<8x128xi32>
    %332 = arith.cmpi slt, %331, %0 : vector<8x128xi32>
    %333 = arith.select %332, %330, %252 : vector<8x128xi1>, vector<8x128xf32>
    %334 = arith.select %332, %328, %253 : vector<8x128xi1>, vector<8x128xf32>
    %cst_91 = arith.constant 0.000000e+00 : f32
    %335 = vector.broadcast %cst_91 : f32 to vector<8x128xf32>
    %336 = arith.select %332, %330, %335 : vector<8x128xi1>, vector<8x128xf32>
    %337 = arith.index_cast %260 : i32 to index
    %c0_92 = arith.constant 0 : index
    %c0_93 = arith.constant 0 : index
    %338 = vector.load %arg15[%337, %c0_92, %c0_93] : memref<8x8x128xf32, #tpu.memory_space<vmem>>, vector<1x8x128xf32>
    %339 = vector.shape_cast %338 : vector<1x8x128xf32> to vector<8x128xf32>
    %340 = vector.shape_cast %336 : vector<8x128xf32> to vector<1x8x128xf32>
    tpu.vector_store %arg15[%337, %c0_92, %c0_93], %340 {strides = array<i32>} : memref<8x8x128xf32, #tpu.memory_space<vmem>>, vector<1x8x128xf32>,
    %c4_i32 = arith.constant 4 : i32
    %c7_i32_94 = arith.constant 7 : i32
    %341 = arith.subi %c7_i32_94, %c4_i32 : i32
    %342 = arith.index_cast %c4_i32 : i32 to index
    %c0_95 = arith.constant 0 : index
    %c0_96 = arith.constant 0 : index
    %343 = vector.load %arg12[%342, %c0_95, %c0_96] : memref<8x8x512xf32, #tpu.memory_space<vmem>>, vector<1x8x512xf32>
    %344 = vector.shape_cast %343 : vector<1x8x512xf32> to vector<8x512xf32>
    %cst_97 = arith.constant dense<0.000000e+00> : vector<8x512xf32>
    %345 = tpu.matmul %293, %14, %cst_97 {dimension_numbers = #tpu.dot_dimension_numbers<[1], [0], [0], [1], [0, 0, 1, 1], [], []>} : vector<8x128xf32>, vector<128x512xf32>, vector<8x512xf32> -> vector<8x512xf32>
    %346 = arith.addf %344, %345 : vector<8x512xf32>
    %347 = vector.extract_strided_slice %346 {offsets = [0, 0], sizes = [8, 128], strides = [1, 1]} : vector<8x512xf32> to vector<8x128xf32>
    %348 = arith.negf %347 : vector<8x128xf32>
    %349 = math.exp %348 : vector<8x128xf32>
    %cst_98 = arith.constant 1.000000e+00 : f32
    %350 = vector.broadcast %cst_98 : f32 to vector<8x128xf32>
    %351 = arith.addf %350, %349 : vector<8x128xf32>
    %352 = arith.divf %350, %351 : vector<8x128xf32>
    %353 = vector.extract_strided_slice %346 {offsets = [0, 128], sizes = [8, 128], strides = [1, 1]} : vector<8x512xf32> to vector<8x128xf32>
    %354 = arith.negf %353 : vector<8x128xf32>
    %355 = math.exp %354 : vector<8x128xf32>
    %cst_99 = arith.constant 1.000000e+00 : f32
    %356 = vector.broadcast %cst_99 : f32 to vector<8x128xf32>
    %357 = arith.addf %356, %355 : vector<8x128xf32>
    %358 = arith.divf %356, %357 : vector<8x128xf32>
    %359 = vector.extract_strided_slice %346 {offsets = [0, 256], sizes = [8, 128], strides = [1, 1]} : vector<8x512xf32> to vector<8x128xf32>
    %360 = math.tanh %359 : vector<8x128xf32>
    %361 = vector.extract_strided_slice %346 {offsets = [0, 384], sizes = [8, 128], strides = [1, 1]} : vector<8x512xf32> to vector<8x128xf32>
    %362 = arith.negf %361 : vector<8x128xf32>
    %363 = math.exp %362 : vector<8x128xf32>
    %cst_100 = arith.constant 1.000000e+00 : f32
    %364 = vector.broadcast %cst_100 : f32 to vector<8x128xf32>
    %365 = arith.addf %364, %363 : vector<8x128xf32>
    %366 = arith.divf %364, %365 : vector<8x128xf32>
    %367 = arith.mulf %358, %294 : vector<8x128xf32>
    %368 = arith.mulf %352, %360 : vector<8x128xf32>
    %369 = arith.addf %367, %368 : vector<8x128xf32>
    %370 = math.tanh %369 : vector<8x128xf32>
    %371 = arith.mulf %366, %370 : vector<8x128xf32>
    %372 = vector.broadcast %c4_i32 : i32 to vector<8x128xi32>
    %373 = arith.cmpi slt, %372, %0 : vector<8x128xi32>
    %374 = arith.select %373, %371, %293 : vector<8x128xi1>, vector<8x128xf32>
    %375 = arith.select %373, %369, %294 : vector<8x128xi1>, vector<8x128xf32>
    %cst_101 = arith.constant 0.000000e+00 : f32
    %376 = vector.broadcast %cst_101 : f32 to vector<8x128xf32>
    %377 = arith.select %373, %371, %376 : vector<8x128xi1>, vector<8x128xf32>
    %378 = arith.index_cast %c4_i32 : i32 to index
    %c0_102 = arith.constant 0 : index
    %c0_103 = arith.constant 0 : index
    %379 = vector.load %arg14[%378, %c0_102, %c0_103] : memref<8x8x128xf32, #tpu.memory_space<vmem>>, vector<1x8x128xf32>
    %380 = vector.shape_cast %379 : vector<1x8x128xf32> to vector<8x128xf32>
    %381 = vector.shape_cast %377 : vector<8x128xf32> to vector<1x8x128xf32>
    tpu.vector_store %arg14[%378, %c0_102, %c0_103], %381 {strides = array<i32>} : memref<8x8x128xf32, #tpu.memory_space<vmem>>, vector<1x8x128xf32>,
    %382 = arith.index_cast %341 : i32 to index
    %c0_104 = arith.constant 0 : index
    %c0_105 = arith.constant 0 : index
    %383 = vector.load %arg13[%382, %c0_104, %c0_105] : memref<8x8x512xf32, #tpu.memory_space<vmem>>, vector<1x8x512xf32>
    %384 = vector.shape_cast %383 : vector<1x8x512xf32> to vector<8x512xf32>
    %cst_106 = arith.constant dense<0.000000e+00> : vector<8x512xf32>
    %385 = tpu.matmul %333, %15, %cst_106 {dimension_numbers = #tpu.dot_dimension_numbers<[1], [0], [0], [1], [0, 0, 1, 1], [], []>} : vector<8x128xf32>, vector<128x512xf32>, vector<8x512xf32> -> vector<8x512xf32>
    %386 = arith.addf %384, %385 : vector<8x512xf32>
    %387 = vector.extract_strided_slice %386 {offsets = [0, 0], sizes = [8, 128], strides = [1, 1]} : vector<8x512xf32> to vector<8x128xf32>
    %388 = arith.negf %387 : vector<8x128xf32>
    %389 = math.exp %388 : vector<8x128xf32>
    %cst_107 = arith.constant 1.000000e+00 : f32
    %390 = vector.broadcast %cst_107 : f32 to vector<8x128xf32>
    %391 = arith.addf %390, %389 : vector<8x128xf32>
    %392 = arith.divf %390, %391 : vector<8x128xf32>
    %393 = vector.extract_strided_slice %386 {offsets = [0, 128], sizes = [8, 128], strides = [1, 1]} : vector<8x512xf32> to vector<8x128xf32>
    %394 = arith.negf %393 : vector<8x128xf32>
    %395 = math.exp %394 : vector<8x128xf32>
    %cst_108 = arith.constant 1.000000e+00 : f32
    %396 = vector.broadcast %cst_108 : f32 to vector<8x128xf32>
    %397 = arith.addf %396, %395 : vector<8x128xf32>
    %398 = arith.divf %396, %397 : vector<8x128xf32>
    %399 = vector.extract_strided_slice %386 {offsets = [0, 256], sizes = [8, 128], strides = [1, 1]} : vector<8x512xf32> to vector<8x128xf32>
    %400 = math.tanh %399 : vector<8x128xf32>
    %401 = vector.extract_strided_slice %386 {offsets = [0, 384], sizes = [8, 128], strides = [1, 1]} : vector<8x512xf32> to vector<8x128xf32>
    %402 = arith.negf %401 : vector<8x128xf32>
    %403 = math.exp %402 : vector<8x128xf32>
    %cst_109 = arith.constant 1.000000e+00 : f32
    %404 = vector.broadcast %cst_109 : f32 to vector<8x128xf32>
    %405 = arith.addf %404, %403 : vector<8x128xf32>
    %406 = arith.divf %404, %405 : vector<8x128xf32>
    %407 = arith.mulf %398, %334 : vector<8x128xf32>
    %408 = arith.mulf %392, %400 : vector<8x128xf32>
    %409 = arith.addf %407, %408 : vector<8x128xf32>
    %410 = math.tanh %409 : vector<8x128xf32>
    %411 = arith.mulf %406, %410 : vector<8x128xf32>
    %412 = vector.broadcast %341 : i32 to vector<8x128xi32>
    %413 = arith.cmpi slt, %412, %0 : vector<8x128xi32>
    %414 = arith.select %413, %411, %333 : vector<8x128xi1>, vector<8x128xf32>
    %415 = arith.select %413, %409, %334 : vector<8x128xi1>, vector<8x128xf32>
    %cst_110 = arith.constant 0.000000e+00 : f32
    %416 = vector.broadcast %cst_110 : f32 to vector<8x128xf32>
    %417 = arith.select %413, %411, %416 : vector<8x128xi1>, vector<8x128xf32>
    %418 = arith.index_cast %341 : i32 to index
    %c0_111 = arith.constant 0 : index
    %c0_112 = arith.constant 0 : index
    %419 = vector.load %arg15[%418, %c0_111, %c0_112] : memref<8x8x128xf32, #tpu.memory_space<vmem>>, vector<1x8x128xf32>
    %420 = vector.shape_cast %419 : vector<1x8x128xf32> to vector<8x128xf32>
    %421 = vector.shape_cast %417 : vector<8x128xf32> to vector<1x8x128xf32>
    tpu.vector_store %arg15[%418, %c0_111, %c0_112], %421 {strides = array<i32>} : memref<8x8x128xf32, #tpu.memory_space<vmem>>, vector<1x8x128xf32>,
    %c5_i32 = arith.constant 5 : i32
    %c7_i32_113 = arith.constant 7 : i32
    %422 = arith.subi %c7_i32_113, %c5_i32 : i32
    %423 = arith.index_cast %c5_i32 : i32 to index
    %c0_114 = arith.constant 0 : index
    %c0_115 = arith.constant 0 : index
    %424 = vector.load %arg12[%423, %c0_114, %c0_115] : memref<8x8x512xf32, #tpu.memory_space<vmem>>, vector<1x8x512xf32>
    %425 = vector.shape_cast %424 : vector<1x8x512xf32> to vector<8x512xf32>
    %cst_116 = arith.constant dense<0.000000e+00> : vector<8x512xf32>
    %426 = tpu.matmul %374, %14, %cst_116 {dimension_numbers = #tpu.dot_dimension_numbers<[1], [0], [0], [1], [0, 0, 1, 1], [], []>} : vector<8x128xf32>, vector<128x512xf32>, vector<8x512xf32> -> vector<8x512xf32>
    %427 = arith.addf %425, %426 : vector<8x512xf32>
    %428 = vector.extract_strided_slice %427 {offsets = [0, 0], sizes = [8, 128], strides = [1, 1]} : vector<8x512xf32> to vector<8x128xf32>
    %429 = arith.negf %428 : vector<8x128xf32>
    %430 = math.exp %429 : vector<8x128xf32>
    %cst_117 = arith.constant 1.000000e+00 : f32
    %431 = vector.broadcast %cst_117 : f32 to vector<8x128xf32>
    %432 = arith.addf %431, %430 : vector<8x128xf32>
    %433 = arith.divf %431, %432 : vector<8x128xf32>
    %434 = vector.extract_strided_slice %427 {offsets = [0, 128], sizes = [8, 128], strides = [1, 1]} : vector<8x512xf32> to vector<8x128xf32>
    %435 = arith.negf %434 : vector<8x128xf32>
    %436 = math.exp %435 : vector<8x128xf32>
    %cst_118 = arith.constant 1.000000e+00 : f32
    %437 = vector.broadcast %cst_118 : f32 to vector<8x128xf32>
    %438 = arith.addf %437, %436 : vector<8x128xf32>
    %439 = arith.divf %437, %438 : vector<8x128xf32>
    %440 = vector.extract_strided_slice %427 {offsets = [0, 256], sizes = [8, 128], strides = [1, 1]} : vector<8x512xf32> to vector<8x128xf32>
    %441 = math.tanh %440 : vector<8x128xf32>
    %442 = vector.extract_strided_slice %427 {offsets = [0, 384], sizes = [8, 128], strides = [1, 1]} : vector<8x512xf32> to vector<8x128xf32>
    %443 = arith.negf %442 : vector<8x128xf32>
    %444 = math.exp %443 : vector<8x128xf32>
    %cst_119 = arith.constant 1.000000e+00 : f32
    %445 = vector.broadcast %cst_119 : f32 to vector<8x128xf32>
    %446 = arith.addf %445, %444 : vector<8x128xf32>
    %447 = arith.divf %445, %446 : vector<8x128xf32>
    %448 = arith.mulf %439, %375 : vector<8x128xf32>
    %449 = arith.mulf %433, %441 : vector<8x128xf32>
    %450 = arith.addf %448, %449 : vector<8x128xf32>
    %451 = math.tanh %450 : vector<8x128xf32>
    %452 = arith.mulf %447, %451 : vector<8x128xf32>
    %453 = vector.broadcast %c5_i32 : i32 to vector<8x128xi32>
    %454 = arith.cmpi slt, %453, %0 : vector<8x128xi32>
    %455 = arith.select %454, %452, %374 : vector<8x128xi1>, vector<8x128xf32>
    %456 = arith.select %454, %450, %375 : vector<8x128xi1>, vector<8x128xf32>
    %cst_120 = arith.constant 0.000000e+00 : f32
    %457 = vector.broadcast %cst_120 : f32 to vector<8x128xf32>
    %458 = arith.select %454, %452, %457 : vector<8x128xi1>, vector<8x128xf32>
    %459 = arith.index_cast %c5_i32 : i32 to index
    %c0_121 = arith.constant 0 : index
    %c0_122 = arith.constant 0 : index
    %460 = vector.load %arg14[%459, %c0_121, %c0_122] : memref<8x8x128xf32, #tpu.memory_space<vmem>>, vector<1x8x128xf32>
    %461 = vector.shape_cast %460 : vector<1x8x128xf32> to vector<8x128xf32>
    %462 = vector.shape_cast %458 : vector<8x128xf32> to vector<1x8x128xf32>
    tpu.vector_store %arg14[%459, %c0_121, %c0_122], %462 {strides = array<i32>} : memref<8x8x128xf32, #tpu.memory_space<vmem>>, vector<1x8x128xf32>,
    %463 = arith.index_cast %422 : i32 to index
    %c0_123 = arith.constant 0 : index
    %c0_124 = arith.constant 0 : index
    %464 = vector.load %arg13[%463, %c0_123, %c0_124] : memref<8x8x512xf32, #tpu.memory_space<vmem>>, vector<1x8x512xf32>
    %465 = vector.shape_cast %464 : vector<1x8x512xf32> to vector<8x512xf32>
    %cst_125 = arith.constant dense<0.000000e+00> : vector<8x512xf32>
    %466 = tpu.matmul %414, %15, %cst_125 {dimension_numbers = #tpu.dot_dimension_numbers<[1], [0], [0], [1], [0, 0, 1, 1], [], []>} : vector<8x128xf32>, vector<128x512xf32>, vector<8x512xf32> -> vector<8x512xf32>
    %467 = arith.addf %465, %466 : vector<8x512xf32>
    %468 = vector.extract_strided_slice %467 {offsets = [0, 0], sizes = [8, 128], strides = [1, 1]} : vector<8x512xf32> to vector<8x128xf32>
    %469 = arith.negf %468 : vector<8x128xf32>
    %470 = math.exp %469 : vector<8x128xf32>
    %cst_126 = arith.constant 1.000000e+00 : f32
    %471 = vector.broadcast %cst_126 : f32 to vector<8x128xf32>
    %472 = arith.addf %471, %470 : vector<8x128xf32>
    %473 = arith.divf %471, %472 : vector<8x128xf32>
    %474 = vector.extract_strided_slice %467 {offsets = [0, 128], sizes = [8, 128], strides = [1, 1]} : vector<8x512xf32> to vector<8x128xf32>
    %475 = arith.negf %474 : vector<8x128xf32>
    %476 = math.exp %475 : vector<8x128xf32>
    %cst_127 = arith.constant 1.000000e+00 : f32
    %477 = vector.broadcast %cst_127 : f32 to vector<8x128xf32>
    %478 = arith.addf %477, %476 : vector<8x128xf32>
    %479 = arith.divf %477, %478 : vector<8x128xf32>
    %480 = vector.extract_strided_slice %467 {offsets = [0, 256], sizes = [8, 128], strides = [1, 1]} : vector<8x512xf32> to vector<8x128xf32>
    %481 = math.tanh %480 : vector<8x128xf32>
    %482 = vector.extract_strided_slice %467 {offsets = [0, 384], sizes = [8, 128], strides = [1, 1]} : vector<8x512xf32> to vector<8x128xf32>
    %483 = arith.negf %482 : vector<8x128xf32>
    %484 = math.exp %483 : vector<8x128xf32>
    %cst_128 = arith.constant 1.000000e+00 : f32
    %485 = vector.broadcast %cst_128 : f32 to vector<8x128xf32>
    %486 = arith.addf %485, %484 : vector<8x128xf32>
    %487 = arith.divf %485, %486 : vector<8x128xf32>
    %488 = arith.mulf %479, %415 : vector<8x128xf32>
    %489 = arith.mulf %473, %481 : vector<8x128xf32>
    %490 = arith.addf %488, %489 : vector<8x128xf32>
    %491 = math.tanh %490 : vector<8x128xf32>
    %492 = arith.mulf %487, %491 : vector<8x128xf32>
    %493 = vector.broadcast %422 : i32 to vector<8x128xi32>
    %494 = arith.cmpi slt, %493, %0 : vector<8x128xi32>
    %495 = arith.select %494, %492, %414 : vector<8x128xi1>, vector<8x128xf32>
    %496 = arith.select %494, %490, %415 : vector<8x128xi1>, vector<8x128xf32>
    %cst_129 = arith.constant 0.000000e+00 : f32
    %497 = vector.broadcast %cst_129 : f32 to vector<8x128xf32>
    %498 = arith.select %494, %492, %497 : vector<8x128xi1>, vector<8x128xf32>
    %499 = arith.index_cast %422 : i32 to index
    %c0_130 = arith.constant 0 : index
    %c0_131 = arith.constant 0 : index
    %500 = vector.load %arg15[%499, %c0_130, %c0_131] : memref<8x8x128xf32, #tpu.memory_space<vmem>>, vector<1x8x128xf32>
    %501 = vector.shape_cast %500 : vector<1x8x128xf32> to vector<8x128xf32>
    %502 = vector.shape_cast %498 : vector<8x128xf32> to vector<1x8x128xf32>
    tpu.vector_store %arg15[%499, %c0_130, %c0_131], %502 {strides = array<i32>} : memref<8x8x128xf32, #tpu.memory_space<vmem>>, vector<1x8x128xf32>,
    %c6_i32 = arith.constant 6 : i32
    %c7_i32_132 = arith.constant 7 : i32
    %503 = arith.subi %c7_i32_132, %c6_i32 : i32
    %504 = arith.index_cast %c6_i32 : i32 to index
    %c0_133 = arith.constant 0 : index
    %c0_134 = arith.constant 0 : index
    %505 = vector.load %arg12[%504, %c0_133, %c0_134] : memref<8x8x512xf32, #tpu.memory_space<vmem>>, vector<1x8x512xf32>
    %506 = vector.shape_cast %505 : vector<1x8x512xf32> to vector<8x512xf32>
    %cst_135 = arith.constant dense<0.000000e+00> : vector<8x512xf32>
    %507 = tpu.matmul %455, %14, %cst_135 {dimension_numbers = #tpu.dot_dimension_numbers<[1], [0], [0], [1], [0, 0, 1, 1], [], []>} : vector<8x128xf32>, vector<128x512xf32>, vector<8x512xf32> -> vector<8x512xf32>
    %508 = arith.addf %506, %507 : vector<8x512xf32>
    %509 = vector.extract_strided_slice %508 {offsets = [0, 0], sizes = [8, 128], strides = [1, 1]} : vector<8x512xf32> to vector<8x128xf32>
    %510 = arith.negf %509 : vector<8x128xf32>
    %511 = math.exp %510 : vector<8x128xf32>
    %cst_136 = arith.constant 1.000000e+00 : f32
    %512 = vector.broadcast %cst_136 : f32 to vector<8x128xf32>
    %513 = arith.addf %512, %511 : vector<8x128xf32>
    %514 = arith.divf %512, %513 : vector<8x128xf32>
    %515 = vector.extract_strided_slice %508 {offsets = [0, 128], sizes = [8, 128], strides = [1, 1]} : vector<8x512xf32> to vector<8x128xf32>
    %516 = arith.negf %515 : vector<8x128xf32>
    %517 = math.exp %516 : vector<8x128xf32>
    %cst_137 = arith.constant 1.000000e+00 : f32
    %518 = vector.broadcast %cst_137 : f32 to vector<8x128xf32>
    %519 = arith.addf %518, %517 : vector<8x128xf32>
    %520 = arith.divf %518, %519 : vector<8x128xf32>
    %521 = vector.extract_strided_slice %508 {offsets = [0, 256], sizes = [8, 128], strides = [1, 1]} : vector<8x512xf32> to vector<8x128xf32>
    %522 = math.tanh %521 : vector<8x128xf32>
    %523 = vector.extract_strided_slice %508 {offsets = [0, 384], sizes = [8, 128], strides = [1, 1]} : vector<8x512xf32> to vector<8x128xf32>
    %524 = arith.negf %523 : vector<8x128xf32>
    %525 = math.exp %524 : vector<8x128xf32>
    %cst_138 = arith.constant 1.000000e+00 : f32
    %526 = vector.broadcast %cst_138 : f32 to vector<8x128xf32>
    %527 = arith.addf %526, %525 : vector<8x128xf32>
    %528 = arith.divf %526, %527 : vector<8x128xf32>
    %529 = arith.mulf %520, %456 : vector<8x128xf32>
    %530 = arith.mulf %514, %522 : vector<8x128xf32>
    %531 = arith.addf %529, %530 : vector<8x128xf32>
    %532 = math.tanh %531 : vector<8x128xf32>
    %533 = arith.mulf %528, %532 : vector<8x128xf32>
    %534 = vector.broadcast %c6_i32 : i32 to vector<8x128xi32>
    %535 = arith.cmpi slt, %534, %0 : vector<8x128xi32>
    %536 = arith.select %535, %533, %455 : vector<8x128xi1>, vector<8x128xf32>
    %537 = arith.select %535, %531, %456 : vector<8x128xi1>, vector<8x128xf32>
    %cst_139 = arith.constant 0.000000e+00 : f32
    %538 = vector.broadcast %cst_139 : f32 to vector<8x128xf32>
    %539 = arith.select %535, %533, %538 : vector<8x128xi1>, vector<8x128xf32>
    %540 = arith.index_cast %c6_i32 : i32 to index
    %c0_140 = arith.constant 0 : index
    %c0_141 = arith.constant 0 : index
    %541 = vector.load %arg14[%540, %c0_140, %c0_141] : memref<8x8x128xf32, #tpu.memory_space<vmem>>, vector<1x8x128xf32>
    %542 = vector.shape_cast %541 : vector<1x8x128xf32> to vector<8x128xf32>
    %543 = vector.shape_cast %539 : vector<8x128xf32> to vector<1x8x128xf32>
    tpu.vector_store %arg14[%540, %c0_140, %c0_141], %543 {strides = array<i32>} : memref<8x8x128xf32, #tpu.memory_space<vmem>>, vector<1x8x128xf32>,
    %544 = arith.index_cast %503 : i32 to index
    %c0_142 = arith.constant 0 : index
    %c0_143 = arith.constant 0 : index
    %545 = vector.load %arg13[%544, %c0_142, %c0_143] : memref<8x8x512xf32, #tpu.memory_space<vmem>>, vector<1x8x512xf32>
    %546 = vector.shape_cast %545 : vector<1x8x512xf32> to vector<8x512xf32>
    %cst_144 = arith.constant dense<0.000000e+00> : vector<8x512xf32>
    %547 = tpu.matmul %495, %15, %cst_144 {dimension_numbers = #tpu.dot_dimension_numbers<[1], [0], [0], [1], [0, 0, 1, 1], [], []>} : vector<8x128xf32>, vector<128x512xf32>, vector<8x512xf32> -> vector<8x512xf32>
    %548 = arith.addf %546, %547 : vector<8x512xf32>
    %549 = vector.extract_strided_slice %548 {offsets = [0, 0], sizes = [8, 128], strides = [1, 1]} : vector<8x512xf32> to vector<8x128xf32>
    %550 = arith.negf %549 : vector<8x128xf32>
    %551 = math.exp %550 : vector<8x128xf32>
    %cst_145 = arith.constant 1.000000e+00 : f32
    %552 = vector.broadcast %cst_145 : f32 to vector<8x128xf32>
    %553 = arith.addf %552, %551 : vector<8x128xf32>
    %554 = arith.divf %552, %553 : vector<8x128xf32>
    %555 = vector.extract_strided_slice %548 {offsets = [0, 128], sizes = [8, 128], strides = [1, 1]} : vector<8x512xf32> to vector<8x128xf32>
    %556 = arith.negf %555 : vector<8x128xf32>
    %557 = math.exp %556 : vector<8x128xf32>
    %cst_146 = arith.constant 1.000000e+00 : f32
    %558 = vector.broadcast %cst_146 : f32 to vector<8x128xf32>
    %559 = arith.addf %558, %557 : vector<8x128xf32>
    %560 = arith.divf %558, %559 : vector<8x128xf32>
    %561 = vector.extract_strided_slice %548 {offsets = [0, 256], sizes = [8, 128], strides = [1, 1]} : vector<8x512xf32> to vector<8x128xf32>
    %562 = math.tanh %561 : vector<8x128xf32>
    %563 = vector.extract_strided_slice %548 {offsets = [0, 384], sizes = [8, 128], strides = [1, 1]} : vector<8x512xf32> to vector<8x128xf32>
    %564 = arith.negf %563 : vector<8x128xf32>
    %565 = math.exp %564 : vector<8x128xf32>
    %cst_147 = arith.constant 1.000000e+00 : f32
    %566 = vector.broadcast %cst_147 : f32 to vector<8x128xf32>
    %567 = arith.addf %566, %565 : vector<8x128xf32>
    %568 = arith.divf %566, %567 : vector<8x128xf32>
    %569 = arith.mulf %560, %496 : vector<8x128xf32>
    %570 = arith.mulf %554, %562 : vector<8x128xf32>
    %571 = arith.addf %569, %570 : vector<8x128xf32>
    %572 = math.tanh %571 : vector<8x128xf32>
    %573 = arith.mulf %568, %572 : vector<8x128xf32>
    %574 = vector.broadcast %503 : i32 to vector<8x128xi32>
    %575 = arith.cmpi slt, %574, %0 : vector<8x128xi32>
    %576 = arith.select %575, %573, %495 : vector<8x128xi1>, vector<8x128xf32>
    %577 = arith.select %575, %571, %496 : vector<8x128xi1>, vector<8x128xf32>
    %cst_148 = arith.constant 0.000000e+00 : f32
    %578 = vector.broadcast %cst_148 : f32 to vector<8x128xf32>
    %579 = arith.select %575, %573, %578 : vector<8x128xi1>, vector<8x128xf32>
    %580 = arith.index_cast %503 : i32 to index
    %c0_149 = arith.constant 0 : index
    %c0_150 = arith.constant 0 : index
    %581 = vector.load %arg15[%580, %c0_149, %c0_150] : memref<8x8x128xf32, #tpu.memory_space<vmem>>, vector<1x8x128xf32>
    %582 = vector.shape_cast %581 : vector<1x8x128xf32> to vector<8x128xf32>
    %583 = vector.shape_cast %579 : vector<8x128xf32> to vector<1x8x128xf32>
    tpu.vector_store %arg15[%580, %c0_149, %c0_150], %583 {strides = array<i32>} : memref<8x8x128xf32, #tpu.memory_space<vmem>>, vector<1x8x128xf32>,
    %c7_i32_151 = arith.constant 7 : i32
    %c7_i32_152 = arith.constant 7 : i32
    %584 = arith.subi %c7_i32_152, %c7_i32_151 : i32
    %585 = arith.index_cast %c7_i32_151 : i32 to index
    %c0_153 = arith.constant 0 : index
    %c0_154 = arith.constant 0 : index
    %586 = vector.load %arg12[%585, %c0_153, %c0_154] : memref<8x8x512xf32, #tpu.memory_space<vmem>>, vector<1x8x512xf32>
    %587 = vector.shape_cast %586 : vector<1x8x512xf32> to vector<8x512xf32>
    %cst_155 = arith.constant dense<0.000000e+00> : vector<8x512xf32>
    %588 = tpu.matmul %536, %14, %cst_155 {dimension_numbers = #tpu.dot_dimension_numbers<[1], [0], [0], [1], [0, 0, 1, 1], [], []>} : vector<8x128xf32>, vector<128x512xf32>, vector<8x512xf32> -> vector<8x512xf32>
    %589 = arith.addf %587, %588 : vector<8x512xf32>
    %590 = vector.extract_strided_slice %589 {offsets = [0, 0], sizes = [8, 128], strides = [1, 1]} : vector<8x512xf32> to vector<8x128xf32>
    %591 = arith.negf %590 : vector<8x128xf32>
    %592 = math.exp %591 : vector<8x128xf32>
    %cst_156 = arith.constant 1.000000e+00 : f32
    %593 = vector.broadcast %cst_156 : f32 to vector<8x128xf32>
    %594 = arith.addf %593, %592 : vector<8x128xf32>
    %595 = arith.divf %593, %594 : vector<8x128xf32>
    %596 = vector.extract_strided_slice %589 {offsets = [0, 128], sizes = [8, 128], strides = [1, 1]} : vector<8x512xf32> to vector<8x128xf32>
    %597 = arith.negf %596 : vector<8x128xf32>
    %598 = math.exp %597 : vector<8x128xf32>
    %cst_157 = arith.constant 1.000000e+00 : f32
    %599 = vector.broadcast %cst_157 : f32 to vector<8x128xf32>
    %600 = arith.addf %599, %598 : vector<8x128xf32>
    %601 = arith.divf %599, %600 : vector<8x128xf32>
    %602 = vector.extract_strided_slice %589 {offsets = [0, 256], sizes = [8, 128], strides = [1, 1]} : vector<8x512xf32> to vector<8x128xf32>
    %603 = math.tanh %602 : vector<8x128xf32>
    %604 = vector.extract_strided_slice %589 {offsets = [0, 384], sizes = [8, 128], strides = [1, 1]} : vector<8x512xf32> to vector<8x128xf32>
    %605 = arith.negf %604 : vector<8x128xf32>
    %606 = math.exp %605 : vector<8x128xf32>
    %cst_158 = arith.constant 1.000000e+00 : f32
    %607 = vector.broadcast %cst_158 : f32 to vector<8x128xf32>
    %608 = arith.addf %607, %606 : vector<8x128xf32>
    %609 = arith.divf %607, %608 : vector<8x128xf32>
    %610 = arith.mulf %601, %537 : vector<8x128xf32>
    %611 = arith.mulf %595, %603 : vector<8x128xf32>
    %612 = arith.addf %610, %611 : vector<8x128xf32>
    %613 = math.tanh %612 : vector<8x128xf32>
    %614 = arith.mulf %609, %613 : vector<8x128xf32>
    %615 = vector.broadcast %c7_i32_151 : i32 to vector<8x128xi32>
    %616 = arith.cmpi slt, %615, %0 : vector<8x128xi32>
    %617 = arith.select %616, %614, %536 : vector<8x128xi1>, vector<8x128xf32>
    %618 = arith.select %616, %612, %537 : vector<8x128xi1>, vector<8x128xf32>
    %cst_159 = arith.constant 0.000000e+00 : f32
    %619 = vector.broadcast %cst_159 : f32 to vector<8x128xf32>
    %620 = arith.select %616, %614, %619 : vector<8x128xi1>, vector<8x128xf32>
    %621 = arith.index_cast %c7_i32_151 : i32 to index
    %c0_160 = arith.constant 0 : index
    %c0_161 = arith.constant 0 : index
    %622 = vector.load %arg14[%621, %c0_160, %c0_161] : memref<8x8x128xf32, #tpu.memory_space<vmem>>, vector<1x8x128xf32>
    %623 = vector.shape_cast %622 : vector<1x8x128xf32> to vector<8x128xf32>
    %624 = vector.shape_cast %620 : vector<8x128xf32> to vector<1x8x128xf32>
    tpu.vector_store %arg14[%621, %c0_160, %c0_161], %624 {strides = array<i32>} : memref<8x8x128xf32, #tpu.memory_space<vmem>>, vector<1x8x128xf32>,
    %625 = arith.index_cast %584 : i32 to index
    %c0_162 = arith.constant 0 : index
    %c0_163 = arith.constant 0 : index
    %626 = vector.load %arg13[%625, %c0_162, %c0_163] : memref<8x8x512xf32, #tpu.memory_space<vmem>>, vector<1x8x512xf32>
    %627 = vector.shape_cast %626 : vector<1x8x512xf32> to vector<8x512xf32>
    %cst_164 = arith.constant dense<0.000000e+00> : vector<8x512xf32>
    %628 = tpu.matmul %576, %15, %cst_164 {dimension_numbers = #tpu.dot_dimension_numbers<[1], [0], [0], [1], [0, 0, 1, 1], [], []>} : vector<8x128xf32>, vector<128x512xf32>, vector<8x512xf32> -> vector<8x512xf32>
    %629 = arith.addf %627, %628 : vector<8x512xf32>
    %630 = vector.extract_strided_slice %629 {offsets = [0, 0], sizes = [8, 128], strides = [1, 1]} : vector<8x512xf32> to vector<8x128xf32>
    %631 = arith.negf %630 : vector<8x128xf32>
    %632 = math.exp %631 : vector<8x128xf32>
    %cst_165 = arith.constant 1.000000e+00 : f32
    %633 = vector.broadcast %cst_165 : f32 to vector<8x128xf32>
    %634 = arith.addf %633, %632 : vector<8x128xf32>
    %635 = arith.divf %633, %634 : vector<8x128xf32>
    %636 = vector.extract_strided_slice %629 {offsets = [0, 128], sizes = [8, 128], strides = [1, 1]} : vector<8x512xf32> to vector<8x128xf32>
    %637 = arith.negf %636 : vector<8x128xf32>
    %638 = math.exp %637 : vector<8x128xf32>
    %cst_166 = arith.constant 1.000000e+00 : f32
    %639 = vector.broadcast %cst_166 : f32 to vector<8x128xf32>
    %640 = arith.addf %639, %638 : vector<8x128xf32>
    %641 = arith.divf %639, %640 : vector<8x128xf32>
    %642 = vector.extract_strided_slice %629 {offsets = [0, 256], sizes = [8, 128], strides = [1, 1]} : vector<8x512xf32> to vector<8x128xf32>
    %643 = math.tanh %642 : vector<8x128xf32>
    %644 = vector.extract_strided_slice %629 {offsets = [0, 384], sizes = [8, 128], strides = [1, 1]} : vector<8x512xf32> to vector<8x128xf32>
    %645 = arith.negf %644 : vector<8x128xf32>
    %646 = math.exp %645 : vector<8x128xf32>
    %cst_167 = arith.constant 1.000000e+00 : f32
    %647 = vector.broadcast %cst_167 : f32 to vector<8x128xf32>
    %648 = arith.addf %647, %646 : vector<8x128xf32>
    %649 = arith.divf %647, %648 : vector<8x128xf32>
    %650 = arith.mulf %641, %577 : vector<8x128xf32>
    %651 = arith.mulf %635, %643 : vector<8x128xf32>
    %652 = arith.addf %650, %651 : vector<8x128xf32>
    %653 = math.tanh %652 : vector<8x128xf32>
    %654 = arith.mulf %649, %653 : vector<8x128xf32>
    %655 = vector.broadcast %584 : i32 to vector<8x128xi32>
    %656 = arith.cmpi slt, %655, %0 : vector<8x128xi32>
    %657 = arith.select %656, %654, %576 : vector<8x128xi1>, vector<8x128xf32>
    %658 = arith.select %656, %652, %577 : vector<8x128xi1>, vector<8x128xf32>
    %cst_168 = arith.constant 0.000000e+00 : f32
    %659 = vector.broadcast %cst_168 : f32 to vector<8x128xf32>
    %660 = arith.select %656, %654, %659 : vector<8x128xi1>, vector<8x128xf32>
    %661 = arith.index_cast %584 : i32 to index
    %c0_169 = arith.constant 0 : index
    %c0_170 = arith.constant 0 : index
    %662 = vector.load %arg15[%661, %c0_169, %c0_170] : memref<8x8x128xf32, #tpu.memory_space<vmem>>, vector<1x8x128xf32>
    %663 = vector.shape_cast %662 : vector<1x8x128xf32> to vector<8x128xf32>
    %664 = vector.shape_cast %660 : vector<8x128xf32> to vector<1x8x128xf32>
    tpu.vector_store %arg15[%661, %c0_169, %c0_170], %664 {strides = array<i32>} : memref<8x8x128xf32, #tpu.memory_space<vmem>>, vector<1x8x128xf32>,
    %c8_i32 = arith.constant 8 : i32
    %c0_171 = arith.constant 0 : index
    %c0_172 = arith.constant 0 : index
    %c0_173 = arith.constant 0 : index
    %665 = vector.load %arg14[%c0_171, %c0_172, %c0_173] : memref<8x8x128xf32, #tpu.memory_space<vmem>>, vector<8x8x128xf32>
    %c0_174 = arith.constant 0 : index
    %c0_175 = arith.constant 0 : index
    %c0_176 = arith.constant 0 : index
    %666 = vector.load %arg15[%c0_174, %c0_175, %c0_176] : memref<8x8x128xf32, #tpu.memory_space<vmem>>, vector<8x8x128xf32>
    %667 = tpu.concatenate %665, %666 in 2 : vector<8x8x128xf32>, vector<8x8x128xf32> -> vector<8x8x256xf32>
    %668 = vector.shape_cast %667 : vector<8x8x256xf32> to vector<64x256xf32>
    %c0_177 = arith.constant 0 : index
    %c0_178 = arith.constant 0 : index
    %669 = vector.load %arg7[%c0_177, %c0_178] : memref<256x1024xf32, #tpu.memory_space<vmem>>, vector<256x1024xf32>
    %cst_179 = arith.constant dense<0.000000e+00> : vector<64x1024xf32>
    %670 = tpu.matmul %668, %669, %cst_179 {dimension_numbers = #tpu.dot_dimension_numbers<[1], [0], [0], [1], [0, 0, 1, 1], [], []>} : vector<64x256xf32>, vector<256x1024xf32>, vector<64x1024xf32> -> vector<64x1024xf32>
    %c0_180 = arith.constant 0 : index
    %c0_181 = arith.constant 0 : index
    %671 = vector.load %arg10[%c0_180, %c0_181] : memref<1x1024xf32, #tpu.memory_space<vmem>>, vector<1x1024xf32>
    %672 = vector.broadcast %671 : vector<1x1024xf32> to vector<64x1024xf32>
    %673 = arith.addf %670, %672 : vector<64x1024xf32>
    %674 = vector.extract_strided_slice %673 {offsets = [0, 0], sizes = [64, 512], strides = [1, 1]} : vector<64x1024xf32> to vector<64x512xf32>
    %675 = vector.shape_cast %674 : vector<64x512xf32> to vector<8x8x512xf32>
    %c0_182 = arith.constant 0 : index
    %c0_183 = arith.constant 0 : index
    %c0_184 = arith.constant 0 : index
    %676 = vector.load %arg12[%c0_182, %c0_183, %c0_184] : memref<8x8x512xf32, #tpu.memory_space<vmem>>, vector<8x8x512xf32>
    tpu.vector_store %arg12[%c0_182, %c0_183, %c0_184], %675 {strides = array<i32>} : memref<8x8x512xf32, #tpu.memory_space<vmem>>, vector<8x8x512xf32>,
    %677 = vector.extract_strided_slice %673 {offsets = [0, 512], sizes = [64, 512], strides = [1, 1]} : vector<64x1024xf32> to vector<64x512xf32>
    %678 = vector.shape_cast %677 : vector<64x512xf32> to vector<8x8x512xf32>
    %c0_185 = arith.constant 0 : index
    %c0_186 = arith.constant 0 : index
    %c0_187 = arith.constant 0 : index
    %679 = vector.load %arg13[%c0_185, %c0_186, %c0_187] : memref<8x8x512xf32, #tpu.memory_space<vmem>>, vector<8x8x512xf32>
    tpu.vector_store %arg13[%c0_185, %c0_186, %c0_187], %678 {strides = array<i32>} : memref<8x8x512xf32, #tpu.memory_space<vmem>>, vector<8x8x512xf32>,
    %c0_188 = arith.constant 0 : index
    %c0_189 = arith.constant 0 : index
    %680 = vector.load %arg8[%c0_188, %c0_189] : memref<128x512xf32, #tpu.memory_space<vmem>>, vector<128x512xf32>
    %c0_190 = arith.constant 0 : index
    %c0_191 = arith.constant 0 : index
    %681 = vector.load %arg9[%c0_190, %c0_191] : memref<128x512xf32, #tpu.memory_space<vmem>>, vector<128x512xf32>
    %cst_192 = arith.constant 0.000000e+00 : f32
    %682 = vector.broadcast %cst_192 : f32 to vector<8x128xf32>
    %c0_i32_193 = arith.constant 0 : i32
    %c7_i32_194 = arith.constant 7 : i32
    %683 = arith.subi %c7_i32_194, %c0_i32_193 : i32
    %684 = arith.index_cast %c0_i32_193 : i32 to index
    %c0_195 = arith.constant 0 : index
    %c0_196 = arith.constant 0 : index
    %685 = vector.load %arg12[%684, %c0_195, %c0_196] : memref<8x8x512xf32, #tpu.memory_space<vmem>>, vector<1x8x512xf32>
    %686 = vector.shape_cast %685 : vector<1x8x512xf32> to vector<8x512xf32>
    %cst_197 = arith.constant dense<0.000000e+00> : vector<8x512xf32>
    %687 = tpu.matmul %682, %680, %cst_197 {dimension_numbers = #tpu.dot_dimension_numbers<[1], [0], [0], [1], [0, 0, 1, 1], [], []>} : vector<8x128xf32>, vector<128x512xf32>, vector<8x512xf32> -> vector<8x512xf32>
    %688 = arith.addf %686, %687 : vector<8x512xf32>
    %689 = vector.extract_strided_slice %688 {offsets = [0, 0], sizes = [8, 128], strides = [1, 1]} : vector<8x512xf32> to vector<8x128xf32>
    %690 = arith.negf %689 : vector<8x128xf32>
    %691 = math.exp %690 : vector<8x128xf32>
    %cst_198 = arith.constant 1.000000e+00 : f32
    %692 = vector.broadcast %cst_198 : f32 to vector<8x128xf32>
    %693 = arith.addf %692, %691 : vector<8x128xf32>
    %694 = arith.divf %692, %693 : vector<8x128xf32>
    %695 = vector.extract_strided_slice %688 {offsets = [0, 128], sizes = [8, 128], strides = [1, 1]} : vector<8x512xf32> to vector<8x128xf32>
    %696 = arith.negf %695 : vector<8x128xf32>
    %697 = math.exp %696 : vector<8x128xf32>
    %cst_199 = arith.constant 1.000000e+00 : f32
    %698 = vector.broadcast %cst_199 : f32 to vector<8x128xf32>
    %699 = arith.addf %698, %697 : vector<8x128xf32>
    %700 = arith.divf %698, %699 : vector<8x128xf32>
    %701 = vector.extract_strided_slice %688 {offsets = [0, 256], sizes = [8, 128], strides = [1, 1]} : vector<8x512xf32> to vector<8x128xf32>
    %702 = math.tanh %701 : vector<8x128xf32>
    %703 = vector.extract_strided_slice %688 {offsets = [0, 384], sizes = [8, 128], strides = [1, 1]} : vector<8x512xf32> to vector<8x128xf32>
    %704 = arith.negf %703 : vector<8x128xf32>
    %705 = math.exp %704 : vector<8x128xf32>
    %cst_200 = arith.constant 1.000000e+00 : f32
    %706 = vector.broadcast %cst_200 : f32 to vector<8x128xf32>
    %707 = arith.addf %706, %705 : vector<8x128xf32>
    %708 = arith.divf %706, %707 : vector<8x128xf32>
    %709 = arith.mulf %700, %682 : vector<8x128xf32>
    %710 = arith.mulf %694, %702 : vector<8x128xf32>
    %711 = arith.addf %709, %710 : vector<8x128xf32>
    %712 = math.tanh %711 : vector<8x128xf32>
    %713 = arith.mulf %708, %712 : vector<8x128xf32>
    %714 = vector.broadcast %c0_i32_193 : i32 to vector<8x128xi32>
    %715 = arith.cmpi slt, %714, %0 : vector<8x128xi32>
    %716 = arith.select %715, %713, %682 : vector<8x128xi1>, vector<8x128xf32>
    %717 = arith.select %715, %711, %682 : vector<8x128xi1>, vector<8x128xf32>
    %cst_201 = arith.constant 0.000000e+00 : f32
    %718 = vector.broadcast %cst_201 : f32 to vector<8x128xf32>
    %719 = arith.select %715, %713, %718 : vector<8x128xi1>, vector<8x128xf32>
    %720 = arith.index_cast %c0_i32_193 : i32 to index
    %c0_202 = arith.constant 0 : index
    %c0_203 = arith.constant 0 : index
    %721 = vector.load %arg14[%720, %c0_202, %c0_203] : memref<8x8x128xf32, #tpu.memory_space<vmem>>, vector<1x8x128xf32>
    %722 = vector.shape_cast %721 : vector<1x8x128xf32> to vector<8x128xf32>
    %723 = vector.shape_cast %719 : vector<8x128xf32> to vector<1x8x128xf32>
    tpu.vector_store %arg14[%720, %c0_202, %c0_203], %723 {strides = array<i32>} : memref<8x8x128xf32, #tpu.memory_space<vmem>>, vector<1x8x128xf32>,
    %724 = arith.index_cast %683 : i32 to index
    %c0_204 = arith.constant 0 : index
    %c0_205 = arith.constant 0 : index
    %725 = vector.load %arg13[%724, %c0_204, %c0_205] : memref<8x8x512xf32, #tpu.memory_space<vmem>>, vector<1x8x512xf32>
    %726 = vector.shape_cast %725 : vector<1x8x512xf32> to vector<8x512xf32>
    %cst_206 = arith.constant dense<0.000000e+00> : vector<8x512xf32>
    %727 = tpu.matmul %682, %681, %cst_206 {dimension_numbers = #tpu.dot_dimension_numbers<[1], [0], [0], [1], [0, 0, 1, 1], [], []>} : vector<8x128xf32>, vector<128x512xf32>, vector<8x512xf32> -> vector<8x512xf32>
    %728 = arith.addf %726, %727 : vector<8x512xf32>
    %729 = vector.extract_strided_slice %728 {offsets = [0, 0], sizes = [8, 128], strides = [1, 1]} : vector<8x512xf32> to vector<8x128xf32>
    %730 = arith.negf %729 : vector<8x128xf32>
    %731 = math.exp %730 : vector<8x128xf32>
    %cst_207 = arith.constant 1.000000e+00 : f32
    %732 = vector.broadcast %cst_207 : f32 to vector<8x128xf32>
    %733 = arith.addf %732, %731 : vector<8x128xf32>
    %734 = arith.divf %732, %733 : vector<8x128xf32>
    %735 = vector.extract_strided_slice %728 {offsets = [0, 128], sizes = [8, 128], strides = [1, 1]} : vector<8x512xf32> to vector<8x128xf32>
    %736 = arith.negf %735 : vector<8x128xf32>
    %737 = math.exp %736 : vector<8x128xf32>
    %cst_208 = arith.constant 1.000000e+00 : f32
    %738 = vector.broadcast %cst_208 : f32 to vector<8x128xf32>
    %739 = arith.addf %738, %737 : vector<8x128xf32>
    %740 = arith.divf %738, %739 : vector<8x128xf32>
    %741 = vector.extract_strided_slice %728 {offsets = [0, 256], sizes = [8, 128], strides = [1, 1]} : vector<8x512xf32> to vector<8x128xf32>
    %742 = math.tanh %741 : vector<8x128xf32>
    %743 = vector.extract_strided_slice %728 {offsets = [0, 384], sizes = [8, 128], strides = [1, 1]} : vector<8x512xf32> to vector<8x128xf32>
    %744 = arith.negf %743 : vector<8x128xf32>
    %745 = math.exp %744 : vector<8x128xf32>
    %cst_209 = arith.constant 1.000000e+00 : f32
    %746 = vector.broadcast %cst_209 : f32 to vector<8x128xf32>
    %747 = arith.addf %746, %745 : vector<8x128xf32>
    %748 = arith.divf %746, %747 : vector<8x128xf32>
    %749 = arith.mulf %740, %682 : vector<8x128xf32>
    %750 = arith.mulf %734, %742 : vector<8x128xf32>
    %751 = arith.addf %749, %750 : vector<8x128xf32>
    %752 = math.tanh %751 : vector<8x128xf32>
    %753 = arith.mulf %748, %752 : vector<8x128xf32>
    %754 = vector.broadcast %683 : i32 to vector<8x128xi32>
    %755 = arith.cmpi slt, %754, %0 : vector<8x128xi32>
    %756 = arith.select %755, %753, %682 : vector<8x128xi1>, vector<8x128xf32>
    %757 = arith.select %755, %751, %682 : vector<8x128xi1>, vector<8x128xf32>
    %cst_210 = arith.constant 0.000000e+00 : f32
    %758 = vector.broadcast %cst_210 : f32 to vector<8x128xf32>
    %759 = arith.select %755, %753, %758 : vector<8x128xi1>, vector<8x128xf32>
    %760 = arith.index_cast %683 : i32 to index
    %c0_211 = arith.constant 0 : index
    %c0_212 = arith.constant 0 : index
    %761 = vector.load %arg15[%760, %c0_211, %c0_212] : memref<8x8x128xf32, #tpu.memory_space<vmem>>, vector<1x8x128xf32>
    %762 = vector.shape_cast %761 : vector<1x8x128xf32> to vector<8x128xf32>
    %763 = vector.shape_cast %759 : vector<8x128xf32> to vector<1x8x128xf32>
    tpu.vector_store %arg15[%760, %c0_211, %c0_212], %763 {strides = array<i32>} : memref<8x8x128xf32, #tpu.memory_space<vmem>>, vector<1x8x128xf32>,
    %c1_i32_213 = arith.constant 1 : i32
    %c7_i32_214 = arith.constant 7 : i32
    %764 = arith.subi %c7_i32_214, %c1_i32_213 : i32
    %765 = arith.index_cast %c1_i32_213 : i32 to index
    %c0_215 = arith.constant 0 : index
    %c0_216 = arith.constant 0 : index
    %766 = vector.load %arg12[%765, %c0_215, %c0_216] : memref<8x8x512xf32, #tpu.memory_space<vmem>>, vector<1x8x512xf32>
    %767 = vector.shape_cast %766 : vector<1x8x512xf32> to vector<8x512xf32>
    %cst_217 = arith.constant dense<0.000000e+00> : vector<8x512xf32>
    %768 = tpu.matmul %716, %680, %cst_217 {dimension_numbers = #tpu.dot_dimension_numbers<[1], [0], [0], [1], [0, 0, 1, 1], [], []>} : vector<8x128xf32>, vector<128x512xf32>, vector<8x512xf32> -> vector<8x512xf32>
    %769 = arith.addf %767, %768 : vector<8x512xf32>
    %770 = vector.extract_strided_slice %769 {offsets = [0, 0], sizes = [8, 128], strides = [1, 1]} : vector<8x512xf32> to vector<8x128xf32>
    %771 = arith.negf %770 : vector<8x128xf32>
    %772 = math.exp %771 : vector<8x128xf32>
    %cst_218 = arith.constant 1.000000e+00 : f32
    %773 = vector.broadcast %cst_218 : f32 to vector<8x128xf32>
    %774 = arith.addf %773, %772 : vector<8x128xf32>
    %775 = arith.divf %773, %774 : vector<8x128xf32>
    %776 = vector.extract_strided_slice %769 {offsets = [0, 128], sizes = [8, 128], strides = [1, 1]} : vector<8x512xf32> to vector<8x128xf32>
    %777 = arith.negf %776 : vector<8x128xf32>
    %778 = math.exp %777 : vector<8x128xf32>
    %cst_219 = arith.constant 1.000000e+00 : f32
    %779 = vector.broadcast %cst_219 : f32 to vector<8x128xf32>
    %780 = arith.addf %779, %778 : vector<8x128xf32>
    %781 = arith.divf %779, %780 : vector<8x128xf32>
    %782 = vector.extract_strided_slice %769 {offsets = [0, 256], sizes = [8, 128], strides = [1, 1]} : vector<8x512xf32> to vector<8x128xf32>
    %783 = math.tanh %782 : vector<8x128xf32>
    %784 = vector.extract_strided_slice %769 {offsets = [0, 384], sizes = [8, 128], strides = [1, 1]} : vector<8x512xf32> to vector<8x128xf32>
    %785 = arith.negf %784 : vector<8x128xf32>
    %786 = math.exp %785 : vector<8x128xf32>
    %cst_220 = arith.constant 1.000000e+00 : f32
    %787 = vector.broadcast %cst_220 : f32 to vector<8x128xf32>
    %788 = arith.addf %787, %786 : vector<8x128xf32>
    %789 = arith.divf %787, %788 : vector<8x128xf32>
    %790 = arith.mulf %781, %717 : vector<8x128xf32>
    %791 = arith.mulf %775, %783 : vector<8x128xf32>
    %792 = arith.addf %790, %791 : vector<8x128xf32>
    %793 = math.tanh %792 : vector<8x128xf32>
    %794 = arith.mulf %789, %793 : vector<8x128xf32>
    %795 = vector.broadcast %c1_i32_213 : i32 to vector<8x128xi32>
    %796 = arith.cmpi slt, %795, %0 : vector<8x128xi32>
    %797 = arith.select %796, %794, %716 : vector<8x128xi1>, vector<8x128xf32>
    %798 = arith.select %796, %792, %717 : vector<8x128xi1>, vector<8x128xf32>
    %cst_221 = arith.constant 0.000000e+00 : f32
    %799 = vector.broadcast %cst_221 : f32 to vector<8x128xf32>
    %800 = arith.select %796, %794, %799 : vector<8x128xi1>, vector<8x128xf32>
    %801 = arith.index_cast %c1_i32_213 : i32 to index
    %c0_222 = arith.constant 0 : index
    %c0_223 = arith.constant 0 : index
    %802 = vector.load %arg14[%801, %c0_222, %c0_223] : memref<8x8x128xf32, #tpu.memory_space<vmem>>, vector<1x8x128xf32>
    %803 = vector.shape_cast %802 : vector<1x8x128xf32> to vector<8x128xf32>
    %804 = vector.shape_cast %800 : vector<8x128xf32> to vector<1x8x128xf32>
    tpu.vector_store %arg14[%801, %c0_222, %c0_223], %804 {strides = array<i32>} : memref<8x8x128xf32, #tpu.memory_space<vmem>>, vector<1x8x128xf32>,
    %805 = arith.index_cast %764 : i32 to index
    %c0_224 = arith.constant 0 : index
    %c0_225 = arith.constant 0 : index
    %806 = vector.load %arg13[%805, %c0_224, %c0_225] : memref<8x8x512xf32, #tpu.memory_space<vmem>>, vector<1x8x512xf32>
    %807 = vector.shape_cast %806 : vector<1x8x512xf32> to vector<8x512xf32>
    %cst_226 = arith.constant dense<0.000000e+00> : vector<8x512xf32>
    %808 = tpu.matmul %756, %681, %cst_226 {dimension_numbers = #tpu.dot_dimension_numbers<[1], [0], [0], [1], [0, 0, 1, 1], [], []>} : vector<8x128xf32>, vector<128x512xf32>, vector<8x512xf32> -> vector<8x512xf32>
    %809 = arith.addf %807, %808 : vector<8x512xf32>
    %810 = vector.extract_strided_slice %809 {offsets = [0, 0], sizes = [8, 128], strides = [1, 1]} : vector<8x512xf32> to vector<8x128xf32>
    %811 = arith.negf %810 : vector<8x128xf32>
    %812 = math.exp %811 : vector<8x128xf32>
    %cst_227 = arith.constant 1.000000e+00 : f32
    %813 = vector.broadcast %cst_227 : f32 to vector<8x128xf32>
    %814 = arith.addf %813, %812 : vector<8x128xf32>
    %815 = arith.divf %813, %814 : vector<8x128xf32>
    %816 = vector.extract_strided_slice %809 {offsets = [0, 128], sizes = [8, 128], strides = [1, 1]} : vector<8x512xf32> to vector<8x128xf32>
    %817 = arith.negf %816 : vector<8x128xf32>
    %818 = math.exp %817 : vector<8x128xf32>
    %cst_228 = arith.constant 1.000000e+00 : f32
    %819 = vector.broadcast %cst_228 : f32 to vector<8x128xf32>
    %820 = arith.addf %819, %818 : vector<8x128xf32>
    %821 = arith.divf %819, %820 : vector<8x128xf32>
    %822 = vector.extract_strided_slice %809 {offsets = [0, 256], sizes = [8, 128], strides = [1, 1]} : vector<8x512xf32> to vector<8x128xf32>
    %823 = math.tanh %822 : vector<8x128xf32>
    %824 = vector.extract_strided_slice %809 {offsets = [0, 384], sizes = [8, 128], strides = [1, 1]} : vector<8x512xf32> to vector<8x128xf32>
    %825 = arith.negf %824 : vector<8x128xf32>
    %826 = math.exp %825 : vector<8x128xf32>
    %cst_229 = arith.constant 1.000000e+00 : f32
    %827 = vector.broadcast %cst_229 : f32 to vector<8x128xf32>
    %828 = arith.addf %827, %826 : vector<8x128xf32>
    %829 = arith.divf %827, %828 : vector<8x128xf32>
    %830 = arith.mulf %821, %757 : vector<8x128xf32>
    %831 = arith.mulf %815, %823 : vector<8x128xf32>
    %832 = arith.addf %830, %831 : vector<8x128xf32>
    %833 = math.tanh %832 : vector<8x128xf32>
    %834 = arith.mulf %829, %833 : vector<8x128xf32>
    %835 = vector.broadcast %764 : i32 to vector<8x128xi32>
    %836 = arith.cmpi slt, %835, %0 : vector<8x128xi32>
    %837 = arith.select %836, %834, %756 : vector<8x128xi1>, vector<8x128xf32>
    %838 = arith.select %836, %832, %757 : vector<8x128xi1>, vector<8x128xf32>
    %cst_230 = arith.constant 0.000000e+00 : f32
    %839 = vector.broadcast %cst_230 : f32 to vector<8x128xf32>
    %840 = arith.select %836, %834, %839 : vector<8x128xi1>, vector<8x128xf32>
    %841 = arith.index_cast %764 : i32 to index
    %c0_231 = arith.constant 0 : index
    %c0_232 = arith.constant 0 : index
    %842 = vector.load %arg15[%841, %c0_231, %c0_232] : memref<8x8x128xf32, #tpu.memory_space<vmem>>, vector<1x8x128xf32>
    %843 = vector.shape_cast %842 : vector<1x8x128xf32> to vector<8x128xf32>
    %844 = vector.shape_cast %840 : vector<8x128xf32> to vector<1x8x128xf32>
    tpu.vector_store %arg15[%841, %c0_231, %c0_232], %844 {strides = array<i32>} : memref<8x8x128xf32, #tpu.memory_space<vmem>>, vector<1x8x128xf32>,
    %c2_i32_233 = arith.constant 2 : i32
    %c7_i32_234 = arith.constant 7 : i32
    %845 = arith.subi %c7_i32_234, %c2_i32_233 : i32
    %846 = arith.index_cast %c2_i32_233 : i32 to index
    %c0_235 = arith.constant 0 : index
    %c0_236 = arith.constant 0 : index
    %847 = vector.load %arg12[%846, %c0_235, %c0_236] : memref<8x8x512xf32, #tpu.memory_space<vmem>>, vector<1x8x512xf32>
    %848 = vector.shape_cast %847 : vector<1x8x512xf32> to vector<8x512xf32>
    %cst_237 = arith.constant dense<0.000000e+00> : vector<8x512xf32>
    %849 = tpu.matmul %797, %680, %cst_237 {dimension_numbers = #tpu.dot_dimension_numbers<[1], [0], [0], [1], [0, 0, 1, 1], [], []>} : vector<8x128xf32>, vector<128x512xf32>, vector<8x512xf32> -> vector<8x512xf32>
    %850 = arith.addf %848, %849 : vector<8x512xf32>
    %851 = vector.extract_strided_slice %850 {offsets = [0, 0], sizes = [8, 128], strides = [1, 1]} : vector<8x512xf32> to vector<8x128xf32>
    %852 = arith.negf %851 : vector<8x128xf32>
    %853 = math.exp %852 : vector<8x128xf32>
    %cst_238 = arith.constant 1.000000e+00 : f32
    %854 = vector.broadcast %cst_238 : f32 to vector<8x128xf32>
    %855 = arith.addf %854, %853 : vector<8x128xf32>
    %856 = arith.divf %854, %855 : vector<8x128xf32>
    %857 = vector.extract_strided_slice %850 {offsets = [0, 128], sizes = [8, 128], strides = [1, 1]} : vector<8x512xf32> to vector<8x128xf32>
    %858 = arith.negf %857 : vector<8x128xf32>
    %859 = math.exp %858 : vector<8x128xf32>
    %cst_239 = arith.constant 1.000000e+00 : f32
    %860 = vector.broadcast %cst_239 : f32 to vector<8x128xf32>
    %861 = arith.addf %860, %859 : vector<8x128xf32>
    %862 = arith.divf %860, %861 : vector<8x128xf32>
    %863 = vector.extract_strided_slice %850 {offsets = [0, 256], sizes = [8, 128], strides = [1, 1]} : vector<8x512xf32> to vector<8x128xf32>
    %864 = math.tanh %863 : vector<8x128xf32>
    %865 = vector.extract_strided_slice %850 {offsets = [0, 384], sizes = [8, 128], strides = [1, 1]} : vector<8x512xf32> to vector<8x128xf32>
    %866 = arith.negf %865 : vector<8x128xf32>
    %867 = math.exp %866 : vector<8x128xf32>
    %cst_240 = arith.constant 1.000000e+00 : f32
    %868 = vector.broadcast %cst_240 : f32 to vector<8x128xf32>
    %869 = arith.addf %868, %867 : vector<8x128xf32>
    %870 = arith.divf %868, %869 : vector<8x128xf32>
    %871 = arith.mulf %862, %798 : vector<8x128xf32>
    %872 = arith.mulf %856, %864 : vector<8x128xf32>
    %873 = arith.addf %871, %872 : vector<8x128xf32>
    %874 = math.tanh %873 : vector<8x128xf32>
    %875 = arith.mulf %870, %874 : vector<8x128xf32>
    %876 = vector.broadcast %c2_i32_233 : i32 to vector<8x128xi32>
    %877 = arith.cmpi slt, %876, %0 : vector<8x128xi32>
    %878 = arith.select %877, %875, %797 : vector<8x128xi1>, vector<8x128xf32>
    %879 = arith.select %877, %873, %798 : vector<8x128xi1>, vector<8x128xf32>
    %cst_241 = arith.constant 0.000000e+00 : f32
    %880 = vector.broadcast %cst_241 : f32 to vector<8x128xf32>
    %881 = arith.select %877, %875, %880 : vector<8x128xi1>, vector<8x128xf32>
    %882 = arith.index_cast %c2_i32_233 : i32 to index
    %c0_242 = arith.constant 0 : index
    %c0_243 = arith.constant 0 : index
    %883 = vector.load %arg14[%882, %c0_242, %c0_243] : memref<8x8x128xf32, #tpu.memory_space<vmem>>, vector<1x8x128xf32>
    %884 = vector.shape_cast %883 : vector<1x8x128xf32> to vector<8x128xf32>
    %885 = vector.shape_cast %881 : vector<8x128xf32> to vector<1x8x128xf32>
    tpu.vector_store %arg14[%882, %c0_242, %c0_243], %885 {strides = array<i32>} : memref<8x8x128xf32, #tpu.memory_space<vmem>>, vector<1x8x128xf32>,
    %886 = arith.index_cast %845 : i32 to index
    %c0_244 = arith.constant 0 : index
    %c0_245 = arith.constant 0 : index
    %887 = vector.load %arg13[%886, %c0_244, %c0_245] : memref<8x8x512xf32, #tpu.memory_space<vmem>>, vector<1x8x512xf32>
    %888 = vector.shape_cast %887 : vector<1x8x512xf32> to vector<8x512xf32>
    %cst_246 = arith.constant dense<0.000000e+00> : vector<8x512xf32>
    %889 = tpu.matmul %837, %681, %cst_246 {dimension_numbers = #tpu.dot_dimension_numbers<[1], [0], [0], [1], [0, 0, 1, 1], [], []>} : vector<8x128xf32>, vector<128x512xf32>, vector<8x512xf32> -> vector<8x512xf32>
    %890 = arith.addf %888, %889 : vector<8x512xf32>
    %891 = vector.extract_strided_slice %890 {offsets = [0, 0], sizes = [8, 128], strides = [1, 1]} : vector<8x512xf32> to vector<8x128xf32>
    %892 = arith.negf %891 : vector<8x128xf32>
    %893 = math.exp %892 : vector<8x128xf32>
    %cst_247 = arith.constant 1.000000e+00 : f32
    %894 = vector.broadcast %cst_247 : f32 to vector<8x128xf32>
    %895 = arith.addf %894, %893 : vector<8x128xf32>
    %896 = arith.divf %894, %895 : vector<8x128xf32>
    %897 = vector.extract_strided_slice %890 {offsets = [0, 128], sizes = [8, 128], strides = [1, 1]} : vector<8x512xf32> to vector<8x128xf32>
    %898 = arith.negf %897 : vector<8x128xf32>
    %899 = math.exp %898 : vector<8x128xf32>
    %cst_248 = arith.constant 1.000000e+00 : f32
    %900 = vector.broadcast %cst_248 : f32 to vector<8x128xf32>
    %901 = arith.addf %900, %899 : vector<8x128xf32>
    %902 = arith.divf %900, %901 : vector<8x128xf32>
    %903 = vector.extract_strided_slice %890 {offsets = [0, 256], sizes = [8, 128], strides = [1, 1]} : vector<8x512xf32> to vector<8x128xf32>
    %904 = math.tanh %903 : vector<8x128xf32>
    %905 = vector.extract_strided_slice %890 {offsets = [0, 384], sizes = [8, 128], strides = [1, 1]} : vector<8x512xf32> to vector<8x128xf32>
    %906 = arith.negf %905 : vector<8x128xf32>
    %907 = math.exp %906 : vector<8x128xf32>
    %cst_249 = arith.constant 1.000000e+00 : f32
    %908 = vector.broadcast %cst_249 : f32 to vector<8x128xf32>
    %909 = arith.addf %908, %907 : vector<8x128xf32>
    %910 = arith.divf %908, %909 : vector<8x128xf32>
    %911 = arith.mulf %902, %838 : vector<8x128xf32>
    %912 = arith.mulf %896, %904 : vector<8x128xf32>
    %913 = arith.addf %911, %912 : vector<8x128xf32>
    %914 = math.tanh %913 : vector<8x128xf32>
    %915 = arith.mulf %910, %914 : vector<8x128xf32>
    %916 = vector.broadcast %845 : i32 to vector<8x128xi32>
    %917 = arith.cmpi slt, %916, %0 : vector<8x128xi32>
    %918 = arith.select %917, %915, %837 : vector<8x128xi1>, vector<8x128xf32>
    %919 = arith.select %917, %913, %838 : vector<8x128xi1>, vector<8x128xf32>
    %cst_250 = arith.constant 0.000000e+00 : f32
    %920 = vector.broadcast %cst_250 : f32 to vector<8x128xf32>
    %921 = arith.select %917, %915, %920 : vector<8x128xi1>, vector<8x128xf32>
    %922 = arith.index_cast %845 : i32 to index
    %c0_251 = arith.constant 0 : index
    %c0_252 = arith.constant 0 : index
    %923 = vector.load %arg15[%922, %c0_251, %c0_252] : memref<8x8x128xf32, #tpu.memory_space<vmem>>, vector<1x8x128xf32>
    %924 = vector.shape_cast %923 : vector<1x8x128xf32> to vector<8x128xf32>
    %925 = vector.shape_cast %921 : vector<8x128xf32> to vector<1x8x128xf32>
    tpu.vector_store %arg15[%922, %c0_251, %c0_252], %925 {strides = array<i32>} : memref<8x8x128xf32, #tpu.memory_space<vmem>>, vector<1x8x128xf32>,
    %c3_i32_253 = arith.constant 3 : i32
    %c7_i32_254 = arith.constant 7 : i32
    %926 = arith.subi %c7_i32_254, %c3_i32_253 : i32
    %927 = arith.index_cast %c3_i32_253 : i32 to index
    %c0_255 = arith.constant 0 : index
    %c0_256 = arith.constant 0 : index
    %928 = vector.load %arg12[%927, %c0_255, %c0_256] : memref<8x8x512xf32, #tpu.memory_space<vmem>>, vector<1x8x512xf32>
    %929 = vector.shape_cast %928 : vector<1x8x512xf32> to vector<8x512xf32>
    %cst_257 = arith.constant dense<0.000000e+00> : vector<8x512xf32>
    %930 = tpu.matmul %878, %680, %cst_257 {dimension_numbers = #tpu.dot_dimension_numbers<[1], [0], [0], [1], [0, 0, 1, 1], [], []>} : vector<8x128xf32>, vector<128x512xf32>, vector<8x512xf32> -> vector<8x512xf32>
    %931 = arith.addf %929, %930 : vector<8x512xf32>
    %932 = vector.extract_strided_slice %931 {offsets = [0, 0], sizes = [8, 128], strides = [1, 1]} : vector<8x512xf32> to vector<8x128xf32>
    %933 = arith.negf %932 : vector<8x128xf32>
    %934 = math.exp %933 : vector<8x128xf32>
    %cst_258 = arith.constant 1.000000e+00 : f32
    %935 = vector.broadcast %cst_258 : f32 to vector<8x128xf32>
    %936 = arith.addf %935, %934 : vector<8x128xf32>
    %937 = arith.divf %935, %936 : vector<8x128xf32>
    %938 = vector.extract_strided_slice %931 {offsets = [0, 128], sizes = [8, 128], strides = [1, 1]} : vector<8x512xf32> to vector<8x128xf32>
    %939 = arith.negf %938 : vector<8x128xf32>
    %940 = math.exp %939 : vector<8x128xf32>
    %cst_259 = arith.constant 1.000000e+00 : f32
    %941 = vector.broadcast %cst_259 : f32 to vector<8x128xf32>
    %942 = arith.addf %941, %940 : vector<8x128xf32>
    %943 = arith.divf %941, %942 : vector<8x128xf32>
    %944 = vector.extract_strided_slice %931 {offsets = [0, 256], sizes = [8, 128], strides = [1, 1]} : vector<8x512xf32> to vector<8x128xf32>
    %945 = math.tanh %944 : vector<8x128xf32>
    %946 = vector.extract_strided_slice %931 {offsets = [0, 384], sizes = [8, 128], strides = [1, 1]} : vector<8x512xf32> to vector<8x128xf32>
    %947 = arith.negf %946 : vector<8x128xf32>
    %948 = math.exp %947 : vector<8x128xf32>
    %cst_260 = arith.constant 1.000000e+00 : f32
    %949 = vector.broadcast %cst_260 : f32 to vector<8x128xf32>
    %950 = arith.addf %949, %948 : vector<8x128xf32>
    %951 = arith.divf %949, %950 : vector<8x128xf32>
    %952 = arith.mulf %943, %879 : vector<8x128xf32>
    %953 = arith.mulf %937, %945 : vector<8x128xf32>
    %954 = arith.addf %952, %953 : vector<8x128xf32>
    %955 = math.tanh %954 : vector<8x128xf32>
    %956 = arith.mulf %951, %955 : vector<8x128xf32>
    %957 = vector.broadcast %c3_i32_253 : i32 to vector<8x128xi32>
    %958 = arith.cmpi slt, %957, %0 : vector<8x128xi32>
    %959 = arith.select %958, %956, %878 : vector<8x128xi1>, vector<8x128xf32>
    %960 = arith.select %958, %954, %879 : vector<8x128xi1>, vector<8x128xf32>
    %cst_261 = arith.constant 0.000000e+00 : f32
    %961 = vector.broadcast %cst_261 : f32 to vector<8x128xf32>
    %962 = arith.select %958, %956, %961 : vector<8x128xi1>, vector<8x128xf32>
    %963 = arith.index_cast %c3_i32_253 : i32 to index
    %c0_262 = arith.constant 0 : index
    %c0_263 = arith.constant 0 : index
    %964 = vector.load %arg14[%963, %c0_262, %c0_263] : memref<8x8x128xf32, #tpu.memory_space<vmem>>, vector<1x8x128xf32>
    %965 = vector.shape_cast %964 : vector<1x8x128xf32> to vector<8x128xf32>
    %966 = vector.shape_cast %962 : vector<8x128xf32> to vector<1x8x128xf32>
    tpu.vector_store %arg14[%963, %c0_262, %c0_263], %966 {strides = array<i32>} : memref<8x8x128xf32, #tpu.memory_space<vmem>>, vector<1x8x128xf32>,
    %967 = arith.index_cast %926 : i32 to index
    %c0_264 = arith.constant 0 : index
    %c0_265 = arith.constant 0 : index
    %968 = vector.load %arg13[%967, %c0_264, %c0_265] : memref<8x8x512xf32, #tpu.memory_space<vmem>>, vector<1x8x512xf32>
    %969 = vector.shape_cast %968 : vector<1x8x512xf32> to vector<8x512xf32>
    %cst_266 = arith.constant dense<0.000000e+00> : vector<8x512xf32>
    %970 = tpu.matmul %918, %681, %cst_266 {dimension_numbers = #tpu.dot_dimension_numbers<[1], [0], [0], [1], [0, 0, 1, 1], [], []>} : vector<8x128xf32>, vector<128x512xf32>, vector<8x512xf32> -> vector<8x512xf32>
    %971 = arith.addf %969, %970 : vector<8x512xf32>
    %972 = vector.extract_strided_slice %971 {offsets = [0, 0], sizes = [8, 128], strides = [1, 1]} : vector<8x512xf32> to vector<8x128xf32>
    %973 = arith.negf %972 : vector<8x128xf32>
    %974 = math.exp %973 : vector<8x128xf32>
    %cst_267 = arith.constant 1.000000e+00 : f32
    %975 = vector.broadcast %cst_267 : f32 to vector<8x128xf32>
    %976 = arith.addf %975, %974 : vector<8x128xf32>
    %977 = arith.divf %975, %976 : vector<8x128xf32>
    %978 = vector.extract_strided_slice %971 {offsets = [0, 128], sizes = [8, 128], strides = [1, 1]} : vector<8x512xf32> to vector<8x128xf32>
    %979 = arith.negf %978 : vector<8x128xf32>
    %980 = math.exp %979 : vector<8x128xf32>
    %cst_268 = arith.constant 1.000000e+00 : f32
    %981 = vector.broadcast %cst_268 : f32 to vector<8x128xf32>
    %982 = arith.addf %981, %980 : vector<8x128xf32>
    %983 = arith.divf %981, %982 : vector<8x128xf32>
    %984 = vector.extract_strided_slice %971 {offsets = [0, 256], sizes = [8, 128], strides = [1, 1]} : vector<8x512xf32> to vector<8x128xf32>
    %985 = math.tanh %984 : vector<8x128xf32>
    %986 = vector.extract_strided_slice %971 {offsets = [0, 384], sizes = [8, 128], strides = [1, 1]} : vector<8x512xf32> to vector<8x128xf32>
    %987 = arith.negf %986 : vector<8x128xf32>
    %988 = math.exp %987 : vector<8x128xf32>
    %cst_269 = arith.constant 1.000000e+00 : f32
    %989 = vector.broadcast %cst_269 : f32 to vector<8x128xf32>
    %990 = arith.addf %989, %988 : vector<8x128xf32>
    %991 = arith.divf %989, %990 : vector<8x128xf32>
    %992 = arith.mulf %983, %919 : vector<8x128xf32>
    %993 = arith.mulf %977, %985 : vector<8x128xf32>
    %994 = arith.addf %992, %993 : vector<8x128xf32>
    %995 = math.tanh %994 : vector<8x128xf32>
    %996 = arith.mulf %991, %995 : vector<8x128xf32>
    %997 = vector.broadcast %926 : i32 to vector<8x128xi32>
    %998 = arith.cmpi slt, %997, %0 : vector<8x128xi32>
    %999 = arith.select %998, %996, %918 : vector<8x128xi1>, vector<8x128xf32>
    %1000 = arith.select %998, %994, %919 : vector<8x128xi1>, vector<8x128xf32>
    %cst_270 = arith.constant 0.000000e+00 : f32
    %1001 = vector.broadcast %cst_270 : f32 to vector<8x128xf32>
    %1002 = arith.select %998, %996, %1001 : vector<8x128xi1>, vector<8x128xf32>
    %1003 = arith.index_cast %926 : i32 to index
    %c0_271 = arith.constant 0 : index
    %c0_272 = arith.constant 0 : index
    %1004 = vector.load %arg15[%1003, %c0_271, %c0_272] : memref<8x8x128xf32, #tpu.memory_space<vmem>>, vector<1x8x128xf32>
    %1005 = vector.shape_cast %1004 : vector<1x8x128xf32> to vector<8x128xf32>
    %1006 = vector.shape_cast %1002 : vector<8x128xf32> to vector<1x8x128xf32>
    tpu.vector_store %arg15[%1003, %c0_271, %c0_272], %1006 {strides = array<i32>} : memref<8x8x128xf32, #tpu.memory_space<vmem>>, vector<1x8x128xf32>,
    %c4_i32_273 = arith.constant 4 : i32
    %c7_i32_274 = arith.constant 7 : i32
    %1007 = arith.subi %c7_i32_274, %c4_i32_273 : i32
    %1008 = arith.index_cast %c4_i32_273 : i32 to index
    %c0_275 = arith.constant 0 : index
    %c0_276 = arith.constant 0 : index
    %1009 = vector.load %arg12[%1008, %c0_275, %c0_276] : memref<8x8x512xf32, #tpu.memory_space<vmem>>, vector<1x8x512xf32>
    %1010 = vector.shape_cast %1009 : vector<1x8x512xf32> to vector<8x512xf32>
    %cst_277 = arith.constant dense<0.000000e+00> : vector<8x512xf32>
    %1011 = tpu.matmul %959, %680, %cst_277 {dimension_numbers = #tpu.dot_dimension_numbers<[1], [0], [0], [1], [0, 0, 1, 1], [], []>} : vector<8x128xf32>, vector<128x512xf32>, vector<8x512xf32> -> vector<8x512xf32>
    %1012 = arith.addf %1010, %1011 : vector<8x512xf32>
    %1013 = vector.extract_strided_slice %1012 {offsets = [0, 0], sizes = [8, 128], strides = [1, 1]} : vector<8x512xf32> to vector<8x128xf32>
    %1014 = arith.negf %1013 : vector<8x128xf32>
    %1015 = math.exp %1014 : vector<8x128xf32>
    %cst_278 = arith.constant 1.000000e+00 : f32
    %1016 = vector.broadcast %cst_278 : f32 to vector<8x128xf32>
    %1017 = arith.addf %1016, %1015 : vector<8x128xf32>
    %1018 = arith.divf %1016, %1017 : vector<8x128xf32>
    %1019 = vector.extract_strided_slice %1012 {offsets = [0, 128], sizes = [8, 128], strides = [1, 1]} : vector<8x512xf32> to vector<8x128xf32>
    %1020 = arith.negf %1019 : vector<8x128xf32>
    %1021 = math.exp %1020 : vector<8x128xf32>
    %cst_279 = arith.constant 1.000000e+00 : f32
    %1022 = vector.broadcast %cst_279 : f32 to vector<8x128xf32>
    %1023 = arith.addf %1022, %1021 : vector<8x128xf32>
    %1024 = arith.divf %1022, %1023 : vector<8x128xf32>
    %1025 = vector.extract_strided_slice %1012 {offsets = [0, 256], sizes = [8, 128], strides = [1, 1]} : vector<8x512xf32> to vector<8x128xf32>
    %1026 = math.tanh %1025 : vector<8x128xf32>
    %1027 = vector.extract_strided_slice %1012 {offsets = [0, 384], sizes = [8, 128], strides = [1, 1]} : vector<8x512xf32> to vector<8x128xf32>
    %1028 = arith.negf %1027 : vector<8x128xf32>
    %1029 = math.exp %1028 : vector<8x128xf32>
    %cst_280 = arith.constant 1.000000e+00 : f32
    %1030 = vector.broadcast %cst_280 : f32 to vector<8x128xf32>
    %1031 = arith.addf %1030, %1029 : vector<8x128xf32>
    %1032 = arith.divf %1030, %1031 : vector<8x128xf32>
    %1033 = arith.mulf %1024, %960 : vector<8x128xf32>
    %1034 = arith.mulf %1018, %1026 : vector<8x128xf32>
    %1035 = arith.addf %1033, %1034 : vector<8x128xf32>
    %1036 = math.tanh %1035 : vector<8x128xf32>
    %1037 = arith.mulf %1032, %1036 : vector<8x128xf32>
    %1038 = vector.broadcast %c4_i32_273 : i32 to vector<8x128xi32>
    %1039 = arith.cmpi slt, %1038, %0 : vector<8x128xi32>
    %1040 = arith.select %1039, %1037, %959 : vector<8x128xi1>, vector<8x128xf32>
    %1041 = arith.select %1039, %1035, %960 : vector<8x128xi1>, vector<8x128xf32>
    %cst_281 = arith.constant 0.000000e+00 : f32
    %1042 = vector.broadcast %cst_281 : f32 to vector<8x128xf32>
    %1043 = arith.select %1039, %1037, %1042 : vector<8x128xi1>, vector<8x128xf32>
    %1044 = arith.index_cast %c4_i32_273 : i32 to index
    %c0_282 = arith.constant 0 : index
    %c0_283 = arith.constant 0 : index
    %1045 = vector.load %arg14[%1044, %c0_282, %c0_283] : memref<8x8x128xf32, #tpu.memory_space<vmem>>, vector<1x8x128xf32>
    %1046 = vector.shape_cast %1045 : vector<1x8x128xf32> to vector<8x128xf32>
    %1047 = vector.shape_cast %1043 : vector<8x128xf32> to vector<1x8x128xf32>
    tpu.vector_store %arg14[%1044, %c0_282, %c0_283], %1047 {strides = array<i32>} : memref<8x8x128xf32, #tpu.memory_space<vmem>>, vector<1x8x128xf32>,
    %1048 = arith.index_cast %1007 : i32 to index
    %c0_284 = arith.constant 0 : index
    %c0_285 = arith.constant 0 : index
    %1049 = vector.load %arg13[%1048, %c0_284, %c0_285] : memref<8x8x512xf32, #tpu.memory_space<vmem>>, vector<1x8x512xf32>
    %1050 = vector.shape_cast %1049 : vector<1x8x512xf32> to vector<8x512xf32>
    %cst_286 = arith.constant dense<0.000000e+00> : vector<8x512xf32>
    %1051 = tpu.matmul %999, %681, %cst_286 {dimension_numbers = #tpu.dot_dimension_numbers<[1], [0], [0], [1], [0, 0, 1, 1], [], []>} : vector<8x128xf32>, vector<128x512xf32>, vector<8x512xf32> -> vector<8x512xf32>
    %1052 = arith.addf %1050, %1051 : vector<8x512xf32>
    %1053 = vector.extract_strided_slice %1052 {offsets = [0, 0], sizes = [8, 128], strides = [1, 1]} : vector<8x512xf32> to vector<8x128xf32>
    %1054 = arith.negf %1053 : vector<8x128xf32>
    %1055 = math.exp %1054 : vector<8x128xf32>
    %cst_287 = arith.constant 1.000000e+00 : f32
    %1056 = vector.broadcast %cst_287 : f32 to vector<8x128xf32>
    %1057 = arith.addf %1056, %1055 : vector<8x128xf32>
    %1058 = arith.divf %1056, %1057 : vector<8x128xf32>
    %1059 = vector.extract_strided_slice %1052 {offsets = [0, 128], sizes = [8, 128], strides = [1, 1]} : vector<8x512xf32> to vector<8x128xf32>
    %1060 = arith.negf %1059 : vector<8x128xf32>
    %1061 = math.exp %1060 : vector<8x128xf32>
    %cst_288 = arith.constant 1.000000e+00 : f32
    %1062 = vector.broadcast %cst_288 : f32 to vector<8x128xf32>
    %1063 = arith.addf %1062, %1061 : vector<8x128xf32>
    %1064 = arith.divf %1062, %1063 : vector<8x128xf32>
    %1065 = vector.extract_strided_slice %1052 {offsets = [0, 256], sizes = [8, 128], strides = [1, 1]} : vector<8x512xf32> to vector<8x128xf32>
    %1066 = math.tanh %1065 : vector<8x128xf32>
    %1067 = vector.extract_strided_slice %1052 {offsets = [0, 384], sizes = [8, 128], strides = [1, 1]} : vector<8x512xf32> to vector<8x128xf32>
    %1068 = arith.negf %1067 : vector<8x128xf32>
    %1069 = math.exp %1068 : vector<8x128xf32>
    %cst_289 = arith.constant 1.000000e+00 : f32
    %1070 = vector.broadcast %cst_289 : f32 to vector<8x128xf32>
    %1071 = arith.addf %1070, %1069 : vector<8x128xf32>
    %1072 = arith.divf %1070, %1071 : vector<8x128xf32>
    %1073 = arith.mulf %1064, %1000 : vector<8x128xf32>
    %1074 = arith.mulf %1058, %1066 : vector<8x128xf32>
    %1075 = arith.addf %1073, %1074 : vector<8x128xf32>
    %1076 = math.tanh %1075 : vector<8x128xf32>
    %1077 = arith.mulf %1072, %1076 : vector<8x128xf32>
    %1078 = vector.broadcast %1007 : i32 to vector<8x128xi32>
    %1079 = arith.cmpi slt, %1078, %0 : vector<8x128xi32>
    %1080 = arith.select %1079, %1077, %999 : vector<8x128xi1>, vector<8x128xf32>
    %1081 = arith.select %1079, %1075, %1000 : vector<8x128xi1>, vector<8x128xf32>
    %cst_290 = arith.constant 0.000000e+00 : f32
    %1082 = vector.broadcast %cst_290 : f32 to vector<8x128xf32>
    %1083 = arith.select %1079, %1077, %1082 : vector<8x128xi1>, vector<8x128xf32>
    %1084 = arith.index_cast %1007 : i32 to index
    %c0_291 = arith.constant 0 : index
    %c0_292 = arith.constant 0 : index
    %1085 = vector.load %arg15[%1084, %c0_291, %c0_292] : memref<8x8x128xf32, #tpu.memory_space<vmem>>, vector<1x8x128xf32>
    %1086 = vector.shape_cast %1085 : vector<1x8x128xf32> to vector<8x128xf32>
    %1087 = vector.shape_cast %1083 : vector<8x128xf32> to vector<1x8x128xf32>
    tpu.vector_store %arg15[%1084, %c0_291, %c0_292], %1087 {strides = array<i32>} : memref<8x8x128xf32, #tpu.memory_space<vmem>>, vector<1x8x128xf32>,
    %c5_i32_293 = arith.constant 5 : i32
    %c7_i32_294 = arith.constant 7 : i32
    %1088 = arith.subi %c7_i32_294, %c5_i32_293 : i32
    %1089 = arith.index_cast %c5_i32_293 : i32 to index
    %c0_295 = arith.constant 0 : index
    %c0_296 = arith.constant 0 : index
    %1090 = vector.load %arg12[%1089, %c0_295, %c0_296] : memref<8x8x512xf32, #tpu.memory_space<vmem>>, vector<1x8x512xf32>
    %1091 = vector.shape_cast %1090 : vector<1x8x512xf32> to vector<8x512xf32>
    %cst_297 = arith.constant dense<0.000000e+00> : vector<8x512xf32>
    %1092 = tpu.matmul %1040, %680, %cst_297 {dimension_numbers = #tpu.dot_dimension_numbers<[1], [0], [0], [1], [0, 0, 1, 1], [], []>} : vector<8x128xf32>, vector<128x512xf32>, vector<8x512xf32> -> vector<8x512xf32>
    %1093 = arith.addf %1091, %1092 : vector<8x512xf32>
    %1094 = vector.extract_strided_slice %1093 {offsets = [0, 0], sizes = [8, 128], strides = [1, 1]} : vector<8x512xf32> to vector<8x128xf32>
    %1095 = arith.negf %1094 : vector<8x128xf32>
    %1096 = math.exp %1095 : vector<8x128xf32>
    %cst_298 = arith.constant 1.000000e+00 : f32
    %1097 = vector.broadcast %cst_298 : f32 to vector<8x128xf32>
    %1098 = arith.addf %1097, %1096 : vector<8x128xf32>
    %1099 = arith.divf %1097, %1098 : vector<8x128xf32>
    %1100 = vector.extract_strided_slice %1093 {offsets = [0, 128], sizes = [8, 128], strides = [1, 1]} : vector<8x512xf32> to vector<8x128xf32>
    %1101 = arith.negf %1100 : vector<8x128xf32>
    %1102 = math.exp %1101 : vector<8x128xf32>
    %cst_299 = arith.constant 1.000000e+00 : f32
    %1103 = vector.broadcast %cst_299 : f32 to vector<8x128xf32>
    %1104 = arith.addf %1103, %1102 : vector<8x128xf32>
    %1105 = arith.divf %1103, %1104 : vector<8x128xf32>
    %1106 = vector.extract_strided_slice %1093 {offsets = [0, 256], sizes = [8, 128], strides = [1, 1]} : vector<8x512xf32> to vector<8x128xf32>
    %1107 = math.tanh %1106 : vector<8x128xf32>
    %1108 = vector.extract_strided_slice %1093 {offsets = [0, 384], sizes = [8, 128], strides = [1, 1]} : vector<8x512xf32> to vector<8x128xf32>
    %1109 = arith.negf %1108 : vector<8x128xf32>
    %1110 = math.exp %1109 : vector<8x128xf32>
    %cst_300 = arith.constant 1.000000e+00 : f32
    %1111 = vector.broadcast %cst_300 : f32 to vector<8x128xf32>
    %1112 = arith.addf %1111, %1110 : vector<8x128xf32>
    %1113 = arith.divf %1111, %1112 : vector<8x128xf32>
    %1114 = arith.mulf %1105, %1041 : vector<8x128xf32>
    %1115 = arith.mulf %1099, %1107 : vector<8x128xf32>
    %1116 = arith.addf %1114, %1115 : vector<8x128xf32>
    %1117 = math.tanh %1116 : vector<8x128xf32>
    %1118 = arith.mulf %1113, %1117 : vector<8x128xf32>
    %1119 = vector.broadcast %c5_i32_293 : i32 to vector<8x128xi32>
    %1120 = arith.cmpi slt, %1119, %0 : vector<8x128xi32>
    %1121 = arith.select %1120, %1118, %1040 : vector<8x128xi1>, vector<8x128xf32>
    %1122 = arith.select %1120, %1116, %1041 : vector<8x128xi1>, vector<8x128xf32>
    %cst_301 = arith.constant 0.000000e+00 : f32
    %1123 = vector.broadcast %cst_301 : f32 to vector<8x128xf32>
    %1124 = arith.select %1120, %1118, %1123 : vector<8x128xi1>, vector<8x128xf32>
    %1125 = arith.index_cast %c5_i32_293 : i32 to index
    %c0_302 = arith.constant 0 : index
    %c0_303 = arith.constant 0 : index
    %1126 = vector.load %arg14[%1125, %c0_302, %c0_303] : memref<8x8x128xf32, #tpu.memory_space<vmem>>, vector<1x8x128xf32>
    %1127 = vector.shape_cast %1126 : vector<1x8x128xf32> to vector<8x128xf32>
    %1128 = vector.shape_cast %1124 : vector<8x128xf32> to vector<1x8x128xf32>
    tpu.vector_store %arg14[%1125, %c0_302, %c0_303], %1128 {strides = array<i32>} : memref<8x8x128xf32, #tpu.memory_space<vmem>>, vector<1x8x128xf32>,
    %1129 = arith.index_cast %1088 : i32 to index
    %c0_304 = arith.constant 0 : index
    %c0_305 = arith.constant 0 : index
    %1130 = vector.load %arg13[%1129, %c0_304, %c0_305] : memref<8x8x512xf32, #tpu.memory_space<vmem>>, vector<1x8x512xf32>
    %1131 = vector.shape_cast %1130 : vector<1x8x512xf32> to vector<8x512xf32>
    %cst_306 = arith.constant dense<0.000000e+00> : vector<8x512xf32>
    %1132 = tpu.matmul %1080, %681, %cst_306 {dimension_numbers = #tpu.dot_dimension_numbers<[1], [0], [0], [1], [0, 0, 1, 1], [], []>} : vector<8x128xf32>, vector<128x512xf32>, vector<8x512xf32> -> vector<8x512xf32>
    %1133 = arith.addf %1131, %1132 : vector<8x512xf32>
    %1134 = vector.extract_strided_slice %1133 {offsets = [0, 0], sizes = [8, 128], strides = [1, 1]} : vector<8x512xf32> to vector<8x128xf32>
    %1135 = arith.negf %1134 : vector<8x128xf32>
    %1136 = math.exp %1135 : vector<8x128xf32>
    %cst_307 = arith.constant 1.000000e+00 : f32
    %1137 = vector.broadcast %cst_307 : f32 to vector<8x128xf32>
    %1138 = arith.addf %1137, %1136 : vector<8x128xf32>
    %1139 = arith.divf %1137, %1138 : vector<8x128xf32>
    %1140 = vector.extract_strided_slice %1133 {offsets = [0, 128], sizes = [8, 128], strides = [1, 1]} : vector<8x512xf32> to vector<8x128xf32>
    %1141 = arith.negf %1140 : vector<8x128xf32>
    %1142 = math.exp %1141 : vector<8x128xf32>
    %cst_308 = arith.constant 1.000000e+00 : f32
    %1143 = vector.broadcast %cst_308 : f32 to vector<8x128xf32>
    %1144 = arith.addf %1143, %1142 : vector<8x128xf32>
    %1145 = arith.divf %1143, %1144 : vector<8x128xf32>
    %1146 = vector.extract_strided_slice %1133 {offsets = [0, 256], sizes = [8, 128], strides = [1, 1]} : vector<8x512xf32> to vector<8x128xf32>
    %1147 = math.tanh %1146 : vector<8x128xf32>
    %1148 = vector.extract_strided_slice %1133 {offsets = [0, 384], sizes = [8, 128], strides = [1, 1]} : vector<8x512xf32> to vector<8x128xf32>
    %1149 = arith.negf %1148 : vector<8x128xf32>
    %1150 = math.exp %1149 : vector<8x128xf32>
    %cst_309 = arith.constant 1.000000e+00 : f32
    %1151 = vector.broadcast %cst_309 : f32 to vector<8x128xf32>
    %1152 = arith.addf %1151, %1150 : vector<8x128xf32>
    %1153 = arith.divf %1151, %1152 : vector<8x128xf32>
    %1154 = arith.mulf %1145, %1081 : vector<8x128xf32>
    %1155 = arith.mulf %1139, %1147 : vector<8x128xf32>
    %1156 = arith.addf %1154, %1155 : vector<8x128xf32>
    %1157 = math.tanh %1156 : vector<8x128xf32>
    %1158 = arith.mulf %1153, %1157 : vector<8x128xf32>
    %1159 = vector.broadcast %1088 : i32 to vector<8x128xi32>
    %1160 = arith.cmpi slt, %1159, %0 : vector<8x128xi32>
    %1161 = arith.select %1160, %1158, %1080 : vector<8x128xi1>, vector<8x128xf32>
    %1162 = arith.select %1160, %1156, %1081 : vector<8x128xi1>, vector<8x128xf32>
    %cst_310 = arith.constant 0.000000e+00 : f32
    %1163 = vector.broadcast %cst_310 : f32 to vector<8x128xf32>
    %1164 = arith.select %1160, %1158, %1163 : vector<8x128xi1>, vector<8x128xf32>
    %1165 = arith.index_cast %1088 : i32 to index
    %c0_311 = arith.constant 0 : index
    %c0_312 = arith.constant 0 : index
    %1166 = vector.load %arg15[%1165, %c0_311, %c0_312] : memref<8x8x128xf32, #tpu.memory_space<vmem>>, vector<1x8x128xf32>
    %1167 = vector.shape_cast %1166 : vector<1x8x128xf32> to vector<8x128xf32>
    %1168 = vector.shape_cast %1164 : vector<8x128xf32> to vector<1x8x128xf32>
    tpu.vector_store %arg15[%1165, %c0_311, %c0_312], %1168 {strides = array<i32>} : memref<8x8x128xf32, #tpu.memory_space<vmem>>, vector<1x8x128xf32>,
    %c6_i32_313 = arith.constant 6 : i32
    %c7_i32_314 = arith.constant 7 : i32
    %1169 = arith.subi %c7_i32_314, %c6_i32_313 : i32
    %1170 = arith.index_cast %c6_i32_313 : i32 to index
    %c0_315 = arith.constant 0 : index
    %c0_316 = arith.constant 0 : index
    %1171 = vector.load %arg12[%1170, %c0_315, %c0_316] : memref<8x8x512xf32, #tpu.memory_space<vmem>>, vector<1x8x512xf32>
    %1172 = vector.shape_cast %1171 : vector<1x8x512xf32> to vector<8x512xf32>
    %cst_317 = arith.constant dense<0.000000e+00> : vector<8x512xf32>
    %1173 = tpu.matmul %1121, %680, %cst_317 {dimension_numbers = #tpu.dot_dimension_numbers<[1], [0], [0], [1], [0, 0, 1, 1], [], []>} : vector<8x128xf32>, vector<128x512xf32>, vector<8x512xf32> -> vector<8x512xf32>
    %1174 = arith.addf %1172, %1173 : vector<8x512xf32>
    %1175 = vector.extract_strided_slice %1174 {offsets = [0, 0], sizes = [8, 128], strides = [1, 1]} : vector<8x512xf32> to vector<8x128xf32>
    %1176 = arith.negf %1175 : vector<8x128xf32>
    %1177 = math.exp %1176 : vector<8x128xf32>
    %cst_318 = arith.constant 1.000000e+00 : f32
    %1178 = vector.broadcast %cst_318 : f32 to vector<8x128xf32>
    %1179 = arith.addf %1178, %1177 : vector<8x128xf32>
    %1180 = arith.divf %1178, %1179 : vector<8x128xf32>
    %1181 = vector.extract_strided_slice %1174 {offsets = [0, 128], sizes = [8, 128], strides = [1, 1]} : vector<8x512xf32> to vector<8x128xf32>
    %1182 = arith.negf %1181 : vector<8x128xf32>
    %1183 = math.exp %1182 : vector<8x128xf32>
    %cst_319 = arith.constant 1.000000e+00 : f32
    %1184 = vector.broadcast %cst_319 : f32 to vector<8x128xf32>
    %1185 = arith.addf %1184, %1183 : vector<8x128xf32>
    %1186 = arith.divf %1184, %1185 : vector<8x128xf32>
    %1187 = vector.extract_strided_slice %1174 {offsets = [0, 256], sizes = [8, 128], strides = [1, 1]} : vector<8x512xf32> to vector<8x128xf32>
    %1188 = math.tanh %1187 : vector<8x128xf32>
    %1189 = vector.extract_strided_slice %1174 {offsets = [0, 384], sizes = [8, 128], strides = [1, 1]} : vector<8x512xf32> to vector<8x128xf32>
    %1190 = arith.negf %1189 : vector<8x128xf32>
    %1191 = math.exp %1190 : vector<8x128xf32>
    %cst_320 = arith.constant 1.000000e+00 : f32
    %1192 = vector.broadcast %cst_320 : f32 to vector<8x128xf32>
    %1193 = arith.addf %1192, %1191 : vector<8x128xf32>
    %1194 = arith.divf %1192, %1193 : vector<8x128xf32>
    %1195 = arith.mulf %1186, %1122 : vector<8x128xf32>
    %1196 = arith.mulf %1180, %1188 : vector<8x128xf32>
    %1197 = arith.addf %1195, %1196 : vector<8x128xf32>
    %1198 = math.tanh %1197 : vector<8x128xf32>
    %1199 = arith.mulf %1194, %1198 : vector<8x128xf32>
    %1200 = vector.broadcast %c6_i32_313 : i32 to vector<8x128xi32>
    %1201 = arith.cmpi slt, %1200, %0 : vector<8x128xi32>
    %1202 = arith.select %1201, %1199, %1121 : vector<8x128xi1>, vector<8x128xf32>
    %1203 = arith.select %1201, %1197, %1122 : vector<8x128xi1>, vector<8x128xf32>
    %cst_321 = arith.constant 0.000000e+00 : f32
    %1204 = vector.broadcast %cst_321 : f32 to vector<8x128xf32>
    %1205 = arith.select %1201, %1199, %1204 : vector<8x128xi1>, vector<8x128xf32>
    %1206 = arith.index_cast %c6_i32_313 : i32 to index
    %c0_322 = arith.constant 0 : index
    %c0_323 = arith.constant 0 : index
    %1207 = vector.load %arg14[%1206, %c0_322, %c0_323] : memref<8x8x128xf32, #tpu.memory_space<vmem>>, vector<1x8x128xf32>
    %1208 = vector.shape_cast %1207 : vector<1x8x128xf32> to vector<8x128xf32>
    %1209 = vector.shape_cast %1205 : vector<8x128xf32> to vector<1x8x128xf32>
    tpu.vector_store %arg14[%1206, %c0_322, %c0_323], %1209 {strides = array<i32>} : memref<8x8x128xf32, #tpu.memory_space<vmem>>, vector<1x8x128xf32>,
    %1210 = arith.index_cast %1169 : i32 to index
    %c0_324 = arith.constant 0 : index
    %c0_325 = arith.constant 0 : index
    %1211 = vector.load %arg13[%1210, %c0_324, %c0_325] : memref<8x8x512xf32, #tpu.memory_space<vmem>>, vector<1x8x512xf32>
    %1212 = vector.shape_cast %1211 : vector<1x8x512xf32> to vector<8x512xf32>
    %cst_326 = arith.constant dense<0.000000e+00> : vector<8x512xf32>
    %1213 = tpu.matmul %1161, %681, %cst_326 {dimension_numbers = #tpu.dot_dimension_numbers<[1], [0], [0], [1], [0, 0, 1, 1], [], []>} : vector<8x128xf32>, vector<128x512xf32>, vector<8x512xf32> -> vector<8x512xf32>
    %1214 = arith.addf %1212, %1213 : vector<8x512xf32>
    %1215 = vector.extract_strided_slice %1214 {offsets = [0, 0], sizes = [8, 128], strides = [1, 1]} : vector<8x512xf32> to vector<8x128xf32>
    %1216 = arith.negf %1215 : vector<8x128xf32>
    %1217 = math.exp %1216 : vector<8x128xf32>
    %cst_327 = arith.constant 1.000000e+00 : f32
    %1218 = vector.broadcast %cst_327 : f32 to vector<8x128xf32>
    %1219 = arith.addf %1218, %1217 : vector<8x128xf32>
    %1220 = arith.divf %1218, %1219 : vector<8x128xf32>
    %1221 = vector.extract_strided_slice %1214 {offsets = [0, 128], sizes = [8, 128], strides = [1, 1]} : vector<8x512xf32> to vector<8x128xf32>
    %1222 = arith.negf %1221 : vector<8x128xf32>
    %1223 = math.exp %1222 : vector<8x128xf32>
    %cst_328 = arith.constant 1.000000e+00 : f32
    %1224 = vector.broadcast %cst_328 : f32 to vector<8x128xf32>
    %1225 = arith.addf %1224, %1223 : vector<8x128xf32>
    %1226 = arith.divf %1224, %1225 : vector<8x128xf32>
    %1227 = vector.extract_strided_slice %1214 {offsets = [0, 256], sizes = [8, 128], strides = [1, 1]} : vector<8x512xf32> to vector<8x128xf32>
    %1228 = math.tanh %1227 : vector<8x128xf32>
    %1229 = vector.extract_strided_slice %1214 {offsets = [0, 384], sizes = [8, 128], strides = [1, 1]} : vector<8x512xf32> to vector<8x128xf32>
    %1230 = arith.negf %1229 : vector<8x128xf32>
    %1231 = math.exp %1230 : vector<8x128xf32>
    %cst_329 = arith.constant 1.000000e+00 : f32
    %1232 = vector.broadcast %cst_329 : f32 to vector<8x128xf32>
    %1233 = arith.addf %1232, %1231 : vector<8x128xf32>
    %1234 = arith.divf %1232, %1233 : vector<8x128xf32>
    %1235 = arith.mulf %1226, %1162 : vector<8x128xf32>
    %1236 = arith.mulf %1220, %1228 : vector<8x128xf32>
    %1237 = arith.addf %1235, %1236 : vector<8x128xf32>
    %1238 = math.tanh %1237 : vector<8x128xf32>
    %1239 = arith.mulf %1234, %1238 : vector<8x128xf32>
    %1240 = vector.broadcast %1169 : i32 to vector<8x128xi32>
    %1241 = arith.cmpi slt, %1240, %0 : vector<8x128xi32>
    %1242 = arith.select %1241, %1239, %1161 : vector<8x128xi1>, vector<8x128xf32>
    %1243 = arith.select %1241, %1237, %1162 : vector<8x128xi1>, vector<8x128xf32>
    %cst_330 = arith.constant 0.000000e+00 : f32
    %1244 = vector.broadcast %cst_330 : f32 to vector<8x128xf32>
    %1245 = arith.select %1241, %1239, %1244 : vector<8x128xi1>, vector<8x128xf32>
    %1246 = arith.index_cast %1169 : i32 to index
    %c0_331 = arith.constant 0 : index
    %c0_332 = arith.constant 0 : index
    %1247 = vector.load %arg15[%1246, %c0_331, %c0_332] : memref<8x8x128xf32, #tpu.memory_space<vmem>>, vector<1x8x128xf32>
    %1248 = vector.shape_cast %1247 : vector<1x8x128xf32> to vector<8x128xf32>
    %1249 = vector.shape_cast %1245 : vector<8x128xf32> to vector<1x8x128xf32>
    tpu.vector_store %arg15[%1246, %c0_331, %c0_332], %1249 {strides = array<i32>} : memref<8x8x128xf32, #tpu.memory_space<vmem>>, vector<1x8x128xf32>,
    %c7_i32_333 = arith.constant 7 : i32
    %c7_i32_334 = arith.constant 7 : i32
    %1250 = arith.subi %c7_i32_334, %c7_i32_333 : i32
    %1251 = arith.index_cast %c7_i32_333 : i32 to index
    %c0_335 = arith.constant 0 : index
    %c0_336 = arith.constant 0 : index
    %1252 = vector.load %arg12[%1251, %c0_335, %c0_336] : memref<8x8x512xf32, #tpu.memory_space<vmem>>, vector<1x8x512xf32>
    %1253 = vector.shape_cast %1252 : vector<1x8x512xf32> to vector<8x512xf32>
    %cst_337 = arith.constant dense<0.000000e+00> : vector<8x512xf32>
    %1254 = tpu.matmul %1202, %680, %cst_337 {dimension_numbers = #tpu.dot_dimension_numbers<[1], [0], [0], [1], [0, 0, 1, 1], [], []>} : vector<8x128xf32>, vector<128x512xf32>, vector<8x512xf32> -> vector<8x512xf32>
    %1255 = arith.addf %1253, %1254 : vector<8x512xf32>
    %1256 = vector.extract_strided_slice %1255 {offsets = [0, 0], sizes = [8, 128], strides = [1, 1]} : vector<8x512xf32> to vector<8x128xf32>
    %1257 = arith.negf %1256 : vector<8x128xf32>
    %1258 = math.exp %1257 : vector<8x128xf32>
    %cst_338 = arith.constant 1.000000e+00 : f32
    %1259 = vector.broadcast %cst_338 : f32 to vector<8x128xf32>
    %1260 = arith.addf %1259, %1258 : vector<8x128xf32>
    %1261 = arith.divf %1259, %1260 : vector<8x128xf32>
    %1262 = vector.extract_strided_slice %1255 {offsets = [0, 128], sizes = [8, 128], strides = [1, 1]} : vector<8x512xf32> to vector<8x128xf32>
    %1263 = arith.negf %1262 : vector<8x128xf32>
    %1264 = math.exp %1263 : vector<8x128xf32>
    %cst_339 = arith.constant 1.000000e+00 : f32
    %1265 = vector.broadcast %cst_339 : f32 to vector<8x128xf32>
    %1266 = arith.addf %1265, %1264 : vector<8x128xf32>
    %1267 = arith.divf %1265, %1266 : vector<8x128xf32>
    %1268 = vector.extract_strided_slice %1255 {offsets = [0, 256], sizes = [8, 128], strides = [1, 1]} : vector<8x512xf32> to vector<8x128xf32>
    %1269 = math.tanh %1268 : vector<8x128xf32>
    %1270 = vector.extract_strided_slice %1255 {offsets = [0, 384], sizes = [8, 128], strides = [1, 1]} : vector<8x512xf32> to vector<8x128xf32>
    %1271 = arith.negf %1270 : vector<8x128xf32>
    %1272 = math.exp %1271 : vector<8x128xf32>
    %cst_340 = arith.constant 1.000000e+00 : f32
    %1273 = vector.broadcast %cst_340 : f32 to vector<8x128xf32>
    %1274 = arith.addf %1273, %1272 : vector<8x128xf32>
    %1275 = arith.divf %1273, %1274 : vector<8x128xf32>
    %1276 = arith.mulf %1267, %1203 : vector<8x128xf32>
    %1277 = arith.mulf %1261, %1269 : vector<8x128xf32>
    %1278 = arith.addf %1276, %1277 : vector<8x128xf32>
    %1279 = math.tanh %1278 : vector<8x128xf32>
    %1280 = arith.mulf %1275, %1279 : vector<8x128xf32>
    %1281 = vector.broadcast %c7_i32_333 : i32 to vector<8x128xi32>
    %1282 = arith.cmpi slt, %1281, %0 : vector<8x128xi32>
    %1283 = arith.select %1282, %1280, %1202 : vector<8x128xi1>, vector<8x128xf32>
    %1284 = arith.select %1282, %1278, %1203 : vector<8x128xi1>, vector<8x128xf32>
    %cst_341 = arith.constant 0.000000e+00 : f32
    %1285 = vector.broadcast %cst_341 : f32 to vector<8x128xf32>
    %1286 = arith.select %1282, %1280, %1285 : vector<8x128xi1>, vector<8x128xf32>
    %1287 = arith.index_cast %c7_i32_333 : i32 to index
    %c0_342 = arith.constant 0 : index
    %c0_343 = arith.constant 0 : index
    %1288 = vector.load %arg14[%1287, %c0_342, %c0_343] : memref<8x8x128xf32, #tpu.memory_space<vmem>>, vector<1x8x128xf32>
    %1289 = vector.shape_cast %1288 : vector<1x8x128xf32> to vector<8x128xf32>
    %1290 = vector.shape_cast %1286 : vector<8x128xf32> to vector<1x8x128xf32>
    tpu.vector_store %arg14[%1287, %c0_342, %c0_343], %1290 {strides = array<i32>} : memref<8x8x128xf32, #tpu.memory_space<vmem>>, vector<1x8x128xf32>,
    %1291 = arith.index_cast %1250 : i32 to index
    %c0_344 = arith.constant 0 : index
    %c0_345 = arith.constant 0 : index
    %1292 = vector.load %arg13[%1291, %c0_344, %c0_345] : memref<8x8x512xf32, #tpu.memory_space<vmem>>, vector<1x8x512xf32>
    %1293 = vector.shape_cast %1292 : vector<1x8x512xf32> to vector<8x512xf32>
    %cst_346 = arith.constant dense<0.000000e+00> : vector<8x512xf32>
    %1294 = tpu.matmul %1242, %681, %cst_346 {dimension_numbers = #tpu.dot_dimension_numbers<[1], [0], [0], [1], [0, 0, 1, 1], [], []>} : vector<8x128xf32>, vector<128x512xf32>, vector<8x512xf32> -> vector<8x512xf32>
    %1295 = arith.addf %1293, %1294 : vector<8x512xf32>
    %1296 = vector.extract_strided_slice %1295 {offsets = [0, 0], sizes = [8, 128], strides = [1, 1]} : vector<8x512xf32> to vector<8x128xf32>
    %1297 = arith.negf %1296 : vector<8x128xf32>
    %1298 = math.exp %1297 : vector<8x128xf32>
    %cst_347 = arith.constant 1.000000e+00 : f32
    %1299 = vector.broadcast %cst_347 : f32 to vector<8x128xf32>
    %1300 = arith.addf %1299, %1298 : vector<8x128xf32>
    %1301 = arith.divf %1299, %1300 : vector<8x128xf32>
    %1302 = vector.extract_strided_slice %1295 {offsets = [0, 128], sizes = [8, 128], strides = [1, 1]} : vector<8x512xf32> to vector<8x128xf32>
    %1303 = arith.negf %1302 : vector<8x128xf32>
    %1304 = math.exp %1303 : vector<8x128xf32>
    %cst_348 = arith.constant 1.000000e+00 : f32
    %1305 = vector.broadcast %cst_348 : f32 to vector<8x128xf32>
    %1306 = arith.addf %1305, %1304 : vector<8x128xf32>
    %1307 = arith.divf %1305, %1306 : vector<8x128xf32>
    %1308 = vector.extract_strided_slice %1295 {offsets = [0, 256], sizes = [8, 128], strides = [1, 1]} : vector<8x512xf32> to vector<8x128xf32>
    %1309 = math.tanh %1308 : vector<8x128xf32>
    %1310 = vector.extract_strided_slice %1295 {offsets = [0, 384], sizes = [8, 128], strides = [1, 1]} : vector<8x512xf32> to vector<8x128xf32>
    %1311 = arith.negf %1310 : vector<8x128xf32>
    %1312 = math.exp %1311 : vector<8x128xf32>
    %cst_349 = arith.constant 1.000000e+00 : f32
    %1313 = vector.broadcast %cst_349 : f32 to vector<8x128xf32>
    %1314 = arith.addf %1313, %1312 : vector<8x128xf32>
    %1315 = arith.divf %1313, %1314 : vector<8x128xf32>
    %1316 = arith.mulf %1307, %1243 : vector<8x128xf32>
    %1317 = arith.mulf %1301, %1309 : vector<8x128xf32>
    %1318 = arith.addf %1316, %1317 : vector<8x128xf32>
    %1319 = math.tanh %1318 : vector<8x128xf32>
    %1320 = arith.mulf %1315, %1319 : vector<8x128xf32>
    %1321 = vector.broadcast %1250 : i32 to vector<8x128xi32>
    %1322 = arith.cmpi slt, %1321, %0 : vector<8x128xi32>
    %1323 = arith.select %1322, %1320, %1242 : vector<8x128xi1>, vector<8x128xf32>
    %1324 = arith.select %1322, %1318, %1243 : vector<8x128xi1>, vector<8x128xf32>
    %cst_350 = arith.constant 0.000000e+00 : f32
    %1325 = vector.broadcast %cst_350 : f32 to vector<8x128xf32>
    %1326 = arith.select %1322, %1320, %1325 : vector<8x128xi1>, vector<8x128xf32>
    %1327 = arith.index_cast %1250 : i32 to index
    %c0_351 = arith.constant 0 : index
    %c0_352 = arith.constant 0 : index
    %1328 = vector.load %arg15[%1327, %c0_351, %c0_352] : memref<8x8x128xf32, #tpu.memory_space<vmem>>, vector<1x8x128xf32>
    %1329 = vector.shape_cast %1328 : vector<1x8x128xf32> to vector<8x128xf32>
    %1330 = vector.shape_cast %1326 : vector<8x128xf32> to vector<1x8x128xf32>
    tpu.vector_store %arg15[%1327, %c0_351, %c0_352], %1330 {strides = array<i32>} : memref<8x8x128xf32, #tpu.memory_space<vmem>>, vector<1x8x128xf32>,
    %c8_i32_353 = arith.constant 8 : i32
    %c0_354 = arith.constant 0 : index
    %c0_355 = arith.constant 0 : index
    %c0_356 = arith.constant 0 : index
    %1331 = vector.load %arg14[%c0_354, %c0_355, %c0_356] : memref<8x8x128xf32, #tpu.memory_space<vmem>>, vector<8x8x128xf32>
    %c0_357 = arith.constant 0 : index
    %c0_358 = arith.constant 0 : index
    %c0_359 = arith.constant 0 : index
    %1332 = vector.load %arg15[%c0_357, %c0_358, %c0_359] : memref<8x8x128xf32, #tpu.memory_space<vmem>>, vector<8x8x128xf32>
    %1333 = tpu.concatenate %1331, %1332 in 2 : vector<8x8x128xf32>, vector<8x8x128xf32> -> vector<8x8x256xf32>
    %c0_360 = arith.constant 0 : index
    %c0_361 = arith.constant 0 : index
    %c0_362 = arith.constant 0 : index
    %1334 = vector.load %arg11[%c0_360, %c0_361, %c0_362] : memref<8x8x256xf32, #tpu.memory_space<vmem>>, vector<8x8x256xf32>
    tpu.vector_store %arg11[%c0_360, %c0_361, %c0_362], %1333 {strides = array<i32>} : memref<8x8x256xf32, #tpu.memory_space<vmem>>, vector<8x8x256xf32>,
    return
  }
  func.func @transform_0(%arg0: i32) -> (i32, i32, i32) {
    %c0_i32 = arith.constant 0 : i32
    %c0_i32_0 = arith.constant 0 : i32
    %c0_i32_1 = arith.constant 0 : i32
    %c0_i32_2 = arith.constant 0 : i32
    return %c0_i32, %c0_i32_0, %c0_i32_1 : i32, i32, i32
  }
  func.func @transform_1(%arg0: i32) -> (i32, i32) {
    %c0_i32 = arith.constant 0 : i32
    %c0_i32_0 = arith.constant 0 : i32
    %c0_i32_1 = arith.constant 0 : i32
    return %c0_i32, %c0_i32_0 : i32, i32
  }
  func.func @transform_2(%arg0: i32) -> (i32, i32) {
    %c0_i32 = arith.constant 0 : i32
    %c0_i32_0 = arith.constant 0 : i32
    %c0_i32_1 = arith.constant 0 : i32
    return %c0_i32, %c0_i32_0 : i32, i32
  }
  func.func @transform_3(%arg0: i32) -> (i32, i32) {
    %c0_i32 = arith.constant 0 : i32
    %c0_i32_0 = arith.constant 0 : i32
    %c0_i32_1 = arith.constant 0 : i32
    return %c0_i32, %c0_i32_0 : i32, i32
  }
  func.func @transform_4(%arg0: i32) -> (i32, i32) {
    %c0_i32 = arith.constant 0 : i32
    %c0_i32_0 = arith.constant 0 : i32
    %c0_i32_1 = arith.constant 0 : i32
    return %c0_i32, %c0_i32_0 : i32, i32
  }
  func.func @transform_5(%arg0: i32) -> (i32, i32) {
    %c0_i32 = arith.constant 0 : i32
    %c0_i32_0 = arith.constant 0 : i32
    %c0_i32_1 = arith.constant 0 : i32
    return %c0_i32, %c0_i32_0 : i32, i32
  }
  func.func @transform_6(%arg0: i32) -> (i32, i32) {
    %c0_i32 = arith.constant 0 : i32
    %c0_i32_0 = arith.constant 0 : i32
    %c0_i32_1 = arith.constant 0 : i32
    return %c0_i32, %c0_i32_0 : i32, i32
  }
  func.func @transform_7(%arg0: i32) -> (i32, i32) {
    %c0_i32 = arith.constant 0 : i32
    %c0_i32_0 = arith.constant 0 : i32
    %c0_i32_1 = arith.constant 0 : i32
    return %c0_i32, %c0_i32_0 : i32, i32
  }
  func.func @transform_8(%arg0: i32) -> (i32, i32) {
    %c0_i32 = arith.constant 0 : i32
    %c0_i32_0 = arith.constant 0 : i32
    %c0_i32_1 = arith.constant 0 : i32
    return %c0_i32, %c0_i32_0 : i32, i32
  }
  func.func @transform_9(%arg0: i32) -> (i32, i32) {
    %c0_i32 = arith.constant 0 : i32
    %c0_i32_0 = arith.constant 0 : i32
    %c0_i32_1 = arith.constant 0 : i32
    return %c0_i32, %c0_i32_0 : i32, i32
  }
  func.func @transform_10(%arg0: i32) -> (i32, i32, i32) {
    %c0_i32 = arith.constant 0 : i32
    %c0_i32_0 = arith.constant 0 : i32
    %c0_i32_1 = arith.constant 0 : i32
    %c0_i32_2 = arith.constant 0 : i32
    return %c0_i32, %c0_i32_0, %c0_i32_1 : i32, i32, i32
  }
}

</mosaic_0001>

<llo_original>
// kernel: lstm_forward.1
$region0: #{lstm_forward.1}
  #allocation0 [shape = 'u32[]', space=smem, size = 0x4, offset = 0x4, fixed_abs, tag = 'smem constant byte address 0x4 - core index']
  #allocation1 [shape = 'u32[144,128]{1,0:T(1,128)}', space=vmem, size = 0x12000, scoped, tag = 'internal scratch']
  #allocation2 [shape = 'f32[8,8,512]{2,1,0:T(8,128)}', space=vmem, size = 0x20000, scoped, tag = 'scratch operand']
  #allocation3 [shape = 'f32[8,8,512]{2,1,0:T(8,128)}', space=vmem, size = 0x20000, scoped, tag = 'scratch operand']
  #allocation4 [shape = 'f32[8,8,128]{2,1,0:T(8,128)}', space=vmem, size = 0x8000, scoped, tag = 'scratch operand']
  #allocation5 [shape = 'f32[8,8,128]{2,1,0:T(8,128)}', space=vmem, size = 0x8000, scoped, tag = 'scratch operand']
  %s0 = inlined_call_operand.vmem [shape: f32[8,8,128], index: 0, kind: input, shape index: {}]
  %s1 = inlined_call_operand.vmem [shape: s32[8,128], index: 1, kind: input, shape index: {}]
  %s2 = inlined_call_operand.hbm [shape: f32[128,1024], index: 2, kind: input, shape index: {}]
  %s3 = inlined_call_operand.hbm [shape: f32[128,512], index: 3, kind: input, shape index: {}]
  %s4 = inlined_call_operand.hbm [shape: f32[128,512], index: 4, kind: input, shape index: {}]
  %s5 = inlined_call_operand.vmem [shape: f32[1,1024], index: 5, kind: input, shape index: {}]
  %s6 = inlined_call_operand.hbm [shape: f32[256,1024], index: 6, kind: input, shape index: {}]
  %s7 = inlined_call_operand.hbm [shape: f32[128,512], index: 7, kind: input, shape index: {}]
  %s8 = inlined_call_operand.hbm [shape: f32[128,512], index: 8, kind: input, shape index: {}]
  %s9 = inlined_call_operand.vmem [shape: f32[1,1024], index: 9, kind: input, shape index: {}]
  %s10 = inlined_call_operand.vmem [shape: f32[8,8,256], index: 10, kind: output, shape index: {}]
  %s11 = sld [smem:[#allocation0]]
  $region74: #{lstm_forward.1} parent=0
    _
  %s13 = ssub.s32 1, %s11
  %s14 = scalar_select 0, %s13, %s11
  $region1: #{lstm_forward.1} parent=0
    #allocation6 [shape = 'u8[524288]{0}', space=vmem, size = 0x80000, scoped, tag = 'input window, operand 2, single buffered']
    #allocation7 [shape = 's32[1]{0}', space=sflag, size = 0x4, scoped, tag = 'scoped memory for lstm_forward.1']
    #allocation8 [shape = 'u8[262144]{0}', space=vmem, size = 0x40000, scoped, tag = 'input window, operand 3, single buffered']
    #allocation9 [shape = 's32[1]{0}', space=sflag, size = 0x4, scoped, tag = 'scoped memory for lstm_forward.1']
    #allocation10 [shape = 'u8[262144]{0}', space=vmem, size = 0x40000, scoped, tag = 'input window, operand 4, single buffered']
    #allocation11 [shape = 'u8[1048576]{0}', space=vmem, size = 0x100000, scoped, tag = 'input window, operand 6, single buffered']
    #allocation12 [shape = 's32[1]{0}', space=sflag, size = 0x4, scoped, tag = 'scoped memory for lstm_forward.1']
    #allocation13 [shape = 'u8[262144]{0}', space=vmem, size = 0x40000, scoped, tag = 'input window, operand 7, single buffered']
    #allocation14 [shape = 'u8[262144]{0}', space=vmem, size = 0x40000, scoped, tag = 'input window, operand 8, single buffered']
    #allocation15 [shape = 's32[1]{0}', space=sflag, size = 0x4, scoped, tag = 'scoped memory for lstm_forward.1']
    %15 = vsyncpa [#allocation7], 0
    %16 = vsyncpa [#allocation9], 0
    %17 = vsyncpa [#allocation12], 0
    %18 = vsyncpa [#allocation15], 0
    // Predicated region
    $region2: #{lstm_forward.1} parent=1 // pred_check
      _
    $region3: #{lstm_forward.1} parent=1 // pred_check_branch
      %20 = sbr.rel (0) target = $region5
    $region4: #{lstm_forward.1} parent=1 // pred_region
      _
    $region5: #{lstm_forward.1} parent=1 // pred_fallthru
      _
    // Predicated region
    $region6: #{lstm_forward.1} parent=1 // pred_check
      _
    $region7: #{lstm_forward.1} parent=1 // pred_check_branch
      %22 = sbr.rel (0) target = $region9
    $region8: #{lstm_forward.1} parent=1 // pred_region
      _
    $region9: #{lstm_forward.1} parent=1 // pred_fallthru
      _
    // Predicated region
    $region10: #{lstm_forward.1} parent=1 // pred_check
      _
    $region11: #{lstm_forward.1} parent=1 // pred_check_branch
      %24 = sbr.rel (0) target = $region13
    $region12: #{lstm_forward.1} parent=1 // pred_region
      %s26 = ssub.s32 16384, 16384
      %27 = vsyncadd [#allocation7], %s26
      %s28 = sshll.u32 [#allocation6], 4
      %s29 = int_to_ptr.vmem [resolvable:$true] %s28
      %34 = dma.hbm_to_vmem [thread:$0]  %s2, 16384, %s29, [#allocation7], 1024, 1024, 64
    $region13: #{lstm_forward.1} parent=1 // pred_fallthru
      _
    // Predicated region
    $region14: #{lstm_forward.1} parent=1 // pred_check
      _
    $region15: #{lstm_forward.1} parent=1 // pred_check_branch
      %36 = sbr.rel (0) target = $region17
    $region16: #{lstm_forward.1} parent=1 // pred_region
      %s38 = ssub.s32 8192, 8192
      %39 = vsyncadd [#allocation9], %s38
      %s40 = sshll.u32 [#allocation8], 4
      %s41 = int_to_ptr.vmem [resolvable:$true] %s40
      %46 = dma.hbm_to_vmem [thread:$0]  %s3, 8192, %s41, [#allocation9], 512, 512, 32
    $region17: #{lstm_forward.1} parent=1 // pred_fallthru
      _
    // Predicated region
    $region18: #{lstm_forward.1} parent=1 // pred_check
      _
    $region19: #{lstm_forward.1} parent=1 // pred_check_branch
      %48 = sbr.rel (0) target = $region21
    $region20: #{lstm_forward.1} parent=1 // pred_region
      %s50 = ssub.s32 8192, 8192
      %51 = vsyncadd [#allocation9], %s50
      %s52 = sshll.u32 [#allocation10], 4
      %s53 = int_to_ptr.vmem [resolvable:$true] %s52
      %58 = dma.hbm_to_vmem [thread:$0]  %s4, 8192, %s53, [#allocation9], 512, 512, 32
    $region21: #{lstm_forward.1} parent=1 // pred_fallthru
      _
    // Predicated region
    $region22: #{lstm_forward.1} parent=1 // pred_check
      _
    $region23: #{lstm_forward.1} parent=1 // pred_check_branch
      %60 = sbr.rel (0) target = $region25
    $region24: #{lstm_forward.1} parent=1 // pred_region
      _
    $region25: #{lstm_forward.1} parent=1 // pred_fallthru
      _
    // Predicated region
    $region26: #{lstm_forward.1} parent=1 // pred_check
      _
    $region27: #{lstm_forward.1} parent=1 // pred_check_branch
      %62 = sbr.rel (0) target = $region29
    $region28: #{lstm_forward.1} parent=1 // pred_region
      %s64 = ssub.s32 32768, 32768
      %65 = vsyncadd [#allocation12], %s64
      %s66 = sshll.u32 [#allocation11], 4
      %s67 = int_to_ptr.vmem [resolvable:$true] %s66
      %72 = dma.hbm_to_vmem [thread:$0]  %s6, 32768, %s67, [#allocation12], 1024, 1024, 64
    $region29: #{lstm_forward.1} parent=1 // pred_fallthru
      _
    // Predicated region
    $region30: #{lstm_forward.1} parent=1 // pred_check
      _
    $region31: #{lstm_forward.1} parent=1 // pred_check_branch
      %74 = sbr.rel (0) target = $region33
    $region32: #{lstm_forward.1} parent=1 // pred_region
      %s76 = ssub.s32 8192, 8192
      %77 = vsyncadd [#allocation12], %s76
      %s78 = sshll.u32 [#allocation13], 4
      %s79 = int_to_ptr.vmem [resolvable:$true] %s78
      %84 = dma.hbm_to_vmem [thread:$0]  %s7, 8192, %s79, [#allocation12], 512, 512, 32
    $region33: #{lstm_forward.1} parent=1 // pred_fallthru
      _
    // Predicated region
    $region34: #{lstm_forward.1} parent=1 // pred_check
      _
    $region35: #{lstm_forward.1} parent=1 // pred_check_branch
      %86 = sbr.rel (0) target = $region37
    $region36: #{lstm_forward.1} parent=1 // pred_region
      %s88 = ssub.s32 8192, 8192
      %89 = vsyncadd [#allocation15], %s88
      %s90 = sshll.u32 [#allocation14], 4
      %s91 = int_to_ptr.vmem [resolvable:$true] %s90
      %96 = dma.hbm_to_vmem [thread:$0]  %s8, 8192, %s91, [#allocation15], 512, 512, 32
    $region37: #{lstm_forward.1} parent=1 // pred_fallthru
      _
    // Predicated region
    $region38: #{lstm_forward.1} parent=1 // pred_check
      _
    $region39: #{lstm_forward.1} parent=1 // pred_check_branch
      %98 = sbr.rel (0) target = $region41
    $region40: #{lstm_forward.1} parent=1 // pred_region
      _
    $region41: #{lstm_forward.1} parent=1 // pred_fallthru
      _
    // Predicated region
    $region42: #{lstm_forward.1} parent=1 // pred_check
      _
    $region43: #{lstm_forward.1} parent=1 // pred_check_branch
      %100 = sbr.rel (0) target = $region45
    $region44: #{lstm_forward.1} parent=1 // pred_region
      %101 = dma.done [#allocation7], 16384
    $region45: #{lstm_forward.1} parent=1 // pred_fallthru
      _
    // Predicated region
    $region46: #{lstm_forward.1} parent=1 // pred_check
      _
    $region47: #{lstm_forward.1} parent=1 // pred_check_branch
      %103 = sbr.rel (0) target = $region49
    $region48: #{lstm_forward.1} parent=1 // pred_region
      %104 = dma.done [#allocation9], 8192
    $region49: #{lstm_forward.1} parent=1 // pred_fallthru
      _
    // Predicated region
    $region50: #{lstm_forward.1} parent=1 // pred_check
      _
    $region51: #{lstm_forward.1} parent=1 // pred_check_branch
      %106 = sbr.rel (0) target = $region53
    $region52: #{lstm_forward.1} parent=1 // pred_region
      %107 = dma.done [#allocation9], 8192
    $region53: #{lstm_forward.1} parent=1 // pred_fallthru
      _
    // Predicated region
    $region54: #{lstm_forward.1} parent=1 // pred_check
      _
    $region55: #{lstm_forward.1} parent=1 // pred_check_branch
      %109 = sbr.rel (0) target = $region57
    $region56: #{lstm_forward.1} parent=1 // pred_region
      %110 = dma.done [#allocation12], 32768
    $region57: #{lstm_forward.1} parent=1 // pred_fallthru
      _
    // Predicated region
    $region58: #{lstm_forward.1} parent=1 // pred_check
      _
    $region59: #{lstm_forward.1} parent=1 // pred_check_branch
      %112 = sbr.rel (0) target = $region61
    $region60: #{lstm_forward.1} parent=1 // pred_region
      %113 = dma.done [#allocation12], 8192
    $region61: #{lstm_forward.1} parent=1 // pred_fallthru
      _
    // Predicated region
    $region62: #{lstm_forward.1} parent=1 // pred_check
      _
    $region63: #{lstm_forward.1} parent=1 // pred_check_branch
      %115 = sbr.rel (0) target = $region65
    $region64: #{lstm_forward.1} parent=1 // pred_region
      %116 = dma.done [#allocation15], 8192
    $region65: #{lstm_forward.1} parent=1 // pred_fallthru
      _
    %v117 = vld [vmem:[%s1] sm:$0xff]
    %v118 = vld [vmem:[%s0] sm:$0xff]
    %v119 = vld [vmem:[%s0 + $0x8] sm:$0xff]
    %v120 = vld [vmem:[%s0 + $0x10] sm:$0xff]
    %v121 = vld [vmem:[%s0 + $0x18] sm:$0xff]
    %v122 = vld [vmem:[%s0 + $0x20] sm:$0xff]
    %v123 = vld [vmem:[%s0 + $0x28] sm:$0xff]
    %v124 = vld [vmem:[%s0 + $0x30] sm:$0xff]
    %v125 = vld [vmem:[%s0 + $0x38] sm:$0xff]
    %v126 = vld [vmem:[#allocation6] sm:$0xff]
    %v127 = vld [vmem:[#allocation6 + $0x8] sm:$0xff]
    %v128 = vld [vmem:[#allocation6 + $0x10] sm:$0xff]
    %v129 = vld [vmem:[#allocation6 + $0x18] sm:$0xff]
    %v130 = vld [vmem:[#allocation6 + $0x20] sm:$0xff]
    %v131 = vld [vmem:[#allocation6 + $0x28] sm:$0xff]
    %v132 = vld [vmem:[#allocation6 + $0x30] sm:$0xff]
    %v133 = vld [vmem:[#allocation6 + $0x38] sm:$0xff]
    %v134 = vld [vmem:[#allocation6 + $0x40] sm:$0xff]
    %v135 = vld [vmem:[#allocation6 + $0x48] sm:$0xff]
    %v136 = vld [vmem:[#allocation6 + $0x50] sm:$0xff]
    %v137 = vld [vmem:[#allocation6 + $0x58] sm:$0xff]
    %v138 = vld [vmem:[#allocation6 + $0x60] sm:$0xff]
    %v139 = vld [vmem:[#allocation6 + $0x68] sm:$0xff]
    %v140 = vld [vmem:[#allocation6 + $0x70] sm:$0xff]
    %v141 = vld [vmem:[#allocation6 + $0x78] sm:$0xff]
    %v142 = vld [vmem:[#allocation6 + $0x80] sm:$0xff]
    %v143 = vld [vmem:[#allocation6 + $0x88] sm:$0xff]
    %v144 = vld [vmem:[#allocation6 + $0x90] sm:$0xff]
    %v145 = vld [vmem:[#allocation6 + $0x98] sm:$0xff]
    %v146 = vld [vmem:[#allocation6 + $0xa0] sm:$0xff]
    %v147 = vld [vmem:[#allocation6 + $0xa8] sm:$0xff]
    %v148 = vld [vmem:[#allocation6 + $0xb0] sm:$0xff]
    %v149 = vld [vmem:[#allocation6 + $0xb8] sm:$0xff]
    %v150 = vld [vmem:[#allocation6 + $0xc0] sm:$0xff]
    %v151 = vld [vmem:[#allocation6 + $0xc8] sm:$0xff]
    %v152 = vld [vmem:[#allocation6 + $0xd0] sm:$0xff]
    %v153 = vld [vmem:[#allocation6 + $0xd8] sm:$0xff]
    %v154 = vld [vmem:[#allocation6 + $0xe0] sm:$0xff]
    %v155 = vld [vmem:[#allocation6 + $0xe8] sm:$0xff]
    %v156 = vld [vmem:[#allocation6 + $0xf0] sm:$0xff]
    %v157 = vld [vmem:[#allocation6 + $0xf8] sm:$0xff]
    %v158 = vld [vmem:[#allocation6 + $0x100] sm:$0xff]
    %v159 = vld [vmem:[#allocation6 + $0x108] sm:$0xff]
    %v160 = vld [vmem:[#allocation6 + $0x110] sm:$0xff]
    %v161 = vld [vmem:[#allocation6 + $0x118] sm:$0xff]
    %v162 = vld [vmem:[#allocation6 + $0x120] sm:$0xff]
    %v163 = vld [vmem:[#allocation6 + $0x128] sm:$0xff]
    %v164 = vld [vmem:[#allocation6 + $0x130] sm:$0xff]
    %v165 = vld [vmem:[#allocation6 + $0x138] sm:$0xff]
    %v166 = vld [vmem:[#allocation6 + $0x140] sm:$0xff]
    %v167 = vld [vmem:[#allocation6 + $0x148] sm:$0xff]
    %v168 = vld [vmem:[#allocation6 + $0x150] sm:$0xff]
    %v169 = vld [vmem:[#allocation6 + $0x158] sm:$0xff]
    %v170 = vld [vmem:[#allocation6 + $0x160] sm:$0xff]
    %v171 = vld [vmem:[#allocation6 + $0x168] sm:$0xff]
    %v172 = vld [vmem:[#allocation6 + $0x170] sm:$0xff]
    %v173 = vld [vmem:[#allocation6 + $0x178] sm:$0xff]
    %v174 = vld [vmem:[#allocation6 + $0x180] sm:$0xff]
    %v175 = vld [vmem:[#allocation6 + $0x188] sm:$0xff]
    %v176 = vld [vmem:[#allocation6 + $0x190] sm:$0xff]
    %v177 = vld [vmem:[#allocation6 + $0x198] sm:$0xff]
    %v178 = vld [vmem:[#allocation6 + $0x1a0] sm:$0xff]
    %v179 = vld [vmem:[#allocation6 + $0x1a8] sm:$0xff]
    %v180 = vld [vmem:[#allocation6 + $0x1b0] sm:$0xff]
    %v181 = vld [vmem:[#allocation6 + $0x1b8] sm:$0xff]
    %v182 = vld [vmem:[#allocation6 + $0x1c0] sm:$0xff]
    %v183 = vld [vmem:[#allocation6 + $0x1c8] sm:$0xff]
    %v184 = vld [vmem:[#allocation6 + $0x1d0] sm:$0xff]
    %v185 = vld [vmem:[#allocation6 + $0x1d8] sm:$0xff]
    %v186 = vld [vmem:[#allocation6 + $0x1e0] sm:$0xff]
    %v187 = vld [vmem:[#allocation6 + $0x1e8] sm:$0xff]
    %v188 = vld [vmem:[#allocation6 + $0x1f0] sm:$0xff]
    %v189 = vld [vmem:[#allocation6 + $0x1f8] sm:$0xff]
    %v190 = vld [vmem:[#allocation6 + $0x200] sm:$0xff]
    %v191 = vld [vmem:[#allocation6 + $0x208] sm:$0xff]
    %v192 = vld [vmem:[#allocation6 + $0x210] sm:$0xff]
    %v193 = vld [vmem:[#allocation6 + $0x218] sm:$0xff]
    %v194 = vld [vmem:[#allocation6 + $0x220] sm:$0xff]
    %v195 = vld [vmem:[#allocation6 + $0x228] sm:$0xff]
    %v196 = vld [vmem:[#allocation6 + $0x230] sm:$0xff]
    %v197 = vld [vmem:[#allocation6 + $0x238] sm:$0xff]
    %v198 = vld [vmem:[#allocation6 + $0x240] sm:$0xff]
    %v199 = vld [vmem:[#allocation6 + $0x248] sm:$0xff]
    %v200 = vld [vmem:[#allocation6 + $0x250] sm:$0xff]
    %v201 = vld [vmem:[#allocation6 + $0x258] sm:$0xff]
    %v202 = vld [vmem:[#allocation6 + $0x260] sm:$0xff]
    %v203 = vld [vmem:[#allocation6 + $0x268] sm:$0xff]
    %v204 = vld [vmem:[#allocation6 + $0x270] sm:$0xff]
    %v205 = vld [vmem:[#allocation6 + $0x278] sm:$0xff]
    %v206 = vld [vmem:[#allocation6 + $0x280] sm:$0xff]
    %v207 = vld [vmem:[#allocation6 + $0x288] sm:$0xff]
    %v208 = vld [vmem:[#allocation6 + $0x290] sm:$0xff]
    %v209 = vld [vmem:[#allocation6 + $0x298] sm:$0xff]
    %v210 = vld [vmem:[#allocation6 + $0x2a0] sm:$0xff]
    %v211 = vld [vmem:[#allocation6 + $0x2a8] sm:$0xff]
    %v212 = vld [vmem:[#allocation6 + $0x2b0] sm:$0xff]
    %v213 = vld [vmem:[#allocation6 + $0x2b8] sm:$0xff]
    %v214 = vld [vmem:[#allocation6 + $0x2c0] sm:$0xff]
    %v215 = vld [vmem:[#allocation6 + $0x2c8] sm:$0xff]
    %v216 = vld [vmem:[#allocation6 + $0x2d0] sm:$0xff]
    %v217 = vld [vmem:[#allocation6 + $0x2d8] sm:$0xff]
    %v218 = vld [vmem:[#allocation6 + $0x2e0] sm:$0xff]
    %v219 = vld [vmem:[#allocation6 + $0x2e8] sm:$0xff]
    %v220 = vld [vmem:[#allocation6 + $0x2f0] sm:$0xff]
    %v221 = vld [vmem:[#allocation6 + $0x2f8] sm:$0xff]
    %v222 = vld [vmem:[#allocation6 + $0x300] sm:$0xff]
    %v223 = vld [vmem:[#allocation6 + $0x308] sm:$0xff]
    %v224 = vld [vmem:[#allocation6 + $0x310] sm:$0xff]
    %v225 = vld [vmem:[#allocation6 + $0x318] sm:$0xff]
    %v226 = vld [vmem:[#allocation6 + $0x320] sm:$0xff]
    %v227 = vld [vmem:[#allocation6 + $0x328] sm:$0xff]
    %v228 = vld [vmem:[#allocation6 + $0x330] sm:$0xff]
    %v229 = vld [vmem:[#allocation6 + $0x338] sm:$0xff]
    %v230 = vld [vmem:[#allocation6 + $0x340] sm:$0xff]
    %v231 = vld [vmem:[#allocation6 + $0x348] sm:$0xff]
    %v232 = vld [vmem:[#allocation6 + $0x350] sm:$0xff]
    %v233 = vld [vmem:[#allocation6 + $0x358] sm:$0xff]
    %v234 = vld [vmem:[#allocation6 + $0x360] sm:$0xff]
    %v235 = vld [vmem:[#allocation6 + $0x368] sm:$0xff]
    %v236 = vld [vmem:[#allocation6 + $0x370] sm:$0xff]
    %v237 = vld [vmem:[#allocation6 + $0x378] sm:$0xff]
    %v238 = vld [vmem:[#allocation6 + $0x380] sm:$0xff]
    %v239 = vld [vmem:[#allocation6 + $0x388] sm:$0xff]
    %v240 = vld [vmem:[#allocation6 + $0x390] sm:$0xff]
    %v241 = vld [vmem:[#allocation6 + $0x398] sm:$0xff]
    %v242 = vld [vmem:[#allocation6 + $0x3a0] sm:$0xff]
    %v243 = vld [vmem:[#allocation6 + $0x3a8] sm:$0xff]
    %v244 = vld [vmem:[#allocation6 + $0x3b0] sm:$0xff]
    %v245 = vld [vmem:[#allocation6 + $0x3b8] sm:$0xff]
    %v246 = vld [vmem:[#allocation6 + $0x3c0] sm:$0xff]
    %v247 = vld [vmem:[#allocation6 + $0x3c8] sm:$0xff]
    %v248 = vld [vmem:[#allocation6 + $0x3d0] sm:$0xff]
    %v249 = vld [vmem:[#allocation6 + $0x3d8] sm:$0xff]
    %v250 = vld [vmem:[#allocation6 + $0x3e0] sm:$0xff]
    %v251 = vld [vmem:[#allocation6 + $0x3e8] sm:$0xff]
    %v252 = vld [vmem:[#allocation6 + $0x3f0] sm:$0xff]
    %v253 = vld [vmem:[#allocation6 + $0x3f8] sm:$0xff]
    %v254 = vld [vmem:[%s5] sm:$0xff]
    %v256 = vlaneseq
    %v257 = vshrl.u32 %v256, 7
    %v258 = vsub.s32 0, %v257
    %v259 = vrot.slane %v254, %v258
    %v260 = vlaneseq
    %v261 = vshrl.u32 %v260, 7
    %v262 = vsub.s32 1, %v261
    %v263 = vrot.slane %v254, %v262
    %v264 = vlaneseq
    %v265 = vshrl.u32 %v264, 7
    %v266 = vsub.s32 2, %v265
    %v267 = vrot.slane %v254, %v266
    %v268 = vlaneseq
    %v269 = vshrl.u32 %v268, 7
    %v270 = vsub.s32 3, %v269
    %v271 = vrot.slane %v254, %v270
    %v272 = vlaneseq
    %v273 = vshrl.u32 %v272, 7
    %v274 = vsub.s32 4, %v273
    %v275 = vrot.slane %v254, %v274
    %v276 = vlaneseq
    %v277 = vshrl.u32 %v276, 7
    %v278 = vsub.s32 5, %v277
    %v279 = vrot.slane %v254, %v278
    %v280 = vlaneseq
    %v281 = vshrl.u32 %v280, 7
    %v282 = vsub.s32 6, %v281
    %v283 = vrot.slane %v254, %v282
    %v284 = vlaneseq
    %v285 = vshrl.u32 %v284, 7
    %v286 = vsub.s32 7, %v285
    %v287 = vrot.slane %v254, %v286
    %296 = vmatprep.subr.mxu0 %v247
    %297 = vmatpush1.msra.mxu0 %v246
    %298 = vmatprep.subr.mxu0 %v239
    %299 = vmatpush1.msra.mxu0 %v238
    %300 = vmatprep.subr.mxu0 %v231
    %301 = vmatpush1.msra.mxu0 %v230
    %302 = vmatprep.subr.mxu0 %v223
    %303 = vmatpush1.msra.mxu0 %v222
    %304 = vmatprep.subr.mxu0 %v215
    %305 = vmatpush1.msra.mxu0 %v214
    %306 = vmatprep.subr.mxu0 %v207
    %307 = vmatpush1.msra.mxu0 %v206
    %308 = vmatprep.subr.mxu0 %v199
    %309 = vmatpush1.msra.mxu0 %v198
    %310 = vmatprep.subr.mxu0 %v191
    %311 = vmatpush1.msra.mxu0 %v190
    %312 = vmatprep.subr.mxu0 %v183
    %313 = vmatpush1.msra.mxu0 %v182
    %314 = vmatprep.subr.mxu0 %v175
    %315 = vmatpush1.msra.mxu0 %v174
    %316 = vmatprep.subr.mxu0 %v167
    %317 = vmatpush1.msra.mxu0 %v166
    %318 = vmatprep.subr.mxu0 %v159
    %319 = vmatpush1.msra.mxu0 %v158
    %320 = vmatprep.subr.mxu0 %v151
    %321 = vmatpush1.msra.mxu0 %v150
    %322 = vmatprep.subr.mxu0 %v143
    %323 = vmatpush1.msra.mxu0 %v142
    %324 = vmatprep.subr.mxu0 %v135
    %325 = vmatpush1.msra.mxu0 %v134
    %326 = vmatprep.subr.mxu0 %v127
    %327 = vmatpush1.msra.mxu0 %v126
    %328 = vmatprep.subr.mxu0 0.0
    %329 = vmatpush2.msra.mxu0 0.0
    %330 = vmatprep.subr.mxu0 0.0
    %331 = vmatpush2.msra.mxu0 0.0
    %332 = vmatprep.subr.mxu0 0.0
    %333 = vmatpush2.msra.mxu0 0.0
    %334 = vmatprep.subr.mxu0 0.0
    %335 = vmatpush2.msra.mxu0 0.0
    %336 = vmatprep.subr.mxu0 0.0
    %337 = vmatpush2.msra.mxu0 0.0
    %338 = vmatprep.subr.mxu0 0.0
    %339 = vmatpush2.msra.mxu0 0.0
    %340 = vmatprep.subr.mxu0 0.0
    %341 = vmatpush2.msra.mxu0 0.0
    %342 = vmatprep.subr.mxu0 0.0
    %343 = vmatpush2.msra.mxu0 0.0
    %344 = vmatprep.subr.mxu0 0.0
    %345 = vmatpush2.msra.mxu0 0.0
    %346 = vmatprep.subr.mxu0 0.0
    %347 = vmatpush2.msra.mxu0 0.0
    %348 = vmatprep.subr.mxu0 0.0
    %349 = vmatpush2.msra.mxu0 0.0
    %350 = vmatprep.subr.mxu0 0.0
    %351 = vmatpush2.msra.mxu0 0.0
    %352 = vmatprep.subr.mxu0 0.0
    %353 = vmatpush2.msra.mxu0 0.0
    %354 = vmatprep.subr.mxu0 0.0
    %355 = vmatpush2.msra.mxu0 0.0
    %356 = vmatprep.subr.mxu0 0.0
    %357 = vmatpush2.msra.mxu0 0.0
    %358 = vmatprep.subr.mxu0 0.0
    %359 = vmatpush2.msra.mxu0 0.0
    %360 = vmatprep.mubr.f32.mxu0 0.0
    %361 = vmatmul.mubr.f32.gmra.mxu0 %v118
    %v362 = vpop.f32.mrf.mxu0
    %v363 = vadd.f32 %v259, %v362
    %v364 = vpop.f32.mrf.mxu0
    %v365 = vadd.f32 %v263, %v364
    %366 = vmatprep.mubr.f32.mxu0 0.0
    %367 = vmatmul.mubr.f32.gmra.mxu0 %v119
    %v368 = vpop.f32.mrf.mxu0
    %v369 = vadd.f32 %v259, %v368
    %v370 = vpop.f32.mrf.mxu0
    %v371 = vadd.f32 %v263, %v370
    %372 = vmatprep.mubr.f32.mxu0 0.0
    %373 = vmatmul.mubr.f32.gmra.mxu0 %v120
    %v374 = vpop.f32.mrf.mxu0
    %v375 = vadd.f32 %v259, %v374
    %v376 = vpop.f32.mrf.mxu0
    %v377 = vadd.f32 %v263, %v376
    %378 = vmatprep.mubr.f32.mxu0 0.0
    %379 = vmatmul.mubr.f32.gmra.mxu0 %v121
    %v380 = vpop.f32.mrf.mxu0
    %v381 = vadd.f32 %v259, %v380
    %v382 = vpop.f32.mrf.mxu0
    %v383 = vadd.f32 %v263, %v382
    %384 = vmatprep.mubr.f32.mxu0 0.0
    %385 = vmatmul.mubr.f32.gmra.mxu0 %v122
    %v386 = vpop.f32.mrf.mxu0
    %v387 = vadd.f32 %v259, %v386
    %v388 = vpop.f32.mrf.mxu0
    %v389 = vadd.f32 %v263, %v388
    %390 = vmatprep.mubr.f32.mxu0 0.0
    %391 = vmatmul.mubr.f32.gmra.mxu0 %v123
    %v392 = vpop.f32.mrf.mxu0
    %v393 = vadd.f32 %v259, %v392
    %v394 = vpop.f32.mrf.mxu0
    %v395 = vadd.f32 %v263, %v394
    %396 = vmatprep.mubr.f32.mxu0 0.0
    %397 = vmatmul.mubr.f32.gmra.mxu0 %v124
    %v398 = vpop.f32.mrf.mxu0
    %v399 = vadd.f32 %v259, %v398
    %v400 = vpop.f32.mrf.mxu0
    %v401 = vadd.f32 %v263, %v400
    %402 = vmatprep.mubr.f32.mxu0 0.0
    %403 = vmatmul.mubr.f32.gmra.mxu0 %v125
    %v404 = vpop.f32.mrf.mxu0
    %v405 = vadd.f32 %v259, %v404
    %v406 = vpop.f32.mrf.mxu0
    %v407 = vadd.f32 %v263, %v406
    %408 = vdwg.mxu0
    %409 = vmatprep.subr.mxu0 %v249
    %410 = vmatpush1.msra.mxu0 %v248
    %411 = vmatprep.subr.mxu0 %v241
    %412 = vmatpush1.msra.mxu0 %v240
    %413 = vmatprep.subr.mxu0 %v233
    %414 = vmatpush1.msra.mxu0 %v232
    %415 = vmatprep.subr.mxu0 %v225
    %416 = vmatpush1.msra.mxu0 %v224
    %417 = vmatprep.subr.mxu0 %v217
    %418 = vmatpush1.msra.mxu0 %v216
    %419 = vmatprep.subr.mxu0 %v209
    %420 = vmatpush1.msra.mxu0 %v208
    %421 = vmatprep.subr.mxu0 %v201
    %422 = vmatpush1.msra.mxu0 %v200
    %423 = vmatprep.subr.mxu0 %v193
    %424 = vmatpush1.msra.mxu0 %v192
    %425 = vmatprep.subr.mxu0 %v185
    %426 = vmatpush1.msra.mxu0 %v184
    %427 = vmatprep.subr.mxu0 %v177
    %428 = vmatpush1.msra.mxu0 %v176
    %429 = vmatprep.subr.mxu0 %v169
    %430 = vmatpush1.msra.mxu0 %v168
    %431 = vmatprep.subr.mxu0 %v161
    %432 = vmatpush1.msra.mxu0 %v160
    %433 = vmatprep.subr.mxu0 %v153
    %434 = vmatpush1.msra.mxu0 %v152
    %435 = vmatprep.subr.mxu0 %v145
    %436 = vmatpush1.msra.mxu0 %v144
    %437 = vmatprep.subr.mxu0 %v137
    %438 = vmatpush1.msra.mxu0 %v136
    %439 = vmatprep.subr.mxu0 %v129
    %440 = vmatpush1.msra.mxu0 %v128
    %441 = vmatprep.subr.mxu0 0.0
    %442 = vmatpush2.msra.mxu0 0.0
    %443 = vmatprep.subr.mxu0 0.0
    %444 = vmatpush2.msra.mxu0 0.0
    %445 = vmatprep.subr.mxu0 0.0
    %446 = vmatpush2.msra.mxu0 0.0
    %447 = vmatprep.subr.mxu0 0.0
    %448 = vmatpush2.msra.mxu0 0.0
    %449 = vmatprep.subr.mxu0 0.0
    %450 = vmatpush2.msra.mxu0 0.0
    %451 = vmatprep.subr.mxu0 0.0
    %452 = vmatpush2.msra.mxu0 0.0
    %453 = vmatprep.subr.mxu0 0.0
    %454 = vmatpush2.msra.mxu0 0.0
    %455 = vmatprep.subr.mxu0 0.0
    %456 = vmatpush2.msra.mxu0 0.0
    %457 = vmatprep.subr.mxu0 0.0
    %458 = vmatpush2.msra.mxu0 0.0
    %459 = vmatprep.subr.mxu0 0.0
    %460 = vmatpush2.msra.mxu0 0.0
    %461 = vmatprep.subr.mxu0 0.0
    %462 = vmatpush2.msra.mxu0 0.0
    %463 = vmatprep.subr.mxu0 0.0
    %464 = vmatpush2.msra.mxu0 0.0
    %465 = vmatprep.subr.mxu0 0.0
    %466 = vmatpush2.msra.mxu0 0.0
    %467 = vmatprep.subr.mxu0 0.0
    %468 = vmatpush2.msra.mxu0 0.0
    %469 = vmatprep.subr.mxu0 0.0
    %470 = vmatpush2.msra.mxu0 0.0
    %471 = vmatprep.subr.mxu0 0.0
    %472 = vmatpush2.msra.mxu0 0.0
    %473 = vmatprep.mubr.f32.mxu0 0.0
    %474 = vmatmul.mubr.f32.gmra.mxu0 %v118
    %v475 = vpop.f32.mrf.mxu0
    %v476 = vadd.f32 %v267, %v475
    %v477 = vpop.f32.mrf.mxu0
    %v478 = vadd.f32 %v271, %v477
    %479 = vmatprep.mubr.f32.mxu0 0.0
    %480 = vmatmul.mubr.f32.gmra.mxu0 %v119
    %v481 = vpop.f32.mrf.mxu0
    %v482 = vadd.f32 %v267, %v481
    %v483 = vpop.f32.mrf.mxu0
    %v484 = vadd.f32 %v271, %v483
    %485 = vmatprep.mubr.f32.mxu0 0.0
    %486 = vmatmul.mubr.f32.gmra.mxu0 %v120
    %v487 = vpop.f32.mrf.mxu0
    %v488 = vadd.f32 %v267, %v487
    %v489 = vpop.f32.mrf.mxu0
    %v490 = vadd.f32 %v271, %v489
    %491 = vmatprep.mubr.f32.mxu0 0.0
    %492 = vmatmul.mubr.f32.gmra.mxu0 %v121
    %v493 = vpop.f32.mrf.mxu0
    %v494 = vadd.f32 %v267, %v493
    %v495 = vpop.f32.mrf.mxu0
    %v496 = vadd.f32 %v271, %v495
    %497 = vmatprep.mubr.f32.mxu0 0.0
    %498 = vmatmul.mubr.f32.gmra.mxu0 %v122
    %v499 = vpop.f32.mrf.mxu0
    %v500 = vadd.f32 %v267, %v499
    %v501 = vpop.f32.mrf.mxu0
    %v502 = vadd.f32 %v271, %v501
    %503 = vmatprep.mubr.f32.mxu0 0.0
    %504 = vmatmul.mubr.f32.gmra.mxu0 %v123
    %v505 = vpop.f32.mrf.mxu0
    %v506 = vadd.f32 %v267, %v505
    %v507 = vpop.f32.mrf.mxu0
    %v508 = vadd.f32 %v271, %v507
    %509 = vmatprep.mubr.f32.mxu0 0.0
    %510 = vmatmul.mubr.f32.gmra.mxu0 %v124
    %v511 = vpop.f32.mrf.mxu0
    %v512 = vadd.f32 %v267, %v511
    %v513 = vpop.f32.mrf.mxu0
    %v514 = vadd.f32 %v271, %v513
    %515 = vmatprep.mubr.f32.mxu0 0.0
    %516 = vmatmul.mubr.f32.gmra.mxu0 %v125
    %v517 = vpop.f32.mrf.mxu0
    %v518 = vadd.f32 %v267, %v517
    %v519 = vpop.f32.mrf.mxu0
    %v520 = vadd.f32 %v271, %v519
    %521 = vdwg.mxu0
    %522 = vmatprep.subr.mxu0 %v251
    %523 = vmatpush1.msra.mxu0 %v250
    %524 = vmatprep.subr.mxu0 %v243
    %525 = vmatpush1.msra.mxu0 %v242
    %526 = vmatprep.subr.mxu0 %v235
    %527 = vmatpush1.msra.mxu0 %v234
    %528 = vmatprep.subr.mxu0 %v227
    %529 = vmatpush1.msra.mxu0 %v226
    %530 = vmatprep.subr.mxu0 %v219
    %531 = vmatpush1.msra.mxu0 %v218
    %532 = vmatprep.subr.mxu0 %v211
    %533 = vmatpush1.msra.mxu0 %v210
    %534 = vmatprep.subr.mxu0 %v203
    %535 = vmatpush1.msra.mxu0 %v202
    %536 = vmatprep.subr.mxu0 %v195
    %537 = vmatpush1.msra.mxu0 %v194
    %538 = vmatprep.subr.mxu0 %v187
    %539 = vmatpush1.msra.mxu0 %v186
    %540 = vmatprep.subr.mxu0 %v179
    %541 = vmatpush1.msra.mxu0 %v178
    %542 = vmatprep.subr.mxu0 %v171
    %543 = vmatpush1.msra.mxu0 %v170
    %544 = vmatprep.subr.mxu0 %v163
    %545 = vmatpush1.msra.mxu0 %v162
    %546 = vmatprep.subr.mxu0 %v155
    %547 = vmatpush1.msra.mxu0 %v154
    %548 = vmatprep.subr.mxu0 %v147
    %549 = vmatpush1.msra.mxu0 %v146
    %550 = vmatprep.subr.mxu0 %v139
    %551 = vmatpush1.msra.mxu0 %v138
    %552 = vmatprep.subr.mxu0 %v131
    %553 = vmatpush1.msra.mxu0 %v130
    %554 = vmatprep.subr.mxu0 0.0
    %555 = vmatpush2.msra.mxu0 0.0
    %556 = vmatprep.subr.mxu0 0.0
    %557 = vmatpush2.msra.mxu0 0.0
    %558 = vmatprep.subr.mxu0 0.0
    %559 = vmatpush2.msra.mxu0 0.0
    %560 = vmatprep.subr.mxu0 0.0
    %561 = vmatpush2.msra.mxu0 0.0
    %562 = vmatprep.subr.mxu0 0.0
    %563 = vmatpush2.msra.mxu0 0.0
    %564 = vmatprep.subr.mxu0 0.0
    %565 = vmatpush2.msra.mxu0 0.0
    %566 = vmatprep.subr.mxu0 0.0
    %567 = vmatpush2.msra.mxu0 0.0
    %568 = vmatprep.subr.mxu0 0.0
    %569 = vmatpush2.msra.mxu0 0.0
    %570 = vmatprep.subr.mxu0 0.0
    %571 = vmatpush2.msra.mxu0 0.0
    %572 = vmatprep.subr.mxu0 0.0
    %573 = vmatpush2.msra.mxu0 0.0
    %574 = vmatprep.subr.mxu0 0.0
    %575 = vmatpush2.msra.mxu0 0.0
    %576 = vmatprep.subr.mxu0 0.0
    %577 = vmatpush2.msra.mxu0 0.0
    %578 = vmatprep.subr.mxu0 0.0
    %579 = vmatpush2.msra.mxu0 0.0
    %580 = vmatprep.subr.mxu0 0.0
    %581 = vmatpush2.msra.mxu0 0.0
    %582 = vmatprep.subr.mxu0 0.0
    %583 = vmatpush2.msra.mxu0 0.0
    %584 = vmatprep.subr.mxu0 0.0
    %585 = vmatpush2.msra.mxu0 0.0
    %586 = vmatprep.mubr.f32.mxu0 0.0
    %587 = vmatmul.mubr.f32.gmra.mxu0 %v118
    %v588 = vpop.f32.mrf.mxu0
    %v589 = vadd.f32 %v275, %v588
    %v590 = vpop.f32.mrf.mxu0
    %v591 = vadd.f32 %v279, %v590
    %592 = vmatprep.mubr.f32.mxu0 0.0
    %593 = vmatmul.mubr.f32.gmra.mxu0 %v119
    %v594 = vpop.f32.mrf.mxu0
    %v595 = vadd.f32 %v275, %v594
    %v596 = vpop.f32.mrf.mxu0
    %v597 = vadd.f32 %v279, %v596
    %598 = vmatprep.mubr.f32.mxu0 0.0
    %599 = vmatmul.mubr.f32.gmra.mxu0 %v120
    %v600 = vpop.f32.mrf.mxu0
    %v601 = vadd.f32 %v275, %v600
    %v602 = vpop.f32.mrf.mxu0
    %v603 = vadd.f32 %v279, %v602
    %604 = vmatprep.mubr.f32.mxu0 0.0
    %605 = vmatmul.mubr.f32.gmra.mxu0 %v121
    %v606 = vpop.f32.mrf.mxu0
    %v607 = vadd.f32 %v275, %v606
    %v608 = vpop.f32.mrf.mxu0
    %v609 = vadd.f32 %v279, %v608
    %610 = vmatprep.mubr.f32.mxu0 0.0
    %611 = vmatmul.mubr.f32.gmra.mxu0 %v122
    %v612 = vpop.f32.mrf.mxu0
    %v613 = vadd.f32 %v275, %v612
    %v614 = vpop.f32.mrf.mxu0
    %v615 = vadd.f32 %v279, %v614
    %616 = vmatprep.mubr.f32.mxu0 0.0
    %617 = vmatmul.mubr.f32.gmra.mxu0 %v123
    %v618 = vpop.f32.mrf.mxu0
    %v619 = vadd.f32 %v275, %v618
    %v620 = vpop.f32.mrf.mxu0
    %v621 = vadd.f32 %v279, %v620
    %622 = vmatprep.mubr.f32.mxu0 0.0
    %623 = vmatmul.mubr.f32.gmra.mxu0 %v124
    %v624 = vpop.f32.mrf.mxu0
    %v625 = vadd.f32 %v275, %v624
    %v626 = vpop.f32.mrf.mxu0
    %v627 = vadd.f32 %v279, %v626
    %628 = vmatprep.mubr.f32.mxu0 0.0
    %629 = vmatmul.mubr.f32.gmra.mxu0 %v125
    %v630 = vpop.f32.mrf.mxu0
    %v631 = vadd.f32 %v275, %v630
    %v632 = vpop.f32.mrf.mxu0
    %v633 = vadd.f32 %v279, %v632
    %634 = vdwg.mxu0
    %635 = vmatprep.subr.mxu0 %v253
    %636 = vmatpush1.msra.mxu0 %v252
    %637 = vmatprep.subr.mxu0 %v245
    %638 = vmatpush1.msra.mxu0 %v244
    %639 = vmatprep.subr.mxu0 %v237
    %640 = vmatpush1.msra.mxu0 %v236
    %641 = vmatprep.subr.mxu0 %v229
    %642 = vmatpush1.msra.mxu0 %v228
    %643 = vmatprep.subr.mxu0 %v221
    %644 = vmatpush1.msra.mxu0 %v220
    %645 = vmatprep.subr.mxu0 %v213
    %646 = vmatpush1.msra.mxu0 %v212
    %647 = vmatprep.subr.mxu0 %v205
    %648 = vmatpush1.msra.mxu0 %v204
    %649 = vmatprep.subr.mxu0 %v197
    %650 = vmatpush1.msra.mxu0 %v196
    %651 = vmatprep.subr.mxu0 %v189
    %652 = vmatpush1.msra.mxu0 %v188
    %653 = vmatprep.subr.mxu0 %v181
    %654 = vmatpush1.msra.mxu0 %v180
    %655 = vmatprep.subr.mxu0 %v173
    %656 = vmatpush1.msra.mxu0 %v172
    %657 = vmatprep.subr.mxu0 %v165
    %658 = vmatpush1.msra.mxu0 %v164
    %659 = vmatprep.subr.mxu0 %v157
    %660 = vmatpush1.msra.mxu0 %v156
    %661 = vmatprep.subr.mxu0 %v149
    %662 = vmatpush1.msra.mxu0 %v148
    %663 = vmatprep.subr.mxu0 %v141
    %664 = vmatpush1.msra.mxu0 %v140
    %665 = vmatprep.subr.mxu0 %v133
    %666 = vmatpush1.msra.mxu0 %v132
    %667 = vmatprep.subr.mxu0 0.0
    %668 = vmatpush2.msra.mxu0 0.0
    %669 = vmatprep.subr.mxu0 0.0
    %670 = vmatpush2.msra.mxu0 0.0
    %671 = vmatprep.subr.mxu0 0.0
    %672 = vmatpush2.msra.mxu0 0.0
    %673 = vmatprep.subr.mxu0 0.0
    %674 = vmatpush2.msra.mxu0 0.0
    %675 = vmatprep.subr.mxu0 0.0
    %676 = vmatpush2.msra.mxu0 0.0
    %677 = vmatprep.subr.mxu0 0.0
    %678 = vmatpush2.msra.mxu0 0.0
    %679 = vmatprep.subr.mxu0 0.0
    %680 = vmatpush2.msra.mxu0 0.0
    %681 = vmatprep.subr.mxu0 0.0
    %682 = vmatpush2.msra.mxu0 0.0
    %683 = vmatprep.subr.mxu0 0.0
    %684 = vmatpush2.msra.mxu0 0.0
    %685 = vmatprep.subr.mxu0 0.0
    %686 = vmatpush2.msra.mxu0 0.0
    %687 = vmatprep.subr.mxu0 0.0
    %688 = vmatpush2.msra.mxu0 0.0
    %689 = vmatprep.subr.mxu0 0.0
    %690 = vmatpush2.msra.mxu0 0.0
    %691 = vmatprep.subr.mxu0 0.0
    %692 = vmatpush2.msra.mxu0 0.0
    %693 = vmatprep.subr.mxu0 0.0
    %694 = vmatpush2.msra.mxu0 0.0
    %695 = vmatprep.subr.mxu0 0.0
    %696 = vmatpush2.msra.mxu0 0.0
    %697 = vmatprep.subr.mxu0 0.0
    %698 = vmatpush2.msra.mxu0 0.0
    %699 = vmatprep.mubr.f32.mxu0 0.0
    %700 = vmatmul.mubr.f32.gmra.mxu0 %v118
    %v701 = vpop.f32.mrf.mxu0
    %v702 = vadd.f32 %v283, %v701
    %v703 = vpop.f32.mrf.mxu0
    %v704 = vadd.f32 %v287, %v703
    %705 = vmatprep.mubr.f32.mxu0 0.0
    %706 = vmatmul.mubr.f32.gmra.mxu0 %v119
    %v707 = vpop.f32.mrf.mxu0
    %v708 = vadd.f32 %v283, %v707
    %v709 = vpop.f32.mrf.mxu0
    %v710 = vadd.f32 %v287, %v709
    %711 = vmatprep.mubr.f32.mxu0 0.0
    %712 = vmatmul.mubr.f32.gmra.mxu0 %v120
    %v713 = vpop.f32.mrf.mxu0
    %v714 = vadd.f32 %v283, %v713
    %v715 = vpop.f32.mrf.mxu0
    %v716 = vadd.f32 %v287, %v715
    %717 = vmatprep.mubr.f32.mxu0 0.0
    %718 = vmatmul.mubr.f32.gmra.mxu0 %v121
    %v719 = vpop.f32.mrf.mxu0
    %v720 = vadd.f32 %v283, %v719
    %v721 = vpop.f32.mrf.mxu0
    %v722 = vadd.f32 %v287, %v721
    %723 = vmatprep.mubr.f32.mxu0 0.0
    %724 = vmatmul.mubr.f32.gmra.mxu0 %v122
    %v725 = vpop.f32.mrf.mxu0
    %v726 = vadd.f32 %v283, %v725
    %v727 = vpop.f32.mrf.mxu0
    %v728 = vadd.f32 %v287, %v727
    %729 = vmatprep.mubr.f32.mxu0 0.0
    %730 = vmatmul.mubr.f32.gmra.mxu0 %v123
    %v731 = vpop.f32.mrf.mxu0
    %v732 = vadd.f32 %v283, %v731
    %v733 = vpop.f32.mrf.mxu0
    %v734 = vadd.f32 %v287, %v733
    %735 = vmatprep.mubr.f32.mxu0 0.0
    %736 = vmatmul.mubr.f32.gmra.mxu0 %v124
    %v737 = vpop.f32.mrf.mxu0
    %v738 = vadd.f32 %v283, %v737
    %v739 = vpop.f32.mrf.mxu0
    %v740 = vadd.f32 %v287, %v739
    %741 = vmatprep.mubr.f32.mxu0 0.0
    %742 = vmatmul.mubr.f32.gmra.mxu0 %v125
    %v743 = vpop.f32.mrf.mxu0
    %v744 = vadd.f32 %v283, %v743
    %v745 = vpop.f32.mrf.mxu0
    %v746 = vadd.f32 %v287, %v745
    %747 = vdwg.mxu0
    %748 = vst [vmem:[#allocation2] sm:$0xff] %v363
    %749 = vst [vmem:[#allocation2 + $0x8] sm:$0xff] %v365
    %750 = vst [vmem:[#allocation2 + $0x10] sm:$0xff] %v476
    %751 = vst [vmem:[#allocation2 + $0x18] sm:$0xff] %v478
    %752 = vst [vmem:[#allocation2 + $0x20] sm:$0xff] %v369
    %753 = vst [vmem:[#allocation2 + $0x28] sm:$0xff] %v371
    %754 = vst [vmem:[#allocation2 + $0x30] sm:$0xff] %v482
    %755 = vst [vmem:[#allocation2 + $0x38] sm:$0xff] %v484
    %756 = vst [vmem:[#allocation2 + $0x40] sm:$0xff] %v375
    %757 = vst [vmem:[#allocation2 + $0x48] sm:$0xff] %v377
    %758 = vst [vmem:[#allocation2 + $0x50] sm:$0xff] %v488
    %759 = vst [vmem:[#allocation2 + $0x58] sm:$0xff] %v490
    %760 = vst [vmem:[#allocation2 + $0x60] sm:$0xff] %v381
    %761 = vst [vmem:[#allocation2 + $0x68] sm:$0xff] %v383
    %762 = vst [vmem:[#allocation2 + $0x70] sm:$0xff] %v494
    %763 = vst [vmem:[#allocation2 + $0x78] sm:$0xff] %v496
    %764 = vst [vmem:[#allocation2 + $0x80] sm:$0xff] %v387
    %765 = vst [vmem:[#allocation2 + $0x88] sm:$0xff] %v389
    %766 = vst [vmem:[#allocation2 + $0x90] sm:$0xff] %v500
    %767 = vst [vmem:[#allocation2 + $0x98] sm:$0xff] %v502
    %768 = vst [vmem:[#allocation2 + $0xa0] sm:$0xff] %v393
    %769 = vst [vmem:[#allocation2 + $0xa8] sm:$0xff] %v395
    %770 = vst [vmem:[#allocation2 + $0xb0] sm:$0xff] %v506
    %771 = vst [vmem:[#allocation2 + $0xb8] sm:$0xff] %v508
    %772 = vst [vmem:[#allocation2 + $0xc0] sm:$0xff] %v399
    %773 = vst [vmem:[#allocation2 + $0xc8] sm:$0xff] %v401
    %774 = vst [vmem:[#allocation2 + $0xd0] sm:$0xff] %v512
    %775 = vst [vmem:[#allocation2 + $0xd8] sm:$0xff] %v514
    %776 = vst [vmem:[#allocation2 + $0xe0] sm:$0xff] %v405
    %777 = vst [vmem:[#allocation2 + $0xe8] sm:$0xff] %v407
    %778 = vst [vmem:[#allocation2 + $0xf0] sm:$0xff] %v518
    %779 = vst [vmem:[#allocation2 + $0xf8] sm:$0xff] %v520
    %780 = vst [vmem:[#allocation3] sm:$0xff] %v589
    %781 = vst [vmem:[#allocation3 + $0x8] sm:$0xff] %v591
    %782 = vst [vmem:[#allocation3 + $0x10] sm:$0xff] %v702
    %783 = vst [vmem:[#allocation3 + $0x18] sm:$0xff] %v704
    %784 = vst [vmem:[#allocation3 + $0x20] sm:$0xff] %v595
    %785 = vst [vmem:[#allocation3 + $0x28] sm:$0xff] %v597
    %786 = vst [vmem:[#allocation3 + $0x30] sm:$0xff] %v708
    %787 = vst [vmem:[#allocation3 + $0x38] sm:$0xff] %v710
    %788 = vst [vmem:[#allocation3 + $0x40] sm:$0xff] %v601
    %789 = vst [vmem:[#allocation3 + $0x48] sm:$0xff] %v603
    %790 = vst [vmem:[#allocation3 + $0x50] sm:$0xff] %v714
    %791 = vst [vmem:[#allocation3 + $0x58] sm:$0xff] %v716
    %792 = vst [vmem:[#allocation3 + $0x60] sm:$0xff] %v607
    %793 = vst [vmem:[#allocation3 + $0x68] sm:$0xff] %v609
    %794 = vst [vmem:[#allocation3 + $0x70] sm:$0xff] %v720
    %795 = vst [vmem:[#allocation3 + $0x78] sm:$0xff] %v722
    %796 = vst [vmem:[#allocation3 + $0x80] sm:$0xff] %v613
    %797 = vst [vmem:[#allocation3 + $0x88] sm:$0xff] %v615
    %798 = vst [vmem:[#allocation3 + $0x90] sm:$0xff] %v726
    %799 = vst [vmem:[#allocation3 + $0x98] sm:$0xff] %v728
    %800 = vst [vmem:[#allocation3 + $0xa0] sm:$0xff] %v619
    %801 = vst [vmem:[#allocation3 + $0xa8] sm:$0xff] %v621
    %802 = vst [vmem:[#allocation3 + $0xb0] sm:$0xff] %v732
    %803 = vst [vmem:[#allocation3 + $0xb8] sm:$0xff] %v734
    %804 = vst [vmem:[#allocation3 + $0xc0] sm:$0xff] %v625
    %805 = vst [vmem:[#allocation3 + $0xc8] sm:$0xff] %v627
    %806 = vst [vmem:[#allocation3 + $0xd0] sm:$0xff] %v738
    %807 = vst [vmem:[#allocation3 + $0xd8] sm:$0xff] %v740
    %808 = vst [vmem:[#allocation3 + $0xe0] sm:$0xff] %v631
    %809 = vst [vmem:[#allocation3 + $0xe8] sm:$0xff] %v633
    %810 = vst [vmem:[#allocation3 + $0xf0] sm:$0xff] %v744
    %811 = vst [vmem:[#allocation3 + $0xf8] sm:$0xff] %v746
    %v812 = vld [vmem:[#allocation8] sm:$0xff]
    %v813 = vld [vmem:[#allocation8 + $0x8] sm:$0xff]
    %v814 = vld [vmem:[#allocation8 + $0x10] sm:$0xff]
    %v815 = vld [vmem:[#allocation8 + $0x18] sm:$0xff]
    %v816 = vld [vmem:[#allocation8 + $0x20] sm:$0xff]
    %v817 = vld [vmem:[#allocation8 + $0x28] sm:$0xff]
    %v818 = vld [vmem:[#allocation8 + $0x30] sm:$0xff]
    %v819 = vld [vmem:[#allocation8 + $0x38] sm:$0xff]
    %v820 = vld [vmem:[#allocation8 + $0x40] sm:$0xff]
    %v821 = vld [vmem:[#allocation8 + $0x48] sm:$0xff]
    %v822 = vld [vmem:[#allocation8 + $0x50] sm:$0xff]
    %v823 = vld [vmem:[#allocation8 + $0x58] sm:$0xff]
    %v824 = vld [vmem:[#allocation8 + $0x60] sm:$0xff]
    %v825 = vld [vmem:[#allocation8 + $0x68] sm:$0xff]
    %v826 = vld [vmem:[#allocation8 + $0x70] sm:$0xff]
    %v827 = vld [vmem:[#allocation8 + $0x78] sm:$0xff]
    %v828 = vld [vmem:[#allocation8 + $0x80] sm:$0xff]
    %v829 = vld [vmem:[#allocation8 + $0x88] sm:$0xff]
    %v830 = vld [vmem:[#allocation8 + $0x90] sm:$0xff]
    %v831 = vld [vmem:[#allocation8 + $0x98] sm:$0xff]
    %v832 = vld [vmem:[#allocation8 + $0xa0] sm:$0xff]
    %v833 = vld [vmem:[#allocation8 + $0xa8] sm:$0xff]
    %v834 = vld [vmem:[#allocation8 + $0xb0] sm:$0xff]
    %v835 = vld [vmem:[#allocation8 + $0xb8] sm:$0xff]
    %v836 = vld [vmem:[#allocation8 + $0xc0] sm:$0xff]
    %v837 = vld [vmem:[#allocation8 + $0xc8] sm:$0xff]
    %v838 = vld [vmem:[#allocation8 + $0xd0] sm:$0xff]
    %v839 = vld [vmem:[#allocation8 + $0xd8] sm:$0xff]
    %v840 = vld [vmem:[#allocation8 + $0xe0] sm:$0xff]
    %v841 = vld [vmem:[#allocation8 + $0xe8] sm:$0xff]
    %v842 = vld [vmem:[#allocation8 + $0xf0] sm:$0xff]
    %v843 = vld [vmem:[#allocation8 + $0xf8] sm:$0xff]
    %v844 = vld [vmem:[#allocation8 + $0x100] sm:$0xff]
    %v845 = vld [vmem:[#allocation8 + $0x108] sm:$0xff]
    %v846 = vld [vmem:[#allocation8 + $0x110] sm:$0xff]
    %v847 = vld [vmem:[#allocation8 + $0x118] sm:$0xff]
    %v848 = vld [vmem:[#allocation8 + $0x120] sm:$0xff]
    %v849 = vld [vmem:[#allocation8 + $0x128] sm:$0xff]
    %v850 = vld [vmem:[#allocation8 + $0x130] sm:$0xff]
    %v851 = vld [vmem:[#allocation8 + $0x138] sm:$0xff]
    %v852 = vld [vmem:[#allocation8 + $0x140] sm:$0xff]
    %v853 = vld [vmem:[#allocation8 + $0x148] sm:$0xff]
    %v854 = vld [vmem:[#allocation8 + $0x150] sm:$0xff]
    %v855 = vld [vmem:[#allocation8 + $0x158] sm:$0xff]
    %v856 = vld [vmem:[#allocation8 + $0x160] sm:$0xff]
    %v857 = vld [vmem:[#allocation8 + $0x168] sm:$0xff]
    %v858 = vld [vmem:[#allocation8 + $0x170] sm:$0xff]
    %v859 = vld [vmem:[#allocation8 + $0x178] sm:$0xff]
    %v860 = vld [vmem:[#allocation8 + $0x180] sm:$0xff]
    %v861 = vld [vmem:[#allocation8 + $0x188] sm:$0xff]
    %v862 = vld [vmem:[#allocation8 + $0x190] sm:$0xff]
    %v863 = vld [vmem:[#allocation8 + $0x198] sm:$0xff]
    %v864 = vld [vmem:[#allocation8 + $0x1a0] sm:$0xff]
    %v865 = vld [vmem:[#allocation8 + $0x1a8] sm:$0xff]
    %v866 = vld [vmem:[#allocation8 + $0x1b0] sm:$0xff]
    %v867 = vld [vmem:[#allocation8 + $0x1b8] sm:$0xff]
    %v868 = vld [vmem:[#allocation8 + $0x1c0] sm:$0xff]
    %v869 = vld [vmem:[#allocation8 + $0x1c8] sm:$0xff]
    %v870 = vld [vmem:[#allocation8 + $0x1d0] sm:$0xff]
    %v871 = vld [vmem:[#allocation8 + $0x1d8] sm:$0xff]
    %v872 = vld [vmem:[#allocation8 + $0x1e0] sm:$0xff]
    %v873 = vld [vmem:[#allocation8 + $0x1e8] sm:$0xff]
    %v874 = vld [vmem:[#allocation8 + $0x1f0] sm:$0xff]
    %v875 = vld [vmem:[#allocation8 + $0x1f8] sm:$0xff]
    %v876 = vld [vmem:[#allocation10] sm:$0xff]
    %v877 = vld [vmem:[#allocation10 + $0x8] sm:$0xff]
    %v878 = vld [vmem:[#allocation10 + $0x10] sm:$0xff]
    %v879 = vld [vmem:[#allocation10 + $0x18] sm:$0xff]
    %v880 = vld [vmem:[#allocation10 + $0x20] sm:$0xff]
    %v881 = vld [vmem:[#allocation10 + $0x28] sm:$0xff]
    %v882 = vld [vmem:[#allocation10 + $0x30] sm:$0xff]
    %v883 = vld [vmem:[#allocation10 + $0x38] sm:$0xff]
    %v884 = vld [vmem:[#allocation10 + $0x40] sm:$0xff]
    %v885 = vld [vmem:[#allocation10 + $0x48] sm:$0xff]
    %v886 = vld [vmem:[#allocation10 + $0x50] sm:$0xff]
    %v887 = vld [vmem:[#allocation10 + $0x58] sm:$0xff]
    %v888 = vld [vmem:[#allocation10 + $0x60] sm:$0xff]
    %v889 = vld [vmem:[#allocation10 + $0x68] sm:$0xff]
    %v890 = vld [vmem:[#allocation10 + $0x70] sm:$0xff]
    %v891 = vld [vmem:[#allocation10 + $0x78] sm:$0xff]
    %v892 = vld [vmem:[#allocation10 + $0x80] sm:$0xff]
    %v893 = vld [vmem:[#allocation10 + $0x88] sm:$0xff]
    %v894 = vld [vmem:[#allocation10 + $0x90] sm:$0xff]
    %v895 = vld [vmem:[#allocation10 + $0x98] sm:$0xff]
    %v896 = vld [vmem:[#allocation10 + $0xa0] sm:$0xff]
    %v897 = vld [vmem:[#allocation10 + $0xa8] sm:$0xff]
    %v898 = vld [vmem:[#allocation10 + $0xb0] sm:$0xff]
    %v899 = vld [vmem:[#allocation10 + $0xb8] sm:$0xff]
    %v900 = vld [vmem:[#allocation10 + $0xc0] sm:$0xff]
    %v901 = vld [vmem:[#allocation10 + $0xc8] sm:$0xff]
    %v902 = vld [vmem:[#allocation10 + $0xd0] sm:$0xff]
    %v903 = vld [vmem:[#allocation10 + $0xd8] sm:$0xff]
    %v904 = vld [vmem:[#allocation10 + $0xe0] sm:$0xff]
    %v905 = vld [vmem:[#allocation10 + $0xe8] sm:$0xff]
    %v906 = vld [vmem:[#allocation10 + $0xf0] sm:$0xff]
    %v907 = vld [vmem:[#allocation10 + $0xf8] sm:$0xff]
    %v908 = vld [vmem:[#allocation10 + $0x100] sm:$0xff]
    %v909 = vld [vmem:[#allocation10 + $0x108] sm:$0xff]
    %v910 = vld [vmem:[#allocation10 + $0x110] sm:$0xff]
    %v911 = vld [vmem:[#allocation10 + $0x118] sm:$0xff]
    %v912 = vld [vmem:[#allocation10 + $0x120] sm:$0xff]
    %v913 = vld [vmem:[#allocation10 + $0x128] sm:$0xff]
    %v914 = vld [vmem:[#allocation10 + $0x130] sm:$0xff]
    %v915 = vld [vmem:[#allocation10 + $0x138] sm:$0xff]
    %v916 = vld [vmem:[#allocation10 + $0x140] sm:$0xff]
    %v917 = vld [vmem:[#allocation10 + $0x148] sm:$0xff]
    %v918 = vld [vmem:[#allocation10 + $0x150] sm:$0xff]
    %v919 = vld [vmem:[#allocation10 + $0x158] sm:$0xff]
    %v920 = vld [vmem:[#allocation10 + $0x160] sm:$0xff]
    %v921 = vld [vmem:[#allocation10 + $0x168] sm:$0xff]
    %v922 = vld [vmem:[#allocation10 + $0x170] sm:$0xff]
    %v923 = vld [vmem:[#allocation10 + $0x178] sm:$0xff]
    %v924 = vld [vmem:[#allocation10 + $0x180] sm:$0xff]
    %v925 = vld [vmem:[#allocation10 + $0x188] sm:$0xff]
    %v926 = vld [vmem:[#allocation10 + $0x190] sm:$0xff]
    %v927 = vld [vmem:[#allocation10 + $0x198] sm:$0xff]
    %v928 = vld [vmem:[#allocation10 + $0x1a0] sm:$0xff]
    %v929 = vld [vmem:[#allocation10 + $0x1a8] sm:$0xff]
    %v930 = vld [vmem:[#allocation10 + $0x1b0] sm:$0xff]
    %v931 = vld [vmem:[#allocation10 + $0x1b8] sm:$0xff]
    %v932 = vld [vmem:[#allocation10 + $0x1c0] sm:$0xff]
    %v933 = vld [vmem:[#allocation10 + $0x1c8] sm:$0xff]
    %v934 = vld [vmem:[#allocation10 + $0x1d0] sm:$0xff]
    %v935 = vld [vmem:[#allocation10 + $0x1d8] sm:$0xff]
    %v936 = vld [vmem:[#allocation10 + $0x1e0] sm:$0xff]
    %v937 = vld [vmem:[#allocation10 + $0x1e8] sm:$0xff]
    %v938 = vld [vmem:[#allocation10 + $0x1f0] sm:$0xff]
    %v939 = vld [vmem:[#allocation10 + $0x1f8] sm:$0xff]
    %v940 = vld [vmem:[#allocation2] sm:$0xff]
    %v941 = vld [vmem:[#allocation2 + $0x8] sm:$0xff]
    %v942 = vld [vmem:[#allocation2 + $0x10] sm:$0xff]
    %v943 = vld [vmem:[#allocation2 + $0x18] sm:$0xff]
    %944 = vmatprep.subr.mxu0 %v873
    %945 = vmatpush1.msra.mxu0 %v872
    %946 = vmatprep.subr.mxu0 %v869
    %947 = vmatpush1.msra.mxu0 %v868
    %948 = vmatprep.subr.mxu0 %v865
    %949 = vmatpush1.msra.mxu0 %v864
    %950 = vmatprep.subr.mxu0 %v861
    %951 = vmatpush1.msra.mxu0 %v860
    %952 = vmatprep.subr.mxu0 %v857
    %953 = vmatpush1.msra.mxu0 %v856
    %954 = vmatprep.subr.mxu0 %v853
    %955 = vmatpush1.msra.mxu0 %v852
    %956 = vmatprep.subr.mxu0 %v849
    %957 = vmatpush1.msra.mxu0 %v848
    %958 = vmatprep.subr.mxu0 %v845
    %959 = vmatpush1.msra.mxu0 %v844
    %960 = vmatprep.subr.mxu0 %v841
    %961 = vmatpush1.msra.mxu0 %v840
    %962 = vmatprep.subr.mxu0 %v837
    %963 = vmatpush1.msra.mxu0 %v836
    %964 = vmatprep.subr.mxu0 %v833
    %965 = vmatpush1.msra.mxu0 %v832
    %966 = vmatprep.subr.mxu0 %v829
    %967 = vmatpush1.msra.mxu0 %v828
    %968 = vmatprep.subr.mxu0 %v825
    %969 = vmatpush1.msra.mxu0 %v824
    %970 = vmatprep.subr.mxu0 %v821
    %971 = vmatpush1.msra.mxu0 %v820
    %972 = vmatprep.subr.mxu0 %v817
    %973 = vmatpush1.msra.mxu0 %v816
    %974 = vmatprep.subr.mxu0 %v813
    %975 = vmatpush1.msra.mxu0 %v812
    %976 = vmatprep.subr.mxu0 0.0
    %977 = vmatpush2.msra.mxu0 0.0
    %978 = vmatprep.subr.mxu0 0.0
    %979 = vmatpush2.msra.mxu0 0.0
    %980 = vmatprep.subr.mxu0 0.0
    %981 = vmatpush2.msra.mxu0 0.0
    %982 = vmatprep.subr.mxu0 0.0
    %983 = vmatpush2.msra.mxu0 0.0
    %984 = vmatprep.subr.mxu0 0.0
    %985 = vmatpush2.msra.mxu0 0.0
    %986 = vmatprep.subr.mxu0 0.0
    %987 = vmatpush2.msra.mxu0 0.0
    %988 = vmatprep.subr.mxu0 0.0
    %989 = vmatpush2.msra.mxu0 0.0
    %990 = vmatprep.subr.mxu0 0.0
    %991 = vmatpush2.msra.mxu0 0.0
    %992 = vmatprep.subr.mxu0 0.0
    %993 = vmatpush2.msra.mxu0 0.0
    %994 = vmatprep.subr.mxu0 0.0
    %995 = vmatpush2.msra.mxu0 0.0
    %996 = vmatprep.subr.mxu0 0.0
    %997 = vmatpush2.msra.mxu0 0.0
    %998 = vmatprep.subr.mxu0 0.0
    %999 = vmatpush2.msra.mxu0 0.0
    %1000 = vmatprep.subr.mxu0 0.0
    %1001 = vmatpush2.msra.mxu0 0.0
    %1002 = vmatprep.subr.mxu0 0.0
    %1003 = vmatpush2.msra.mxu0 0.0
    %1004 = vmatprep.subr.mxu0 0.0
    %1005 = vmatpush2.msra.mxu0 0.0
    %1006 = vmatprep.subr.mxu0 0.0
    %1007 = vmatpush2.msra.mxu0 0.0
    %1008 = vmatprep.mubr.f32.mxu0 0.0
    %1009 = vmatmul.mubr.f32.gmra.mxu0 0.0
    %v1010 = vpop.f32.mrf.mxu0
    %v1011 = vadd.f32 0.0, %v1010
    %v1012 = vpop.f32.mrf.mxu0
    %v1013 = vadd.f32 0.0, %v1012
    %1014 = vdwg.mxu0
    %1015 = vmatprep.subr.mxu0 %v875
    %1016 = vmatpush1.msra.mxu0 %v874
    %1017 = vmatprep.subr.mxu0 %v871
    %1018 = vmatpush1.msra.mxu0 %v870
    %1019 = vmatprep.subr.mxu0 %v867
    %1020 = vmatpush1.msra.mxu0 %v866
    %1021 = vmatprep.subr.mxu0 %v863
    %1022 = vmatpush1.msra.mxu0 %v862
    %1023 = vmatprep.subr.mxu0 %v859
    %1024 = vmatpush1.msra.mxu0 %v858
    %1025 = vmatprep.subr.mxu0 %v855
    %1026 = vmatpush1.msra.mxu0 %v854
    %1027 = vmatprep.subr.mxu0 %v851
    %1028 = vmatpush1.msra.mxu0 %v850
    %1029 = vmatprep.subr.mxu0 %v847
    %1030 = vmatpush1.msra.mxu0 %v846
    %1031 = vmatprep.subr.mxu0 %v843
    %1032 = vmatpush1.msra.mxu0 %v842
    %1033 = vmatprep.subr.mxu0 %v839
    %1034 = vmatpush1.msra.mxu0 %v838
    %1035 = vmatprep.subr.mxu0 %v835
    %1036 = vmatpush1.msra.mxu0 %v834
    %1037 = vmatprep.subr.mxu0 %v831
    %1038 = vmatpush1.msra.mxu0 %v830
    %1039 = vmatprep.subr.mxu0 %v827
    %1040 = vmatpush1.msra.mxu0 %v826
    %1041 = vmatprep.subr.mxu0 %v823
    %1042 = vmatpush1.msra.mxu0 %v822
    %1043 = vmatprep.subr.mxu0 %v819
    %1044 = vmatpush1.msra.mxu0 %v818
    %1045 = vmatprep.subr.mxu0 %v815
    %1046 = vmatpush1.msra.mxu0 %v814
    %1047 = vmatprep.subr.mxu0 0.0
    %1048 = vmatpush2.msra.mxu0 0.0
    %1049 = vmatprep.subr.mxu0 0.0
    %1050 = vmatpush2.msra.mxu0 0.0
    %1051 = vmatprep.subr.mxu0 0.0
    %1052 = vmatpush2.msra.mxu0 0.0
    %1053 = vmatprep.subr.mxu0 0.0
    %1054 = vmatpush2.msra.mxu0 0.0
    %1055 = vmatprep.subr.mxu0 0.0
    %1056 = vmatpush2.msra.mxu0 0.0
    %1057 = vmatprep.subr.mxu0 0.0
    %1058 = vmatpush2.msra.mxu0 0.0
    %1059 = vmatprep.subr.mxu0 0.0
    %1060 = vmatpush2.msra.mxu0 0.0
    %1061 = vmatprep.subr.mxu0 0.0
    %1062 = vmatpush2.msra.mxu0 0.0
    %1063 = vmatprep.subr.mxu0 0.0
    %1064 = vmatpush2.msra.mxu0 0.0
    %1065 = vmatprep.subr.mxu0 0.0
    %1066 = vmatpush2.msra.mxu0 0.0
    %1067 = vmatprep.subr.mxu0 0.0
    %1068 = vmatpush2.msra.mxu0 0.0
    %1069 = vmatprep.subr.mxu0 0.0
    %1070 = vmatpush2.msra.mxu0 0.0
    %1071 = vmatprep.subr.mxu0 0.0
    %1072 = vmatpush2.msra.mxu0 0.0
    %1073 = vmatprep.subr.mxu0 0.0
    %1074 = vmatpush2.msra.mxu0 0.0
    %1075 = vmatprep.subr.mxu0 0.0
    %1076 = vmatpush2.msra.mxu0 0.0
    %1077 = vmatprep.subr.mxu0 0.0
    %1078 = vmatpush2.msra.mxu0 0.0
    %1079 = vmatprep.mubr.f32.mxu0 0.0
    %1080 = vmatmul.mubr.f32.gmra.mxu0 0.0
    %v1081 = vpop.f32.mrf.mxu0
    %v1082 = vadd.f32 0.0, %v1081
    %v1083 = vpop.f32.mrf.mxu0
    %v1084 = vadd.f32 0.0, %v1083
    %1085 = vdwg.mxu0
    %v1086 = vadd.f32 %v940, %v1011
    %v1087 = vadd.f32 %v941, %v1013
    %v1088 = vadd.f32 %v942, %v1082
    %v1089 = vadd.f32 %v943, %v1084
    %v1090 = vxor.u32 %v1086, 2147483648
    %v1091 = vmul.f32 %v1090, 1.442695
    %v1092 = vpow.pop %v1091
    %v1093 = vadd.f32 %v1092, 1.0
    %v1094 = vrcp.pop %v1093
    %v1095 = vmul.f32 1.0, %v1094
    %v1096 = vxor.u32 %v1087, 2147483648
    %v1097 = vmul.f32 %v1096, 1.442695
    %v1098 = vpow.pop %v1097
    %v1099 = vadd.f32 %v1098, 1.0
    %v1100 = vrcp.pop %v1099
    %v1101 = vmul.f32 1.0, %v1100
    %v1102 = vtanh.pop %v1088
    %v1103 = vxor.u32 %v1089, 2147483648
    %v1104 = vmul.f32 %v1103, 1.442695
    %v1105 = vpow.pop %v1104
    %v1106 = vadd.f32 %v1105, 1.0
    %v1107 = vrcp.pop %v1106
    %v1108 = vmul.f32 1.0, %v1107
    %v1109 = vmul.f32 %v1101, 0.0
    %v1110 = vmul.f32 %v1095, %v1102
    %v1111 = vadd.f32 %v1109, %v1110
    %v1112 = vtanh.pop %v1111
    %v1113 = vmul.f32 %v1108, %v1112
    %vm1114 = vcmp.gt.s32.totalorder %v117, 0
    %v1115 = vsel %vm1114, %v1113, 0.0
    %v1116 = vsel %vm1114, %v1111, 0.0
    %1117 = vst [vmem:[#allocation4] sm:$0xff] %v1115
    %s1118 = scalar_lea.vmem [#allocation3], 224
    %v1119 = vld [vmem:[%s1118] sm:$0xff]
    %v1120 = vld [vmem:[%s1118 + $0x8] sm:$0xff]
    %v1121 = vld [vmem:[%s1118 + $0x10] sm:$0xff]
    %v1122 = vld [vmem:[%s1118 + $0x18] sm:$0xff]
    %1123 = vmatprep.subr.mxu0 %v937
    %1124 = vmatpush1.msra.mxu0 %v936
    %1125 = vmatprep.subr.mxu0 %v933
    %1126 = vmatpush1.msra.mxu0 %v932
    %1127 = vmatprep.subr.mxu0 %v929
    %1128 = vmatpush1.msra.mxu0 %v928
    %1129 = vmatprep.subr.mxu0 %v925
    %1130 = vmatpush1.msra.mxu0 %v924
    %1131 = vmatprep.subr.mxu0 %v921
    %1132 = vmatpush1.msra.mxu0 %v920
    %1133 = vmatprep.subr.mxu0 %v917
    %1134 = vmatpush1.msra.mxu0 %v916
    %1135 = vmatprep.subr.mxu0 %v913
    %1136 = vmatpush1.msra.mxu0 %v912
    %1137 = vmatprep.subr.mxu0 %v909
    %1138 = vmatpush1.msra.mxu0 %v908
    %1139 = vmatprep.subr.mxu0 %v905
    %1140 = vmatpush1.msra.mxu0 %v904
    %1141 = vmatprep.subr.mxu0 %v901
    %1142 = vmatpush1.msra.mxu0 %v900
    %1143 = vmatprep.subr.mxu0 %v897
    %1144 = vmatpush1.msra.mxu0 %v896
    %1145 = vmatprep.subr.mxu0 %v893
    %1146 = vmatpush1.msra.mxu0 %v892
    %1147 = vmatprep.subr.mxu0 %v889
    %1148 = vmatpush1.msra.mxu0 %v888
    %1149 = vmatprep.subr.mxu0 %v885
    %1150 = vmatpush1.msra.mxu0 %v884
    %1151 = vmatprep.subr.mxu0 %v881
    %1152 = vmatpush1.msra.mxu0 %v880
    %1153 = vmatprep.subr.mxu0 %v877
    %1154 = vmatpush1.msra.mxu0 %v876
    %1155 = vmatprep.subr.mxu0 0.0
    %1156 = vmatpush2.msra.mxu0 0.0
    %1157 = vmatprep.subr.mxu0 0.0
    %1158 = vmatpush2.msra.mxu0 0.0
    %1159 = vmatprep.subr.mxu0 0.0
    %1160 = vmatpush2.msra.mxu0 0.0
    %1161 = vmatprep.subr.mxu0 0.0
    %1162 = vmatpush2.msra.mxu0 0.0
    %1163 = vmatprep.subr.mxu0 0.0
    %1164 = vmatpush2.msra.mxu0 0.0
    %1165 = vmatprep.subr.mxu0 0.0
    %1166 = vmatpush2.msra.mxu0 0.0
    %1167 = vmatprep.subr.mxu0 0.0
    %1168 = vmatpush2.msra.mxu0 0.0
    %1169 = vmatprep.subr.mxu0 0.0
    %1170 = vmatpush2.msra.mxu0 0.0
    %1171 = vmatprep.subr.mxu0 0.0
    %1172 = vmatpush2.msra.mxu0 0.0
    %1173 = vmatprep.subr.mxu0 0.0
    %1174 = vmatpush2.msra.mxu0 0.0
    %1175 = vmatprep.subr.mxu0 0.0
    %1176 = vmatpush2.msra.mxu0 0.0
    %1177 = vmatprep.subr.mxu0 0.0
    %1178 = vmatpush2.msra.mxu0 0.0
    %1179 = vmatprep.subr.mxu0 0.0
    %1180 = vmatpush2.msra.mxu0 0.0
    %1181 = vmatprep.subr.mxu0 0.0
    %1182 = vmatpush2.msra.mxu0 0.0
    %1183 = vmatprep.subr.mxu0 0.0
    %1184 = vmatpush2.msra.mxu0 0.0
    %1185 = vmatprep.subr.mxu0 0.0
    %1186 = vmatpush2.msra.mxu0 0.0
    %1187 = vmatprep.mubr.f32.mxu0 0.0
    %1188 = vmatmul.mubr.f32.gmra.mxu0 0.0
    %v1189 = vpop.f32.mrf.mxu0
    %v1190 = vadd.f32 0.0, %v1189
    %v1191 = vpop.f32.mrf.mxu0
    %v1192 = vadd.f32 0.0, %v1191
    %1193 = vdwg.mxu0
    %1194 = vmatprep.subr.mxu0 %v939
    %1195 = vmatpush1.msra.mxu0 %v938
    %1196 = vmatprep.subr.mxu0 %v935
    %1197 = vmatpush1.msra.mxu0 %v934
    %1198 = vmatprep.subr.mxu0 %v931
    %1199 = vmatpush1.msra.mxu0 %v930
    %1200 = vmatprep.subr.mxu0 %v927
    %1201 = vmatpush1.msra.mxu0 %v926
    %1202 = vmatprep.subr.mxu0 %v923
    %1203 = vmatpush1.msra.mxu0 %v922
    %1204 = vmatprep.subr.mxu0 %v919
    %1205 = vmatpush1.msra.mxu0 %v918
    %1206 = vmatprep.subr.mxu0 %v915
    %1207 = vmatpush1.msra.mxu0 %v914
    %1208 = vmatprep.subr.mxu0 %v911
    %1209 = vmatpush1.msra.mxu0 %v910
    %1210 = vmatprep.subr.mxu0 %v907
    %1211 = vmatpush1.msra.mxu0 %v906
    %1212 = vmatprep.subr.mxu0 %v903
    %1213 = vmatpush1.msra.mxu0 %v902
    %1214 = vmatprep.subr.mxu0 %v899
    %1215 = vmatpush1.msra.mxu0 %v898
    %1216 = vmatprep.subr.mxu0 %v895
    %1217 = vmatpush1.msra.mxu0 %v894
    %1218 = vmatprep.subr.mxu0 %v891
    %1219 = vmatpush1.msra.mxu0 %v890
    %1220 = vmatprep.subr.mxu0 %v887
    %1221 = vmatpush1.msra.mxu0 %v886
    %1222 = vmatprep.subr.mxu0 %v883
    %1223 = vmatpush1.msra.mxu0 %v882
    %1224 = vmatprep.subr.mxu0 %v879
    %1225 = vmatpush1.msra.mxu0 %v878
    %1226 = vmatprep.subr.mxu0 0.0
    %1227 = vmatpush2.msra.mxu0 0.0
    %1228 = vmatprep.subr.mxu0 0.0
    %1229 = vmatpush2.msra.mxu0 0.0
    %1230 = vmatprep.subr.mxu0 0.0
    %1231 = vmatpush2.msra.mxu0 0.0
    %1232 = vmatprep.subr.mxu0 0.0
    %1233 = vmatpush2.msra.mxu0 0.0
    %1234 = vmatprep.subr.mxu0 0.0
    %1235 = vmatpush2.msra.mxu0 0.0
    %1236 = vmatprep.subr.mxu0 0.0
    %1237 = vmatpush2.msra.mxu0 0.0
    %1238 = vmatprep.subr.mxu0 0.0
    %1239 = vmatpush2.msra.mxu0 0.0
    %1240 = vmatprep.subr.mxu0 0.0
    %1241 = vmatpush2.msra.mxu0 0.0
    %1242 = vmatprep.subr.mxu0 0.0
    %1243 = vmatpush2.msra.mxu0 0.0
    %1244 = vmatprep.subr.mxu0 0.0
    %1245 = vmatpush2.msra.mxu0 0.0
    %1246 = vmatprep.subr.mxu0 0.0
    %1247 = vmatpush2.msra.mxu0 0.0
    %1248 = vmatprep.subr.mxu0 0.0
    %1249 = vmatpush2.msra.mxu0 0.0
    %1250 = vmatprep.subr.mxu0 0.0
    %1251 = vmatpush2.msra.mxu0 0.0
    %1252 = vmatprep.subr.mxu0 0.0
    %1253 = vmatpush2.msra.mxu0 0.0
    %1254 = vmatprep.subr.mxu0 0.0
    %1255 = vmatpush2.msra.mxu0 0.0
    %1256 = vmatprep.subr.mxu0 0.0
    %1257 = vmatpush2.msra.mxu0 0.0
    %1258 = vmatprep.mubr.f32.mxu0 0.0
    %1259 = vmatmul.mubr.f32.gmra.mxu0 0.0
    %v1260 = vpop.f32.mrf.mxu0
    %v1261 = vadd.f32 0.0, %v1260
    %v1262 = vpop.f32.mrf.mxu0
    %v1263 = vadd.f32 0.0, %v1262
    %1264 = vdwg.mxu0
    %v1265 = vadd.f32 %v1119, %v1190
    %v1266 = vadd.f32 %v1120, %v1192
    %v1267 = vadd.f32 %v1121, %v1261
    %v1268 = vadd.f32 %v1122, %v1263
    %v1269 = vxor.u32 %v1265, 2147483648
    %v1270 = vmul.f32 %v1269, 1.442695
    %v1271 = vpow.pop %v1270
    %v1272 = vadd.f32 %v1271, 1.0
    %v1273 = vrcp.pop %v1272
    %v1274 = vmul.f32 1.0, %v1273
    %v1275 = vxor.u32 %v1266, 2147483648
    %v1276 = vmul.f32 %v1275, 1.442695
    %v1277 = vpow.pop %v1276
    %v1278 = vadd.f32 %v1277, 1.0
    %v1279 = vrcp.pop %v1278
    %v1280 = vmul.f32 1.0, %v1279
    %v1281 = vtanh.pop %v1267
    %v1282 = vxor.u32 %v1268, 2147483648
    %v1283 = vmul.f32 %v1282, 1.442695
    %v1284 = vpow.pop %v1283
    %v1285 = vadd.f32 %v1284, 1.0
    %v1286 = vrcp.pop %v1285
    %v1287 = vmul.f32 1.0, %v1286
    %v1288 = vmul.f32 %v1280, 0.0
    %v1289 = vmul.f32 %v1274, %v1281
    %v1290 = vadd.f32 %v1288, %v1289
    %v1291 = vtanh.pop %v1290
    %v1292 = vmul.f32 %v1287, %v1291
    %vm1293 = vcmp.gt.s32.totalorder %v117, 7
    %v1294 = vsel %vm1293, %v1292, 0.0
    %v1295 = vsel %vm1293, %v1290, 0.0
    %s1296 = scalar_lea.vmem [#allocation5], 56
    %1297 = vst [vmem:[%s1296] sm:$0xff] %v1294
    %s1298 = scalar_lea.vmem [#allocation2], 32
    %v1299 = vld [vmem:[%s1298] sm:$0xff]
    %v1300 = vld [vmem:[%s1298 + $0x8] sm:$0xff]
    %v1301 = vld [vmem:[%s1298 + $0x10] sm:$0xff]
    %v1302 = vld [vmem:[%s1298 + $0x18] sm:$0xff]
    %1303 = vmatprep.subr.mxu0 %v873
    %1304 = vmatpush1.msra.mxu0 %v872
    %1305 = vmatprep.subr.mxu0 %v869
    %1306 = vmatpush1.msra.mxu0 %v868
    %1307 = vmatprep.subr.mxu0 %v865
    %1308 = vmatpush1.msra.mxu0 %v864
    %1309 = vmatprep.subr.mxu0 %v861
    %1310 = vmatpush1.msra.mxu0 %v860
    %1311 = vmatprep.subr.mxu0 %v857
    %1312 = vmatpush1.msra.mxu0 %v856
    %1313 = vmatprep.subr.mxu0 %v853
    %1314 = vmatpush1.msra.mxu0 %v852
    %1315 = vmatprep.subr.mxu0 %v849
    %1316 = vmatpush1.msra.mxu0 %v848
    %1317 = vmatprep.subr.mxu0 %v845
    %1318 = vmatpush1.msra.mxu0 %v844
    %1319 = vmatprep.subr.mxu0 %v841
    %1320 = vmatpush1.msra.mxu0 %v840
    %1321 = vmatprep.subr.mxu0 %v837
    %1322 = vmatpush1.msra.mxu0 %v836
    %1323 = vmatprep.subr.mxu0 %v833
    %1324 = vmatpush1.msra.mxu0 %v832
    %1325 = vmatprep.subr.mxu0 %v829
    %1326 = vmatpush1.msra.mxu0 %v828
    %1327 = vmatprep.subr.mxu0 %v825
    %1328 = vmatpush1.msra.mxu0 %v824
    %1329 = vmatprep.subr.mxu0 %v821
    %1330 = vmatpush1.msra.mxu0 %v820
    %1331 = vmatprep.subr.mxu0 %v817
    %1332 = vmatpush1.msra.mxu0 %v816
    %1333 = vmatprep.subr.mxu0 %v813
    %1334 = vmatpush1.msra.mxu0 %v812
    %1335 = vmatprep.subr.mxu0 0.0
    %1336 = vmatpush2.msra.mxu0 0.0
    %1337 = vmatprep.subr.mxu0 0.0
    %1338 = vmatpush2.msra.mxu0 0.0
    %1339 = vmatprep.subr.mxu0 0.0
    %1340 = vmatpush2.msra.mxu0 0.0
    %1341 = vmatprep.subr.mxu0 0.0
    %1342 = vmatpush2.msra.mxu0 0.0
    %1343 = vmatprep.subr.mxu0 0.0
    %1344 = vmatpush2.msra.mxu0 0.0
    %1345 = vmatprep.subr.mxu0 0.0
    %1346 = vmatpush2.msra.mxu0 0.0
    %1347 = vmatprep.subr.mxu0 0.0
    %1348 = vmatpush2.msra.mxu0 0.0
    %1349 = vmatprep.subr.mxu0 0.0
    %1350 = vmatpush2.msra.mxu0 0.0
    %1351 = vmatprep.subr.mxu0 0.0
    %1352 = vmatpush2.msra.mxu0 0.0
    %1353 = vmatprep.subr.mxu0 0.0
    %1354 = vmatpush2.msra.mxu0 0.0
    %1355 = vmatprep.subr.mxu0 0.0
    %1356 = vmatpush2.msra.mxu0 0.0
    %1357 = vmatprep.subr.mxu0 0.0
    %1358 = vmatpush2.msra.mxu0 0.0
    %1359 = vmatprep.subr.mxu0 0.0
    %1360 = vmatpush2.msra.mxu0 0.0
    %1361 = vmatprep.subr.mxu0 0.0
    %1362 = vmatpush2.msra.mxu0 0.0
    %1363 = vmatprep.subr.mxu0 0.0
    %1364 = vmatpush2.msra.mxu0 0.0
    %1365 = vmatprep.subr.mxu0 0.0
    %1366 = vmatpush2.msra.mxu0 0.0
    %1367 = vmatprep.mubr.f32.mxu0 0.0
    %1368 = vmatmul.mubr.f32.gmra.mxu0 %v1115
    %v1369 = vpop.f32.mrf.mxu0
    %v1370 = vadd.f32 0.0, %v1369
    %v1371 = vpop.f32.mrf.mxu0
    %v1372 = vadd.f32 0.0, %v1371
    %1373 = vdwg.mxu0
    %1374 = vmatprep.subr.mxu0 %v875
    %1375 = vmatpush1.msra.mxu0 %v874
    %1376 = vmatprep.subr.mxu0 %v871
    %1377 = vmatpush1.msra.mxu0 %v870
    %1378 = vmatprep.subr.mxu0 %v867
    %1379 = vmatpush1.msra.mxu0 %v866
    %1380 = vmatprep.subr.mxu0 %v863
    %1381 = vmatpush1.msra.mxu0 %v862
    %1382 = vmatprep.subr.mxu0 %v859
    %1383 = vmatpush1.msra.mxu0 %v858
    %1384 = vmatprep.subr.mxu0 %v855
    %1385 = vmatpush1.msra.mxu0 %v854
    %1386 = vmatprep.subr.mxu0 %v851
    %1387 = vmatpush1.msra.mxu0 %v850
    %1388 = vmatprep.subr.mxu0 %v847
    %1389 = vmatpush1.msra.mxu0 %v846
    %1390 = vmatprep.subr.mxu0 %v843
    %1391 = vmatpush1.msra.mxu0 %v842
    %1392 = vmatprep.subr.mxu0 %v839
    %1393 = vmatpush1.msra.mxu0 %v838
    %1394 = vmatprep.subr.mxu0 %v835
    %1395 = vmatpush1.msra.mxu0 %v834
    %1396 = vmatprep.subr.mxu0 %v831
    %1397 = vmatpush1.msra.mxu0 %v830
    %1398 = vmatprep.subr.mxu0 %v827
    %1399 = vmatpush1.msra.mxu0 %v826
    %1400 = vmatprep.subr.mxu0 %v823
    %1401 = vmatpush1.msra.mxu0 %v822
    %1402 = vmatprep.subr.mxu0 %v819
    %1403 = vmatpush1.msra.mxu0 %v818
    %1404 = vmatprep.subr.mxu0 %v815
    %1405 = vmatpush1.msra.mxu0 %v814
    %1406 = vmatprep.subr.mxu0 0.0
    %1407 = vmatpush2.msra.mxu0 0.0
    %1408 = vmatprep.subr.mxu0 0.0
    %1409 = vmatpush2.msra.mxu0 0.0
    %1410 = vmatprep.subr.mxu0 0.0
    %1411 = vmatpush2.msra.mxu0 0.0
    %1412 = vmatprep.subr.mxu0 0.0
    %1413 = vmatpush2.msra.mxu0 0.0
    %1414 = vmatprep.subr.mxu0 0.0
    %1415 = vmatpush2.msra.mxu0 0.0
    %1416 = vmatprep.subr.mxu0 0.0
    %1417 = vmatpush2.msra.mxu0 0.0
    %1418 = vmatprep.subr.mxu0 0.0
    %1419 = vmatpush2.msra.mxu0 0.0
    %1420 = vmatprep.subr.mxu0 0.0
    %1421 = vmatpush2.msra.mxu0 0.0
    %1422 = vmatprep.subr.mxu0 0.0
    %1423 = vmatpush2.msra.mxu0 0.0
    %1424 = vmatprep.subr.mxu0 0.0
    %1425 = vmatpush2.msra.mxu0 0.0
    %1426 = vmatprep.subr.mxu0 0.0
    %1427 = vmatpush2.msra.mxu0 0.0
    %1428 = vmatprep.subr.mxu0 0.0
    %1429 = vmatpush2.msra.mxu0 0.0
    %1430 = vmatprep.subr.mxu0 0.0
    %1431 = vmatpush2.msra.mxu0 0.0
    %1432 = vmatprep.subr.mxu0 0.0
    %1433 = vmatpush2.msra.mxu0 0.0
    %1434 = vmatprep.subr.mxu0 0.0
    %1435 = vmatpush2.msra.mxu0 0.0
    %1436 = vmatprep.subr.mxu0 0.0
    %1437 = vmatpush2.msra.mxu0 0.0
    %1438 = vmatprep.mubr.f32.mxu0 0.0
    %1439 = vmatmul.mubr.f32.gmra.mxu0 %v1115
    %v1440 = vpop.f32.mrf.mxu0
    %v1441 = vadd.f32 0.0, %v1440
    %v1442 = vpop.f32.mrf.mxu0
    %v1443 = vadd.f32 0.0, %v1442
    %1444 = vdwg.mxu0
    %v1445 = vadd.f32 %v1299, %v1370
    %v1446 = vadd.f32 %v1300, %v1372
    %v1447 = vadd.f32 %v1301, %v1441
    %v1448 = vadd.f32 %v1302, %v1443
    %v1449 = vxor.u32 %v1445, 2147483648
    %v1450 = vmul.f32 %v1449, 1.442695
    %v1451 = vpow.pop %v1450
    %v1452 = vadd.f32 %v1451, 1.0
    %v1453 = vrcp.pop %v1452
    %v1454 = vmul.f32 1.0, %v1453
    %v1455 = vxor.u32 %v1446, 2147483648
    %v1456 = vmul.f32 %v1455, 1.442695
    %v1457 = vpow.pop %v1456
    %v1458 = vadd.f32 %v1457, 1.0
    %v1459 = vrcp.pop %v1458
    %v1460 = vmul.f32 1.0, %v1459
    %v1461 = vtanh.pop %v1447
    %v1462 = vxor.u32 %v1448, 2147483648
    %v1463 = vmul.f32 %v1462, 1.442695
    %v1464 = vpow.pop %v1463
    %v1465 = vadd.f32 %v1464, 1.0
    %v1466 = vrcp.pop %v1465
    %v1467 = vmul.f32 1.0, %v1466
    %v1468 = vmul.f32 %v1460, %v1116
    %v1469 = vmul.f32 %v1454, %v1461
    %v1470 = vadd.f32 %v1468, %v1469
    %v1471 = vtanh.pop %v1470
    %v1472 = vmul.f32 %v1467, %v1471
    %vm1473 = vcmp.gt.s32.totalorder %v117, 1
    %v1474 = vsel %vm1473, %v1472, %v1115
    %v1475 = vsel %vm1473, %v1470, %v1116
    %v1476 = vsel %vm1473, %v1472, 0.0
    %s1477 = scalar_lea.vmem [#allocation4], 8
    %1478 = vst [vmem:[%s1477] sm:$0xff] %v1476
    %s1479 = scalar_lea.vmem [#allocation3], 192
    %v1480 = vld [vmem:[%s1479] sm:$0xff]
    %v1481 = vld [vmem:[%s1479 + $0x8] sm:$0xff]
    %v1482 = vld [vmem:[%s1479 + $0x10] sm:$0xff]
    %v1483 = vld [vmem:[%s1479 + $0x18] sm:$0xff]
    %1484 = vmatprep.subr.mxu0 %v937
    %1485 = vmatpush1.msra.mxu0 %v936
    %1486 = vmatprep.subr.mxu0 %v933
    %1487 = vmatpush1.msra.mxu0 %v932
    %1488 = vmatprep.subr.mxu0 %v929
    %1489 = vmatpush1.msra.mxu0 %v928
    %1490 = vmatprep.subr.mxu0 %v925
    %1491 = vmatpush1.msra.mxu0 %v924
    %1492 = vmatprep.subr.mxu0 %v921
    %1493 = vmatpush1.msra.mxu0 %v920
    %1494 = vmatprep.subr.mxu0 %v917
    %1495 = vmatpush1.msra.mxu0 %v916
    %1496 = vmatprep.subr.mxu0 %v913
    %1497 = vmatpush1.msra.mxu0 %v912
    %1498 = vmatprep.subr.mxu0 %v909
    %1499 = vmatpush1.msra.mxu0 %v908
    %1500 = vmatprep.subr.mxu0 %v905
    %1501 = vmatpush1.msra.mxu0 %v904
    %1502 = vmatprep.subr.mxu0 %v901
    %1503 = vmatpush1.msra.mxu0 %v900
    %1504 = vmatprep.subr.mxu0 %v897
    %1505 = vmatpush1.msra.mxu0 %v896
    %1506 = vmatprep.subr.mxu0 %v893
    %1507 = vmatpush1.msra.mxu0 %v892
    %1508 = vmatprep.subr.mxu0 %v889
    %1509 = vmatpush1.msra.mxu0 %v888
    %1510 = vmatprep.subr.mxu0 %v885
    %1511 = vmatpush1.msra.mxu0 %v884
    %1512 = vmatprep.subr.mxu0 %v881
    %1513 = vmatpush1.msra.mxu0 %v880
    %1514 = vmatprep.subr.mxu0 %v877
    %1515 = vmatpush1.msra.mxu0 %v876
    %1516 = vmatprep.subr.mxu0 0.0
    %1517 = vmatpush2.msra.mxu0 0.0
    %1518 = vmatprep.subr.mxu0 0.0
    %1519 = vmatpush2.msra.mxu0 0.0
    %1520 = vmatprep.subr.mxu0 0.0
    %1521 = vmatpush2.msra.mxu0 0.0
    %1522 = vmatprep.subr.mxu0 0.0
    %1523 = vmatpush2.msra.mxu0 0.0
    %1524 = vmatprep.subr.mxu0 0.0
    %1525 = vmatpush2.msra.mxu0 0.0
    %1526 = vmatprep.subr.mxu0 0.0
    %1527 = vmatpush2.msra.mxu0 0.0
    %1528 = vmatprep.subr.mxu0 0.0
    %1529 = vmatpush2.msra.mxu0 0.0
    %1530 = vmatprep.subr.mxu0 0.0
    %1531 = vmatpush2.msra.mxu0 0.0
    %1532 = vmatprep.subr.mxu0 0.0
    %1533 = vmatpush2.msra.mxu0 0.0
    %1534 = vmatprep.subr.mxu0 0.0
    %1535 = vmatpush2.msra.mxu0 0.0
    %1536 = vmatprep.subr.mxu0 0.0
    %1537 = vmatpush2.msra.mxu0 0.0
    %1538 = vmatprep.subr.mxu0 0.0
    %1539 = vmatpush2.msra.mxu0 0.0
    %1540 = vmatprep.subr.mxu0 0.0
    %1541 = vmatpush2.msra.mxu0 0.0
    %1542 = vmatprep.subr.mxu0 0.0
    %1543 = vmatpush2.msra.mxu0 0.0
    %1544 = vmatprep.subr.mxu0 0.0
    %1545 = vmatpush2.msra.mxu0 0.0
    %1546 = vmatprep.subr.mxu0 0.0
    %1547 = vmatpush2.msra.mxu0 0.0
    %1548 = vmatprep.mubr.f32.mxu0 0.0
    %1549 = vmatmul.mubr.f32.gmra.mxu0 %v1294
    %v1550 = vpop.f32.mrf.mxu0
    %v1551 = vadd.f32 0.0, %v1550
    %v1552 = vpop.f32.mrf.mxu0
    %v1553 = vadd.f32 0.0, %v1552
    %1554 = vdwg.mxu0
    %1555 = vmatprep.subr.mxu0 %v939
    %1556 = vmatpush1.msra.mxu0 %v938
    %1557 = vmatprep.subr.mxu0 %v935
    %1558 = vmatpush1.msra.mxu0 %v934
    %1559 = vmatprep.subr.mxu0 %v931
    %1560 = vmatpush1.msra.mxu0 %v930
    %1561 = vmatprep.subr.mxu0 %v927
    %1562 = vmatpush1.msra.mxu0 %v926
    %1563 = vmatprep.subr.mxu0 %v923
    %1564 = vmatpush1.msra.mxu0 %v922
    %1565 = vmatprep.subr.mxu0 %v919
    %1566 = vmatpush1.msra.mxu0 %v918
    %1567 = vmatprep.subr.mxu0 %v915
    %1568 = vmatpush1.msra.mxu0 %v914
    %1569 = vmatprep.subr.mxu0 %v911
    %1570 = vmatpush1.msra.mxu0 %v910
    %1571 = vmatprep.subr.mxu0 %v907
    %1572 = vmatpush1.msra.mxu0 %v906
    %1573 = vmatprep.subr.mxu0 %v903
    %1574 = vmatpush1.msra.mxu0 %v902
    %1575 = vmatprep.subr.mxu0 %v899
    %1576 = vmatpush1.msra.mxu0 %v898
    %1577 = vmatprep.subr.mxu0 %v895
    %1578 = vmatpush1.msra.mxu0 %v894
    %1579 = vmatprep.subr.mxu0 %v891
    %1580 = vmatpush1.msra.mxu0 %v890
    %1581 = vmatprep.subr.mxu0 %v887
    %1582 = vmatpush1.msra.mxu0 %v886
    %1583 = vmatprep.subr.mxu0 %v883
    %1584 = vmatpush1.msra.mxu0 %v882
    %1585 = vmatprep.subr.mxu0 %v879
    %1586 = vmatpush1.msra.mxu0 %v878
    %1587 = vmatprep.subr.mxu0 0.0
    %1588 = vmatpush2.msra.mxu0 0.0
    %1589 = vmatprep.subr.mxu0 0.0
    %1590 = vmatpush2.msra.mxu0 0.0
    %1591 = vmatprep.subr.mxu0 0.0
    %1592 = vmatpush2.msra.mxu0 0.0
    %1593 = vmatprep.subr.mxu0 0.0
    %1594 = vmatpush2.msra.mxu0 0.0
    %1595 = vmatprep.subr.mxu0 0.0
    %1596 = vmatpush2.msra.mxu0 0.0
    %1597 = vmatprep.subr.mxu0 0.0
    %1598 = vmatpush2.msra.mxu0 0.0
    %1599 = vmatprep.subr.mxu0 0.0
    %1600 = vmatpush2.msra.mxu0 0.0
    %1601 = vmatprep.subr.mxu0 0.0
    %1602 = vmatpush2.msra.mxu0 0.0
    %1603 = vmatprep.subr.mxu0 0.0
    %1604 = vmatpush2.msra.mxu0 0.0
    %1605 = vmatprep.subr.mxu0 0.0
    %1606 = vmatpush2.msra.mxu0 0.0
    %1607 = vmatprep.subr.mxu0 0.0
    %1608 = vmatpush2.msra.mxu0 0.0
    %1609 = vmatprep.subr.mxu0 0.0
    %1610 = vmatpush2.msra.mxu0 0.0
    %1611 = vmatprep.subr.mxu0 0.0
    %1612 = vmatpush2.msra.mxu0 0.0
    %1613 = vmatprep.subr.mxu0 0.0
    %1614 = vmatpush2.msra.mxu0 0.0
    %1615 = vmatprep.subr.mxu0 0.0
    %1616 = vmatpush2.msra.mxu0 0.0
    %1617 = vmatprep.subr.mxu0 0.0
    %1618 = vmatpush2.msra.mxu0 0.0
    %1619 = vmatprep.mubr.f32.mxu0 0.0
    %1620 = vmatmul.mubr.f32.gmra.mxu0 %v1294
    %v1621 = vpop.f32.mrf.mxu0
    %v1622 = vadd.f32 0.0, %v1621
    %v1623 = vpop.f32.mrf.mxu0
    %v1624 = vadd.f32 0.0, %v1623
    %1625 = vdwg.mxu0
    %v1626 = vadd.f32 %v1480, %v1551
    %v1627 = vadd.f32 %v1481, %v1553
    %v1628 = vadd.f32 %v1482, %v1622
    %v1629 = vadd.f32 %v1483, %v1624
    %v1630 = vxor.u32 %v1626, 2147483648
    %v1631 = vmul.f32 %v1630, 1.442695
    %v1632 = vpow.pop %v1631
    %v1633 = vadd.f32 %v1632, 1.0
    %v1634 = vrcp.pop %v1633
    %v1635 = vmul.f32 1.0, %v1634
    %v1636 = vxor.u32 %v1627, 2147483648
    %v1637 = vmul.f32 %v1636, 1.442695
    %v1638 = vpow.pop %v1637
    %v1639 = vadd.f32 %v1638, 1.0
    %v1640 = vrcp.pop %v1639
    %v1641 = vmul.f32 1.0, %v1640
    %v1642 = vtanh.pop %v1628
    %v1643 = vxor.u32 %v1629, 2147483648
    %v1644 = vmul.f32 %v1643, 1.442695
    %v1645 = vpow.pop %v1644
    %v1646 = vadd.f32 %v1645, 1.0
    %v1647 = vrcp.pop %v1646
    %v1648 = vmul.f32 1.0, %v1647
    %v1649 = vmul.f32 %v1641, %v1295
    %v1650 = vmul.f32 %v1635, %v1642
    %v1651 = vadd.f32 %v1649, %v1650
    %v1652 = vtanh.pop %v1651
    %v1653 = vmul.f32 %v1648, %v1652
    %vm1654 = vcmp.gt.s32.totalorder %v117, 6
    %v1655 = vsel %vm1654, %v1653, %v1294
    %v1656 = vsel %vm1654, %v1651, %v1295
    %v1657 = vsel %vm1654, %v1653, 0.0
    %s1658 = scalar_lea.vmem [#allocation5], 48
    %1659 = vst [vmem:[%s1658] sm:$0xff] %v1657
    %s1660 = scalar_lea.vmem [#allocation2], 64
    %v1661 = vld [vmem:[%s1660] sm:$0xff]
    %v1662 = vld [vmem:[%s1660 + $0x8] sm:$0xff]
    %v1663 = vld [vmem:[%s1660 + $0x10] sm:$0xff]
    %v1664 = vld [vmem:[%s1660 + $0x18] sm:$0xff]
    %1665 = vmatprep.subr.mxu0 %v873
    %1666 = vmatpush1.msra.mxu0 %v872
    %1667 = vmatprep.subr.mxu0 %v869
    %1668 = vmatpush1.msra.mxu0 %v868
    %1669 = vmatprep.subr.mxu0 %v865
    %1670 = vmatpush1.msra.mxu0 %v864
    %1671 = vmatprep.subr.mxu0 %v861
    %1672 = vmatpush1.msra.mxu0 %v860
    %1673 = vmatprep.subr.mxu0 %v857
    %1674 = vmatpush1.msra.mxu0 %v856
    %1675 = vmatprep.subr.mxu0 %v853
    %1676 = vmatpush1.msra.mxu0 %v852
    %1677 = vmatprep.subr.mxu0 %v849
    %1678 = vmatpush1.msra.mxu0 %v848
    %1679 = vmatprep.subr.mxu0 %v845
    %1680 = vmatpush1.msra.mxu0 %v844
    %1681 = vmatprep.subr.mxu0 %v841
    %1682 = vmatpush1.msra.mxu0 %v840
    %1683 = vmatprep.subr.mxu0 %v837
    %1684 = vmatpush1.msra.mxu0 %v836
    %1685 = vmatprep.subr.mxu0 %v833
    %1686 = vmatpush1.msra.mxu0 %v832
    %1687 = vmatprep.subr.mxu0 %v829
    %1688 = vmatpush1.msra.mxu0 %v828
    %1689 = vmatprep.subr.mxu0 %v825
    %1690 = vmatpush1.msra.mxu0 %v824
    %1691 = vmatprep.subr.mxu0 %v821
    %1692 = vmatpush1.msra.mxu0 %v820
    %1693 = vmatprep.subr.mxu0 %v817
    %1694 = vmatpush1.msra.mxu0 %v816
    %1695 = vmatprep.subr.mxu0 %v813
    %1696 = vmatpush1.msra.mxu0 %v812
    %1697 = vmatprep.subr.mxu0 0.0
    %1698 = vmatpush2.msra.mxu0 0.0
    %1699 = vmatprep.subr.mxu0 0.0
    %1700 = vmatpush2.msra.mxu0 0.0
    %1701 = vmatprep.subr.mxu0 0.0
    %1702 = vmatpush2.msra.mxu0 0.0
    %1703 = vmatprep.subr.mxu0 0.0
    %1704 = vmatpush2.msra.mxu0 0.0
    %1705 = vmatprep.subr.mxu0 0.0
    %1706 = vmatpush2.msra.mxu0 0.0
    %1707 = vmatprep.subr.mxu0 0.0
    %1708 = vmatpush2.msra.mxu0 0.0
    %1709 = vmatprep.subr.mxu0 0.0
    %1710 = vmatpush2.msra.mxu0 0.0
    %1711 = vmatprep.subr.mxu0 0.0
    %1712 = vmatpush2.msra.mxu0 0.0
    %1713 = vmatprep.subr.mxu0 0.0
    %1714 = vmatpush2.msra.mxu0 0.0
    %1715 = vmatprep.subr.mxu0 0.0
    %1716 = vmatpush2.msra.mxu0 0.0
    %1717 = vmatprep.subr.mxu0 0.0
    %1718 = vmatpush2.msra.mxu0 0.0
    %1719 = vmatprep.subr.mxu0 0.0
    %1720 = vmatpush2.msra.mxu0 0.0
    %1721 = vmatprep.subr.mxu0 0.0
    %1722 = vmatpush2.msra.mxu0 0.0
    %1723 = vmatprep.subr.mxu0 0.0
    %1724 = vmatpush2.msra.mxu0 0.0
    %1725 = vmatprep.subr.mxu0 0.0
    %1726 = vmatpush2.msra.mxu0 0.0
    %1727 = vmatprep.subr.mxu0 0.0
    %1728 = vmatpush2.msra.mxu0 0.0
    %1729 = vmatprep.mubr.f32.mxu0 0.0
    %1730 = vmatmul.mubr.f32.gmra.mxu0 %v1474
    %v1731 = vpop.f32.mrf.mxu0
    %v1732 = vadd.f32 0.0, %v1731
    %v1733 = vpop.f32.mrf.mxu0
    %v1734 = vadd.f32 0.0, %v1733
    %1735 = vdwg.mxu0
    %1736 = vmatprep.subr.mxu0 %v875
    %1737 = vmatpush1.msra.mxu0 %v874
    %1738 = vmatprep.subr.mxu0 %v871
    %1739 = vmatpush1.msra.mxu0 %v870
    %1740 = vmatprep.subr.mxu0 %v867
    %1741 = vmatpush1.msra.mxu0 %v866
    %1742 = vmatprep.subr.mxu0 %v863
    %1743 = vmatpush1.msra.mxu0 %v862
    %1744 = vmatprep.subr.mxu0 %v859
    %1745 = vmatpush1.msra.mxu0 %v858
    %1746 = vmatprep.subr.mxu0 %v855
    %1747 = vmatpush1.msra.mxu0 %v854
    %1748 = vmatprep.subr.mxu0 %v851
    %1749 = vmatpush1.msra.mxu0 %v850
    %1750 = vmatprep.subr.mxu0 %v847
    %1751 = vmatpush1.msra.mxu0 %v846
    %1752 = vmatprep.subr.mxu0 %v843
    %1753 = vmatpush1.msra.mxu0 %v842
    %1754 = vmatprep.subr.mxu0 %v839
    %1755 = vmatpush1.msra.mxu0 %v838
    %1756 = vmatprep.subr.mxu0 %v835
    %1757 = vmatpush1.msra.mxu0 %v834
    %1758 = vmatprep.subr.mxu0 %v831
    %1759 = vmatpush1.msra.mxu0 %v830
    %1760 = vmatprep.subr.mxu0 %v827
    %1761 = vmatpush1.msra.mxu0 %v826
    %1762 = vmatprep.subr.mxu0 %v823
    %1763 = vmatpush1.msra.mxu0 %v822
    %1764 = vmatprep.subr.mxu0 %v819
    %1765 = vmatpush1.msra.mxu0 %v818
    %1766 = vmatprep.subr.mxu0 %v815
    %1767 = vmatpush1.msra.mxu0 %v814
    %1768 = vmatprep.subr.mxu0 0.0
    %1769 = vmatpush2.msra.mxu0 0.0
    %1770 = vmatprep.subr.mxu0 0.0
    %1771 = vmatpush2.msra.mxu0 0.0
    %1772 = vmatprep.subr.mxu0 0.0
    %1773 = vmatpush2.msra.mxu0 0.0
    %1774 = vmatprep.subr.mxu0 0.0
    %1775 = vmatpush2.msra.mxu0 0.0
    %1776 = vmatprep.subr.mxu0 0.0
    %1777 = vmatpush2.msra.mxu0 0.0
    %1778 = vmatprep.subr.mxu0 0.0
    %1779 = vmatpush2.msra.mxu0 0.0
    %1780 = vmatprep.subr.mxu0 0.0
    %1781 = vmatpush2.msra.mxu0 0.0
    %1782 = vmatprep.subr.mxu0 0.0
    %1783 = vmatpush2.msra.mxu0 0.0
    %1784 = vmatprep.subr.mxu0 0.0
    %1785 = vmatpush2.msra.mxu0 0.0
    %1786 = vmatprep.subr.mxu0 0.0
    %1787 = vmatpush2.msra.mxu0 0.0
    %1788 = vmatprep.subr.mxu0 0.0
    %1789 = vmatpush2.msra.mxu0 0.0
    %1790 = vmatprep.subr.mxu0 0.0
    %1791 = vmatpush2.msra.mxu0 0.0
    %1792 = vmatprep.subr.mxu0 0.0
    %1793 = vmatpush2.msra.mxu0 0.0
    %1794 = vmatprep.subr.mxu0 0.0
    %1795 = vmatpush2.msra.mxu0 0.0
    %1796 = vmatprep.subr.mxu0 0.0
    %1797 = vmatpush2.msra.mxu0 0.0
    %1798 = vmatprep.subr.mxu0 0.0
    %1799 = vmatpush2.msra.mxu0 0.0
    %1800 = vmatprep.mubr.f32.mxu0 0.0
    %1801 = vmatmul.mubr.f32.gmra.mxu0 %v1474
    %v1802 = vpop.f32.mrf.mxu0
    %v1803 = vadd.f32 0.0, %v1802
    %v1804 = vpop.f32.mrf.mxu0
    %v1805 = vadd.f32 0.0, %v1804
    %1806 = vdwg.mxu0
    %v1807 = vadd.f32 %v1661, %v1732
    %v1808 = vadd.f32 %v1662, %v1734
    %v1809 = vadd.f32 %v1663, %v1803
    %v1810 = vadd.f32 %v1664, %v1805
    %v1811 = vxor.u32 %v1807, 2147483648
    %v1812 = vmul.f32 %v1811, 1.442695
    %v1813 = vpow.pop %v1812
    %v1814 = vadd.f32 %v1813, 1.0
    %v1815 = vrcp.pop %v1814
    %v1816 = vmul.f32 1.0, %v1815
    %v1817 = vxor.u32 %v1808, 2147483648
    %v1818 = vmul.f32 %v1817, 1.442695
    %v1819 = vpow.pop %v1818
    %v1820 = vadd.f32 %v1819, 1.0
    %v1821 = vrcp.pop %v1820
    %v1822 = vmul.f32 1.0, %v1821
    %v1823 = vtanh.pop %v1809
    %v1824 = vxor.u32 %v1810, 2147483648
    %v1825 = vmul.f32 %v1824, 1.442695
    %v1826 = vpow.pop %v1825
    %v1827 = vadd.f32 %v1826, 1.0
    %v1828 = vrcp.pop %v1827
    %v1829 = vmul.f32 1.0, %v1828
    %v1830 = vmul.f32 %v1822, %v1475
    %v1831 = vmul.f32 %v1816, %v1823
    %v1832 = vadd.f32 %v1830, %v1831
    %v1833 = vtanh.pop %v1832
    %v1834 = vmul.f32 %v1829, %v1833
    %vm1835 = vcmp.gt.s32.totalorder %v117, 2
    %v1836 = vsel %vm1835, %v1834, %v1474
    %v1837 = vsel %vm1835, %v1832, %v1475
    %v1838 = vsel %vm1835, %v1834, 0.0
    %s1839 = scalar_lea.vmem [#allocation4], 16
    %1840 = vst [vmem:[%s1839] sm:$0xff] %v1838
    %s1841 = scalar_lea.vmem [#allocation3], 160
    %v1842 = vld [vmem:[%s1841] sm:$0xff]
    %v1843 = vld [vmem:[%s1841 + $0x8] sm:$0xff]
    %v1844 = vld [vmem:[%s1841 + $0x10] sm:$0xff]
    %v1845 = vld [vmem:[%s1841 + $0x18] sm:$0xff]
    %1846 = vmatprep.subr.mxu0 %v937
    %1847 = vmatpush1.msra.mxu0 %v936
    %1848 = vmatprep.subr.mxu0 %v933
    %1849 = vmatpush1.msra.mxu0 %v932
    %1850 = vmatprep.subr.mxu0 %v929
    %1851 = vmatpush1.msra.mxu0 %v928
    %1852 = vmatprep.subr.mxu0 %v925
    %1853 = vmatpush1.msra.mxu0 %v924
    %1854 = vmatprep.subr.mxu0 %v921
    %1855 = vmatpush1.msra.mxu0 %v920
    %1856 = vmatprep.subr.mxu0 %v917
    %1857 = vmatpush1.msra.mxu0 %v916
    %1858 = vmatprep.subr.mxu0 %v913
    %1859 = vmatpush1.msra.mxu0 %v912
    %1860 = vmatprep.subr.mxu0 %v909
    %1861 = vmatpush1.msra.mxu0 %v908
    %1862 = vmatprep.subr.mxu0 %v905
    %1863 = vmatpush1.msra.mxu0 %v904
    %1864 = vmatprep.subr.mxu0 %v901
    %1865 = vmatpush1.msra.mxu0 %v900
    %1866 = vmatprep.subr.mxu0 %v897
    %1867 = vmatpush1.msra.mxu0 %v896
    %1868 = vmatprep.subr.mxu0 %v893
    %1869 = vmatpush1.msra.mxu0 %v892
    %1870 = vmatprep.subr.mxu0 %v889
    %1871 = vmatpush1.msra.mxu0 %v888
    %1872 = vmatprep.subr.mxu0 %v885
    %1873 = vmatpush1.msra.mxu0 %v884
    %1874 = vmatprep.subr.mxu0 %v881
    %1875 = vmatpush1.msra.mxu0 %v880
    %1876 = vmatprep.subr.mxu0 %v877
    %1877 = vmatpush1.msra.mxu0 %v876
    %1878 = vmatprep.subr.mxu0 0.0
    %1879 = vmatpush2.msra.mxu0 0.0
    %1880 = vmatprep.subr.mxu0 0.0
    %1881 = vmatpush2.msra.mxu0 0.0
    %1882 = vmatprep.subr.mxu0 0.0
    %1883 = vmatpush2.msra.mxu0 0.0
    %1884 = vmatprep.subr.mxu0 0.0
    %1885 = vmatpush2.msra.mxu0 0.0
    %1886 = vmatprep.subr.mxu0 0.0
    %1887 = vmatpush2.msra.mxu0 0.0
    %1888 = vmatprep.subr.mxu0 0.0
    %1889 = vmatpush2.msra.mxu0 0.0
    %1890 = vmatprep.subr.mxu0 0.0
    %1891 = vmatpush2.msra.mxu0 0.0
    %1892 = vmatprep.subr.mxu0 0.0
    %1893 = vmatpush2.msra.mxu0 0.0
    %1894 = vmatprep.subr.mxu0 0.0
    %1895 = vmatpush2.msra.mxu0 0.0
    %1896 = vmatprep.subr.mxu0 0.0
    %1897 = vmatpush2.msra.mxu0 0.0
    %1898 = vmatprep.subr.mxu0 0.0
    %1899 = vmatpush2.msra.mxu0 0.0
    %1900 = vmatprep.subr.mxu0 0.0
    %1901 = vmatpush2.msra.mxu0 0.0
    %1902 = vmatprep.subr.mxu0 0.0
    %1903 = vmatpush2.msra.mxu0 0.0
    %1904 = vmatprep.subr.mxu0 0.0
    %1905 = vmatpush2.msra.mxu0 0.0
    %1906 = vmatprep.subr.mxu0 0.0
    %1907 = vmatpush2.msra.mxu0 0.0
    %1908 = vmatprep.subr.mxu0 0.0
    %1909 = vmatpush2.msra.mxu0 0.0
    %1910 = vmatprep.mubr.f32.mxu0 0.0
    %1911 = vmatmul.mubr.f32.gmra.mxu0 %v1655
    %v1912 = vpop.f32.mrf.mxu0
    %v1913 = vadd.f32 0.0, %v1912
    %v1914 = vpop.f32.mrf.mxu0
    %v1915 = vadd.f32 0.0, %v1914
    %1916 = vdwg.mxu0
    %1917 = vmatprep.subr.mxu0 %v939
    %1918 = vmatpush1.msra.mxu0 %v938
    %1919 = vmatprep.subr.mxu0 %v935
    %1920 = vmatpush1.msra.mxu0 %v934
    %1921 = vmatprep.subr.mxu0 %v931
    %1922 = vmatpush1.msra.mxu0 %v930
    %1923 = vmatprep.subr.mxu0 %v927
    %1924 = vmatpush1.msra.mxu0 %v926
    %1925 = vmatprep.subr.mxu0 %v923
    %1926 = vmatpush1.msra.mxu0 %v922
    %1927 = vmatprep.subr.mxu0 %v919
    %1928 = vmatpush1.msra.mxu0 %v918
    %1929 = vmatprep.subr.mxu0 %v915
    %1930 = vmatpush1.msra.mxu0 %v914
    %1931 = vmatprep.subr.mxu0 %v911
    %1932 = vmatpush1.msra.mxu0 %v910
    %1933 = vmatprep.subr.mxu0 %v907
    %1934 = vmatpush1.msra.mxu0 %v906
    %1935 = vmatprep.subr.mxu0 %v903
    %1936 = vmatpush1.msra.mxu0 %v902
    %1937 = vmatprep.subr.mxu0 %v899
    %1938 = vmatpush1.msra.mxu0 %v898
    %1939 = vmatprep.subr.mxu0 %v895
    %1940 = vmatpush1.msra.mxu0 %v894
    %1941 = vmatprep.subr.mxu0 %v891
    %1942 = vmatpush1.msra.mxu0 %v890
    %1943 = vmatprep.subr.mxu0 %v887
    %1944 = vmatpush1.msra.mxu0 %v886
    %1945 = vmatprep.subr.mxu0 %v883
    %1946 = vmatpush1.msra.mxu0 %v882
    %1947 = vmatprep.subr.mxu0 %v879
    %1948 = vmatpush1.msra.mxu0 %v878
    %1949 = vmatprep.subr.mxu0 0.0
    %1950 = vmatpush2.msra.mxu0 0.0
    %1951 = vmatprep.subr.mxu0 0.0
    %1952 = vmatpush2.msra.mxu0 0.0
    %1953 = vmatprep.subr.mxu0 0.0
    %1954 = vmatpush2.msra.mxu0 0.0
    %1955 = vmatprep.subr.mxu0 0.0
    %1956 = vmatpush2.msra.mxu0 0.0
    %1957 = vmatprep.subr.mxu0 0.0
    %1958 = vmatpush2.msra.mxu0 0.0
    %1959 = vmatprep.subr.mxu0 0.0
    %1960 = vmatpush2.msra.mxu0 0.0
    %1961 = vmatprep.subr.mxu0 0.0
    %1962 = vmatpush2.msra.mxu0 0.0
    %1963 = vmatprep.subr.mxu0 0.0
    %1964 = vmatpush2.msra.mxu0 0.0
    %1965 = vmatprep.subr.mxu0 0.0
    %1966 = vmatpush2.msra.mxu0 0.0
    %1967 = vmatprep.subr.mxu0 0.0
    %1968 = vmatpush2.msra.mxu0 0.0
    %1969 = vmatprep.subr.mxu0 0.0
    %1970 = vmatpush2.msra.mxu0 0.0
    %1971 = vmatprep.subr.mxu0 0.0
    %1972 = vmatpush2.msra.mxu0 0.0
    %1973 = vmatprep.subr.mxu0 0.0
    %1974 = vmatpush2.msra.mxu0 0.0
    %1975 = vmatprep.subr.mxu0 0.0
    %1976 = vmatpush2.msra.mxu0 0.0
    %1977 = vmatprep.subr.mxu0 0.0
    %1978 = vmatpush2.msra.mxu0 0.0
    %1979 = vmatprep.subr.mxu0 0.0
    %1980 = vmatpush2.msra.mxu0 0.0
    %1981 = vmatprep.mubr.f32.mxu0 0.0
    %1982 = vmatmul.mubr.f32.gmra.mxu0 %v1655
    %v1983 = vpop.f32.mrf.mxu0
    %v1984 = vadd.f32 0.0, %v1983
    %v1985 = vpop.f32.mrf.mxu0
    %v1986 = vadd.f32 0.0, %v1985
    %1987 = vdwg.mxu0
    %v1988 = vadd.f32 %v1842, %v1913
    %v1989 = vadd.f32 %v1843, %v1915
    %v1990 = vadd.f32 %v1844, %v1984
    %v1991 = vadd.f32 %v1845, %v1986
    %v1992 = vxor.u32 %v1988, 2147483648
    %v1993 = vmul.f32 %v1992, 1.442695
    %v1994 = vpow.pop %v1993
    %v1995 = vadd.f32 %v1994, 1.0
    %v1996 = vrcp.pop %v1995
    %v1997 = vmul.f32 1.0, %v1996
    %v1998 = vxor.u32 %v1989, 2147483648
    %v1999 = vmul.f32 %v1998, 1.442695
    %v2000 = vpow.pop %v1999
    %v2001 = vadd.f32 %v2000, 1.0
    %v2002 = vrcp.pop %v2001
    %v2003 = vmul.f32 1.0, %v2002
    %v2004 = vtanh.pop %v1990
    %v2005 = vxor.u32 %v1991, 2147483648
    %v2006 = vmul.f32 %v2005, 1.442695
    %v2007 = vpow.pop %v2006
    %v2008 = vadd.f32 %v2007, 1.0
    %v2009 = vrcp.pop %v2008
    %v2010 = vmul.f32 1.0, %v2009
    %v2011 = vmul.f32 %v2003, %v1656
    %v2012 = vmul.f32 %v1997, %v2004
    %v2013 = vadd.f32 %v2011, %v2012
    %v2014 = vtanh.pop %v2013
    %v2015 = vmul.f32 %v2010, %v2014
    %vm2016 = vcmp.gt.s32.totalorder %v117, 5
    %v2017 = vsel %vm2016, %v2015, %v1655
    %v2018 = vsel %vm2016, %v2013, %v1656
    %v2019 = vsel %vm2016, %v2015, 0.0
    %s2020 = scalar_lea.vmem [#allocation5], 40
    %2021 = vst [vmem:[%s2020] sm:$0xff] %v2019
    %s2022 = scalar_lea.vmem [#allocation2], 96
    %v2023 = vld [vmem:[%s2022] sm:$0xff]
    %v2024 = vld [vmem:[%s2022 + $0x8] sm:$0xff]
    %v2025 = vld [vmem:[%s2022 + $0x10] sm:$0xff]
    %v2026 = vld [vmem:[%s2022 + $0x18] sm:$0xff]
    %2027 = vmatprep.subr.mxu0 %v873
    %2028 = vmatpush1.msra.mxu0 %v872
    %2029 = vmatprep.subr.mxu0 %v869
    %2030 = vmatpush1.msra.mxu0 %v868
    %2031 = vmatprep.subr.mxu0 %v865
    %2032 = vmatpush1.msra.mxu0 %v864
    %2033 = vmatprep.subr.mxu0 %v861
    %2034 = vmatpush1.msra.mxu0 %v860
    %2035 = vmatprep.subr.mxu0 %v857
    %2036 = vmatpush1.msra.mxu0 %v856
    %2037 = vmatprep.subr.mxu0 %v853
    %2038 = vmatpush1.msra.mxu0 %v852
    %2039 = vmatprep.subr.mxu0 %v849
    %2040 = vmatpush1.msra.mxu0 %v848
    %2041 = vmatprep.subr.mxu0 %v845
    %2042 = vmatpush1.msra.mxu0 %v844
    %2043 = vmatprep.subr.mxu0 %v841
    %2044 = vmatpush1.msra.mxu0 %v840
    %2045 = vmatprep.subr.mxu0 %v837
    %2046 = vmatpush1.msra.mxu0 %v836
    %2047 = vmatprep.subr.mxu0 %v833
    %2048 = vmatpush1.msra.mxu0 %v832
    %2049 = vmatprep.subr.mxu0 %v829
    %2050 = vmatpush1.msra.mxu0 %v828
    %2051 = vmatprep.subr.mxu0 %v825
    %2052 = vmatpush1.msra.mxu0 %v824
    %2053 = vmatprep.subr.mxu0 %v821
    %2054 = vmatpush1.msra.mxu0 %v820
    %2055 = vmatprep.subr.mxu0 %v817
    %2056 = vmatpush1.msra.mxu0 %v816
    %2057 = vmatprep.subr.mxu0 %v813
    %2058 = vmatpush1.msra.mxu0 %v812
    %2059 = vmatprep.subr.mxu0 0.0
    %2060 = vmatpush2.msra.mxu0 0.0
    %2061 = vmatprep.subr.mxu0 0.0
    %2062 = vmatpush2.msra.mxu0 0.0
    %2063 = vmatprep.subr.mxu0 0.0
    %2064 = vmatpush2.msra.mxu0 0.0
    %2065 = vmatprep.subr.mxu0 0.0
    %2066 = vmatpush2.msra.mxu0 0.0
    %2067 = vmatprep.subr.mxu0 0.0
    %2068 = vmatpush2.msra.mxu0 0.0
    %2069 = vmatprep.subr.mxu0 0.0
    %2070 = vmatpush2.msra.mxu0 0.0
    %2071 = vmatprep.subr.mxu0 0.0
    %2072 = vmatpush2.msra.mxu0 0.0
    %2073 = vmatprep.subr.mxu0 0.0
    %2074 = vmatpush2.msra.mxu0 0.0
    %2075 = vmatprep.subr.mxu0 0.0
    %2076 = vmatpush2.msra.mxu0 0.0
    %2077 = vmatprep.subr.mxu0 0.0
    %2078 = vmatpush2.msra.mxu0 0.0
    %2079 = vmatprep.subr.mxu0 0.0
    %2080 = vmatpush2.msra.mxu0 0.0
    %2081 = vmatprep.subr.mxu0 0.0
    %2082 = vmatpush2.msra.mxu0 0.0
    %2083 = vmatprep.subr.mxu0 0.0
    %2084 = vmatpush2.msra.mxu0 0.0
    %2085 = vmatprep.subr.mxu0 0.0
    %2086 = vmatpush2.msra.mxu0 0.0
    %2087 = vmatprep.subr.mxu0 0.0
    %2088 = vmatpush2.msra.mxu0 0.0
    %2089 = vmatprep.subr.mxu0 0.0
    %2090 = vmatpush2.msra.mxu0 0.0
    %2091 = vmatprep.mubr.f32.mxu0 0.0
    %2092 = vmatmul.mubr.f32.gmra.mxu0 %v1836
    %v2093 = vpop.f32.mrf.mxu0
    %v2094 = vadd.f32 0.0, %v2093
    %v2095 = vpop.f32.mrf.mxu0
    %v2096 = vadd.f32 0.0, %v2095
    %2097 = vdwg.mxu0
    %2098 = vmatprep.subr.mxu0 %v875
    %2099 = vmatpush1.msra.mxu0 %v874
    %2100 = vmatprep.subr.mxu0 %v871
    %2101 = vmatpush1.msra.mxu0 %v870
    %2102 = vmatprep.subr.mxu0 %v867
    %2103 = vmatpush1.msra.mxu0 %v866
    %2104 = vmatprep.subr.mxu0 %v863
    %2105 = vmatpush1.msra.mxu0 %v862
    %2106 = vmatprep.subr.mxu0 %v859
    %2107 = vmatpush1.msra.mxu0 %v858
    %2108 = vmatprep.subr.mxu0 %v855
    %2109 = vmatpush1.msra.mxu0 %v854
    %2110 = vmatprep.subr.mxu0 %v851
    %2111 = vmatpush1.msra.mxu0 %v850
    %2112 = vmatprep.subr.mxu0 %v847
    %2113 = vmatpush1.msra.mxu0 %v846
    %2114 = vmatprep.subr.mxu0 %v843
    %2115 = vmatpush1.msra.mxu0 %v842
    %2116 = vmatprep.subr.mxu0 %v839
    %2117 = vmatpush1.msra.mxu0 %v838
    %2118 = vmatprep.subr.mxu0 %v835
    %2119 = vmatpush1.msra.mxu0 %v834
    %2120 = vmatprep.subr.mxu0 %v831
    %2121 = vmatpush1.msra.mxu0 %v830
    %2122 = vmatprep.subr.mxu0 %v827
    %2123 = vmatpush1.msra.mxu0 %v826
    %2124 = vmatprep.subr.mxu0 %v823
    %2125 = vmatpush1.msra.mxu0 %v822
    %2126 = vmatprep.subr.mxu0 %v819
    %2127 = vmatpush1.msra.mxu0 %v818
    %2128 = vmatprep.subr.mxu0 %v815
    %2129 = vmatpush1.msra.mxu0 %v814
    %2130 = vmatprep.subr.mxu0 0.0
    %2131 = vmatpush2.msra.mxu0 0.0
    %2132 = vmatprep.subr.mxu0 0.0
    %2133 = vmatpush2.msra.mxu0 0.0
    %2134 = vmatprep.subr.mxu0 0.0
    %2135 = vmatpush2.msra.mxu0 0.0
    %2136 = vmatprep.subr.mxu0 0.0
    %2137 = vmatpush2.msra.mxu0 0.0
    %2138 = vmatprep.subr.mxu0 0.0
    %2139 = vmatpush2.msra.mxu0 0.0
    %2140 = vmatprep.subr.mxu0 0.0
    %2141 = vmatpush2.msra.mxu0 0.0
    %2142 = vmatprep.subr.mxu0 0.0
    %2143 = vmatpush2.msra.mxu0 0.0
    %2144 = vmatprep.subr.mxu0 0.0
    %2145 = vmatpush2.msra.mxu0 0.0
    %2146 = vmatprep.subr.mxu0 0.0
    %2147 = vmatpush2.msra.mxu0 0.0
    %2148 = vmatprep.subr.mxu0 0.0
    %2149 = vmatpush2.msra.mxu0 0.0
    %2150 = vmatprep.subr.mxu0 0.0
    %2151 = vmatpush2.msra.mxu0 0.0
    %2152 = vmatprep.subr.mxu0 0.0
    %2153 = vmatpush2.msra.mxu0 0.0
    %2154 = vmatprep.subr.mxu0 0.0
    %2155 = vmatpush2.msra.mxu0 0.0
    %2156 = vmatprep.subr.mxu0 0.0
    %2157 = vmatpush2.msra.mxu0 0.0
    %2158 = vmatprep.subr.mxu0 0.0
    %2159 = vmatpush2.msra.mxu0 0.0
    %2160 = vmatprep.subr.mxu0 0.0
    %2161 = vmatpush2.msra.mxu0 0.0
    %2162 = vmatprep.mubr.f32.mxu0 0.0
    %2163 = vmatmul.mubr.f32.gmra.mxu0 %v1836
    %v2164 = vpop.f32.mrf.mxu0
    %v2165 = vadd.f32 0.0, %v2164
    %v2166 = vpop.f32.mrf.mxu0
    %v2167 = vadd.f32 0.0, %v2166
    %2168 = vdwg.mxu0
    %v2169 = vadd.f32 %v2023, %v2094
    %v2170 = vadd.f32 %v2024, %v2096
    %v2171 = vadd.f32 %v2025, %v2165
    %v2172 = vadd.f32 %v2026, %v2167
    %v2173 = vxor.u32 %v2169, 2147483648
    %v2174 = vmul.f32 %v2173, 1.442695
    %v2175 = vpow.pop %v2174
    %v2176 = vadd.f32 %v2175, 1.0
    %v2177 = vrcp.pop %v2176
    %v2178 = vmul.f32 1.0, %v2177
    %v2179 = vxor.u32 %v2170, 2147483648
    %v2180 = vmul.f32 %v2179, 1.442695
    %v2181 = vpow.pop %v2180
    %v2182 = vadd.f32 %v2181, 1.0
    %v2183 = vrcp.pop %v2182
    %v2184 = vmul.f32 1.0, %v2183
    %v2185 = vtanh.pop %v2171
    %v2186 = vxor.u32 %v2172, 2147483648
    %v2187 = vmul.f32 %v2186, 1.442695
    %v2188 = vpow.pop %v2187
    %v2189 = vadd.f32 %v2188, 1.0
    %v2190 = vrcp.pop %v2189
    %v2191 = vmul.f32 1.0, %v2190
    %v2192 = vmul.f32 %v2184, %v1837
    %v2193 = vmul.f32 %v2178, %v2185
    %v2194 = vadd.f32 %v2192, %v2193
    %v2195 = vtanh.pop %v2194
    %v2196 = vmul.f32 %v2191, %v2195
    %vm2197 = vcmp.gt.s32.totalorder %v117, 3
    %v2198 = vsel %vm2197, %v2196, %v1836
    %v2199 = vsel %vm2197, %v2194, %v1837
    %v2200 = vsel %vm2197, %v2196, 0.0
    %s2201 = scalar_lea.vmem [#allocation4], 24
    %2202 = vst [vmem:[%s2201] sm:$0xff] %v2200
    %s2203 = scalar_lea.vmem [#allocation3], 128
    %v2204 = vld [vmem:[%s2203] sm:$0xff]
    %v2205 = vld [vmem:[%s2203 + $0x8] sm:$0xff]
    %v2206 = vld [vmem:[%s2203 + $0x10] sm:$0xff]
    %v2207 = vld [vmem:[%s2203 + $0x18] sm:$0xff]
    %2208 = vmatprep.subr.mxu0 %v937
    %2209 = vmatpush1.msra.mxu0 %v936
    %2210 = vmatprep.subr.mxu0 %v933
    %2211 = vmatpush1.msra.mxu0 %v932
    %2212 = vmatprep.subr.mxu0 %v929
    %2213 = vmatpush1.msra.mxu0 %v928
    %2214 = vmatprep.subr.mxu0 %v925
    %2215 = vmatpush1.msra.mxu0 %v924
    %2216 = vmatprep.subr.mxu0 %v921
    %2217 = vmatpush1.msra.mxu0 %v920
    %2218 = vmatprep.subr.mxu0 %v917
    %2219 = vmatpush1.msra.mxu0 %v916
    %2220 = vmatprep.subr.mxu0 %v913
    %2221 = vmatpush1.msra.mxu0 %v912
    %2222 = vmatprep.subr.mxu0 %v909
    %2223 = vmatpush1.msra.mxu0 %v908
    %2224 = vmatprep.subr.mxu0 %v905
    %2225 = vmatpush1.msra.mxu0 %v904
    %2226 = vmatprep.subr.mxu0 %v901
    %2227 = vmatpush1.msra.mxu0 %v900
    %2228 = vmatprep.subr.mxu0 %v897
    %2229 = vmatpush1.msra.mxu0 %v896
    %2230 = vmatprep.subr.mxu0 %v893
    %2231 = vmatpush1.msra.mxu0 %v892
    %2232 = vmatprep.subr.mxu0 %v889
    %2233 = vmatpush1.msra.mxu0 %v888
    %2234 = vmatprep.subr.mxu0 %v885
    %2235 = vmatpush1.msra.mxu0 %v884
    %2236 = vmatprep.subr.mxu0 %v881
    %2237 = vmatpush1.msra.mxu0 %v880
    %2238 = vmatprep.subr.mxu0 %v877
    %2239 = vmatpush1.msra.mxu0 %v876
    %2240 = vmatprep.subr.mxu0 0.0
    %2241 = vmatpush2.msra.mxu0 0.0
    %2242 = vmatprep.subr.mxu0 0.0
    %2243 = vmatpush2.msra.mxu0 0.0
    %2244 = vmatprep.subr.mxu0 0.0
    %2245 = vmatpush2.msra.mxu0 0.0
    %2246 = vmatprep.subr.mxu0 0.0
    %2247 = vmatpush2.msra.mxu0 0.0
    %2248 = vmatprep.subr.mxu0 0.0
    %2249 = vmatpush2.msra.mxu0 0.0
    %2250 = vmatprep.subr.mxu0 0.0
    %2251 = vmatpush2.msra.mxu0 0.0
    %2252 = vmatprep.subr.mxu0 0.0
    %2253 = vmatpush2.msra.mxu0 0.0
    %2254 = vmatprep.subr.mxu0 0.0
    %2255 = vmatpush2.msra.mxu0 0.0
    %2256 = vmatprep.subr.mxu0 0.0
    %2257 = vmatpush2.msra.mxu0 0.0
    %2258 = vmatprep.subr.mxu0 0.0
    %2259 = vmatpush2.msra.mxu0 0.0
    %2260 = vmatprep.subr.mxu0 0.0
    %2261 = vmatpush2.msra.mxu0 0.0
    %2262 = vmatprep.subr.mxu0 0.0
    %2263 = vmatpush2.msra.mxu0 0.0
    %2264 = vmatprep.subr.mxu0 0.0
    %2265 = vmatpush2.msra.mxu0 0.0
    %2266 = vmatprep.subr.mxu0 0.0
    %2267 = vmatpush2.msra.mxu0 0.0
    %2268 = vmatprep.subr.mxu0 0.0
    %2269 = vmatpush2.msra.mxu0 0.0
    %2270 = vmatprep.subr.mxu0 0.0
    %2271 = vmatpush2.msra.mxu0 0.0
    %2272 = vmatprep.mubr.f32.mxu0 0.0
    %2273 = vmatmul.mubr.f32.gmra.mxu0 %v2017
    %v2274 = vpop.f32.mrf.mxu0
    %v2275 = vadd.f32 0.0, %v2274
    %v2276 = vpop.f32.mrf.mxu0
    %v2277 = vadd.f32 0.0, %v2276
    %2278 = vdwg.mxu0
    %2279 = vmatprep.subr.mxu0 %v939
    %2280 = vmatpush1.msra.mxu0 %v938
    %2281 = vmatprep.subr.mxu0 %v935
    %2282 = vmatpush1.msra.mxu0 %v934
    %2283 = vmatprep.subr.mxu0 %v931
    %2284 = vmatpush1.msra.mxu0 %v930
    %2285 = vmatprep.subr.mxu0 %v927
    %2286 = vmatpush1.msra.mxu0 %v926
    %2287 = vmatprep.subr.mxu0 %v923
    %2288 = vmatpush1.msra.mxu0 %v922
    %2289 = vmatprep.subr.mxu0 %v919
    %2290 = vmatpush1.msra.mxu0 %v918
    %2291 = vmatprep.subr.mxu0 %v915
    %2292 = vmatpush1.msra.mxu0 %v914
    %2293 = vmatprep.subr.mxu0 %v911
    %2294 = vmatpush1.msra.mxu0 %v910
    %2295 = vmatprep.subr.mxu0 %v907
    %2296 = vmatpush1.msra.mxu0 %v906
    %2297 = vmatprep.subr.mxu0 %v903
    %2298 = vmatpush1.msra.mxu0 %v902
    %2299 = vmatprep.subr.mxu0 %v899
    %2300 = vmatpush1.msra.mxu0 %v898
    %2301 = vmatprep.subr.mxu0 %v895
    %2302 = vmatpush1.msra.mxu0 %v894
    %2303 = vmatprep.subr.mxu0 %v891
    %2304 = vmatpush1.msra.mxu0 %v890
    %2305 = vmatprep.subr.mxu0 %v887
    %2306 = vmatpush1.msra.mxu0 %v886
    %2307 = vmatprep.subr.mxu0 %v883
    %2308 = vmatpush1.msra.mxu0 %v882
    %2309 = vmatprep.subr.mxu0 %v879
    %2310 = vmatpush1.msra.mxu0 %v878
    %2311 = vmatprep.subr.mxu0 0.0
    %2312 = vmatpush2.msra.mxu0 0.0
    %2313 = vmatprep.subr.mxu0 0.0
    %2314 = vmatpush2.msra.mxu0 0.0
    %2315 = vmatprep.subr.mxu0 0.0
    %2316 = vmatpush2.msra.mxu0 0.0
    %2317 = vmatprep.subr.mxu0 0.0
    %2318 = vmatpush2.msra.mxu0 0.0
    %2319 = vmatprep.subr.mxu0 0.0
    %2320 = vmatpush2.msra.mxu0 0.0
    %2321 = vmatprep.subr.mxu0 0.0
    %2322 = vmatpush2.msra.mxu0 0.0
    %2323 = vmatprep.subr.mxu0 0.0
    %2324 = vmatpush2.msra.mxu0 0.0
    %2325 = vmatprep.subr.mxu0 0.0
    %2326 = vmatpush2.msra.mxu0 0.0
    %2327 = vmatprep.subr.mxu0 0.0
    %2328 = vmatpush2.msra.mxu0 0.0
    %2329 = vmatprep.subr.mxu0 0.0
    %2330 = vmatpush2.msra.mxu0 0.0
    %2331 = vmatprep.subr.mxu0 0.0
    %2332 = vmatpush2.msra.mxu0 0.0
    %2333 = vmatprep.subr.mxu0 0.0
    %2334 = vmatpush2.msra.mxu0 0.0
    %2335 = vmatprep.subr.mxu0 0.0
    %2336 = vmatpush2.msra.mxu0 0.0
    %2337 = vmatprep.subr.mxu0 0.0
    %2338 = vmatpush2.msra.mxu0 0.0
    %2339 = vmatprep.subr.mxu0 0.0
    %2340 = vmatpush2.msra.mxu0 0.0
    %2341 = vmatprep.subr.mxu0 0.0
    %2342 = vmatpush2.msra.mxu0 0.0
    %2343 = vmatprep.mubr.f32.mxu0 0.0
    %2344 = vmatmul.mubr.f32.gmra.mxu0 %v2017
    %v2345 = vpop.f32.mrf.mxu0
    %v2346 = vadd.f32 0.0, %v2345
    %v2347 = vpop.f32.mrf.mxu0
    %v2348 = vadd.f32 0.0, %v2347
    %2349 = vdwg.mxu0
    %v2350 = vadd.f32 %v2204, %v2275
    %v2351 = vadd.f32 %v2205, %v2277
    %v2352 = vadd.f32 %v2206, %v2346
    %v2353 = vadd.f32 %v2207, %v2348
    %v2354 = vxor.u32 %v2350, 2147483648
    %v2355 = vmul.f32 %v2354, 1.442695
    %v2356 = vpow.pop %v2355
    %v2357 = vadd.f32 %v2356, 1.0
    %v2358 = vrcp.pop %v2357
    %v2359 = vmul.f32 1.0, %v2358
    %v2360 = vxor.u32 %v2351, 2147483648
    %v2361 = vmul.f32 %v2360, 1.442695
    %v2362 = vpow.pop %v2361
    %v2363 = vadd.f32 %v2362, 1.0
    %v2364 = vrcp.pop %v2363
    %v2365 = vmul.f32 1.0, %v2364
    %v2366 = vtanh.pop %v2352
    %v2367 = vxor.u32 %v2353, 2147483648
    %v2368 = vmul.f32 %v2367, 1.442695
    %v2369 = vpow.pop %v2368
    %v2370 = vadd.f32 %v2369, 1.0
    %v2371 = vrcp.pop %v2370
    %v2372 = vmul.f32 1.0, %v2371
    %v2373 = vmul.f32 %v2365, %v2018
    %v2374 = vmul.f32 %v2359, %v2366
    %v2375 = vadd.f32 %v2373, %v2374
    %v2376 = vtanh.pop %v2375
    %v2377 = vmul.f32 %v2372, %v2376
    %vm2378 = vcmp.gt.s32.totalorder %v117, 4
    %v2379 = vsel %vm2378, %v2377, %v2017
    %v2380 = vsel %vm2378, %v2375, %v2018
    %v2381 = vsel %vm2378, %v2377, 0.0
    %s2382 = scalar_lea.vmem [#allocation5], 32
    %2383 = vst [vmem:[%s2382] sm:$0xff] %v2381
    %s2384 = scalar_lea.vmem [#allocation2], 128
    %v2385 = vld [vmem:[%s2384] sm:$0xff]
    %v2386 = vld [vmem:[%s2384 + $0x8] sm:$0xff]
    %v2387 = vld [vmem:[%s2384 + $0x10] sm:$0xff]
    %v2388 = vld [vmem:[%s2384 + $0x18] sm:$0xff]
    %2389 = vmatprep.subr.mxu0 %v873
    %2390 = vmatpush1.msra.mxu0 %v872
    %2391 = vmatprep.subr.mxu0 %v869
    %2392 = vmatpush1.msra.mxu0 %v868
    %2393 = vmatprep.subr.mxu0 %v865
    %2394 = vmatpush1.msra.mxu0 %v864
    %2395 = vmatprep.subr.mxu0 %v861
    %2396 = vmatpush1.msra.mxu0 %v860
    %2397 = vmatprep.subr.mxu0 %v857
    %2398 = vmatpush1.msra.mxu0 %v856
    %2399 = vmatprep.subr.mxu0 %v853
    %2400 = vmatpush1.msra.mxu0 %v852
    %2401 = vmatprep.subr.mxu0 %v849
    %2402 = vmatpush1.msra.mxu0 %v848
    %2403 = vmatprep.subr.mxu0 %v845
    %2404 = vmatpush1.msra.mxu0 %v844
    %2405 = vmatprep.subr.mxu0 %v841
    %2406 = vmatpush1.msra.mxu0 %v840
    %2407 = vmatprep.subr.mxu0 %v837
    %2408 = vmatpush1.msra.mxu0 %v836
    %2409 = vmatprep.subr.mxu0 %v833
    %2410 = vmatpush1.msra.mxu0 %v832
    %2411 = vmatprep.subr.mxu0 %v829
    %2412 = vmatpush1.msra.mxu0 %v828
    %2413 = vmatprep.subr.mxu0 %v825
    %2414 = vmatpush1.msra.mxu0 %v824
    %2415 = vmatprep.subr.mxu0 %v821
    %2416 = vmatpush1.msra.mxu0 %v820
    %2417 = vmatprep.subr.mxu0 %v817
    %2418 = vmatpush1.msra.mxu0 %v816
    %2419 = vmatprep.subr.mxu0 %v813
    %2420 = vmatpush1.msra.mxu0 %v812
    %2421 = vmatprep.subr.mxu0 0.0
    %2422 = vmatpush2.msra.mxu0 0.0
    %2423 = vmatprep.subr.mxu0 0.0
    %2424 = vmatpush2.msra.mxu0 0.0
    %2425 = vmatprep.subr.mxu0 0.0
    %2426 = vmatpush2.msra.mxu0 0.0
    %2427 = vmatprep.subr.mxu0 0.0
    %2428 = vmatpush2.msra.mxu0 0.0
    %2429 = vmatprep.subr.mxu0 0.0
    %2430 = vmatpush2.msra.mxu0 0.0
    %2431 = vmatprep.subr.mxu0 0.0
    %2432 = vmatpush2.msra.mxu0 0.0
    %2433 = vmatprep.subr.mxu0 0.0
    %2434 = vmatpush2.msra.mxu0 0.0
    %2435 = vmatprep.subr.mxu0 0.0
    %2436 = vmatpush2.msra.mxu0 0.0
    %2437 = vmatprep.subr.mxu0 0.0
    %2438 = vmatpush2.msra.mxu0 0.0
    %2439 = vmatprep.subr.mxu0 0.0
    %2440 = vmatpush2.msra.mxu0 0.0
    %2441 = vmatprep.subr.mxu0 0.0
    %2442 = vmatpush2.msra.mxu0 0.0
    %2443 = vmatprep.subr.mxu0 0.0
    %2444 = vmatpush2.msra.mxu0 0.0
    %2445 = vmatprep.subr.mxu0 0.0
    %2446 = vmatpush2.msra.mxu0 0.0
    %2447 = vmatprep.subr.mxu0 0.0
    %2448 = vmatpush2.msra.mxu0 0.0
    %2449 = vmatprep.subr.mxu0 0.0
    %2450 = vmatpush2.msra.mxu0 0.0
    %2451 = vmatprep.subr.mxu0 0.0
    %2452 = vmatpush2.msra.mxu0 0.0
    %2453 = vmatprep.mubr.f32.mxu0 0.0
    %2454 = vmatmul.mubr.f32.gmra.mxu0 %v2198
    %v2455 = vpop.f32.mrf.mxu0
    %v2456 = vadd.f32 0.0, %v2455
    %v2457 = vpop.f32.mrf.mxu0
    %v2458 = vadd.f32 0.0, %v2457
    %2459 = vdwg.mxu0
    %2460 = vmatprep.subr.mxu0 %v875
    %2461 = vmatpush1.msra.mxu0 %v874
    %2462 = vmatprep.subr.mxu0 %v871
    %2463 = vmatpush1.msra.mxu0 %v870
    %2464 = vmatprep.subr.mxu0 %v867
    %2465 = vmatpush1.msra.mxu0 %v866
    %2466 = vmatprep.subr.mxu0 %v863
    %2467 = vmatpush1.msra.mxu0 %v862
    %2468 = vmatprep.subr.mxu0 %v859
    %2469 = vmatpush1.msra.mxu0 %v858
    %2470 = vmatprep.subr.mxu0 %v855
    %2471 = vmatpush1.msra.mxu0 %v854
    %2472 = vmatprep.subr.mxu0 %v851
    %2473 = vmatpush1.msra.mxu0 %v850
    %2474 = vmatprep.subr.mxu0 %v847
    %2475 = vmatpush1.msra.mxu0 %v846
    %2476 = vmatprep.subr.mxu0 %v843
    %2477 = vmatpush1.msra.mxu0 %v842
    %2478 = vmatprep.subr.mxu0 %v839
    %2479 = vmatpush1.msra.mxu0 %v838
    %2480 = vmatprep.subr.mxu0 %v835
    %2481 = vmatpush1.msra.mxu0 %v834
    %2482 = vmatprep.subr.mxu0 %v831
    %2483 = vmatpush1.msra.mxu0 %v830
    %2484 = vmatprep.subr.mxu0 %v827
    %2485 = vmatpush1.msra.mxu0 %v826
    %2486 = vmatprep.subr.mxu0 %v823
    %2487 = vmatpush1.msra.mxu0 %v822
    %2488 = vmatprep.subr.mxu0 %v819
    %2489 = vmatpush1.msra.mxu0 %v818
    %2490 = vmatprep.subr.mxu0 %v815
    %2491 = vmatpush1.msra.mxu0 %v814
    %2492 = vmatprep.subr.mxu0 0.0
    %2493 = vmatpush2.msra.mxu0 0.0
    %2494 = vmatprep.subr.mxu0 0.0
    %2495 = vmatpush2.msra.mxu0 0.0
    %2496 = vmatprep.subr.mxu0 0.0
    %2497 = vmatpush2.msra.mxu0 0.0
    %2498 = vmatprep.subr.mxu0 0.0
    %2499 = vmatpush2.msra.mxu0 0.0
    %2500 = vmatprep.subr.mxu0 0.0
    %2501 = vmatpush2.msra.mxu0 0.0
    %2502 = vmatprep.subr.mxu0 0.0
    %2503 = vmatpush2.msra.mxu0 0.0
    %2504 = vmatprep.subr.mxu0 0.0
    %2505 = vmatpush2.msra.mxu0 0.0
    %2506 = vmatprep.subr.mxu0 0.0
    %2507 = vmatpush2.msra.mxu0 0.0
    %2508 = vmatprep.subr.mxu0 0.0
    %2509 = vmatpush2.msra.mxu0 0.0
    %2510 = vmatprep.subr.mxu0 0.0
    %2511 = vmatpush2.msra.mxu0 0.0
    %2512 = vmatprep.subr.mxu0 0.0
    %2513 = vmatpush2.msra.mxu0 0.0
    %2514 = vmatprep.subr.mxu0 0.0
    %2515 = vmatpush2.msra.mxu0 0.0
    %2516 = vmatprep.subr.mxu0 0.0
    %2517 = vmatpush2.msra.mxu0 0.0
    %2518 = vmatprep.subr.mxu0 0.0
    %2519 = vmatpush2.msra.mxu0 0.0
    %2520 = vmatprep.subr.mxu0 0.0
    %2521 = vmatpush2.msra.mxu0 0.0
    %2522 = vmatprep.subr.mxu0 0.0
    %2523 = vmatpush2.msra.mxu0 0.0
    %2524 = vmatprep.mubr.f32.mxu0 0.0
    %2525 = vmatmul.mubr.f32.gmra.mxu0 %v2198
    %v2526 = vpop.f32.mrf.mxu0
    %v2527 = vadd.f32 0.0, %v2526
    %v2528 = vpop.f32.mrf.mxu0
    %v2529 = vadd.f32 0.0, %v2528
    %2530 = vdwg.mxu0
    %v2531 = vadd.f32 %v2385, %v2456
    %v2532 = vadd.f32 %v2386, %v2458
    %v2533 = vadd.f32 %v2387, %v2527
    %v2534 = vadd.f32 %v2388, %v2529
    %v2535 = vxor.u32 %v2531, 2147483648
    %v2536 = vmul.f32 %v2535, 1.442695
    %v2537 = vpow.pop %v2536
    %v2538 = vadd.f32 %v2537, 1.0
    %v2539 = vrcp.pop %v2538
    %v2540 = vmul.f32 1.0, %v2539
    %v2541 = vxor.u32 %v2532, 2147483648
    %v2542 = vmul.f32 %v2541, 1.442695
    %v2543 = vpow.pop %v2542
    %v2544 = vadd.f32 %v2543, 1.0
    %v2545 = vrcp.pop %v2544
    %v2546 = vmul.f32 1.0, %v2545
    %v2547 = vtanh.pop %v2533
    %v2548 = vxor.u32 %v2534, 2147483648
    %v2549 = vmul.f32 %v2548, 1.442695
    %v2550 = vpow.pop %v2549
    %v2551 = vadd.f32 %v2550, 1.0
    %v2552 = vrcp.pop %v2551
    %v2553 = vmul.f32 1.0, %v2552
    %v2554 = vmul.f32 %v2546, %v2199
    %v2555 = vmul.f32 %v2540, %v2547
    %v2556 = vadd.f32 %v2554, %v2555
    %v2557 = vtanh.pop %v2556
    %v2558 = vmul.f32 %v2553, %v2557
    %v2559 = vsel %vm2378, %v2558, %v2198
    %v2560 = vsel %vm2378, %v2556, %v2199
    %v2561 = vsel %vm2378, %v2558, 0.0
    %s2562 = scalar_lea.vmem [#allocation4], 32
    %2563 = vst [vmem:[%s2562] sm:$0xff] %v2561
    %s2564 = scalar_lea.vmem [#allocation3], 96
    %v2565 = vld [vmem:[%s2564] sm:$0xff]
    %v2566 = vld [vmem:[%s2564 + $0x8] sm:$0xff]
    %v2567 = vld [vmem:[%s2564 + $0x10] sm:$0xff]
    %v2568 = vld [vmem:[%s2564 + $0x18] sm:$0xff]
    %2569 = vmatprep.subr.mxu0 %v937
    %2570 = vmatpush1.msra.mxu0 %v936
    %2571 = vmatprep.subr.mxu0 %v933
    %2572 = vmatpush1.msra.mxu0 %v932
    %2573 = vmatprep.subr.mxu0 %v929
    %2574 = vmatpush1.msra.mxu0 %v928
    %2575 = vmatprep.subr.mxu0 %v925
    %2576 = vmatpush1.msra.mxu0 %v924
    %2577 = vmatprep.subr.mxu0 %v921
    %2578 = vmatpush1.msra.mxu0 %v920
    %2579 = vmatprep.subr.mxu0 %v917
    %2580 = vmatpush1.msra.mxu0 %v916
    %2581 = vmatprep.subr.mxu0 %v913
    %2582 = vmatpush1.msra.mxu0 %v912
    %2583 = vmatprep.subr.mxu0 %v909
    %2584 = vmatpush1.msra.mxu0 %v908
    %2585 = vmatprep.subr.mxu0 %v905
    %2586 = vmatpush1.msra.mxu0 %v904
    %2587 = vmatprep.subr.mxu0 %v901
    %2588 = vmatpush1.msra.mxu0 %v900
    %2589 = vmatprep.subr.mxu0 %v897
    %2590 = vmatpush1.msra.mxu0 %v896
    %2591 = vmatprep.subr.mxu0 %v893
    %2592 = vmatpush1.msra.mxu0 %v892
    %2593 = vmatprep.subr.mxu0 %v889
    %2594 = vmatpush1.msra.mxu0 %v888
    %2595 = vmatprep.subr.mxu0 %v885
    %2596 = vmatpush1.msra.mxu0 %v884
    %2597 = vmatprep.subr.mxu0 %v881
    %2598 = vmatpush1.msra.mxu0 %v880
    %2599 = vmatprep.subr.mxu0 %v877
    %2600 = vmatpush1.msra.mxu0 %v876
    %2601 = vmatprep.subr.mxu0 0.0
    %2602 = vmatpush2.msra.mxu0 0.0
    %2603 = vmatprep.subr.mxu0 0.0
    %2604 = vmatpush2.msra.mxu0 0.0
    %2605 = vmatprep.subr.mxu0 0.0
    %2606 = vmatpush2.msra.mxu0 0.0
    %2607 = vmatprep.subr.mxu0 0.0
    %2608 = vmatpush2.msra.mxu0 0.0
    %2609 = vmatprep.subr.mxu0 0.0
    %2610 = vmatpush2.msra.mxu0 0.0
    %2611 = vmatprep.subr.mxu0 0.0
    %2612 = vmatpush2.msra.mxu0 0.0
    %2613 = vmatprep.subr.mxu0 0.0
    %2614 = vmatpush2.msra.mxu0 0.0
    %2615 = vmatprep.subr.mxu0 0.0
    %2616 = vmatpush2.msra.mxu0 0.0
    %2617 = vmatprep.subr.mxu0 0.0
    %2618 = vmatpush2.msra.mxu0 0.0
    %2619 = vmatprep.subr.mxu0 0.0
    %2620 = vmatpush2.msra.mxu0 0.0
    %2621 = vmatprep.subr.mxu0 0.0
    %2622 = vmatpush2.msra.mxu0 0.0
    %2623 = vmatprep.subr.mxu0 0.0
    %2624 = vmatpush2.msra.mxu0 0.0
    %2625 = vmatprep.subr.mxu0 0.0
    %2626 = vmatpush2.msra.mxu0 0.0
    %2627 = vmatprep.subr.mxu0 0.0
    %2628 = vmatpush2.msra.mxu0 0.0
    %2629 = vmatprep.subr.mxu0 0.0
    %2630 = vmatpush2.msra.mxu0 0.0
    %2631 = vmatprep.subr.mxu0 0.0
    %2632 = vmatpush2.msra.mxu0 0.0
    %2633 = vmatprep.mubr.f32.mxu0 0.0
    %2634 = vmatmul.mubr.f32.gmra.mxu0 %v2379
    %v2635 = vpop.f32.mrf.mxu0
    %v2636 = vadd.f32 0.0, %v2635
    %v2637 = vpop.f32.mrf.mxu0
    %v2638 = vadd.f32 0.0, %v2637
    %2639 = vdwg.mxu0
    %2640 = vmatprep.subr.mxu0 %v939
    %2641 = vmatpush1.msra.mxu0 %v938
    %2642 = vmatprep.subr.mxu0 %v935
    %2643 = vmatpush1.msra.mxu0 %v934
    %2644 = vmatprep.subr.mxu0 %v931
    %2645 = vmatpush1.msra.mxu0 %v930
    %2646 = vmatprep.subr.mxu0 %v927
    %2647 = vmatpush1.msra.mxu0 %v926
    %2648 = vmatprep.subr.mxu0 %v923
    %2649 = vmatpush1.msra.mxu0 %v922
    %2650 = vmatprep.subr.mxu0 %v919
    %2651 = vmatpush1.msra.mxu0 %v918
    %2652 = vmatprep.subr.mxu0 %v915
    %2653 = vmatpush1.msra.mxu0 %v914
    %2654 = vmatprep.subr.mxu0 %v911
    %2655 = vmatpush1.msra.mxu0 %v910
    %2656 = vmatprep.subr.mxu0 %v907
    %2657 = vmatpush1.msra.mxu0 %v906
    %2658 = vmatprep.subr.mxu0 %v903
    %2659 = vmatpush1.msra.mxu0 %v902
    %2660 = vmatprep.subr.mxu0 %v899
    %2661 = vmatpush1.msra.mxu0 %v898
    %2662 = vmatprep.subr.mxu0 %v895
    %2663 = vmatpush1.msra.mxu0 %v894
    %2664 = vmatprep.subr.mxu0 %v891
    %2665 = vmatpush1.msra.mxu0 %v890
    %2666 = vmatprep.subr.mxu0 %v887
    %2667 = vmatpush1.msra.mxu0 %v886
    %2668 = vmatprep.subr.mxu0 %v883
    %2669 = vmatpush1.msra.mxu0 %v882
    %2670 = vmatprep.subr.mxu0 %v879
    %2671 = vmatpush1.msra.mxu0 %v878
    %2672 = vmatprep.subr.mxu0 0.0
    %2673 = vmatpush2.msra.mxu0 0.0
    %2674 = vmatprep.subr.mxu0 0.0
    %2675 = vmatpush2.msra.mxu0 0.0
    %2676 = vmatprep.subr.mxu0 0.0
    %2677 = vmatpush2.msra.mxu0 0.0
    %2678 = vmatprep.subr.mxu0 0.0
    %2679 = vmatpush2.msra.mxu0 0.0
    %2680 = vmatprep.subr.mxu0 0.0
    %2681 = vmatpush2.msra.mxu0 0.0
    %2682 = vmatprep.subr.mxu0 0.0
    %2683 = vmatpush2.msra.mxu0 0.0
    %2684 = vmatprep.subr.mxu0 0.0
    %2685 = vmatpush2.msra.mxu0 0.0
    %2686 = vmatprep.subr.mxu0 0.0
    %2687 = vmatpush2.msra.mxu0 0.0
    %2688 = vmatprep.subr.mxu0 0.0
    %2689 = vmatpush2.msra.mxu0 0.0
    %2690 = vmatprep.subr.mxu0 0.0
    %2691 = vmatpush2.msra.mxu0 0.0
    %2692 = vmatprep.subr.mxu0 0.0
    %2693 = vmatpush2.msra.mxu0 0.0
    %2694 = vmatprep.subr.mxu0 0.0
    %2695 = vmatpush2.msra.mxu0 0.0
    %2696 = vmatprep.subr.mxu0 0.0
    %2697 = vmatpush2.msra.mxu0 0.0
    %2698 = vmatprep.subr.mxu0 0.0
    %2699 = vmatpush2.msra.mxu0 0.0
    %2700 = vmatprep.subr.mxu0 0.0
    %2701 = vmatpush2.msra.mxu0 0.0
    %2702 = vmatprep.subr.mxu0 0.0
    %2703 = vmatpush2.msra.mxu0 0.0
    %2704 = vmatprep.mubr.f32.mxu0 0.0
    %2705 = vmatmul.mubr.f32.gmra.mxu0 %v2379
    %v2706 = vpop.f32.mrf.mxu0
    %v2707 = vadd.f32 0.0, %v2706
    %v2708 = vpop.f32.mrf.mxu0
    %v2709 = vadd.f32 0.0, %v2708
    %2710 = vdwg.mxu0
    %v2711 = vadd.f32 %v2565, %v2636
    %v2712 = vadd.f32 %v2566, %v2638
    %v2713 = vadd.f32 %v2567, %v2707
    %v2714 = vadd.f32 %v2568, %v2709
    %v2715 = vxor.u32 %v2711, 2147483648
    %v2716 = vmul.f32 %v2715, 1.442695
    %v2717 = vpow.pop %v2716
    %v2718 = vadd.f32 %v2717, 1.0
    %v2719 = vrcp.pop %v2718
    %v2720 = vmul.f32 1.0, %v2719
    %v2721 = vxor.u32 %v2712, 2147483648
    %v2722 = vmul.f32 %v2721, 1.442695
    %v2723 = vpow.pop %v2722
    %v2724 = vadd.f32 %v2723, 1.0
    %v2725 = vrcp.pop %v2724
    %v2726 = vmul.f32 1.0, %v2725
    %v2727 = vtanh.pop %v2713
    %v2728 = vxor.u32 %v2714, 2147483648
    %v2729 = vmul.f32 %v2728, 1.442695
    %v2730 = vpow.pop %v2729
    %v2731 = vadd.f32 %v2730, 1.0
    %v2732 = vrcp.pop %v2731
    %v2733 = vmul.f32 1.0, %v2732
    %v2734 = vmul.f32 %v2726, %v2380
    %v2735 = vmul.f32 %v2720, %v2727
    %v2736 = vadd.f32 %v2734, %v2735
    %v2737 = vtanh.pop %v2736
    %v2738 = vmul.f32 %v2733, %v2737
    %v2739 = vsel %vm2197, %v2738, %v2379
    %v2740 = vsel %vm2197, %v2736, %v2380
    %v2741 = vsel %vm2197, %v2738, 0.0
    %s2742 = scalar_lea.vmem [#allocation5], 24
    %2743 = vst [vmem:[%s2742] sm:$0xff] %v2741
    %s2744 = scalar_lea.vmem [#allocation2], 160
    %v2745 = vld [vmem:[%s2744] sm:$0xff]
    %v2746 = vld [vmem:[%s2744 + $0x8] sm:$0xff]
    %v2747 = vld [vmem:[%s2744 + $0x10] sm:$0xff]
    %v2748 = vld [vmem:[%s2744 + $0x18] sm:$0xff]
    %2749 = vmatprep.subr.mxu0 %v873
    %2750 = vmatpush1.msra.mxu0 %v872
    %2751 = vmatprep.subr.mxu0 %v869
    %2752 = vmatpush1.msra.mxu0 %v868
    %2753 = vmatprep.subr.mxu0 %v865
    %2754 = vmatpush1.msra.mxu0 %v864
    %2755 = vmatprep.subr.mxu0 %v861
    %2756 = vmatpush1.msra.mxu0 %v860
    %2757 = vmatprep.subr.mxu0 %v857
    %2758 = vmatpush1.msra.mxu0 %v856
    %2759 = vmatprep.subr.mxu0 %v853
    %2760 = vmatpush1.msra.mxu0 %v852
    %2761 = vmatprep.subr.mxu0 %v849
    %2762 = vmatpush1.msra.mxu0 %v848
    %2763 = vmatprep.subr.mxu0 %v845
    %2764 = vmatpush1.msra.mxu0 %v844
    %2765 = vmatprep.subr.mxu0 %v841
    %2766 = vmatpush1.msra.mxu0 %v840
    %2767 = vmatprep.subr.mxu0 %v837
    %2768 = vmatpush1.msra.mxu0 %v836
    %2769 = vmatprep.subr.mxu0 %v833
    %2770 = vmatpush1.msra.mxu0 %v832
    %2771 = vmatprep.subr.mxu0 %v829
    %2772 = vmatpush1.msra.mxu0 %v828
    %2773 = vmatprep.subr.mxu0 %v825
    %2774 = vmatpush1.msra.mxu0 %v824
    %2775 = vmatprep.subr.mxu0 %v821
    %2776 = vmatpush1.msra.mxu0 %v820
    %2777 = vmatprep.subr.mxu0 %v817
    %2778 = vmatpush1.msra.mxu0 %v816
    %2779 = vmatprep.subr.mxu0 %v813
    %2780 = vmatpush1.msra.mxu0 %v812
    %2781 = vmatprep.subr.mxu0 0.0
    %2782 = vmatpush2.msra.mxu0 0.0
    %2783 = vmatprep.subr.mxu0 0.0
    %2784 = vmatpush2.msra.mxu0 0.0
    %2785 = vmatprep.subr.mxu0 0.0
    %2786 = vmatpush2.msra.mxu0 0.0
    %2787 = vmatprep.subr.mxu0 0.0
    %2788 = vmatpush2.msra.mxu0 0.0
    %2789 = vmatprep.subr.mxu0 0.0
    %2790 = vmatpush2.msra.mxu0 0.0
    %2791 = vmatprep.subr.mxu0 0.0
    %2792 = vmatpush2.msra.mxu0 0.0
    %2793 = vmatprep.subr.mxu0 0.0
    %2794 = vmatpush2.msra.mxu0 0.0
    %2795 = vmatprep.subr.mxu0 0.0
    %2796 = vmatpush2.msra.mxu0 0.0
    %2797 = vmatprep.subr.mxu0 0.0
    %2798 = vmatpush2.msra.mxu0 0.0
    %2799 = vmatprep.subr.mxu0 0.0
    %2800 = vmatpush2.msra.mxu0 0.0
    %2801 = vmatprep.subr.mxu0 0.0
    %2802 = vmatpush2.msra.mxu0 0.0
    %2803 = vmatprep.subr.mxu0 0.0
    %2804 = vmatpush2.msra.mxu0 0.0
    %2805 = vmatprep.subr.mxu0 0.0
    %2806 = vmatpush2.msra.mxu0 0.0
    %2807 = vmatprep.subr.mxu0 0.0
    %2808 = vmatpush2.msra.mxu0 0.0
    %2809 = vmatprep.subr.mxu0 0.0
    %2810 = vmatpush2.msra.mxu0 0.0
    %2811 = vmatprep.subr.mxu0 0.0
    %2812 = vmatpush2.msra.mxu0 0.0
    %2813 = vmatprep.mubr.f32.mxu0 0.0
    %2814 = vmatmul.mubr.f32.gmra.mxu0 %v2559
    %v2815 = vpop.f32.mrf.mxu0
    %v2816 = vadd.f32 0.0, %v2815
    %v2817 = vpop.f32.mrf.mxu0
    %v2818 = vadd.f32 0.0, %v2817
    %2819 = vdwg.mxu0
    %2820 = vmatprep.subr.mxu0 %v875
    %2821 = vmatpush1.msra.mxu0 %v874
    %2822 = vmatprep.subr.mxu0 %v871
    %2823 = vmatpush1.msra.mxu0 %v870
    %2824 = vmatprep.subr.mxu0 %v867
    %2825 = vmatpush1.msra.mxu0 %v866
    %2826 = vmatprep.subr.mxu0 %v863
    %2827 = vmatpush1.msra.mxu0 %v862
    %2828 = vmatprep.subr.mxu0 %v859
    %2829 = vmatpush1.msra.mxu0 %v858
    %2830 = vmatprep.subr.mxu0 %v855
    %2831 = vmatpush1.msra.mxu0 %v854
    %2832 = vmatprep.subr.mxu0 %v851
    %2833 = vmatpush1.msra.mxu0 %v850
    %2834 = vmatprep.subr.mxu0 %v847
    %2835 = vmatpush1.msra.mxu0 %v846
    %2836 = vmatprep.subr.mxu0 %v843
    %2837 = vmatpush1.msra.mxu0 %v842
    %2838 = vmatprep.subr.mxu0 %v839
    %2839 = vmatpush1.msra.mxu0 %v838
    %2840 = vmatprep.subr.mxu0 %v835
    %2841 = vmatpush1.msra.mxu0 %v834
    %2842 = vmatprep.subr.mxu0 %v831
    %2843 = vmatpush1.msra.mxu0 %v830
    %2844 = vmatprep.subr.mxu0 %v827
    %2845 = vmatpush1.msra.mxu0 %v826
    %2846 = vmatprep.subr.mxu0 %v823
    %2847 = vmatpush1.msra.mxu0 %v822
    %2848 = vmatprep.subr.mxu0 %v819
    %2849 = vmatpush1.msra.mxu0 %v818
    %2850 = vmatprep.subr.mxu0 %v815
    %2851 = vmatpush1.msra.mxu0 %v814
    %2852 = vmatprep.subr.mxu0 0.0
    %2853 = vmatpush2.msra.mxu0 0.0
    %2854 = vmatprep.subr.mxu0 0.0
    %2855 = vmatpush2.msra.mxu0 0.0
    %2856 = vmatprep.subr.mxu0 0.0
    %2857 = vmatpush2.msra.mxu0 0.0
    %2858 = vmatprep.subr.mxu0 0.0
    %2859 = vmatpush2.msra.mxu0 0.0
    %2860 = vmatprep.subr.mxu0 0.0
    %2861 = vmatpush2.msra.mxu0 0.0
    %2862 = vmatprep.subr.mxu0 0.0
    %2863 = vmatpush2.msra.mxu0 0.0
    %2864 = vmatprep.subr.mxu0 0.0
    %2865 = vmatpush2.msra.mxu0 0.0
    %2866 = vmatprep.subr.mxu0 0.0
    %2867 = vmatpush2.msra.mxu0 0.0
    %2868 = vmatprep.subr.mxu0 0.0
    %2869 = vmatpush2.msra.mxu0 0.0
    %2870 = vmatprep.subr.mxu0 0.0
    %2871 = vmatpush2.msra.mxu0 0.0
    %2872 = vmatprep.subr.mxu0 0.0
    %2873 = vmatpush2.msra.mxu0 0.0
    %2874 = vmatprep.subr.mxu0 0.0
    %2875 = vmatpush2.msra.mxu0 0.0
    %2876 = vmatprep.subr.mxu0 0.0
    %2877 = vmatpush2.msra.mxu0 0.0
    %2878 = vmatprep.subr.mxu0 0.0
    %2879 = vmatpush2.msra.mxu0 0.0
    %2880 = vmatprep.subr.mxu0 0.0
    %2881 = vmatpush2.msra.mxu0 0.0
    %2882 = vmatprep.subr.mxu0 0.0
    %2883 = vmatpush2.msra.mxu0 0.0
    %2884 = vmatprep.mubr.f32.mxu0 0.0
    %2885 = vmatmul.mubr.f32.gmra.mxu0 %v2559
    %v2886 = vpop.f32.mrf.mxu0
    %v2887 = vadd.f32 0.0, %v2886
    %v2888 = vpop.f32.mrf.mxu0
    %v2889 = vadd.f32 0.0, %v2888
    %2890 = vdwg.mxu0
    %v2891 = vadd.f32 %v2745, %v2816
    %v2892 = vadd.f32 %v2746, %v2818
    %v2893 = vadd.f32 %v2747, %v2887
    %v2894 = vadd.f32 %v2748, %v2889
    %v2895 = vxor.u32 %v2891, 2147483648
    %v2896 = vmul.f32 %v2895, 1.442695
    %v2897 = vpow.pop %v2896
    %v2898 = vadd.f32 %v2897, 1.0
    %v2899 = vrcp.pop %v2898
    %v2900 = vmul.f32 1.0, %v2899
    %v2901 = vxor.u32 %v2892, 2147483648
    %v2902 = vmul.f32 %v2901, 1.442695
    %v2903 = vpow.pop %v2902
    %v2904 = vadd.f32 %v2903, 1.0
    %v2905 = vrcp.pop %v2904
    %v2906 = vmul.f32 1.0, %v2905
    %v2907 = vtanh.pop %v2893
    %v2908 = vxor.u32 %v2894, 2147483648
    %v2909 = vmul.f32 %v2908, 1.442695
    %v2910 = vpow.pop %v2909
    %v2911 = vadd.f32 %v2910, 1.0
    %v2912 = vrcp.pop %v2911
    %v2913 = vmul.f32 1.0, %v2912
    %v2914 = vmul.f32 %v2906, %v2560
    %v2915 = vmul.f32 %v2900, %v2907
    %v2916 = vadd.f32 %v2914, %v2915
    %v2917 = vtanh.pop %v2916
    %v2918 = vmul.f32 %v2913, %v2917
    %v2919 = vsel %vm2016, %v2918, %v2559
    %v2920 = vsel %vm2016, %v2916, %v2560
    %v2921 = vsel %vm2016, %v2918, 0.0
    %s2922 = scalar_lea.vmem [#allocation4], 40
    %2923 = vst [vmem:[%s2922] sm:$0xff] %v2921
    %s2924 = scalar_lea.vmem [#allocation3], 64
    %v2925 = vld [vmem:[%s2924] sm:$0xff]
    %v2926 = vld [vmem:[%s2924 + $0x8] sm:$0xff]
    %v2927 = vld [vmem:[%s2924 + $0x10] sm:$0xff]
    %v2928 = vld [vmem:[%s2924 + $0x18] sm:$0xff]
    %2929 = vmatprep.subr.mxu0 %v937
    %2930 = vmatpush1.msra.mxu0 %v936
    %2931 = vmatprep.subr.mxu0 %v933
    %2932 = vmatpush1.msra.mxu0 %v932
    %2933 = vmatprep.subr.mxu0 %v929
    %2934 = vmatpush1.msra.mxu0 %v928
    %2935 = vmatprep.subr.mxu0 %v925
    %2936 = vmatpush1.msra.mxu0 %v924
    %2937 = vmatprep.subr.mxu0 %v921
    %2938 = vmatpush1.msra.mxu0 %v920
    %2939 = vmatprep.subr.mxu0 %v917
    %2940 = vmatpush1.msra.mxu0 %v916
    %2941 = vmatprep.subr.mxu0 %v913
    %2942 = vmatpush1.msra.mxu0 %v912
    %2943 = vmatprep.subr.mxu0 %v909
    %2944 = vmatpush1.msra.mxu0 %v908
    %2945 = vmatprep.subr.mxu0 %v905
    %2946 = vmatpush1.msra.mxu0 %v904
    %2947 = vmatprep.subr.mxu0 %v901
    %2948 = vmatpush1.msra.mxu0 %v900
    %2949 = vmatprep.subr.mxu0 %v897
    %2950 = vmatpush1.msra.mxu0 %v896
    %2951 = vmatprep.subr.mxu0 %v893
    %2952 = vmatpush1.msra.mxu0 %v892
    %2953 = vmatprep.subr.mxu0 %v889
    %2954 = vmatpush1.msra.mxu0 %v888
    %2955 = vmatprep.subr.mxu0 %v885
    %2956 = vmatpush1.msra.mxu0 %v884
    %2957 = vmatprep.subr.mxu0 %v881
    %2958 = vmatpush1.msra.mxu0 %v880
    %2959 = vmatprep.subr.mxu0 %v877
    %2960 = vmatpush1.msra.mxu0 %v876
    %2961 = vmatprep.subr.mxu0 0.0
    %2962 = vmatpush2.msra.mxu0 0.0
    %2963 = vmatprep.subr.mxu0 0.0
    %2964 = vmatpush2.msra.mxu0 0.0
    %2965 = vmatprep.subr.mxu0 0.0
    %2966 = vmatpush2.msra.mxu0 0.0
    %2967 = vmatprep.subr.mxu0 0.0
    %2968 = vmatpush2.msra.mxu0 0.0
    %2969 = vmatprep.subr.mxu0 0.0
    %2970 = vmatpush2.msra.mxu0 0.0
    %2971 = vmatprep.subr.mxu0 0.0
    %2972 = vmatpush2.msra.mxu0 0.0
    %2973 = vmatprep.subr.mxu0 0.0
    %2974 = vmatpush2.msra.mxu0 0.0
    %2975 = vmatprep.subr.mxu0 0.0
    %2976 = vmatpush2.msra.mxu0 0.0
    %2977 = vmatprep.subr.mxu0 0.0
    %2978 = vmatpush2.msra.mxu0 0.0
    %2979 = vmatprep.subr.mxu0 0.0
    %2980 = vmatpush2.msra.mxu0 0.0
    %2981 = vmatprep.subr.mxu0 0.0
    %2982 = vmatpush2.msra.mxu0 0.0
    %2983 = vmatprep.subr.mxu0 0.0
    %2984 = vmatpush2.msra.mxu0 0.0
    %2985 = vmatprep.subr.mxu0 0.0
    %2986 = vmatpush2.msra.mxu0 0.0
    %2987 = vmatprep.subr.mxu0 0.0
    %2988 = vmatpush2.msra.mxu0 0.0
    %2989 = vmatprep.subr.mxu0 0.0
    %2990 = vmatpush2.msra.mxu0 0.0
    %2991 = vmatprep.subr.mxu0 0.0
    %2992 = vmatpush2.msra.mxu0 0.0
    %2993 = vmatprep.mubr.f32.mxu0 0.0
    %2994 = vmatmul.mubr.f32.gmra.mxu0 %v2739
    %v2995 = vpop.f32.mrf.mxu0
    %v2996 = vadd.f32 0.0, %v2995
    %v2997 = vpop.f32.mrf.mxu0
    %v2998 = vadd.f32 0.0, %v2997
    %2999 = vdwg.mxu0
    %3000 = vmatprep.subr.mxu0 %v939
    %3001 = vmatpush1.msra.mxu0 %v938
    %3002 = vmatprep.subr.mxu0 %v935
    %3003 = vmatpush1.msra.mxu0 %v934
    %3004 = vmatprep.subr.mxu0 %v931
    %3005 = vmatpush1.msra.mxu0 %v930
    %3006 = vmatprep.subr.mxu0 %v927
    %3007 = vmatpush1.msra.mxu0 %v926
    %3008 = vmatprep.subr.mxu0 %v923
    %3009 = vmatpush1.msra.mxu0 %v922
    %3010 = vmatprep.subr.mxu0 %v919
    %3011 = vmatpush1.msra.mxu0 %v918
    %3012 = vmatprep.subr.mxu0 %v915
    %3013 = vmatpush1.msra.mxu0 %v914
    %3014 = vmatprep.subr.mxu0 %v911
    %3015 = vmatpush1.msra.mxu0 %v910
    %3016 = vmatprep.subr.mxu0 %v907
    %3017 = vmatpush1.msra.mxu0 %v906
    %3018 = vmatprep.subr.mxu0 %v903
    %3019 = vmatpush1.msra.mxu0 %v902
    %3020 = vmatprep.subr.mxu0 %v899
    %3021 = vmatpush1.msra.mxu0 %v898
    %3022 = vmatprep.subr.mxu0 %v895
    %3023 = vmatpush1.msra.mxu0 %v894
    %3024 = vmatprep.subr.mxu0 %v891
    %3025 = vmatpush1.msra.mxu0 %v890
    %3026 = vmatprep.subr.mxu0 %v887
    %3027 = vmatpush1.msra.mxu0 %v886
    %3028 = vmatprep.subr.mxu0 %v883
    %3029 = vmatpush1.msra.mxu0 %v882
    %3030 = vmatprep.subr.mxu0 %v879
    %3031 = vmatpush1.msra.mxu0 %v878
    %3032 = vmatprep.subr.mxu0 0.0
    %3033 = vmatpush2.msra.mxu0 0.0
    %3034 = vmatprep.subr.mxu0 0.0
    %3035 = vmatpush2.msra.mxu0 0.0
    %3036 = vmatprep.subr.mxu0 0.0
    %3037 = vmatpush2.msra.mxu0 0.0
    %3038 = vmatprep.subr.mxu0 0.0
    %3039 = vmatpush2.msra.mxu0 0.0
    %3040 = vmatprep.subr.mxu0 0.0
    %3041 = vmatpush2.msra.mxu0 0.0
    %3042 = vmatprep.subr.mxu0 0.0
    %3043 = vmatpush2.msra.mxu0 0.0
    %3044 = vmatprep.subr.mxu0 0.0
    %3045 = vmatpush2.msra.mxu0 0.0
    %3046 = vmatprep.subr.mxu0 0.0
    %3047 = vmatpush2.msra.mxu0 0.0
    %3048 = vmatprep.subr.mxu0 0.0
    %3049 = vmatpush2.msra.mxu0 0.0
    %3050 = vmatprep.subr.mxu0 0.0
    %3051 = vmatpush2.msra.mxu0 0.0
    %3052 = vmatprep.subr.mxu0 0.0
    %3053 = vmatpush2.msra.mxu0 0.0
    %3054 = vmatprep.subr.mxu0 0.0
    %3055 = vmatpush2.msra.mxu0 0.0
    %3056 = vmatprep.subr.mxu0 0.0
    %3057 = vmatpush2.msra.mxu0 0.0
    %3058 = vmatprep.subr.mxu0 0.0
    %3059 = vmatpush2.msra.mxu0 0.0
    %3060 = vmatprep.subr.mxu0 0.0
    %3061 = vmatpush2.msra.mxu0 0.0
    %3062 = vmatprep.subr.mxu0 0.0
    %3063 = vmatpush2.msra.mxu0 0.0
    %3064 = vmatprep.mubr.f32.mxu0 0.0
    %3065 = vmatmul.mubr.f32.gmra.mxu0 %v2739
    %v3066 = vpop.f32.mrf.mxu0
    %v3067 = vadd.f32 0.0, %v3066
    %v3068 = vpop.f32.mrf.mxu0
    %v3069 = vadd.f32 0.0, %v3068
    %3070 = vdwg.mxu0
    %v3071 = vadd.f32 %v2925, %v2996
    %v3072 = vadd.f32 %v2926, %v2998
    %v3073 = vadd.f32 %v2927, %v3067
    %v3074 = vadd.f32 %v2928, %v3069
    %v3075 = vxor.u32 %v3071, 2147483648
    %v3076 = vmul.f32 %v3075, 1.442695
    %v3077 = vpow.pop %v3076
    %v3078 = vadd.f32 %v3077, 1.0
    %v3079 = vrcp.pop %v3078
    %v3080 = vmul.f32 1.0, %v3079
    %v3081 = vxor.u32 %v3072, 2147483648
    %v3082 = vmul.f32 %v3081, 1.442695
    %v3083 = vpow.pop %v3082
    %v3084 = vadd.f32 %v3083, 1.0
    %v3085 = vrcp.pop %v3084
    %v3086 = vmul.f32 1.0, %v3085
    %v3087 = vtanh.pop %v3073
    %v3088 = vxor.u32 %v3074, 2147483648
    %v3089 = vmul.f32 %v3088, 1.442695
    %v3090 = vpow.pop %v3089
    %v3091 = vadd.f32 %v3090, 1.0
    %v3092 = vrcp.pop %v3091
    %v3093 = vmul.f32 1.0, %v3092
    %v3094 = vmul.f32 %v3086, %v2740
    %v3095 = vmul.f32 %v3080, %v3087
    %v3096 = vadd.f32 %v3094, %v3095
    %v3097 = vtanh.pop %v3096
    %v3098 = vmul.f32 %v3093, %v3097
    %v3099 = vsel %vm1835, %v3098, %v2739
    %v3100 = vsel %vm1835, %v3096, %v2740
    %v3101 = vsel %vm1835, %v3098, 0.0
    %s3102 = scalar_lea.vmem [#allocation5], 16
    %3103 = vst [vmem:[%s3102] sm:$0xff] %v3101
    %s3104 = scalar_lea.vmem [#allocation2], 192
    %v3105 = vld [vmem:[%s3104] sm:$0xff]
    %v3106 = vld [vmem:[%s3104 + $0x8] sm:$0xff]
    %v3107 = vld [vmem:[%s3104 + $0x10] sm:$0xff]
    %v3108 = vld [vmem:[%s3104 + $0x18] sm:$0xff]
    %3109 = vmatprep.subr.mxu0 %v873
    %3110 = vmatpush1.msra.mxu0 %v872
    %3111 = vmatprep.subr.mxu0 %v869
    %3112 = vmatpush1.msra.mxu0 %v868
    %3113 = vmatprep.subr.mxu0 %v865
    %3114 = vmatpush1.msra.mxu0 %v864
    %3115 = vmatprep.subr.mxu0 %v861
    %3116 = vmatpush1.msra.mxu0 %v860
    %3117 = vmatprep.subr.mxu0 %v857
    %3118 = vmatpush1.msra.mxu0 %v856
    %3119 = vmatprep.subr.mxu0 %v853
    %3120 = vmatpush1.msra.mxu0 %v852
    %3121 = vmatprep.subr.mxu0 %v849
    %3122 = vmatpush1.msra.mxu0 %v848
    %3123 = vmatprep.subr.mxu0 %v845
    %3124 = vmatpush1.msra.mxu0 %v844
    %3125 = vmatprep.subr.mxu0 %v841
    %3126 = vmatpush1.msra.mxu0 %v840
    %3127 = vmatprep.subr.mxu0 %v837
    %3128 = vmatpush1.msra.mxu0 %v836
    %3129 = vmatprep.subr.mxu0 %v833
    %3130 = vmatpush1.msra.mxu0 %v832
    %3131 = vmatprep.subr.mxu0 %v829
    %3132 = vmatpush1.msra.mxu0 %v828
    %3133 = vmatprep.subr.mxu0 %v825
    %3134 = vmatpush1.msra.mxu0 %v824
    %3135 = vmatprep.subr.mxu0 %v821
    %3136 = vmatpush1.msra.mxu0 %v820
    %3137 = vmatprep.subr.mxu0 %v817
    %3138 = vmatpush1.msra.mxu0 %v816
    %3139 = vmatprep.subr.mxu0 %v813
    %3140 = vmatpush1.msra.mxu0 %v812
    %3141 = vmatprep.subr.mxu0 0.0
    %3142 = vmatpush2.msra.mxu0 0.0
    %3143 = vmatprep.subr.mxu0 0.0
    %3144 = vmatpush2.msra.mxu0 0.0
    %3145 = vmatprep.subr.mxu0 0.0
    %3146 = vmatpush2.msra.mxu0 0.0
    %3147 = vmatprep.subr.mxu0 0.0
    %3148 = vmatpush2.msra.mxu0 0.0
    %3149 = vmatprep.subr.mxu0 0.0
    %3150 = vmatpush2.msra.mxu0 0.0
    %3151 = vmatprep.subr.mxu0 0.0
    %3152 = vmatpush2.msra.mxu0 0.0
    %3153 = vmatprep.subr.mxu0 0.0
    %3154 = vmatpush2.msra.mxu0 0.0
    %3155 = vmatprep.subr.mxu0 0.0
    %3156 = vmatpush2.msra.mxu0 0.0
    %3157 = vmatprep.subr.mxu0 0.0
    %3158 = vmatpush2.msra.mxu0 0.0
    %3159 = vmatprep.subr.mxu0 0.0
    %3160 = vmatpush2.msra.mxu0 0.0
    %3161 = vmatprep.subr.mxu0 0.0
    %3162 = vmatpush2.msra.mxu0 0.0
    %3163 = vmatprep.subr.mxu0 0.0
    %3164 = vmatpush2.msra.mxu0 0.0
    %3165 = vmatprep.subr.mxu0 0.0
    %3166 = vmatpush2.msra.mxu0 0.0
    %3167 = vmatprep.subr.mxu0 0.0
    %3168 = vmatpush2.msra.mxu0 0.0
    %3169 = vmatprep.subr.mxu0 0.0
    %3170 = vmatpush2.msra.mxu0 0.0
    %3171 = vmatprep.subr.mxu0 0.0
    %3172 = vmatpush2.msra.mxu0 0.0
    %3173 = vmatprep.mubr.f32.mxu0 0.0
    %3174 = vmatmul.mubr.f32.gmra.mxu0 %v2919
    %v3175 = vpop.f32.mrf.mxu0
    %v3176 = vadd.f32 0.0, %v3175
    %v3177 = vpop.f32.mrf.mxu0
    %v3178 = vadd.f32 0.0, %v3177
    %3179 = vdwg.mxu0
    %3180 = vmatprep.subr.mxu0 %v875
    %3181 = vmatpush1.msra.mxu0 %v874
    %3182 = vmatprep.subr.mxu0 %v871
    %3183 = vmatpush1.msra.mxu0 %v870
    %3184 = vmatprep.subr.mxu0 %v867
    %3185 = vmatpush1.msra.mxu0 %v866
    %3186 = vmatprep.subr.mxu0 %v863
    %3187 = vmatpush1.msra.mxu0 %v862
    %3188 = vmatprep.subr.mxu0 %v859
    %3189 = vmatpush1.msra.mxu0 %v858
    %3190 = vmatprep.subr.mxu0 %v855
    %3191 = vmatpush1.msra.mxu0 %v854
    %3192 = vmatprep.subr.mxu0 %v851
    %3193 = vmatpush1.msra.mxu0 %v850
    %3194 = vmatprep.subr.mxu0 %v847
    %3195 = vmatpush1.msra.mxu0 %v846
    %3196 = vmatprep.subr.mxu0 %v843
    %3197 = vmatpush1.msra.mxu0 %v842
    %3198 = vmatprep.subr.mxu0 %v839
    %3199 = vmatpush1.msra.mxu0 %v838
    %3200 = vmatprep.subr.mxu0 %v835
    %3201 = vmatpush1.msra.mxu0 %v834
    %3202 = vmatprep.subr.mxu0 %v831
    %3203 = vmatpush1.msra.mxu0 %v830
    %3204 = vmatprep.subr.mxu0 %v827
    %3205 = vmatpush1.msra.mxu0 %v826
    %3206 = vmatprep.subr.mxu0 %v823
    %3207 = vmatpush1.msra.mxu0 %v822
    %3208 = vmatprep.subr.mxu0 %v819
    %3209 = vmatpush1.msra.mxu0 %v818
    %3210 = vmatprep.subr.mxu0 %v815
    %3211 = vmatpush1.msra.mxu0 %v814
    %3212 = vmatprep.subr.mxu0 0.0
    %3213 = vmatpush2.msra.mxu0 0.0
    %3214 = vmatprep.subr.mxu0 0.0
    %3215 = vmatpush2.msra.mxu0 0.0
    %3216 = vmatprep.subr.mxu0 0.0
    %3217 = vmatpush2.msra.mxu0 0.0
    %3218 = vmatprep.subr.mxu0 0.0
    %3219 = vmatpush2.msra.mxu0 0.0
    %3220 = vmatprep.subr.mxu0 0.0
    %3221 = vmatpush2.msra.mxu0 0.0
    %3222 = vmatprep.subr.mxu0 0.0
    %3223 = vmatpush2.msra.mxu0 0.0
    %3224 = vmatprep.subr.mxu0 0.0
    %3225 = vmatpush2.msra.mxu0 0.0
    %3226 = vmatprep.subr.mxu0 0.0
    %3227 = vmatpush2.msra.mxu0 0.0
    %3228 = vmatprep.subr.mxu0 0.0
    %3229 = vmatpush2.msra.mxu0 0.0
    %3230 = vmatprep.subr.mxu0 0.0
    %3231 = vmatpush2.msra.mxu0 0.0
    %3232 = vmatprep.subr.mxu0 0.0
    %3233 = vmatpush2.msra.mxu0 0.0
    %3234 = vmatprep.subr.mxu0 0.0
    %3235 = vmatpush2.msra.mxu0 0.0
    %3236 = vmatprep.subr.mxu0 0.0
    %3237 = vmatpush2.msra.mxu0 0.0
    %3238 = vmatprep.subr.mxu0 0.0
    %3239 = vmatpush2.msra.mxu0 0.0
    %3240 = vmatprep.subr.mxu0 0.0
    %3241 = vmatpush2.msra.mxu0 0.0
    %3242 = vmatprep.subr.mxu0 0.0
    %3243 = vmatpush2.msra.mxu0 0.0
    %3244 = vmatprep.mubr.f32.mxu0 0.0
    %3245 = vmatmul.mubr.f32.gmra.mxu0 %v2919
    %v3246 = vpop.f32.mrf.mxu0
    %v3247 = vadd.f32 0.0, %v3246
    %v3248 = vpop.f32.mrf.mxu0
    %v3249 = vadd.f32 0.0, %v3248
    %3250 = vdwg.mxu0
    %v3251 = vadd.f32 %v3105, %v3176
    %v3252 = vadd.f32 %v3106, %v3178
    %v3253 = vadd.f32 %v3107, %v3247
    %v3254 = vadd.f32 %v3108, %v3249
    %v3255 = vxor.u32 %v3251, 2147483648
    %v3256 = vmul.f32 %v3255, 1.442695
    %v3257 = vpow.pop %v3256
    %v3258 = vadd.f32 %v3257, 1.0
    %v3259 = vrcp.pop %v3258
    %v3260 = vmul.f32 1.0, %v3259
    %v3261 = vxor.u32 %v3252, 2147483648
    %v3262 = vmul.f32 %v3261, 1.442695
    %v3263 = vpow.pop %v3262
    %v3264 = vadd.f32 %v3263, 1.0
    %v3265 = vrcp.pop %v3264
    %v3266 = vmul.f32 1.0, %v3265
    %v3267 = vtanh.pop %v3253
    %v3268 = vxor.u32 %v3254, 2147483648
    %v3269 = vmul.f32 %v3268, 1.442695
    %v3270 = vpow.pop %v3269
    %v3271 = vadd.f32 %v3270, 1.0
    %v3272 = vrcp.pop %v3271
    %v3273 = vmul.f32 1.0, %v3272
    %v3274 = vmul.f32 %v3266, %v2920
    %v3275 = vmul.f32 %v3260, %v3267
    %v3276 = vadd.f32 %v3274, %v3275
    %v3277 = vtanh.pop %v3276
    %v3278 = vmul.f32 %v3273, %v3277
    %v3279 = vsel %vm1654, %v3278, %v2919
    %v3280 = vsel %vm1654, %v3276, %v2920
    %v3281 = vsel %vm1654, %v3278, 0.0
    %s3282 = scalar_lea.vmem [#allocation4], 48
    %3283 = vst [vmem:[%s3282] sm:$0xff] %v3281
    %s3284 = scalar_lea.vmem [#allocation3], 32
    %v3285 = vld [vmem:[%s3284] sm:$0xff]
    %v3286 = vld [vmem:[%s3284 + $0x8] sm:$0xff]
    %v3287 = vld [vmem:[%s3284 + $0x10] sm:$0xff]
    %v3288 = vld [vmem:[%s3284 + $0x18] sm:$0xff]
    %3289 = vmatprep.subr.mxu0 %v937
    %3290 = vmatpush1.msra.mxu0 %v936
    %3291 = vmatprep.subr.mxu0 %v933
    %3292 = vmatpush1.msra.mxu0 %v932
    %3293 = vmatprep.subr.mxu0 %v929
    %3294 = vmatpush1.msra.mxu0 %v928
    %3295 = vmatprep.subr.mxu0 %v925
    %3296 = vmatpush1.msra.mxu0 %v924
    %3297 = vmatprep.subr.mxu0 %v921
    %3298 = vmatpush1.msra.mxu0 %v920
    %3299 = vmatprep.subr.mxu0 %v917
    %3300 = vmatpush1.msra.mxu0 %v916
    %3301 = vmatprep.subr.mxu0 %v913
    %3302 = vmatpush1.msra.mxu0 %v912
    %3303 = vmatprep.subr.mxu0 %v909
    %3304 = vmatpush1.msra.mxu0 %v908
    %3305 = vmatprep.subr.mxu0 %v905
    %3306 = vmatpush1.msra.mxu0 %v904
    %3307 = vmatprep.subr.mxu0 %v901
    %3308 = vmatpush1.msra.mxu0 %v900
    %3309 = vmatprep.subr.mxu0 %v897
    %3310 = vmatpush1.msra.mxu0 %v896
    %3311 = vmatprep.subr.mxu0 %v893
    %3312 = vmatpush1.msra.mxu0 %v892
    %3313 = vmatprep.subr.mxu0 %v889
    %3314 = vmatpush1.msra.mxu0 %v888
    %3315 = vmatprep.subr.mxu0 %v885
    %3316 = vmatpush1.msra.mxu0 %v884
    %3317 = vmatprep.subr.mxu0 %v881
    %3318 = vmatpush1.msra.mxu0 %v880
    %3319 = vmatprep.subr.mxu0 %v877
    %3320 = vmatpush1.msra.mxu0 %v876
    %3321 = vmatprep.subr.mxu0 0.0
    %3322 = vmatpush2.msra.mxu0 0.0
    %3323 = vmatprep.subr.mxu0 0.0
    %3324 = vmatpush2.msra.mxu0 0.0
    %3325 = vmatprep.subr.mxu0 0.0
    %3326 = vmatpush2.msra.mxu0 0.0
    %3327 = vmatprep.subr.mxu0 0.0
    %3328 = vmatpush2.msra.mxu0 0.0
    %3329 = vmatprep.subr.mxu0 0.0
    %3330 = vmatpush2.msra.mxu0 0.0
    %3331 = vmatprep.subr.mxu0 0.0
    %3332 = vmatpush2.msra.mxu0 0.0
    %3333 = vmatprep.subr.mxu0 0.0
    %3334 = vmatpush2.msra.mxu0 0.0
    %3335 = vmatprep.subr.mxu0 0.0
    %3336 = vmatpush2.msra.mxu0 0.0
    %3337 = vmatprep.subr.mxu0 0.0
    %3338 = vmatpush2.msra.mxu0 0.0
    %3339 = vmatprep.subr.mxu0 0.0
    %3340 = vmatpush2.msra.mxu0 0.0
    %3341 = vmatprep.subr.mxu0 0.0
    %3342 = vmatpush2.msra.mxu0 0.0
    %3343 = vmatprep.subr.mxu0 0.0
    %3344 = vmatpush2.msra.mxu0 0.0
    %3345 = vmatprep.subr.mxu0 0.0
    %3346 = vmatpush2.msra.mxu0 0.0
    %3347 = vmatprep.subr.mxu0 0.0
    %3348 = vmatpush2.msra.mxu0 0.0
    %3349 = vmatprep.subr.mxu0 0.0
    %3350 = vmatpush2.msra.mxu0 0.0
    %3351 = vmatprep.subr.mxu0 0.0
    %3352 = vmatpush2.msra.mxu0 0.0
    %3353 = vmatprep.mubr.f32.mxu0 0.0
    %3354 = vmatmul.mubr.f32.gmra.mxu0 %v3099
    %v3355 = vpop.f32.mrf.mxu0
    %v3356 = vadd.f32 0.0, %v3355
    %v3357 = vpop.f32.mrf.mxu0
    %v3358 = vadd.f32 0.0, %v3357
    %3359 = vdwg.mxu0
    %3360 = vmatprep.subr.mxu0 %v939
    %3361 = vmatpush1.msra.mxu0 %v938
    %3362 = vmatprep.subr.mxu0 %v935
    %3363 = vmatpush1.msra.mxu0 %v934
    %3364 = vmatprep.subr.mxu0 %v931
    %3365 = vmatpush1.msra.mxu0 %v930
    %3366 = vmatprep.subr.mxu0 %v927
    %3367 = vmatpush1.msra.mxu0 %v926
    %3368 = vmatprep.subr.mxu0 %v923
    %3369 = vmatpush1.msra.mxu0 %v922
    %3370 = vmatprep.subr.mxu0 %v919
    %3371 = vmatpush1.msra.mxu0 %v918
    %3372 = vmatprep.subr.mxu0 %v915
    %3373 = vmatpush1.msra.mxu0 %v914
    %3374 = vmatprep.subr.mxu0 %v911
    %3375 = vmatpush1.msra.mxu0 %v910
    %3376 = vmatprep.subr.mxu0 %v907
    %3377 = vmatpush1.msra.mxu0 %v906
    %3378 = vmatprep.subr.mxu0 %v903
    %3379 = vmatpush1.msra.mxu0 %v902
    %3380 = vmatprep.subr.mxu0 %v899
    %3381 = vmatpush1.msra.mxu0 %v898
    %3382 = vmatprep.subr.mxu0 %v895
    %3383 = vmatpush1.msra.mxu0 %v894
    %3384 = vmatprep.subr.mxu0 %v891
    %3385 = vmatpush1.msra.mxu0 %v890
    %3386 = vmatprep.subr.mxu0 %v887
    %3387 = vmatpush1.msra.mxu0 %v886
    %3388 = vmatprep.subr.mxu0 %v883
    %3389 = vmatpush1.msra.mxu0 %v882
    %3390 = vmatprep.subr.mxu0 %v879
    %3391 = vmatpush1.msra.mxu0 %v878
    %3392 = vmatprep.subr.mxu0 0.0
    %3393 = vmatpush2.msra.mxu0 0.0
    %3394 = vmatprep.subr.mxu0 0.0
    %3395 = vmatpush2.msra.mxu0 0.0
    %3396 = vmatprep.subr.mxu0 0.0
    %3397 = vmatpush2.msra.mxu0 0.0
    %3398 = vmatprep.subr.mxu0 0.0
    %3399 = vmatpush2.msra.mxu0 0.0
    %3400 = vmatprep.subr.mxu0 0.0
    %3401 = vmatpush2.msra.mxu0 0.0
    %3402 = vmatprep.subr.mxu0 0.0
    %3403 = vmatpush2.msra.mxu0 0.0
    %3404 = vmatprep.subr.mxu0 0.0
    %3405 = vmatpush2.msra.mxu0 0.0
    %3406 = vmatprep.subr.mxu0 0.0
    %3407 = vmatpush2.msra.mxu0 0.0
    %3408 = vmatprep.subr.mxu0 0.0
    %3409 = vmatpush2.msra.mxu0 0.0
    %3410 = vmatprep.subr.mxu0 0.0
    %3411 = vmatpush2.msra.mxu0 0.0
    %3412 = vmatprep.subr.mxu0 0.0
    %3413 = vmatpush2.msra.mxu0 0.0
    %3414 = vmatprep.subr.mxu0 0.0
    %3415 = vmatpush2.msra.mxu0 0.0
    %3416 = vmatprep.subr.mxu0 0.0
    %3417 = vmatpush2.msra.mxu0 0.0
    %3418 = vmatprep.subr.mxu0 0.0
    %3419 = vmatpush2.msra.mxu0 0.0
    %3420 = vmatprep.subr.mxu0 0.0
    %3421 = vmatpush2.msra.mxu0 0.0
    %3422 = vmatprep.subr.mxu0 0.0
    %3423 = vmatpush2.msra.mxu0 0.0
    %3424 = vmatprep.mubr.f32.mxu0 0.0
    %3425 = vmatmul.mubr.f32.gmra.mxu0 %v3099
    %v3426 = vpop.f32.mrf.mxu0
    %v3427 = vadd.f32 0.0, %v3426
    %v3428 = vpop.f32.mrf.mxu0
    %v3429 = vadd.f32 0.0, %v3428
    %3430 = vdwg.mxu0
    %v3431 = vadd.f32 %v3285, %v3356
    %v3432 = vadd.f32 %v3286, %v3358
    %v3433 = vadd.f32 %v3287, %v3427
    %v3434 = vadd.f32 %v3288, %v3429
    %v3435 = vxor.u32 %v3431, 2147483648
    %v3436 = vmul.f32 %v3435, 1.442695
    %v3437 = vpow.pop %v3436
    %v3438 = vadd.f32 %v3437, 1.0
    %v3439 = vrcp.pop %v3438
    %v3440 = vmul.f32 1.0, %v3439
    %v3441 = vxor.u32 %v3432, 2147483648
    %v3442 = vmul.f32 %v3441, 1.442695
    %v3443 = vpow.pop %v3442
    %v3444 = vadd.f32 %v3443, 1.0
    %v3445 = vrcp.pop %v3444
    %v3446 = vmul.f32 1.0, %v3445
    %v3447 = vtanh.pop %v3433
    %v3448 = vxor.u32 %v3434, 2147483648
    %v3449 = vmul.f32 %v3448, 1.442695
    %v3450 = vpow.pop %v3449
    %v3451 = vadd.f32 %v3450, 1.0
    %v3452 = vrcp.pop %v3451
    %v3453 = vmul.f32 1.0, %v3452
    %v3454 = vmul.f32 %v3446, %v3100
    %v3455 = vmul.f32 %v3440, %v3447
    %v3456 = vadd.f32 %v3454, %v3455
    %v3457 = vtanh.pop %v3456
    %v3458 = vmul.f32 %v3453, %v3457
    %v3459 = vsel %vm1473, %v3458, %v3099
    %v3460 = vsel %vm1473, %v3456, %v3100
    %v3461 = vsel %vm1473, %v3458, 0.0
    %s3462 = scalar_lea.vmem [#allocation5], 8
    %3463 = vst [vmem:[%s3462] sm:$0xff] %v3461
    %s3464 = scalar_lea.vmem [#allocation2], 224
    %v3465 = vld [vmem:[%s3464] sm:$0xff]
    %v3466 = vld [vmem:[%s3464 + $0x8] sm:$0xff]
    %v3467 = vld [vmem:[%s3464 + $0x10] sm:$0xff]
    %v3468 = vld [vmem:[%s3464 + $0x18] sm:$0xff]
    %3469 = vmatprep.subr.mxu0 %v873
    %3470 = vmatpush1.msra.mxu0 %v872
    %3471 = vmatprep.subr.mxu0 %v869
    %3472 = vmatpush1.msra.mxu0 %v868
    %3473 = vmatprep.subr.mxu0 %v865
    %3474 = vmatpush1.msra.mxu0 %v864
    %3475 = vmatprep.subr.mxu0 %v861
    %3476 = vmatpush1.msra.mxu0 %v860
    %3477 = vmatprep.subr.mxu0 %v857
    %3478 = vmatpush1.msra.mxu0 %v856
    %3479 = vmatprep.subr.mxu0 %v853
    %3480 = vmatpush1.msra.mxu0 %v852
    %3481 = vmatprep.subr.mxu0 %v849
    %3482 = vmatpush1.msra.mxu0 %v848
    %3483 = vmatprep.subr.mxu0 %v845
    %3484 = vmatpush1.msra.mxu0 %v844
    %3485 = vmatprep.subr.mxu0 %v841
    %3486 = vmatpush1.msra.mxu0 %v840
    %3487 = vmatprep.subr.mxu0 %v837
    %3488 = vmatpush1.msra.mxu0 %v836
    %3489 = vmatprep.subr.mxu0 %v833
    %3490 = vmatpush1.msra.mxu0 %v832
    %3491 = vmatprep.subr.mxu0 %v829
    %3492 = vmatpush1.msra.mxu0 %v828
    %3493 = vmatprep.subr.mxu0 %v825
    %3494 = vmatpush1.msra.mxu0 %v824
    %3495 = vmatprep.subr.mxu0 %v821
    %3496 = vmatpush1.msra.mxu0 %v820
    %3497 = vmatprep.subr.mxu0 %v817
    %3498 = vmatpush1.msra.mxu0 %v816
    %3499 = vmatprep.subr.mxu0 %v813
    %3500 = vmatpush1.msra.mxu0 %v812
    %3501 = vmatprep.subr.mxu0 0.0
    %3502 = vmatpush2.msra.mxu0 0.0
    %3503 = vmatprep.subr.mxu0 0.0
    %3504 = vmatpush2.msra.mxu0 0.0
    %3505 = vmatprep.subr.mxu0 0.0
    %3506 = vmatpush2.msra.mxu0 0.0
    %3507 = vmatprep.subr.mxu0 0.0
    %3508 = vmatpush2.msra.mxu0 0.0
    %3509 = vmatprep.subr.mxu0 0.0
    %3510 = vmatpush2.msra.mxu0 0.0
    %3511 = vmatprep.subr.mxu0 0.0
    %3512 = vmatpush2.msra.mxu0 0.0
    %3513 = vmatprep.subr.mxu0 0.0
    %3514 = vmatpush2.msra.mxu0 0.0
    %3515 = vmatprep.subr.mxu0 0.0
    %3516 = vmatpush2.msra.mxu0 0.0
    %3517 = vmatprep.subr.mxu0 0.0
    %3518 = vmatpush2.msra.mxu0 0.0
    %3519 = vmatprep.subr.mxu0 0.0
    %3520 = vmatpush2.msra.mxu0 0.0
    %3521 = vmatprep.subr.mxu0 0.0
    %3522 = vmatpush2.msra.mxu0 0.0
    %3523 = vmatprep.subr.mxu0 0.0
    %3524 = vmatpush2.msra.mxu0 0.0
    %3525 = vmatprep.subr.mxu0 0.0
    %3526 = vmatpush2.msra.mxu0 0.0
    %3527 = vmatprep.subr.mxu0 0.0
    %3528 = vmatpush2.msra.mxu0 0.0
    %3529 = vmatprep.subr.mxu0 0.0
    %3530 = vmatpush2.msra.mxu0 0.0
    %3531 = vmatprep.subr.mxu0 0.0
    %3532 = vmatpush2.msra.mxu0 0.0
    %3533 = vmatprep.mubr.f32.mxu0 0.0
    %3534 = vmatmul.mubr.f32.gmra.mxu0 %v3279
    %v3535 = vpop.f32.mrf.mxu0
    %v3536 = vadd.f32 0.0, %v3535
    %v3537 = vpop.f32.mrf.mxu0
    %v3538 = vadd.f32 0.0, %v3537
    %3539 = vdwg.mxu0
    %3540 = vmatprep.subr.mxu0 %v875
    %3541 = vmatpush1.msra.mxu0 %v874
    %3542 = vmatprep.subr.mxu0 %v871
    %3543 = vmatpush1.msra.mxu0 %v870
    %3544 = vmatprep.subr.mxu0 %v867
    %3545 = vmatpush1.msra.mxu0 %v866
    %3546 = vmatprep.subr.mxu0 %v863
    %3547 = vmatpush1.msra.mxu0 %v862
    %3548 = vmatprep.subr.mxu0 %v859
    %3549 = vmatpush1.msra.mxu0 %v858
    %3550 = vmatprep.subr.mxu0 %v855
    %3551 = vmatpush1.msra.mxu0 %v854
    %3552 = vmatprep.subr.mxu0 %v851
    %3553 = vmatpush1.msra.mxu0 %v850
    %3554 = vmatprep.subr.mxu0 %v847
    %3555 = vmatpush1.msra.mxu0 %v846
    %3556 = vmatprep.subr.mxu0 %v843
    %3557 = vmatpush1.msra.mxu0 %v842
    %3558 = vmatprep.subr.mxu0 %v839
    %3559 = vmatpush1.msra.mxu0 %v838
    %3560 = vmatprep.subr.mxu0 %v835
    %3561 = vmatpush1.msra.mxu0 %v834
    %3562 = vmatprep.subr.mxu0 %v831
    %3563 = vmatpush1.msra.mxu0 %v830
    %3564 = vmatprep.subr.mxu0 %v827
    %3565 = vmatpush1.msra.mxu0 %v826
    %3566 = vmatprep.subr.mxu0 %v823
    %3567 = vmatpush1.msra.mxu0 %v822
    %3568 = vmatprep.subr.mxu0 %v819
    %3569 = vmatpush1.msra.mxu0 %v818
    %3570 = vmatprep.subr.mxu0 %v815
    %3571 = vmatpush1.msra.mxu0 %v814
    %3572 = vmatprep.subr.mxu0 0.0
    %3573 = vmatpush2.msra.mxu0 0.0
    %3574 = vmatprep.subr.mxu0 0.0
    %3575 = vmatpush2.msra.mxu0 0.0
    %3576 = vmatprep.subr.mxu0 0.0
    %3577 = vmatpush2.msra.mxu0 0.0
    %3578 = vmatprep.subr.mxu0 0.0
    %3579 = vmatpush2.msra.mxu0 0.0
    %3580 = vmatprep.subr.mxu0 0.0
    %3581 = vmatpush2.msra.mxu0 0.0
    %3582 = vmatprep.subr.mxu0 0.0
    %3583 = vmatpush2.msra.mxu0 0.0
    %3584 = vmatprep.subr.mxu0 0.0
    %3585 = vmatpush2.msra.mxu0 0.0
    %3586 = vmatprep.subr.mxu0 0.0
    %3587 = vmatpush2.msra.mxu0 0.0
    %3588 = vmatprep.subr.mxu0 0.0
    %3589 = vmatpush2.msra.mxu0 0.0
    %3590 = vmatprep.subr.mxu0 0.0
    %3591 = vmatpush2.msra.mxu0 0.0
    %3592 = vmatprep.subr.mxu0 0.0
    %3593 = vmatpush2.msra.mxu0 0.0
    %3594 = vmatprep.subr.mxu0 0.0
    %3595 = vmatpush2.msra.mxu0 0.0
    %3596 = vmatprep.subr.mxu0 0.0
    %3597 = vmatpush2.msra.mxu0 0.0
    %3598 = vmatprep.subr.mxu0 0.0
    %3599 = vmatpush2.msra.mxu0 0.0
    %3600 = vmatprep.subr.mxu0 0.0
    %3601 = vmatpush2.msra.mxu0 0.0
    %3602 = vmatprep.subr.mxu0 0.0
    %3603 = vmatpush2.msra.mxu0 0.0
    %3604 = vmatprep.mubr.f32.mxu0 0.0
    %3605 = vmatmul.mubr.f32.gmra.mxu0 %v3279
    %v3606 = vpop.f32.mrf.mxu0
    %v3607 = vadd.f32 0.0, %v3606
    %v3608 = vpop.f32.mrf.mxu0
    %v3609 = vadd.f32 0.0, %v3608
    %3610 = vdwg.mxu0
    %v3611 = vadd.f32 %v3465, %v3536
    %v3612 = vadd.f32 %v3466, %v3538
    %v3613 = vadd.f32 %v3467, %v3607
    %v3614 = vadd.f32 %v3468, %v3609
    %v3615 = vxor.u32 %v3611, 2147483648
    %v3616 = vmul.f32 %v3615, 1.442695
    %v3617 = vpow.pop %v3616
    %v3618 = vadd.f32 %v3617, 1.0
    %v3619 = vrcp.pop %v3618
    %v3620 = vmul.f32 1.0, %v3619
    %v3621 = vxor.u32 %v3612, 2147483648
    %v3622 = vmul.f32 %v3621, 1.442695
    %v3623 = vpow.pop %v3622
    %v3624 = vadd.f32 %v3623, 1.0
    %v3625 = vrcp.pop %v3624
    %v3626 = vmul.f32 1.0, %v3625
    %v3627 = vtanh.pop %v3613
    %v3628 = vxor.u32 %v3614, 2147483648
    %v3629 = vmul.f32 %v3628, 1.442695
    %v3630 = vpow.pop %v3629
    %v3631 = vadd.f32 %v3630, 1.0
    %v3632 = vrcp.pop %v3631
    %v3633 = vmul.f32 1.0, %v3632
    %v3634 = vmul.f32 %v3626, %v3280
    %v3635 = vmul.f32 %v3620, %v3627
    %v3636 = vadd.f32 %v3634, %v3635
    %v3637 = vtanh.pop %v3636
    %v3638 = vmul.f32 %v3633, %v3637
    %v3639 = vsel %vm1293, %v3638, 0.0
    %s3640 = scalar_lea.vmem [#allocation4], 56
    %3641 = vst [vmem:[%s3640] sm:$0xff] %v3639
    %v3642 = vld [vmem:[#allocation3] sm:$0xff]
    %v3643 = vld [vmem:[#allocation3 + $0x8] sm:$0xff]
    %v3644 = vld [vmem:[#allocation3 + $0x10] sm:$0xff]
    %v3645 = vld [vmem:[#allocation3 + $0x18] sm:$0xff]
    %3646 = vmatprep.subr.mxu0 %v937
    %3647 = vmatpush1.msra.mxu0 %v936
    %3648 = vmatprep.subr.mxu0 %v933
    %3649 = vmatpush1.msra.mxu0 %v932
    %3650 = vmatprep.subr.mxu0 %v929
    %3651 = vmatpush1.msra.mxu0 %v928
    %3652 = vmatprep.subr.mxu0 %v925
    %3653 = vmatpush1.msra.mxu0 %v924
    %3654 = vmatprep.subr.mxu0 %v921
    %3655 = vmatpush1.msra.mxu0 %v920
    %3656 = vmatprep.subr.mxu0 %v917
    %3657 = vmatpush1.msra.mxu0 %v916
    %3658 = vmatprep.subr.mxu0 %v913
    %3659 = vmatpush1.msra.mxu0 %v912
    %3660 = vmatprep.subr.mxu0 %v909
    %3661 = vmatpush1.msra.mxu0 %v908
    %3662 = vmatprep.subr.mxu0 %v905
    %3663 = vmatpush1.msra.mxu0 %v904
    %3664 = vmatprep.subr.mxu0 %v901
    %3665 = vmatpush1.msra.mxu0 %v900
    %3666 = vmatprep.subr.mxu0 %v897
    %3667 = vmatpush1.msra.mxu0 %v896
    %3668 = vmatprep.subr.mxu0 %v893
    %3669 = vmatpush1.msra.mxu0 %v892
    %3670 = vmatprep.subr.mxu0 %v889
    %3671 = vmatpush1.msra.mxu0 %v888
    %3672 = vmatprep.subr.mxu0 %v885
    %3673 = vmatpush1.msra.mxu0 %v884
    %3674 = vmatprep.subr.mxu0 %v881
    %3675 = vmatpush1.msra.mxu0 %v880
    %3676 = vmatprep.subr.mxu0 %v877
    %3677 = vmatpush1.msra.mxu0 %v876
    %3678 = vmatprep.subr.mxu0 0.0
    %3679 = vmatpush2.msra.mxu0 0.0
    %3680 = vmatprep.subr.mxu0 0.0
    %3681 = vmatpush2.msra.mxu0 0.0
    %3682 = vmatprep.subr.mxu0 0.0
    %3683 = vmatpush2.msra.mxu0 0.0
    %3684 = vmatprep.subr.mxu0 0.0
    %3685 = vmatpush2.msra.mxu0 0.0
    %3686 = vmatprep.subr.mxu0 0.0
    %3687 = vmatpush2.msra.mxu0 0.0
    %3688 = vmatprep.subr.mxu0 0.0
    %3689 = vmatpush2.msra.mxu0 0.0
    %3690 = vmatprep.subr.mxu0 0.0
    %3691 = vmatpush2.msra.mxu0 0.0
    %3692 = vmatprep.subr.mxu0 0.0
    %3693 = vmatpush2.msra.mxu0 0.0
    %3694 = vmatprep.subr.mxu0 0.0
    %3695 = vmatpush2.msra.mxu0 0.0
    %3696 = vmatprep.subr.mxu0 0.0
    %3697 = vmatpush2.msra.mxu0 0.0
    %3698 = vmatprep.subr.mxu0 0.0
    %3699 = vmatpush2.msra.mxu0 0.0
    %3700 = vmatprep.subr.mxu0 0.0
    %3701 = vmatpush2.msra.mxu0 0.0
    %3702 = vmatprep.subr.mxu0 0.0
    %3703 = vmatpush2.msra.mxu0 0.0
    %3704 = vmatprep.subr.mxu0 0.0
    %3705 = vmatpush2.msra.mxu0 0.0
    %3706 = vmatprep.subr.mxu0 0.0
    %3707 = vmatpush2.msra.mxu0 0.0
    %3708 = vmatprep.subr.mxu0 0.0
    %3709 = vmatpush2.msra.mxu0 0.0
    %3710 = vmatprep.mubr.f32.mxu0 0.0
    %3711 = vmatmul.mubr.f32.gmra.mxu0 %v3459
    %v3712 = vpop.f32.mrf.mxu0
    %v3713 = vadd.f32 0.0, %v3712
    %v3714 = vpop.f32.mrf.mxu0
    %v3715 = vadd.f32 0.0, %v3714
    %3716 = vdwg.mxu0
    %3717 = vmatprep.subr.mxu0 %v939
    %3718 = vmatpush1.msra.mxu0 %v938
    %3719 = vmatprep.subr.mxu0 %v935
    %3720 = vmatpush1.msra.mxu0 %v934
    %3721 = vmatprep.subr.mxu0 %v931
    %3722 = vmatpush1.msra.mxu0 %v930
    %3723 = vmatprep.subr.mxu0 %v927
    %3724 = vmatpush1.msra.mxu0 %v926
    %3725 = vmatprep.subr.mxu0 %v923
    %3726 = vmatpush1.msra.mxu0 %v922
    %3727 = vmatprep.subr.mxu0 %v919
    %3728 = vmatpush1.msra.mxu0 %v918
    %3729 = vmatprep.subr.mxu0 %v915
    %3730 = vmatpush1.msra.mxu0 %v914
    %3731 = vmatprep.subr.mxu0 %v911
    %3732 = vmatpush1.msra.mxu0 %v910
    %3733 = vmatprep.subr.mxu0 %v907
    %3734 = vmatpush1.msra.mxu0 %v906
    %3735 = vmatprep.subr.mxu0 %v903
    %3736 = vmatpush1.msra.mxu0 %v902
    %3737 = vmatprep.subr.mxu0 %v899
    %3738 = vmatpush1.msra.mxu0 %v898
    %3739 = vmatprep.subr.mxu0 %v895
    %3740 = vmatpush1.msra.mxu0 %v894
    %3741 = vmatprep.subr.mxu0 %v891
    %3742 = vmatpush1.msra.mxu0 %v890
    %3743 = vmatprep.subr.mxu0 %v887
    %3744 = vmatpush1.msra.mxu0 %v886
    %3745 = vmatprep.subr.mxu0 %v883
    %3746 = vmatpush1.msra.mxu0 %v882
    %3747 = vmatprep.subr.mxu0 %v879
    %3748 = vmatpush1.msra.mxu0 %v878
    %3749 = vmatprep.subr.mxu0 0.0
    %3750 = vmatpush2.msra.mxu0 0.0
    %3751 = vmatprep.subr.mxu0 0.0
    %3752 = vmatpush2.msra.mxu0 0.0
    %3753 = vmatprep.subr.mxu0 0.0
    %3754 = vmatpush2.msra.mxu0 0.0
    %3755 = vmatprep.subr.mxu0 0.0
    %3756 = vmatpush2.msra.mxu0 0.0
    %3757 = vmatprep.subr.mxu0 0.0
    %3758 = vmatpush2.msra.mxu0 0.0
    %3759 = vmatprep.subr.mxu0 0.0
    %3760 = vmatpush2.msra.mxu0 0.0
    %3761 = vmatprep.subr.mxu0 0.0
    %3762 = vmatpush2.msra.mxu0 0.0
    %3763 = vmatprep.subr.mxu0 0.0
    %3764 = vmatpush2.msra.mxu0 0.0
    %3765 = vmatprep.subr.mxu0 0.0
    %3766 = vmatpush2.msra.mxu0 0.0
    %3767 = vmatprep.subr.mxu0 0.0
    %3768 = vmatpush2.msra.mxu0 0.0
    %3769 = vmatprep.subr.mxu0 0.0
    %3770 = vmatpush2.msra.mxu0 0.0
    %3771 = vmatprep.subr.mxu0 0.0
    %3772 = vmatpush2.msra.mxu0 0.0
    %3773 = vmatprep.subr.mxu0 0.0
    %3774 = vmatpush2.msra.mxu0 0.0
    %3775 = vmatprep.subr.mxu0 0.0
    %3776 = vmatpush2.msra.mxu0 0.0
    %3777 = vmatprep.subr.mxu0 0.0
    %3778 = vmatpush2.msra.mxu0 0.0
    %3779 = vmatprep.subr.mxu0 0.0
    %3780 = vmatpush2.msra.mxu0 0.0
    %3781 = vmatprep.mubr.f32.mxu0 0.0
    %3782 = vmatmul.mubr.f32.gmra.mxu0 %v3459
    %v3783 = vpop.f32.mrf.mxu0
    %v3784 = vadd.f32 0.0, %v3783
    %v3785 = vpop.f32.mrf.mxu0
    %v3786 = vadd.f32 0.0, %v3785
    %3787 = vdwg.mxu0
    %v3788 = vadd.f32 %v3642, %v3713
    %v3789 = vadd.f32 %v3643, %v3715
    %v3790 = vadd.f32 %v3644, %v3784
    %v3791 = vadd.f32 %v3645, %v3786
    %v3792 = vxor.u32 %v3788, 2147483648
    %v3793 = vmul.f32 %v3792, 1.442695
    %v3794 = vpow.pop %v3793
    %v3795 = vadd.f32 %v3794, 1.0
    %v3796 = vrcp.pop %v3795
    %v3797 = vmul.f32 1.0, %v3796
    %v3798 = vxor.u32 %v3789, 2147483648
    %v3799 = vmul.f32 %v3798, 1.442695
    %v3800 = vpow.pop %v3799
    %v3801 = vadd.f32 %v3800, 1.0
    %v3802 = vrcp.pop %v3801
    %v3803 = vmul.f32 1.0, %v3802
    %v3804 = vtanh.pop %v3790
    %v3805 = vxor.u32 %v3791, 2147483648
    %v3806 = vmul.f32 %v3805, 1.442695
    %v3807 = vpow.pop %v3806
    %v3808 = vadd.f32 %v3807, 1.0
    %v3809 = vrcp.pop %v3808
    %v3810 = vmul.f32 1.0, %v3809
    %v3811 = vmul.f32 %v3803, %v3460
    %v3812 = vmul.f32 %v3797, %v3804
    %v3813 = vadd.f32 %v3811, %v3812
    %v3814 = vtanh.pop %v3813
    %v3815 = vmul.f32 %v3810, %v3814
    %v3816 = vsel %vm1114, %v3815, 0.0
    %3817 = vst [vmem:[#allocation5] sm:$0xff] %v3816
    %v3818 = vld [vmem:[#allocation4] sm:$0xff]
    %v3819 = vld [vmem:[#allocation4 + $0x8] sm:$0xff]
    %v3820 = vld [vmem:[#allocation4 + $0x10] sm:$0xff]
    %v3821 = vld [vmem:[#allocation4 + $0x18] sm:$0xff]
    %v3822 = vld [vmem:[#allocation4 + $0x20] sm:$0xff]
    %v3823 = vld [vmem:[#allocation4 + $0x28] sm:$0xff]
    %v3824 = vld [vmem:[#allocation4 + $0x30] sm:$0xff]
    %v3825 = vld [vmem:[#allocation4 + $0x38] sm:$0xff]
    %v3826 = vld [vmem:[#allocation5] sm:$0xff]
    %v3827 = vld [vmem:[#allocation5 + $0x8] sm:$0xff]
    %v3828 = vld [vmem:[#allocation5 + $0x10] sm:$0xff]
    %v3829 = vld [vmem:[#allocation5 + $0x18] sm:$0xff]
    %v3830 = vld [vmem:[#allocation5 + $0x20] sm:$0xff]
    %v3831 = vld [vmem:[#allocation5 + $0x28] sm:$0xff]
    %v3832 = vld [vmem:[#allocation5 + $0x30] sm:$0xff]
    %v3833 = vld [vmem:[#allocation5 + $0x38] sm:$0xff]
    %v3834 = vld [vmem:[#allocation11] sm:$0xff]
    %v3835 = vld [vmem:[#allocation11 + $0x8] sm:$0xff]
    %v3836 = vld [vmem:[#allocation11 + $0x10] sm:$0xff]
    %v3837 = vld [vmem:[#allocation11 + $0x18] sm:$0xff]
    %v3838 = vld [vmem:[#allocation11 + $0x20] sm:$0xff]
    %v3839 = vld [vmem:[#allocation11 + $0x28] sm:$0xff]
    %v3840 = vld [vmem:[#allocation11 + $0x30] sm:$0xff]
    %v3841 = vld [vmem:[#allocation11 + $0x38] sm:$0xff]
    %v3842 = vld [vmem:[#allocation11 + $0x40] sm:$0xff]
    %v3843 = vld [vmem:[#allocation11 + $0x48] sm:$0xff]
    %v3844 = vld [vmem:[#allocation11 + $0x50] sm:$0xff]
    %v3845 = vld [vmem:[#allocation11 + $0x58] sm:$0xff]
    %v3846 = vld [vmem:[#allocation11 + $0x60] sm:$0xff]
    %v3847 = vld [vmem:[#allocation11 + $0x68] sm:$0xff]
    %v3848 = vld [vmem:[#allocation11 + $0x70] sm:$0xff]
    %v3849 = vld [vmem:[#allocation11 + $0x78] sm:$0xff]
    %v3850 = vld [vmem:[#allocation11 + $0x80] sm:$0xff]
    %v3851 = vld [vmem:[#allocation11 + $0x88] sm:$0xff]
    %v3852 = vld [vmem:[#allocation11 + $0x90] sm:$0xff]
    %v3853 = vld [vmem:[#allocation11 + $0x98] sm:$0xff]
    %v3854 = vld [vmem:[#allocation11 + $0xa0] sm:$0xff]
    %v3855 = vld [vmem:[#allocation11 + $0xa8] sm:$0xff]
    %v3856 = vld [vmem:[#allocation11 + $0xb0] sm:$0xff]
    %v3857 = vld [vmem:[#allocation11 + $0xb8] sm:$0xff]
    %v3858 = vld [vmem:[#allocation11 + $0xc0] sm:$0xff]
    %v3859 = vld [vmem:[#allocation11 + $0xc8] sm:$0xff]
    %v3860 = vld [vmem:[#allocation11 + $0xd0] sm:$0xff]
    %v3861 = vld [vmem:[#allocation11 + $0xd8] sm:$0xff]
    %v3862 = vld [vmem:[#allocation11 + $0xe0] sm:$0xff]
    %v3863 = vld [vmem:[#allocation11 + $0xe8] sm:$0xff]
    %v3864 = vld [vmem:[#allocation11 + $0xf0] sm:$0xff]
    %v3865 = vld [vmem:[#allocation11 + $0xf8] sm:$0xff]
    %v3866 = vld [vmem:[#allocation11 + $0x100] sm:$0xff]
    %v3867 = vld [vmem:[#allocation11 + $0x108] sm:$0xff]
    %v3868 = vld [vmem:[#allocation11 + $0x110] sm:$0xff]
    %v3869 = vld [vmem:[#allocation11 + $0x118] sm:$0xff]
    %v3870 = vld [vmem:[#allocation11 + $0x120] sm:$0xff]
    %v3871 = vld [vmem:[#allocation11 + $0x128] sm:$0xff]
    %v3872 = vld [vmem:[#allocation11 + $0x130] sm:$0xff]
    %v3873 = vld [vmem:[#allocation11 + $0x138] sm:$0xff]
    %v3874 = vld [vmem:[#allocation11 + $0x140] sm:$0xff]
    %v3875 = vld [vmem:[#allocation11 + $0x148] sm:$0xff]
    %v3876 = vld [vmem:[#allocation11 + $0x150] sm:$0xff]
    %v3877 = vld [vmem:[#allocation11 + $0x158] sm:$0xff]
    %v3878 = vld [vmem:[#allocation11 + $0x160] sm:$0xff]
    %v3879 = vld [vmem:[#allocation11 + $0x168] sm:$0xff]
    %v3880 = vld [vmem:[#allocation11 + $0x170] sm:$0xff]
    %v3881 = vld [vmem:[#allocation11 + $0x178] sm:$0xff]
    %v3882 = vld [vmem:[#allocation11 + $0x180] sm:$0xff]
    %v3883 = vld [vmem:[#allocation11 + $0x188] sm:$0xff]
    %v3884 = vld [vmem:[#allocation11 + $0x190] sm:$0xff]
    %v3885 = vld [vmem:[#allocation11 + $0x198] sm:$0xff]
    %v3886 = vld [vmem:[#allocation11 + $0x1a0] sm:$0xff]
    %v3887 = vld [vmem:[#allocation11 + $0x1a8] sm:$0xff]
    %v3888 = vld [vmem:[#allocation11 + $0x1b0] sm:$0xff]
    %v3889 = vld [vmem:[#allocation11 + $0x1b8] sm:$0xff]
    %v3890 = vld [vmem:[#allocation11 + $0x1c0] sm:$0xff]
    %v3891 = vld [vmem:[#allocation11 + $0x1c8] sm:$0xff]
    %v3892 = vld [vmem:[#allocation11 + $0x1d0] sm:$0xff]
    %v3893 = vld [vmem:[#allocation11 + $0x1d8] sm:$0xff]
    %v3894 = vld [vmem:[#allocation11 + $0x1e0] sm:$0xff]
    %v3895 = vld [vmem:[#allocation11 + $0x1e8] sm:$0xff]
    %v3896 = vld [vmem:[#allocation11 + $0x1f0] sm:$0xff]
    %v3897 = vld [vmem:[#allocation11 + $0x1f8] sm:$0xff]
    %v3898 = vld [vmem:[#allocation11 + $0x200] sm:$0xff]
    %v3899 = vld [vmem:[#allocation11 + $0x208] sm:$0xff]
    %v3900 = vld [vmem:[#allocation11 + $0x210] sm:$0xff]
    %v3901 = vld [vmem:[#allocation11 + $0x218] sm:$0xff]
    %v3902 = vld [vmem:[#allocation11 + $0x220] sm:$0xff]
    %v3903 = vld [vmem:[#allocation11 + $0x228] sm:$0xff]
    %v3904 = vld [vmem:[#allocation11 + $0x230] sm:$0xff]
    %v3905 = vld [vmem:[#allocation11 + $0x238] sm:$0xff]
    %v3906 = vld [vmem:[#allocation11 + $0x240] sm:$0xff]
    %v3907 = vld [vmem:[#allocation11 + $0x248] sm:$0xff]
    %v3908 = vld [vmem:[#allocation11 + $0x250] sm:$0xff]
    %v3909 = vld [vmem:[#allocation11 + $0x258] sm:$0xff]
    %v3910 = vld [vmem:[#allocation11 + $0x260] sm:$0xff]
    %v3911 = vld [vmem:[#allocation11 + $0x268] sm:$0xff]
    %v3912 = vld [vmem:[#allocation11 + $0x270] sm:$0xff]
    %v3913 = vld [vmem:[#allocation11 + $0x278] sm:$0xff]
    %v3914 = vld [vmem:[#allocation11 + $0x280] sm:$0xff]
    %v3915 = vld [vmem:[#allocation11 + $0x288] sm:$0xff]
    %v3916 = vld [vmem:[#allocation11 + $0x290] sm:$0xff]
    %v3917 = vld [vmem:[#allocation11 + $0x298] sm:$0xff]
    %v3918 = vld [vmem:[#allocation11 + $0x2a0] sm:$0xff]
    %v3919 = vld [vmem:[#allocation11 + $0x2a8] sm:$0xff]
    %v3920 = vld [vmem:[#allocation11 + $0x2b0] sm:$0xff]
    %v3921 = vld [vmem:[#allocation11 + $0x2b8] sm:$0xff]
    %v3922 = vld [vmem:[#allocation11 + $0x2c0] sm:$0xff]
    %v3923 = vld [vmem:[#allocation11 + $0x2c8] sm:$0xff]
    %v3924 = vld [vmem:[#allocation11 + $0x2d0] sm:$0xff]
    %v3925 = vld [vmem:[#allocation11 + $0x2d8] sm:$0xff]
    %v3926 = vld [vmem:[#allocation11 + $0x2e0] sm:$0xff]
    %v3927 = vld [vmem:[#allocation11 + $0x2e8] sm:$0xff]
    %v3928 = vld [vmem:[#allocation11 + $0x2f0] sm:$0xff]
    %v3929 = vld [vmem:[#allocation11 + $0x2f8] sm:$0xff]
    %v3930 = vld [vmem:[#allocation11 + $0x300] sm:$0xff]
    %v3931 = vld [vmem:[#allocation11 + $0x308] sm:$0xff]
    %v3932 = vld [vmem:[#allocation11 + $0x310] sm:$0xff]
    %v3933 = vld [vmem:[#allocation11 + $0x318] sm:$0xff]
    %v3934 = vld [vmem:[#allocation11 + $0x320] sm:$0xff]
    %v3935 = vld [vmem:[#allocation11 + $0x328] sm:$0xff]
    %v3936 = vld [vmem:[#allocation11 + $0x330] sm:$0xff]
    %v3937 = vld [vmem:[#allocation11 + $0x338] sm:$0xff]
    %v3938 = vld [vmem:[#allocation11 + $0x340] sm:$0xff]
    %v3939 = vld [vmem:[#allocation11 + $0x348] sm:$0xff]
    %v3940 = vld [vmem:[#allocation11 + $0x350] sm:$0xff]
    %v3941 = vld [vmem:[#allocation11 + $0x358] sm:$0xff]
    %v3942 = vld [vmem:[#allocation11 + $0x360] sm:$0xff]
    %v3943 = vld [vmem:[#allocation11 + $0x368] sm:$0xff]
    %v3944 = vld [vmem:[#allocation11 + $0x370] sm:$0xff]
    %v3945 = vld [vmem:[#allocation11 + $0x378] sm:$0xff]
    %v3946 = vld [vmem:[#allocation11 + $0x380] sm:$0xff]
    %v3947 = vld [vmem:[#allocation11 + $0x388] sm:$0xff]
    %v3948 = vld [vmem:[#allocation11 + $0x390] sm:$0xff]
    %v3949 = vld [vmem:[#allocation11 + $0x398] sm:$0xff]
    %v3950 = vld [vmem:[#allocation11 + $0x3a0] sm:$0xff]
    %v3951 = vld [vmem:[#allocation11 + $0x3a8] sm:$0xff]
    %v3952 = vld [vmem:[#allocation11 + $0x3b0] sm:$0xff]
    %v3953 = vld [vmem:[#allocation11 + $0x3b8] sm:$0xff]
    %v3954 = vld [vmem:[#allocation11 + $0x3c0] sm:$0xff]
    %v3955 = vld [vmem:[#allocation11 + $0x3c8] sm:$0xff]
    %v3956 = vld [vmem:[#allocation11 + $0x3d0] sm:$0xff]
    %v3957 = vld [vmem:[#allocation11 + $0x3d8] sm:$0xff]
    %v3958 = vld [vmem:[#allocation11 + $0x3e0] sm:$0xff]
    %v3959 = vld [vmem:[#allocation11 + $0x3e8] sm:$0xff]
    %v3960 = vld [vmem:[#allocation11 + $0x3f0] sm:$0xff]
    %v3961 = vld [vmem:[#allocation11 + $0x3f8] sm:$0xff]
    %v3962 = vld [vmem:[#allocation11 + $0x400] sm:$0xff]
    %v3963 = vld [vmem:[#allocation11 + $0x408] sm:$0xff]
    %v3964 = vld [vmem:[#allocation11 + $0x410] sm:$0xff]
    %v3965 = vld [vmem:[#allocation11 + $0x418] sm:$0xff]
    %v3966 = vld [vmem:[#allocation11 + $0x420] sm:$0xff]
    %v3967 = vld [vmem:[#allocation11 + $0x428] sm:$0xff]
    %v3968 = vld [vmem:[#allocation11 + $0x430] sm:$0xff]
    %v3969 = vld [vmem:[#allocation11 + $0x438] sm:$0xff]
    %v3970 = vld [vmem:[#allocation11 + $0x440] sm:$0xff]
    %v3971 = vld [vmem:[#allocation11 + $0x448] sm:$0xff]
    %v3972 = vld [vmem:[#allocation11 + $0x450] sm:$0xff]
    %v3973 = vld [vmem:[#allocation11 + $0x458] sm:$0xff]
    %v3974 = vld [vmem:[#allocation11 + $0x460] sm:$0xff]
    %v3975 = vld [vmem:[#allocation11 + $0x468] sm:$0xff]
    %v3976 = vld [vmem:[#allocation11 + $0x470] sm:$0xff]
    %v3977 = vld [vmem:[#allocation11 + $0x478] sm:$0xff]
    %v3978 = vld [vmem:[#allocation11 + $0x480] sm:$0xff]
    %v3979 = vld [vmem:[#allocation11 + $0x488] sm:$0xff]
    %v3980 = vld [vmem:[#allocation11 + $0x490] sm:$0xff]
    %v3981 = vld [vmem:[#allocation11 + $0x498] sm:$0xff]
    %v3982 = vld [vmem:[#allocation11 + $0x4a0] sm:$0xff]
    %v3983 = vld [vmem:[#allocation11 + $0x4a8] sm:$0xff]
    %v3984 = vld [vmem:[#allocation11 + $0x4b0] sm:$0xff]
    %v3985 = vld [vmem:[#allocation11 + $0x4b8] sm:$0xff]
    %v3986 = vld [vmem:[#allocation11 + $0x4c0] sm:$0xff]
    %v3987 = vld [vmem:[#allocation11 + $0x4c8] sm:$0xff]
    %v3988 = vld [vmem:[#allocation11 + $0x4d0] sm:$0xff]
    %v3989 = vld [vmem:[#allocation11 + $0x4d8] sm:$0xff]
    %v3990 = vld [vmem:[#allocation11 + $0x4e0] sm:$0xff]
    %v3991 = vld [vmem:[#allocation11 + $0x4e8] sm:$0xff]
    %v3992 = vld [vmem:[#allocation11 + $0x4f0] sm:$0xff]
    %v3993 = vld [vmem:[#allocation11 + $0x4f8] sm:$0xff]
    %v3994 = vld [vmem:[#allocation11 + $0x500] sm:$0xff]
    %v3995 = vld [vmem:[#allocation11 + $0x508] sm:$0xff]
    %v3996 = vld [vmem:[#allocation11 + $0x510] sm:$0xff]
    %v3997 = vld [vmem:[#allocation11 + $0x518] sm:$0xff]
    %v3998 = vld [vmem:[#allocation11 + $0x520] sm:$0xff]
    %v3999 = vld [vmem:[#allocation11 + $0x528] sm:$0xff]
    %v4000 = vld [vmem:[#allocation11 + $0x530] sm:$0xff]
    %v4001 = vld [vmem:[#allocation11 + $0x538] sm:$0xff]
    %v4002 = vld [vmem:[#allocation11 + $0x540] sm:$0xff]
    %v4003 = vld [vmem:[#allocation11 + $0x548] sm:$0xff]
    %v4004 = vld [vmem:[#allocation11 + $0x550] sm:$0xff]
    %v4005 = vld [vmem:[#allocation11 + $0x558] sm:$0xff]
    %v4006 = vld [vmem:[#allocation11 + $0x560] sm:$0xff]
    %v4007 = vld [vmem:[#allocation11 + $0x568] sm:$0xff]
    %v4008 = vld [vmem:[#allocation11 + $0x570] sm:$0xff]
    %v4009 = vld [vmem:[#allocation11 + $0x578] sm:$0xff]
    %v4010 = vld [vmem:[#allocation11 + $0x580] sm:$0xff]
    %v4011 = vld [vmem:[#allocation11 + $0x588] sm:$0xff]
    %v4012 = vld [vmem:[#allocation11 + $0x590] sm:$0xff]
    %v4013 = vld [vmem:[#allocation11 + $0x598] sm:$0xff]
    %v4014 = vld [vmem:[#allocation11 + $0x5a0] sm:$0xff]
    %v4015 = vld [vmem:[#allocation11 + $0x5a8] sm:$0xff]
    %v4016 = vld [vmem:[#allocation11 + $0x5b0] sm:$0xff]
    %v4017 = vld [vmem:[#allocation11 + $0x5b8] sm:$0xff]
    %v4018 = vld [vmem:[#allocation11 + $0x5c0] sm:$0xff]
    %v4019 = vld [vmem:[#allocation11 + $0x5c8] sm:$0xff]
    %v4020 = vld [vmem:[#allocation11 + $0x5d0] sm:$0xff]
    %v4021 = vld [vmem:[#allocation11 + $0x5d8] sm:$0xff]
    %v4022 = vld [vmem:[#allocation11 + $0x5e0] sm:$0xff]
    %v4023 = vld [vmem:[#allocation11 + $0x5e8] sm:$0xff]
    %v4024 = vld [vmem:[#allocation11 + $0x5f0] sm:$0xff]
    %v4025 = vld [vmem:[#allocation11 + $0x5f8] sm:$0xff]
    %v4026 = vld [vmem:[#allocation11 + $0x600] sm:$0xff]
    %v4027 = vld [vmem:[#allocation11 + $0x608] sm:$0xff]
    %v4028 = vld [vmem:[#allocation11 + $0x610] sm:$0xff]
    %v4029 = vld [vmem:[#allocation11 + $0x618] sm:$0xff]
    %v4030 = vld [vmem:[#allocation11 + $0x620] sm:$0xff]
    %v4031 = vld [vmem:[#allocation11 + $0x628] sm:$0xff]
    %v4032 = vld [vmem:[#allocation11 + $0x630] sm:$0xff]
    %v4033 = vld [vmem:[#allocation11 + $0x638] sm:$0xff]
    %v4034 = vld [vmem:[#allocation11 + $0x640] sm:$0xff]
    %v4035 = vld [vmem:[#allocation11 + $0x648] sm:$0xff]
    %v4036 = vld [vmem:[#allocation11 + $0x650] sm:$0xff]
    %v4037 = vld [vmem:[#allocation11 + $0x658] sm:$0xff]
    %v4038 = vld [vmem:[#allocation11 + $0x660] sm:$0xff]
    %v4039 = vld [vmem:[#allocation11 + $0x668] sm:$0xff]
    %v4040 = vld [vmem:[#allocation11 + $0x670] sm:$0xff]
    %v4041 = vld [vmem:[#allocation11 + $0x678] sm:$0xff]
    %v4042 = vld [vmem:[#allocation11 + $0x680] sm:$0xff]
    %v4043 = vld [vmem:[#allocation11 + $0x688] sm:$0xff]
    %v4044 = vld [vmem:[#allocation11 + $0x690] sm:$0xff]
    %v4045 = vld [vmem:[#allocation11 + $0x698] sm:$0xff]
    %v4046 = vld [vmem:[#allocation11 + $0x6a0] sm:$0xff]
    %v4047 = vld [vmem:[#allocation11 + $0x6a8] sm:$0xff]
    %v4048 = vld [vmem:[#allocation11 + $0x6b0] sm:$0xff]
    %v4049 = vld [vmem:[#allocation11 + $0x6b8] sm:$0xff]
    %v4050 = vld [vmem:[#allocation11 + $0x6c0] sm:$0xff]
    %v4051 = vld [vmem:[#allocation11 + $0x6c8] sm:$0xff]
    %v4052 = vld [vmem:[#allocation11 + $0x6d0] sm:$0xff]
    %v4053 = vld [vmem:[#allocation11 + $0x6d8] sm:$0xff]
    %v4054 = vld [vmem:[#allocation11 + $0x6e0] sm:$0xff]
    %v4055 = vld [vmem:[#allocation11 + $0x6e8] sm:$0xff]
    %v4056 = vld [vmem:[#allocation11 + $0x6f0] sm:$0xff]
    %v4057 = vld [vmem:[#allocation11 + $0x6f8] sm:$0xff]
    %v4058 = vld [vmem:[#allocation11 + $0x700] sm:$0xff]
    %v4059 = vld [vmem:[#allocation11 + $0x708] sm:$0xff]
    %v4060 = vld [vmem:[#allocation11 + $0x710] sm:$0xff]
    %v4061 = vld [vmem:[#allocation11 + $0x718] sm:$0xff]
    %v4062 = vld [vmem:[#allocation11 + $0x720] sm:$0xff]
    %v4063 = vld [vmem:[#allocation11 + $0x728] sm:$0xff]
    %v4064 = vld [vmem:[#allocation11 + $0x730] sm:$0xff]
    %v4065 = vld [vmem:[#allocation11 + $0x738] sm:$0xff]
    %v4066 = vld [vmem:[#allocation11 + $0x740] sm:$0xff]
    %v4067 = vld [vmem:[#allocation11 + $0x748] sm:$0xff]
    %v4068 = vld [vmem:[#allocation11 + $0x750] sm:$0xff]
    %v4069 = vld [vmem:[#allocation11 + $0x758] sm:$0xff]
    %v4070 = vld [vmem:[#allocation11 + $0x760] sm:$0xff]
    %v4071 = vld [vmem:[#allocation11 + $0x768] sm:$0xff]
    %v4072 = vld [vmem:[#allocation11 + $0x770] sm:$0xff]
    %v4073 = vld [vmem:[#allocation11 + $0x778] sm:$0xff]
    %v4074 = vld [vmem:[#allocation11 + $0x780] sm:$0xff]
    %v4075 = vld [vmem:[#allocation11 + $0x788] sm:$0xff]
    %v4076 = vld [vmem:[#allocation11 + $0x790] sm:$0xff]
    %v4077 = vld [vmem:[#allocation11 + $0x798] sm:$0xff]
    %v4078 = vld [vmem:[#allocation11 + $0x7a0] sm:$0xff]
    %v4079 = vld [vmem:[#allocation11 + $0x7a8] sm:$0xff]
    %v4080 = vld [vmem:[#allocation11 + $0x7b0] sm:$0xff]
    %v4081 = vld [vmem:[#allocation11 + $0x7b8] sm:$0xff]
    %v4082 = vld [vmem:[#allocation11 + $0x7c0] sm:$0xff]
    %v4083 = vld [vmem:[#allocation11 + $0x7c8] sm:$0xff]
    %v4084 = vld [vmem:[#allocation11 + $0x7d0] sm:$0xff]
    %v4085 = vld [vmem:[#allocation11 + $0x7d8] sm:$0xff]
    %v4086 = vld [vmem:[#allocation11 + $0x7e0] sm:$0xff]
    %v4087 = vld [vmem:[#allocation11 + $0x7e8] sm:$0xff]
    %v4088 = vld [vmem:[#allocation11 + $0x7f0] sm:$0xff]
    %v4089 = vld [vmem:[#allocation11 + $0x7f8] sm:$0xff]
    %v4090 = vld [vmem:[%s9] sm:$0xff]
    %v4092 = vlaneseq
    %v4093 = vshrl.u32 %v4092, 7
    %v4094 = vsub.s32 0, %v4093
    %v4095 = vrot.slane %v4090, %v4094
    %v4096 = vlaneseq
    %v4097 = vshrl.u32 %v4096, 7
    %v4098 = vsub.s32 1, %v4097
    %v4099 = vrot.slane %v4090, %v4098
    %v4100 = vlaneseq
    %v4101 = vshrl.u32 %v4100, 7
    %v4102 = vsub.s32 2, %v4101
    %v4103 = vrot.slane %v4090, %v4102
    %v4104 = vlaneseq
    %v4105 = vshrl.u32 %v4104, 7
    %v4106 = vsub.s32 3, %v4105
    %v4107 = vrot.slane %v4090, %v4106
    %v4108 = vlaneseq
    %v4109 = vshrl.u32 %v4108, 7
    %v4110 = vsub.s32 4, %v4109
    %v4111 = vrot.slane %v4090, %v4110
    %v4112 = vlaneseq
    %v4113 = vshrl.u32 %v4112, 7
    %v4114 = vsub.s32 5, %v4113
    %v4115 = vrot.slane %v4090, %v4114
    %v4116 = vlaneseq
    %v4117 = vshrl.u32 %v4116, 7
    %v4118 = vsub.s32 6, %v4117
    %v4119 = vrot.slane %v4090, %v4118
    %v4120 = vlaneseq
    %v4121 = vshrl.u32 %v4120, 7
    %v4122 = vsub.s32 7, %v4121
    %v4123 = vrot.slane %v4090, %v4122
    %4132 = vmatprep.subr.mxu0 %v3955
    %4133 = vmatpush1.msra.mxu0 %v3954
    %4134 = vmatprep.subr.mxu0 %v3947
    %4135 = vmatpush1.msra.mxu0 %v3946
    %4136 = vmatprep.subr.mxu0 %v3939
    %4137 = vmatpush1.msra.mxu0 %v3938
    %4138 = vmatprep.subr.mxu0 %v3931
    %4139 = vmatpush1.msra.mxu0 %v3930
    %4140 = vmatprep.subr.mxu0 %v3923
    %4141 = vmatpush1.msra.mxu0 %v3922
    %4142 = vmatprep.subr.mxu0 %v3915
    %4143 = vmatpush1.msra.mxu0 %v3914
    %4144 = vmatprep.subr.mxu0 %v3907
    %4145 = vmatpush1.msra.mxu0 %v3906
    %4146 = vmatprep.subr.mxu0 %v3899
    %4147 = vmatpush1.msra.mxu0 %v3898
    %4148 = vmatprep.subr.mxu0 %v3891
    %4149 = vmatpush1.msra.mxu0 %v3890
    %4150 = vmatprep.subr.mxu0 %v3883
    %4151 = vmatpush1.msra.mxu0 %v3882
    %4152 = vmatprep.subr.mxu0 %v3875
    %4153 = vmatpush1.msra.mxu0 %v3874
    %4154 = vmatprep.subr.mxu0 %v3867
    %4155 = vmatpush1.msra.mxu0 %v3866
    %4156 = vmatprep.subr.mxu0 %v3859
    %4157 = vmatpush1.msra.mxu0 %v3858
    %4158 = vmatprep.subr.mxu0 %v3851
    %4159 = vmatpush1.msra.mxu0 %v3850
    %4160 = vmatprep.subr.mxu0 %v3843
    %4161 = vmatpush1.msra.mxu0 %v3842
    %4162 = vmatprep.subr.mxu0 %v3835
    %4163 = vmatpush1.msra.mxu0 %v3834
    %4164 = vmatprep.subr.mxu0 %v4083
    %4165 = vmatpush2.msra.mxu0 %v4082
    %4166 = vmatprep.subr.mxu0 %v4075
    %4167 = vmatpush2.msra.mxu0 %v4074
    %4168 = vmatprep.subr.mxu0 %v4067
    %4169 = vmatpush2.msra.mxu0 %v4066
    %4170 = vmatprep.subr.mxu0 %v4059
    %4171 = vmatpush2.msra.mxu0 %v4058
    %4172 = vmatprep.subr.mxu0 %v4051
    %4173 = vmatpush2.msra.mxu0 %v4050
    %4174 = vmatprep.subr.mxu0 %v4043
    %4175 = vmatpush2.msra.mxu0 %v4042
    %4176 = vmatprep.subr.mxu0 %v4035
    %4177 = vmatpush2.msra.mxu0 %v4034
    %4178 = vmatprep.subr.mxu0 %v4027
    %4179 = vmatpush2.msra.mxu0 %v4026
    %4180 = vmatprep.subr.mxu0 %v4019
    %4181 = vmatpush2.msra.mxu0 %v4018
    %4182 = vmatprep.subr.mxu0 %v4011
    %4183 = vmatpush2.msra.mxu0 %v4010
    %4184 = vmatprep.subr.mxu0 %v4003
    %4185 = vmatpush2.msra.mxu0 %v4002
    %4186 = vmatprep.subr.mxu0 %v3995
    %4187 = vmatpush2.msra.mxu0 %v3994
    %4188 = vmatprep.subr.mxu0 %v3987
    %4189 = vmatpush2.msra.mxu0 %v3986
    %4190 = vmatprep.subr.mxu0 %v3979
    %4191 = vmatpush2.msra.mxu0 %v3978
    %4192 = vmatprep.subr.mxu0 %v3971
    %4193 = vmatpush2.msra.mxu0 %v3970
    %4194 = vmatprep.subr.mxu0 %v3963
    %4195 = vmatpush2.msra.mxu0 %v3962
    %4196 = vmatprep.mubr.f32.mxu0 %v3826
    %4197 = vmatmul.mubr.f32.gmra.mxu0 %v3818
    %v4198 = vpop.f32.mrf.mxu0
    %v4199 = vadd.f32 %v4095, %v4198
    %v4200 = vpop.f32.mrf.mxu0
    %v4201 = vadd.f32 %v4099, %v4200
    %4202 = vmatprep.mubr.f32.mxu0 %v3827
    %4203 = vmatmul.mubr.f32.gmra.mxu0 %v3819
    %v4204 = vpop.f32.mrf.mxu0
    %v4205 = vadd.f32 %v4095, %v4204
    %v4206 = vpop.f32.mrf.mxu0
    %v4207 = vadd.f32 %v4099, %v4206
    %4208 = vmatprep.mubr.f32.mxu0 %v3828
    %4209 = vmatmul.mubr.f32.gmra.mxu0 %v3820
    %v4210 = vpop.f32.mrf.mxu0
    %v4211 = vadd.f32 %v4095, %v4210
    %v4212 = vpop.f32.mrf.mxu0
    %v4213 = vadd.f32 %v4099, %v4212
    %4214 = vmatprep.mubr.f32.mxu0 %v3829
    %4215 = vmatmul.mubr.f32.gmra.mxu0 %v3821
    %v4216 = vpop.f32.mrf.mxu0
    %v4217 = vadd.f32 %v4095, %v4216
    %v4218 = vpop.f32.mrf.mxu0
    %v4219 = vadd.f32 %v4099, %v4218
    %4220 = vmatprep.mubr.f32.mxu0 %v3830
    %4221 = vmatmul.mubr.f32.gmra.mxu0 %v3822
    %v4222 = vpop.f32.mrf.mxu0
    %v4223 = vadd.f32 %v4095, %v4222
    %v4224 = vpop.f32.mrf.mxu0
    %v4225 = vadd.f32 %v4099, %v4224
    %4226 = vmatprep.mubr.f32.mxu0 %v3831
    %4227 = vmatmul.mubr.f32.gmra.mxu0 %v3823
    %v4228 = vpop.f32.mrf.mxu0
    %v4229 = vadd.f32 %v4095, %v4228
    %v4230 = vpop.f32.mrf.mxu0
    %v4231 = vadd.f32 %v4099, %v4230
    %4232 = vmatprep.mubr.f32.mxu0 %v3832
    %4233 = vmatmul.mubr.f32.gmra.mxu0 %v3824
    %v4234 = vpop.f32.mrf.mxu0
    %v4235 = vadd.f32 %v4095, %v4234
    %v4236 = vpop.f32.mrf.mxu0
    %v4237 = vadd.f32 %v4099, %v4236
    %4238 = vmatprep.mubr.f32.mxu0 %v3833
    %4239 = vmatmul.mubr.f32.gmra.mxu0 %v3825
    %v4240 = vpop.f32.mrf.mxu0
    %v4241 = vadd.f32 %v4095, %v4240
    %v4242 = vpop.f32.mrf.mxu0
    %v4243 = vadd.f32 %v4099, %v4242
    %4244 = vdwg.mxu0
    %4245 = vmatprep.subr.mxu0 %v3957
    %4246 = vmatpush1.msra.mxu0 %v3956
    %4247 = vmatprep.subr.mxu0 %v3949
    %4248 = vmatpush1.msra.mxu0 %v3948
    %4249 = vmatprep.subr.mxu0 %v3941
    %4250 = vmatpush1.msra.mxu0 %v3940
    %4251 = vmatprep.subr.mxu0 %v3933
    %4252 = vmatpush1.msra.mxu0 %v3932
    %4253 = vmatprep.subr.mxu0 %v3925
    %4254 = vmatpush1.msra.mxu0 %v3924
    %4255 = vmatprep.subr.mxu0 %v3917
    %4256 = vmatpush1.msra.mxu0 %v3916
    %4257 = vmatprep.subr.mxu0 %v3909
    %4258 = vmatpush1.msra.mxu0 %v3908
    %4259 = vmatprep.subr.mxu0 %v3901
    %4260 = vmatpush1.msra.mxu0 %v3900
    %4261 = vmatprep.subr.mxu0 %v3893
    %4262 = vmatpush1.msra.mxu0 %v3892
    %4263 = vmatprep.subr.mxu0 %v3885
    %4264 = vmatpush1.msra.mxu0 %v3884
    %4265 = vmatprep.subr.mxu0 %v3877
    %4266 = vmatpush1.msra.mxu0 %v3876
    %4267 = vmatprep.subr.mxu0 %v3869
    %4268 = vmatpush1.msra.mxu0 %v3868
    %4269 = vmatprep.subr.mxu0 %v3861
    %4270 = vmatpush1.msra.mxu0 %v3860
    %4271 = vmatprep.subr.mxu0 %v3853
    %4272 = vmatpush1.msra.mxu0 %v3852
    %4273 = vmatprep.subr.mxu0 %v3845
    %4274 = vmatpush1.msra.mxu0 %v3844
    %4275 = vmatprep.subr.mxu0 %v3837
    %4276 = vmatpush1.msra.mxu0 %v3836
    %4277 = vmatprep.subr.mxu0 %v4085
    %4278 = vmatpush2.msra.mxu0 %v4084
    %4279 = vmatprep.subr.mxu0 %v4077
    %4280 = vmatpush2.msra.mxu0 %v4076
    %4281 = vmatprep.subr.mxu0 %v4069
    %4282 = vmatpush2.msra.mxu0 %v4068
    %4283 = vmatprep.subr.mxu0 %v4061
    %4284 = vmatpush2.msra.mxu0 %v4060
    %4285 = vmatprep.subr.mxu0 %v4053
    %4286 = vmatpush2.msra.mxu0 %v4052
    %4287 = vmatprep.subr.mxu0 %v4045
    %4288 = vmatpush2.msra.mxu0 %v4044
    %4289 = vmatprep.subr.mxu0 %v4037
    %4290 = vmatpush2.msra.mxu0 %v4036
    %4291 = vmatprep.subr.mxu0 %v4029
    %4292 = vmatpush2.msra.mxu0 %v4028
    %4293 = vmatprep.subr.mxu0 %v4021
    %4294 = vmatpush2.msra.mxu0 %v4020
    %4295 = vmatprep.subr.mxu0 %v4013
    %4296 = vmatpush2.msra.mxu0 %v4012
    %4297 = vmatprep.subr.mxu0 %v4005
    %4298 = vmatpush2.msra.mxu0 %v4004
    %4299 = vmatprep.subr.mxu0 %v3997
    %4300 = vmatpush2.msra.mxu0 %v3996
    %4301 = vmatprep.subr.mxu0 %v3989
    %4302 = vmatpush2.msra.mxu0 %v3988
    %4303 = vmatprep.subr.mxu0 %v3981
    %4304 = vmatpush2.msra.mxu0 %v3980
    %4305 = vmatprep.subr.mxu0 %v3973
    %4306 = vmatpush2.msra.mxu0 %v3972
    %4307 = vmatprep.subr.mxu0 %v3965
    %4308 = vmatpush2.msra.mxu0 %v3964
    %4309 = vmatprep.mubr.f32.mxu0 %v3826
    %4310 = vmatmul.mubr.f32.gmra.mxu0 %v3818
    %v4311 = vpop.f32.mrf.mxu0
    %v4312 = vadd.f32 %v4103, %v4311
    %v4313 = vpop.f32.mrf.mxu0
    %v4314 = vadd.f32 %v4107, %v4313
    %4315 = vmatprep.mubr.f32.mxu0 %v3827
    %4316 = vmatmul.mubr.f32.gmra.mxu0 %v3819
    %v4317 = vpop.f32.mrf.mxu0
    %v4318 = vadd.f32 %v4103, %v4317
    %v4319 = vpop.f32.mrf.mxu0
    %v4320 = vadd.f32 %v4107, %v4319
    %4321 = vmatprep.mubr.f32.mxu0 %v3828
    %4322 = vmatmul.mubr.f32.gmra.mxu0 %v3820
    %v4323 = vpop.f32.mrf.mxu0
    %v4324 = vadd.f32 %v4103, %v4323
    %v4325 = vpop.f32.mrf.mxu0
    %v4326 = vadd.f32 %v4107, %v4325
    %4327 = vmatprep.mubr.f32.mxu0 %v3829
    %4328 = vmatmul.mubr.f32.gmra.mxu0 %v3821
    %v4329 = vpop.f32.mrf.mxu0
    %v4330 = vadd.f32 %v4103, %v4329
    %v4331 = vpop.f32.mrf.mxu0
    %v4332 = vadd.f32 %v4107, %v4331
    %4333 = vmatprep.mubr.f32.mxu0 %v3830
    %4334 = vmatmul.mubr.f32.gmra.mxu0 %v3822
    %v4335 = vpop.f32.mrf.mxu0
    %v4336 = vadd.f32 %v4103, %v4335
    %v4337 = vpop.f32.mrf.mxu0
    %v4338 = vadd.f32 %v4107, %v4337
    %4339 = vmatprep.mubr.f32.mxu0 %v3831
    %4340 = vmatmul.mubr.f32.gmra.mxu0 %v3823
    %v4341 = vpop.f32.mrf.mxu0
    %v4342 = vadd.f32 %v4103, %v4341
    %v4343 = vpop.f32.mrf.mxu0
    %v4344 = vadd.f32 %v4107, %v4343
    %4345 = vmatprep.mubr.f32.mxu0 %v3832
    %4346 = vmatmul.mubr.f32.gmra.mxu0 %v3824
    %v4347 = vpop.f32.mrf.mxu0
    %v4348 = vadd.f32 %v4103, %v4347
    %v4349 = vpop.f32.mrf.mxu0
    %v4350 = vadd.f32 %v4107, %v4349
    %4351 = vmatprep.mubr.f32.mxu0 %v3833
    %4352 = vmatmul.mubr.f32.gmra.mxu0 %v3825
    %v4353 = vpop.f32.mrf.mxu0
    %v4354 = vadd.f32 %v4103, %v4353
    %v4355 = vpop.f32.mrf.mxu0
    %v4356 = vadd.f32 %v4107, %v4355
    %4357 = vdwg.mxu0
    %4358 = vmatprep.subr.mxu0 %v3959
    %4359 = vmatpush1.msra.mxu0 %v3958
    %4360 = vmatprep.subr.mxu0 %v3951
    %4361 = vmatpush1.msra.mxu0 %v3950
    %4362 = vmatprep.subr.mxu0 %v3943
    %4363 = vmatpush1.msra.mxu0 %v3942
    %4364 = vmatprep.subr.mxu0 %v3935
    %4365 = vmatpush1.msra.mxu0 %v3934
    %4366 = vmatprep.subr.mxu0 %v3927
    %4367 = vmatpush1.msra.mxu0 %v3926
    %4368 = vmatprep.subr.mxu0 %v3919
    %4369 = vmatpush1.msra.mxu0 %v3918
    %4370 = vmatprep.subr.mxu0 %v3911
    %4371 = vmatpush1.msra.mxu0 %v3910
    %4372 = vmatprep.subr.mxu0 %v3903
    %4373 = vmatpush1.msra.mxu0 %v3902
    %4374 = vmatprep.subr.mxu0 %v3895
    %4375 = vmatpush1.msra.mxu0 %v3894
    %4376 = vmatprep.subr.mxu0 %v3887
    %4377 = vmatpush1.msra.mxu0 %v3886
    %4378 = vmatprep.subr.mxu0 %v3879
    %4379 = vmatpush1.msra.mxu0 %v3878
    %4380 = vmatprep.subr.mxu0 %v3871
    %4381 = vmatpush1.msra.mxu0 %v3870
    %4382 = vmatprep.subr.mxu0 %v3863
    %4383 = vmatpush1.msra.mxu0 %v3862
    %4384 = vmatprep.subr.mxu0 %v3855
    %4385 = vmatpush1.msra.mxu0 %v3854
    %4386 = vmatprep.subr.mxu0 %v3847
    %4387 = vmatpush1.msra.mxu0 %v3846
    %4388 = vmatprep.subr.mxu0 %v3839
    %4389 = vmatpush1.msra.mxu0 %v3838
    %4390 = vmatprep.subr.mxu0 %v4087
    %4391 = vmatpush2.msra.mxu0 %v4086
    %4392 = vmatprep.subr.mxu0 %v4079
    %4393 = vmatpush2.msra.mxu0 %v4078
    %4394 = vmatprep.subr.mxu0 %v4071
    %4395 = vmatpush2.msra.mxu0 %v4070
    %4396 = vmatprep.subr.mxu0 %v4063
    %4397 = vmatpush2.msra.mxu0 %v4062
    %4398 = vmatprep.subr.mxu0 %v4055
    %4399 = vmatpush2.msra.mxu0 %v4054
    %4400 = vmatprep.subr.mxu0 %v4047
    %4401 = vmatpush2.msra.mxu0 %v4046
    %4402 = vmatprep.subr.mxu0 %v4039
    %4403 = vmatpush2.msra.mxu0 %v4038
    %4404 = vmatprep.subr.mxu0 %v4031
    %4405 = vmatpush2.msra.mxu0 %v4030
    %4406 = vmatprep.subr.mxu0 %v4023
    %4407 = vmatpush2.msra.mxu0 %v4022
    %4408 = vmatprep.subr.mxu0 %v4015
    %4409 = vmatpush2.msra.mxu0 %v4014
    %4410 = vmatprep.subr.mxu0 %v4007
    %4411 = vmatpush2.msra.mxu0 %v4006
    %4412 = vmatprep.subr.mxu0 %v3999
    %4413 = vmatpush2.msra.mxu0 %v3998
    %4414 = vmatprep.subr.mxu0 %v3991
    %4415 = vmatpush2.msra.mxu0 %v3990
    %4416 = vmatprep.subr.mxu0 %v3983
    %4417 = vmatpush2.msra.mxu0 %v3982
    %4418 = vmatprep.subr.mxu0 %v3975
    %4419 = vmatpush2.msra.mxu0 %v3974
    %4420 = vmatprep.subr.mxu0 %v3967
    %4421 = vmatpush2.msra.mxu0 %v3966
    %4422 = vmatprep.mubr.f32.mxu0 %v3826
    %4423 = vmatmul.mubr.f32.gmra.mxu0 %v3818
    %v4424 = vpop.f32.mrf.mxu0
    %v4425 = vadd.f32 %v4111, %v4424
    %v4426 = vpop.f32.mrf.mxu0
    %v4427 = vadd.f32 %v4115, %v4426
    %4428 = vmatprep.mubr.f32.mxu0 %v3827
    %4429 = vmatmul.mubr.f32.gmra.mxu0 %v3819
    %v4430 = vpop.f32.mrf.mxu0
    %v4431 = vadd.f32 %v4111, %v4430
    %v4432 = vpop.f32.mrf.mxu0
    %v4433 = vadd.f32 %v4115, %v4432
    %4434 = vmatprep.mubr.f32.mxu0 %v3828
    %4435 = vmatmul.mubr.f32.gmra.mxu0 %v3820
    %v4436 = vpop.f32.mrf.mxu0
    %v4437 = vadd.f32 %v4111, %v4436
    %v4438 = vpop.f32.mrf.mxu0
    %v4439 = vadd.f32 %v4115, %v4438
    %4440 = vmatprep.mubr.f32.mxu0 %v3829
    %4441 = vmatmul.mubr.f32.gmra.mxu0 %v3821
    %v4442 = vpop.f32.mrf.mxu0
    %v4443 = vadd.f32 %v4111, %v4442
    %v4444 = vpop.f32.mrf.mxu0
    %v4445 = vadd.f32 %v4115, %v4444
    %4446 = vmatprep.mubr.f32.mxu0 %v3830
    %4447 = vmatmul.mubr.f32.gmra.mxu0 %v3822
    %v4448 = vpop.f32.mrf.mxu0
    %v4449 = vadd.f32 %v4111, %v4448
    %v4450 = vpop.f32.mrf.mxu0
    %v4451 = vadd.f32 %v4115, %v4450
    %4452 = vmatprep.mubr.f32.mxu0 %v3831
    %4453 = vmatmul.mubr.f32.gmra.mxu0 %v3823
    %v4454 = vpop.f32.mrf.mxu0
    %v4455 = vadd.f32 %v4111, %v4454
    %v4456 = vpop.f32.mrf.mxu0
    %v4457 = vadd.f32 %v4115, %v4456
    %4458 = vmatprep.mubr.f32.mxu0 %v3832
    %4459 = vmatmul.mubr.f32.gmra.mxu0 %v3824
    %v4460 = vpop.f32.mrf.mxu0
    %v4461 = vadd.f32 %v4111, %v4460
    %v4462 = vpop.f32.mrf.mxu0
    %v4463 = vadd.f32 %v4115, %v4462
    %4464 = vmatprep.mubr.f32.mxu0 %v3833
    %4465 = vmatmul.mubr.f32.gmra.mxu0 %v3825
    %v4466 = vpop.f32.mrf.mxu0
    %v4467 = vadd.f32 %v4111, %v4466
    %v4468 = vpop.f32.mrf.mxu0
    %v4469 = vadd.f32 %v4115, %v4468
    %4470 = vdwg.mxu0
    %4471 = vmatprep.subr.mxu0 %v3961
    %4472 = vmatpush1.msra.mxu0 %v3960
    %4473 = vmatprep.subr.mxu0 %v3953
    %4474 = vmatpush1.msra.mxu0 %v3952
    %4475 = vmatprep.subr.mxu0 %v3945
    %4476 = vmatpush1.msra.mxu0 %v3944
    %4477 = vmatprep.subr.mxu0 %v3937
    %4478 = vmatpush1.msra.mxu0 %v3936
    %4479 = vmatprep.subr.mxu0 %v3929
    %4480 = vmatpush1.msra.mxu0 %v3928
    %4481 = vmatprep.subr.mxu0 %v3921
    %4482 = vmatpush1.msra.mxu0 %v3920
    %4483 = vmatprep.subr.mxu0 %v3913
    %4484 = vmatpush1.msra.mxu0 %v3912
    %4485 = vmatprep.subr.mxu0 %v3905
    %4486 = vmatpush1.msra.mxu0 %v3904
    %4487 = vmatprep.subr.mxu0 %v3897
    %4488 = vmatpush1.msra.mxu0 %v3896
    %4489 = vmatprep.subr.mxu0 %v3889
    %4490 = vmatpush1.msra.mxu0 %v3888
    %4491 = vmatprep.subr.mxu0 %v3881
    %4492 = vmatpush1.msra.mxu0 %v3880
    %4493 = vmatprep.subr.mxu0 %v3873
    %4494 = vmatpush1.msra.mxu0 %v3872
    %4495 = vmatprep.subr.mxu0 %v3865
    %4496 = vmatpush1.msra.mxu0 %v3864
    %4497 = vmatprep.subr.mxu0 %v3857
    %4498 = vmatpush1.msra.mxu0 %v3856
    %4499 = vmatprep.subr.mxu0 %v3849
    %4500 = vmatpush1.msra.mxu0 %v3848
    %4501 = vmatprep.subr.mxu0 %v3841
    %4502 = vmatpush1.msra.mxu0 %v3840
    %4503 = vmatprep.subr.mxu0 %v4089
    %4504 = vmatpush2.msra.mxu0 %v4088
    %4505 = vmatprep.subr.mxu0 %v4081
    %4506 = vmatpush2.msra.mxu0 %v4080
    %4507 = vmatprep.subr.mxu0 %v4073
    %4508 = vmatpush2.msra.mxu0 %v4072
    %4509 = vmatprep.subr.mxu0 %v4065
    %4510 = vmatpush2.msra.mxu0 %v4064
    %4511 = vmatprep.subr.mxu0 %v4057
    %4512 = vmatpush2.msra.mxu0 %v4056
    %4513 = vmatprep.subr.mxu0 %v4049
    %4514 = vmatpush2.msra.mxu0 %v4048
    %4515 = vmatprep.subr.mxu0 %v4041
    %4516 = vmatpush2.msra.mxu0 %v4040
    %4517 = vmatprep.subr.mxu0 %v4033
    %4518 = vmatpush2.msra.mxu0 %v4032
    %4519 = vmatprep.subr.mxu0 %v4025
    %4520 = vmatpush2.msra.mxu0 %v4024
    %4521 = vmatprep.subr.mxu0 %v4017
    %4522 = vmatpush2.msra.mxu0 %v4016
    %4523 = vmatprep.subr.mxu0 %v4009
    %4524 = vmatpush2.msra.mxu0 %v4008
    %4525 = vmatprep.subr.mxu0 %v4001
    %4526 = vmatpush2.msra.mxu0 %v4000
    %4527 = vmatprep.subr.mxu0 %v3993
    %4528 = vmatpush2.msra.mxu0 %v3992
    %4529 = vmatprep.subr.mxu0 %v3985
    %4530 = vmatpush2.msra.mxu0 %v3984
    %4531 = vmatprep.subr.mxu0 %v3977
    %4532 = vmatpush2.msra.mxu0 %v3976
    %4533 = vmatprep.subr.mxu0 %v3969
    %4534 = vmatpush2.msra.mxu0 %v3968
    %4535 = vmatprep.mubr.f32.mxu0 %v3826
    %4536 = vmatmul.mubr.f32.gmra.mxu0 %v3818
    %v4537 = vpop.f32.mrf.mxu0
    %v4538 = vadd.f32 %v4119, %v4537
    %v4539 = vpop.f32.mrf.mxu0
    %v4540 = vadd.f32 %v4123, %v4539
    %4541 = vmatprep.mubr.f32.mxu0 %v3827
    %4542 = vmatmul.mubr.f32.gmra.mxu0 %v3819
    %v4543 = vpop.f32.mrf.mxu0
    %v4544 = vadd.f32 %v4119, %v4543
    %v4545 = vpop.f32.mrf.mxu0
    %v4546 = vadd.f32 %v4123, %v4545
    %4547 = vmatprep.mubr.f32.mxu0 %v3828
    %4548 = vmatmul.mubr.f32.gmra.mxu0 %v3820
    %v4549 = vpop.f32.mrf.mxu0
    %v4550 = vadd.f32 %v4119, %v4549
    %v4551 = vpop.f32.mrf.mxu0
    %v4552 = vadd.f32 %v4123, %v4551
    %4553 = vmatprep.mubr.f32.mxu0 %v3829
    %4554 = vmatmul.mubr.f32.gmra.mxu0 %v3821
    %v4555 = vpop.f32.mrf.mxu0
    %v4556 = vadd.f32 %v4119, %v4555
    %v4557 = vpop.f32.mrf.mxu0
    %v4558 = vadd.f32 %v4123, %v4557
    %4559 = vmatprep.mubr.f32.mxu0 %v3830
    %4560 = vmatmul.mubr.f32.gmra.mxu0 %v3822
    %v4561 = vpop.f32.mrf.mxu0
    %v4562 = vadd.f32 %v4119, %v4561
    %v4563 = vpop.f32.mrf.mxu0
    %v4564 = vadd.f32 %v4123, %v4563
    %4565 = vmatprep.mubr.f32.mxu0 %v3831
    %4566 = vmatmul.mubr.f32.gmra.mxu0 %v3823
    %v4567 = vpop.f32.mrf.mxu0
    %v4568 = vadd.f32 %v4119, %v4567
    %v4569 = vpop.f32.mrf.mxu0
    %v4570 = vadd.f32 %v4123, %v4569
    %4571 = vmatprep.mubr.f32.mxu0 %v3832
    %4572 = vmatmul.mubr.f32.gmra.mxu0 %v3824
    %v4573 = vpop.f32.mrf.mxu0
    %v4574 = vadd.f32 %v4119, %v4573
    %v4575 = vpop.f32.mrf.mxu0
    %v4576 = vadd.f32 %v4123, %v4575
    %4577 = vmatprep.mubr.f32.mxu0 %v3833
    %4578 = vmatmul.mubr.f32.gmra.mxu0 %v3825
    %v4579 = vpop.f32.mrf.mxu0
    %v4580 = vadd.f32 %v4119, %v4579
    %v4581 = vpop.f32.mrf.mxu0
    %v4582 = vadd.f32 %v4123, %v4581
    %4583 = vdwg.mxu0
    %4584 = vst [vmem:[#allocation2] sm:$0xff] %v4199
    %4585 = vst [vmem:[#allocation2 + $0x8] sm:$0xff] %v4201
    %4586 = vst [vmem:[#allocation2 + $0x10] sm:$0xff] %v4312
    %4587 = vst [vmem:[#allocation2 + $0x18] sm:$0xff] %v4314
    %4588 = vst [vmem:[#allocation2 + $0x20] sm:$0xff] %v4205
    %4589 = vst [vmem:[#allocation2 + $0x28] sm:$0xff] %v4207
    %4590 = vst [vmem:[#allocation2 + $0x30] sm:$0xff] %v4318
    %4591 = vst [vmem:[#allocation2 + $0x38] sm:$0xff] %v4320
    %4592 = vst [vmem:[#allocation2 + $0x40] sm:$0xff] %v4211
    %4593 = vst [vmem:[#allocation2 + $0x48] sm:$0xff] %v4213
    %4594 = vst [vmem:[#allocation2 + $0x50] sm:$0xff] %v4324
    %4595 = vst [vmem:[#allocation2 + $0x58] sm:$0xff] %v4326
    %4596 = vst [vmem:[#allocation2 + $0x60] sm:$0xff] %v4217
    %4597 = vst [vmem:[#allocation2 + $0x68] sm:$0xff] %v4219
    %4598 = vst [vmem:[#allocation2 + $0x70] sm:$0xff] %v4330
    %4599 = vst [vmem:[#allocation2 + $0x78] sm:$0xff] %v4332
    %4600 = vst [vmem:[#allocation2 + $0x80] sm:$0xff] %v4223
    %4601 = vst [vmem:[#allocation2 + $0x88] sm:$0xff] %v4225
    %4602 = vst [vmem:[#allocation2 + $0x90] sm:$0xff] %v4336
    %4603 = vst [vmem:[#allocation2 + $0x98] sm:$0xff] %v4338
    %4604 = vst [vmem:[#allocation2 + $0xa0] sm:$0xff] %v4229
    %4605 = vst [vmem:[#allocation2 + $0xa8] sm:$0xff] %v4231
    %4606 = vst [vmem:[#allocation2 + $0xb0] sm:$0xff] %v4342
    %4607 = vst [vmem:[#allocation2 + $0xb8] sm:$0xff] %v4344
    %4608 = vst [vmem:[#allocation2 + $0xc0] sm:$0xff] %v4235
    %4609 = vst [vmem:[#allocation2 + $0xc8] sm:$0xff] %v4237
    %4610 = vst [vmem:[#allocation2 + $0xd0] sm:$0xff] %v4348
    %4611 = vst [vmem:[#allocation2 + $0xd8] sm:$0xff] %v4350
    %4612 = vst [vmem:[#allocation2 + $0xe0] sm:$0xff] %v4241
    %4613 = vst [vmem:[#allocation2 + $0xe8] sm:$0xff] %v4243
    %4614 = vst [vmem:[#allocation2 + $0xf0] sm:$0xff] %v4354
    %4615 = vst [vmem:[#allocation2 + $0xf8] sm:$0xff] %v4356
    %4616 = vst [vmem:[#allocation3] sm:$0xff] %v4425
    %4617 = vst [vmem:[#allocation3 + $0x8] sm:$0xff] %v4427
    %4618 = vst [vmem:[#allocation3 + $0x10] sm:$0xff] %v4538
    %4619 = vst [vmem:[#allocation3 + $0x18] sm:$0xff] %v4540
    %4620 = vst [vmem:[#allocation3 + $0x20] sm:$0xff] %v4431
    %4621 = vst [vmem:[#allocation3 + $0x28] sm:$0xff] %v4433
    %4622 = vst [vmem:[#allocation3 + $0x30] sm:$0xff] %v4544
    %4623 = vst [vmem:[#allocation3 + $0x38] sm:$0xff] %v4546
    %4624 = vst [vmem:[#allocation3 + $0x40] sm:$0xff] %v4437
    %4625 = vst [vmem:[#allocation3 + $0x48] sm:$0xff] %v4439
    %4626 = vst [vmem:[#allocation3 + $0x50] sm:$0xff] %v4550
    %4627 = vst [vmem:[#allocation3 + $0x58] sm:$0xff] %v4552
    %4628 = vst [vmem:[#allocation3 + $0x60] sm:$0xff] %v4443
    %4629 = vst [vmem:[#allocation3 + $0x68] sm:$0xff] %v4445
    %4630 = vst [vmem:[#allocation3 + $0x70] sm:$0xff] %v4556
    %4631 = vst [vmem:[#allocation3 + $0x78] sm:$0xff] %v4558
    %4632 = vst [vmem:[#allocation3 + $0x80] sm:$0xff] %v4449
    %4633 = vst [vmem:[#allocation3 + $0x88] sm:$0xff] %v4451
    %4634 = vst [vmem:[#allocation3 + $0x90] sm:$0xff] %v4562
    %4635 = vst [vmem:[#allocation3 + $0x98] sm:$0xff] %v4564
    %4636 = vst [vmem:[#allocation3 + $0xa0] sm:$0xff] %v4455
    %4637 = vst [vmem:[#allocation3 + $0xa8] sm:$0xff] %v4457
    %4638 = vst [vmem:[#allocation3 + $0xb0] sm:$0xff] %v4568
    %4639 = vst [vmem:[#allocation3 + $0xb8] sm:$0xff] %v4570
    %4640 = vst [vmem:[#allocation3 + $0xc0] sm:$0xff] %v4461
    %4641 = vst [vmem:[#allocation3 + $0xc8] sm:$0xff] %v4463
    %4642 = vst [vmem:[#allocation3 + $0xd0] sm:$0xff] %v4574
    %4643 = vst [vmem:[#allocation3 + $0xd8] sm:$0xff] %v4576
    %4644 = vst [vmem:[#allocation3 + $0xe0] sm:$0xff] %v4467
    %4645 = vst [vmem:[#allocation3 + $0xe8] sm:$0xff] %v4469
    %4646 = vst [vmem:[#allocation3 + $0xf0] sm:$0xff] %v4580
    %4647 = vst [vmem:[#allocation3 + $0xf8] sm:$0xff] %v4582
    %v4648 = vld [vmem:[#allocation13] sm:$0xff]
    %v4649 = vld [vmem:[#allocation13 + $0x8] sm:$0xff]
    %v4650 = vld [vmem:[#allocation13 + $0x10] sm:$0xff]
    %v4651 = vld [vmem:[#allocation13 + $0x18] sm:$0xff]
    %v4652 = vld [vmem:[#allocation13 + $0x20] sm:$0xff]
    %v4653 = vld [vmem:[#allocation13 + $0x28] sm:$0xff]
    %v4654 = vld [vmem:[#allocation13 + $0x30] sm:$0xff]
    %v4655 = vld [vmem:[#allocation13 + $0x38] sm:$0xff]
    %v4656 = vld [vmem:[#allocation13 + $0x40] sm:$0xff]
    %v4657 = vld [vmem:[#allocation13 + $0x48] sm:$0xff]
    %v4658 = vld [vmem:[#allocation13 + $0x50] sm:$0xff]
    %v4659 = vld [vmem:[#allocation13 + $0x58] sm:$0xff]
    %v4660 = vld [vmem:[#allocation13 + $0x60] sm:$0xff]
    %v4661 = vld [vmem:[#allocation13 + $0x68] sm:$0xff]
    %v4662 = vld [vmem:[#allocation13 + $0x70] sm:$0xff]
    %v4663 = vld [vmem:[#allocation13 + $0x78] sm:$0xff]
    %v4664 = vld [vmem:[#allocation13 + $0x80] sm:$0xff]
    %v4665 = vld [vmem:[#allocation13 + $0x88] sm:$0xff]
    %v4666 = vld [vmem:[#allocation13 + $0x90] sm:$0xff]
    %v4667 = vld [vmem:[#allocation13 + $0x98] sm:$0xff]
    %v4668 = vld [vmem:[#allocation13 + $0xa0] sm:$0xff]
    %v4669 = vld [vmem:[#allocation13 + $0xa8] sm:$0xff]
    %v4670 = vld [vmem:[#allocation13 + $0xb0] sm:$0xff]
    %v4671 = vld [vmem:[#allocation13 + $0xb8] sm:$0xff]
    %v4672 = vld [vmem:[#allocation13 + $0xc0] sm:$0xff]
    %v4673 = vld [vmem:[#allocation13 + $0xc8] sm:$0xff]
    %v4674 = vld [vmem:[#allocation13 + $0xd0] sm:$0xff]
    %v4675 = vld [vmem:[#allocation13 + $0xd8] sm:$0xff]
    %v4676 = vld [vmem:[#allocation13 + $0xe0] sm:$0xff]
    %v4677 = vld [vmem:[#allocation13 + $0xe8] sm:$0xff]
    %v4678 = vld [vmem:[#allocation13 + $0xf0] sm:$0xff]
    %v4679 = vld [vmem:[#allocation13 + $0xf8] sm:$0xff]
    %v4680 = vld [vmem:[#allocation13 + $0x100] sm:$0xff]
    %v4681 = vld [vmem:[#allocation13 + $0x108] sm:$0xff]
    %v4682 = vld [vmem:[#allocation13 + $0x110] sm:$0xff]
    %v4683 = vld [vmem:[#allocation13 + $0x118] sm:$0xff]
    %v4684 = vld [vmem:[#allocation13 + $0x120] sm:$0xff]
    %v4685 = vld [vmem:[#allocation13 + $0x128] sm:$0xff]
    %v4686 = vld [vmem:[#allocation13 + $0x130] sm:$0xff]
    %v4687 = vld [vmem:[#allocation13 + $0x138] sm:$0xff]
    %v4688 = vld [vmem:[#allocation13 + $0x140] sm:$0xff]
    %v4689 = vld [vmem:[#allocation13 + $0x148] sm:$0xff]
    %v4690 = vld [vmem:[#allocation13 + $0x150] sm:$0xff]
    %v4691 = vld [vmem:[#allocation13 + $0x158] sm:$0xff]
    %v4692 = vld [vmem:[#allocation13 + $0x160] sm:$0xff]
    %v4693 = vld [vmem:[#allocation13 + $0x168] sm:$0xff]
    %v4694 = vld [vmem:[#allocation13 + $0x170] sm:$0xff]
    %v4695 = vld [vmem:[#allocation13 + $0x178] sm:$0xff]
    %v4696 = vld [vmem:[#allocation13 + $0x180] sm:$0xff]
    %v4697 = vld [vmem:[#allocation13 + $0x188] sm:$0xff]
    %v4698 = vld [vmem:[#allocation13 + $0x190] sm:$0xff]
    %v4699 = vld [vmem:[#allocation13 + $0x198] sm:$0xff]
    %v4700 = vld [vmem:[#allocation13 + $0x1a0] sm:$0xff]
    %v4701 = vld [vmem:[#allocation13 + $0x1a8] sm:$0xff]
    %v4702 = vld [vmem:[#allocation13 + $0x1b0] sm:$0xff]
    %v4703 = vld [vmem:[#allocation13 + $0x1b8] sm:$0xff]
    %v4704 = vld [vmem:[#allocation13 + $0x1c0] sm:$0xff]
    %v4705 = vld [vmem:[#allocation13 + $0x1c8] sm:$0xff]
    %v4706 = vld [vmem:[#allocation13 + $0x1d0] sm:$0xff]
    %v4707 = vld [vmem:[#allocation13 + $0x1d8] sm:$0xff]
    %v4708 = vld [vmem:[#allocation13 + $0x1e0] sm:$0xff]
    %v4709 = vld [vmem:[#allocation13 + $0x1e8] sm:$0xff]
    %v4710 = vld [vmem:[#allocation13 + $0x1f0] sm:$0xff]
    %v4711 = vld [vmem:[#allocation13 + $0x1f8] sm:$0xff]
    %v4712 = vld [vmem:[#allocation14] sm:$0xff]
    %v4713 = vld [vmem:[#allocation14 + $0x8] sm:$0xff]
    %v4714 = vld [vmem:[#allocation14 + $0x10] sm:$0xff]
    %v4715 = vld [vmem:[#allocation14 + $0x18] sm:$0xff]
    %v4716 = vld [vmem:[#allocation14 + $0x20] sm:$0xff]
    %v4717 = vld [vmem:[#allocation14 + $0x28] sm:$0xff]
    %v4718 = vld [vmem:[#allocation14 + $0x30] sm:$0xff]
    %v4719 = vld [vmem:[#allocation14 + $0x38] sm:$0xff]
    %v4720 = vld [vmem:[#allocation14 + $0x40] sm:$0xff]
    %v4721 = vld [vmem:[#allocation14 + $0x48] sm:$0xff]
    %v4722 = vld [vmem:[#allocation14 + $0x50] sm:$0xff]
    %v4723 = vld [vmem:[#allocation14 + $0x58] sm:$0xff]
    %v4724 = vld [vmem:[#allocation14 + $0x60] sm:$0xff]
    %v4725 = vld [vmem:[#allocation14 + $0x68] sm:$0xff]
    %v4726 = vld [vmem:[#allocation14 + $0x70] sm:$0xff]
    %v4727 = vld [vmem:[#allocation14 + $0x78] sm:$0xff]
    %v4728 = vld [vmem:[#allocation14 + $0x80] sm:$0xff]
    %v4729 = vld [vmem:[#allocation14 + $0x88] sm:$0xff]
    %v4730 = vld [vmem:[#allocation14 + $0x90] sm:$0xff]
    %v4731 = vld [vmem:[#allocation14 + $0x98] sm:$0xff]
    %v4732 = vld [vmem:[#allocation14 + $0xa0] sm:$0xff]
    %v4733 = vld [vmem:[#allocation14 + $0xa8] sm:$0xff]
    %v4734 = vld [vmem:[#allocation14 + $0xb0] sm:$0xff]
    %v4735 = vld [vmem:[#allocation14 + $0xb8] sm:$0xff]
    %v4736 = vld [vmem:[#allocation14 + $0xc0] sm:$0xff]
    %v4737 = vld [vmem:[#allocation14 + $0xc8] sm:$0xff]
    %v4738 = vld [vmem:[#allocation14 + $0xd0] sm:$0xff]
    %v4739 = vld [vmem:[#allocation14 + $0xd8] sm:$0xff]
    %v4740 = vld [vmem:[#allocation14 + $0xe0] sm:$0xff]
    %v4741 = vld [vmem:[#allocation14 + $0xe8] sm:$0xff]
    %v4742 = vld [vmem:[#allocation14 + $0xf0] sm:$0xff]
    %v4743 = vld [vmem:[#allocation14 + $0xf8] sm:$0xff]
    %v4744 = vld [vmem:[#allocation14 + $0x100] sm:$0xff]
    %v4745 = vld [vmem:[#allocation14 + $0x108] sm:$0xff]
    %v4746 = vld [vmem:[#allocation14 + $0x110] sm:$0xff]
    %v4747 = vld [vmem:[#allocation14 + $0x118] sm:$0xff]
    %v4748 = vld [vmem:[#allocation14 + $0x120] sm:$0xff]
    %v4749 = vld [vmem:[#allocation14 + $0x128] sm:$0xff]
    %v4750 = vld [vmem:[#allocation14 + $0x130] sm:$0xff]
    %v4751 = vld [vmem:[#allocation14 + $0x138] sm:$0xff]
    %v4752 = vld [vmem:[#allocation14 + $0x140] sm:$0xff]
    %v4753 = vld [vmem:[#allocation14 + $0x148] sm:$0xff]
    %v4754 = vld [vmem:[#allocation14 + $0x150] sm:$0xff]
    %v4755 = vld [vmem:[#allocation14 + $0x158] sm:$0xff]
    %v4756 = vld [vmem:[#allocation14 + $0x160] sm:$0xff]
    %v4757 = vld [vmem:[#allocation14 + $0x168] sm:$0xff]
    %v4758 = vld [vmem:[#allocation14 + $0x170] sm:$0xff]
    %v4759 = vld [vmem:[#allocation14 + $0x178] sm:$0xff]
    %v4760 = vld [vmem:[#allocation14 + $0x180] sm:$0xff]
    %v4761 = vld [vmem:[#allocation14 + $0x188] sm:$0xff]
    %v4762 = vld [vmem:[#allocation14 + $0x190] sm:$0xff]
    %v4763 = vld [vmem:[#allocation14 + $0x198] sm:$0xff]
    %v4764 = vld [vmem:[#allocation14 + $0x1a0] sm:$0xff]
    %v4765 = vld [vmem:[#allocation14 + $0x1a8] sm:$0xff]
    %v4766 = vld [vmem:[#allocation14 + $0x1b0] sm:$0xff]
    %v4767 = vld [vmem:[#allocation14 + $0x1b8] sm:$0xff]
    %v4768 = vld [vmem:[#allocation14 + $0x1c0] sm:$0xff]
    %v4769 = vld [vmem:[#allocation14 + $0x1c8] sm:$0xff]
    %v4770 = vld [vmem:[#allocation14 + $0x1d0] sm:$0xff]
    %v4771 = vld [vmem:[#allocation14 + $0x1d8] sm:$0xff]
    %v4772 = vld [vmem:[#allocation14 + $0x1e0] sm:$0xff]
    %v4773 = vld [vmem:[#allocation14 + $0x1e8] sm:$0xff]
    %v4774 = vld [vmem:[#allocation14 + $0x1f0] sm:$0xff]
    %v4775 = vld [vmem:[#allocation14 + $0x1f8] sm:$0xff]
    %v4776 = vld [vmem:[#allocation2] sm:$0xff]
    %v4777 = vld [vmem:[#allocation2 + $0x8] sm:$0xff]
    %v4778 = vld [vmem:[#allocation2 + $0x10] sm:$0xff]
    %v4779 = vld [vmem:[#allocation2 + $0x18] sm:$0xff]
    %4780 = vmatprep.subr.mxu0 %v4709
    %4781 = vmatpush1.msra.mxu0 %v4708
    %4782 = vmatprep.subr.mxu0 %v4705
    %4783 = vmatpush1.msra.mxu0 %v4704
    %4784 = vmatprep.subr.mxu0 %v4701
    %4785 = vmatpush1.msra.mxu0 %v4700
    %4786 = vmatprep.subr.mxu0 %v4697
    %4787 = vmatpush1.msra.mxu0 %v4696
    %4788 = vmatprep.subr.mxu0 %v4693
    %4789 = vmatpush1.msra.mxu0 %v4692
    %4790 = vmatprep.subr.mxu0 %v4689
    %4791 = vmatpush1.msra.mxu0 %v4688
    %4792 = vmatprep.subr.mxu0 %v4685
    %4793 = vmatpush1.msra.mxu0 %v4684
    %4794 = vmatprep.subr.mxu0 %v4681
    %4795 = vmatpush1.msra.mxu0 %v4680
    %4796 = vmatprep.subr.mxu0 %v4677
    %4797 = vmatpush1.msra.mxu0 %v4676
    %4798 = vmatprep.subr.mxu0 %v4673
    %4799 = vmatpush1.msra.mxu0 %v4672
    %4800 = vmatprep.subr.mxu0 %v4669
    %4801 = vmatpush1.msra.mxu0 %v4668
    %4802 = vmatprep.subr.mxu0 %v4665
    %4803 = vmatpush1.msra.mxu0 %v4664
    %4804 = vmatprep.subr.mxu0 %v4661
    %4805 = vmatpush1.msra.mxu0 %v4660
    %4806 = vmatprep.subr.mxu0 %v4657
    %4807 = vmatpush1.msra.mxu0 %v4656
    %4808 = vmatprep.subr.mxu0 %v4653
    %4809 = vmatpush1.msra.mxu0 %v4652
    %4810 = vmatprep.subr.mxu0 %v4649
    %4811 = vmatpush1.msra.mxu0 %v4648
    %4812 = vmatprep.subr.mxu0 0.0
    %4813 = vmatpush2.msra.mxu0 0.0
    %4814 = vmatprep.subr.mxu0 0.0
    %4815 = vmatpush2.msra.mxu0 0.0
    %4816 = vmatprep.subr.mxu0 0.0
    %4817 = vmatpush2.msra.mxu0 0.0
    %4818 = vmatprep.subr.mxu0 0.0
    %4819 = vmatpush2.msra.mxu0 0.0
    %4820 = vmatprep.subr.mxu0 0.0
    %4821 = vmatpush2.msra.mxu0 0.0
    %4822 = vmatprep.subr.mxu0 0.0
    %4823 = vmatpush2.msra.mxu0 0.0
    %4824 = vmatprep.subr.mxu0 0.0
    %4825 = vmatpush2.msra.mxu0 0.0
    %4826 = vmatprep.subr.mxu0 0.0
    %4827 = vmatpush2.msra.mxu0 0.0
    %4828 = vmatprep.subr.mxu0 0.0
    %4829 = vmatpush2.msra.mxu0 0.0
    %4830 = vmatprep.subr.mxu0 0.0
    %4831 = vmatpush2.msra.mxu0 0.0
    %4832 = vmatprep.subr.mxu0 0.0
    %4833 = vmatpush2.msra.mxu0 0.0
    %4834 = vmatprep.subr.mxu0 0.0
    %4835 = vmatpush2.msra.mxu0 0.0
    %4836 = vmatprep.subr.mxu0 0.0
    %4837 = vmatpush2.msra.mxu0 0.0
    %4838 = vmatprep.subr.mxu0 0.0
    %4839 = vmatpush2.msra.mxu0 0.0
    %4840 = vmatprep.subr.mxu0 0.0
    %4841 = vmatpush2.msra.mxu0 0.0
    %4842 = vmatprep.subr.mxu0 0.0
    %4843 = vmatpush2.msra.mxu0 0.0
    %4844 = vmatprep.mubr.f32.mxu0 0.0
    %4845 = vmatmul.mubr.f32.gmra.mxu0 0.0
    %v4846 = vpop.f32.mrf.mxu0
    %v4847 = vadd.f32 0.0, %v4846
    %v4848 = vpop.f32.mrf.mxu0
    %v4849 = vadd.f32 0.0, %v4848
    %4850 = vdwg.mxu0
    %4851 = vmatprep.subr.mxu0 %v4711
    %4852 = vmatpush1.msra.mxu0 %v4710
    %4853 = vmatprep.subr.mxu0 %v4707
    %4854 = vmatpush1.msra.mxu0 %v4706
    %4855 = vmatprep.subr.mxu0 %v4703
    %4856 = vmatpush1.msra.mxu0 %v4702
    %4857 = vmatprep.subr.mxu0 %v4699
    %4858 = vmatpush1.msra.mxu0 %v4698
    %4859 = vmatprep.subr.mxu0 %v4695
    %4860 = vmatpush1.msra.mxu0 %v4694
    %4861 = vmatprep.subr.mxu0 %v4691
    %4862 = vmatpush1.msra.mxu0 %v4690
    %4863 = vmatprep.subr.mxu0 %v4687
    %4864 = vmatpush1.msra.mxu0 %v4686
    %4865 = vmatprep.subr.mxu0 %v4683
    %4866 = vmatpush1.msra.mxu0 %v4682
    %4867 = vmatprep.subr.mxu0 %v4679
    %4868 = vmatpush1.msra.mxu0 %v4678
    %4869 = vmatprep.subr.mxu0 %v4675
    %4870 = vmatpush1.msra.mxu0 %v4674
    %4871 = vmatprep.subr.mxu0 %v4671
    %4872 = vmatpush1.msra.mxu0 %v4670
    %4873 = vmatprep.subr.mxu0 %v4667
    %4874 = vmatpush1.msra.mxu0 %v4666
    %4875 = vmatprep.subr.mxu0 %v4663
    %4876 = vmatpush1.msra.mxu0 %v4662
    %4877 = vmatprep.subr.mxu0 %v4659
    %4878 = vmatpush1.msra.mxu0 %v4658
    %4879 = vmatprep.subr.mxu0 %v4655
    %4880 = vmatpush1.msra.mxu0 %v4654
    %4881 = vmatprep.subr.mxu0 %v4651
    %4882 = vmatpush1.msra.mxu0 %v4650
    %4883 = vmatprep.subr.mxu0 0.0
    %4884 = vmatpush2.msra.mxu0 0.0
    %4885 = vmatprep.subr.mxu0 0.0
    %4886 = vmatpush2.msra.mxu0 0.0
    %4887 = vmatprep.subr.mxu0 0.0
    %4888 = vmatpush2.msra.mxu0 0.0
    %4889 = vmatprep.subr.mxu0 0.0
    %4890 = vmatpush2.msra.mxu0 0.0
    %4891 = vmatprep.subr.mxu0 0.0
    %4892 = vmatpush2.msra.mxu0 0.0
    %4893 = vmatprep.subr.mxu0 0.0
    %4894 = vmatpush2.msra.mxu0 0.0
    %4895 = vmatprep.subr.mxu0 0.0
    %4896 = vmatpush2.msra.mxu0 0.0
    %4897 = vmatprep.subr.mxu0 0.0
    %4898 = vmatpush2.msra.mxu0 0.0
    %4899 = vmatprep.subr.mxu0 0.0
    %4900 = vmatpush2.msra.mxu0 0.0
    %4901 = vmatprep.subr.mxu0 0.0
    %4902 = vmatpush2.msra.mxu0 0.0
    %4903 = vmatprep.subr.mxu0 0.0
    %4904 = vmatpush2.msra.mxu0 0.0
    %4905 = vmatprep.subr.mxu0 0.0
    %4906 = vmatpush2.msra.mxu0 0.0
    %4907 = vmatprep.subr.mxu0 0.0
    %4908 = vmatpush2.msra.mxu0 0.0
    %4909 = vmatprep.subr.mxu0 0.0
    %4910 = vmatpush2.msra.mxu0 0.0
    %4911 = vmatprep.subr.mxu0 0.0
    %4912 = vmatpush2.msra.mxu0 0.0
    %4913 = vmatprep.subr.mxu0 0.0
    %4914 = vmatpush2.msra.mxu0 0.0
    %4915 = vmatprep.mubr.f32.mxu0 0.0
    %4916 = vmatmul.mubr.f32.gmra.mxu0 0.0
    %v4917 = vpop.f32.mrf.mxu0
    %v4918 = vadd.f32 0.0, %v4917
    %v4919 = vpop.f32.mrf.mxu0
    %v4920 = vadd.f32 0.0, %v4919
    %4921 = vdwg.mxu0
    %v4922 = vadd.f32 %v4776, %v4847
    %v4923 = vadd.f32 %v4777, %v4849
    %v4924 = vadd.f32 %v4778, %v4918
    %v4925 = vadd.f32 %v4779, %v4920
    %v4926 = vxor.u32 %v4922, 2147483648
    %v4927 = vmul.f32 %v4926, 1.442695
    %v4928 = vpow.pop %v4927
    %v4929 = vadd.f32 %v4928, 1.0
    %v4930 = vrcp.pop %v4929
    %v4931 = vmul.f32 1.0, %v4930
    %v4932 = vxor.u32 %v4923, 2147483648
    %v4933 = vmul.f32 %v4932, 1.442695
    %v4934 = vpow.pop %v4933
    %v4935 = vadd.f32 %v4934, 1.0
    %v4936 = vrcp.pop %v4935
    %v4937 = vmul.f32 1.0, %v4936
    %v4938 = vtanh.pop %v4924
    %v4939 = vxor.u32 %v4925, 2147483648
    %v4940 = vmul.f32 %v4939, 1.442695
    %v4941 = vpow.pop %v4940
    %v4942 = vadd.f32 %v4941, 1.0
    %v4943 = vrcp.pop %v4942
    %v4944 = vmul.f32 1.0, %v4943
    %v4945 = vmul.f32 %v4937, 0.0
    %v4946 = vmul.f32 %v4931, %v4938
    %v4947 = vadd.f32 %v4945, %v4946
    %v4948 = vtanh.pop %v4947
    %v4949 = vmul.f32 %v4944, %v4948
    %v4950 = vsel %vm1114, %v4949, 0.0
    %v4951 = vsel %vm1114, %v4947, 0.0
    %4952 = vst [vmem:[#allocation4] sm:$0xff] %v4950
    %v4953 = vld [vmem:[%s1118] sm:$0xff]
    %v4954 = vld [vmem:[%s1118 + $0x8] sm:$0xff]
    %v4955 = vld [vmem:[%s1118 + $0x10] sm:$0xff]
    %v4956 = vld [vmem:[%s1118 + $0x18] sm:$0xff]
    %4957 = vmatprep.subr.mxu0 %v4773
    %4958 = vmatpush1.msra.mxu0 %v4772
    %4959 = vmatprep.subr.mxu0 %v4769
    %4960 = vmatpush1.msra.mxu0 %v4768
    %4961 = vmatprep.subr.mxu0 %v4765
    %4962 = vmatpush1.msra.mxu0 %v4764
    %4963 = vmatprep.subr.mxu0 %v4761
    %4964 = vmatpush1.msra.mxu0 %v4760
    %4965 = vmatprep.subr.mxu0 %v4757
    %4966 = vmatpush1.msra.mxu0 %v4756
    %4967 = vmatprep.subr.mxu0 %v4753
    %4968 = vmatpush1.msra.mxu0 %v4752
    %4969 = vmatprep.subr.mxu0 %v4749
    %4970 = vmatpush1.msra.mxu0 %v4748
    %4971 = vmatprep.subr.mxu0 %v4745
    %4972 = vmatpush1.msra.mxu0 %v4744
    %4973 = vmatprep.subr.mxu0 %v4741
    %4974 = vmatpush1.msra.mxu0 %v4740
    %4975 = vmatprep.subr.mxu0 %v4737
    %4976 = vmatpush1.msra.mxu0 %v4736
    %4977 = vmatprep.subr.mxu0 %v4733
    %4978 = vmatpush1.msra.mxu0 %v4732
    %4979 = vmatprep.subr.mxu0 %v4729
    %4980 = vmatpush1.msra.mxu0 %v4728
    %4981 = vmatprep.subr.mxu0 %v4725
    %4982 = vmatpush1.msra.mxu0 %v4724
    %4983 = vmatprep.subr.mxu0 %v4721
    %4984 = vmatpush1.msra.mxu0 %v4720
    %4985 = vmatprep.subr.mxu0 %v4717
    %4986 = vmatpush1.msra.mxu0 %v4716
    %4987 = vmatprep.subr.mxu0 %v4713
    %4988 = vmatpush1.msra.mxu0 %v4712
    %4989 = vmatprep.subr.mxu0 0.0
    %4990 = vmatpush2.msra.mxu0 0.0
    %4991 = vmatprep.subr.mxu0 0.0
    %4992 = vmatpush2.msra.mxu0 0.0
    %4993 = vmatprep.subr.mxu0 0.0
    %4994 = vmatpush2.msra.mxu0 0.0
    %4995 = vmatprep.subr.mxu0 0.0
    %4996 = vmatpush2.msra.mxu0 0.0
    %4997 = vmatprep.subr.mxu0 0.0
    %4998 = vmatpush2.msra.mxu0 0.0
    %4999 = vmatprep.subr.mxu0 0.0
    %5000 = vmatpush2.msra.mxu0 0.0
    %5001 = vmatprep.subr.mxu0 0.0
    %5002 = vmatpush2.msra.mxu0 0.0
    %5003 = vmatprep.subr.mxu0 0.0
    %5004 = vmatpush2.msra.mxu0 0.0
    %5005 = vmatprep.subr.mxu0 0.0
    %5006 = vmatpush2.msra.mxu0 0.0
    %5007 = vmatprep.subr.mxu0 0.0
    %5008 = vmatpush2.msra.mxu0 0.0
    %5009 = vmatprep.subr.mxu0 0.0
    %5010 = vmatpush2.msra.mxu0 0.0
    %5011 = vmatprep.subr.mxu0 0.0
    %5012 = vmatpush2.msra.mxu0 0.0
    %5013 = vmatprep.subr.mxu0 0.0
    %5014 = vmatpush2.msra.mxu0 0.0
    %5015 = vmatprep.subr.mxu0 0.0
    %5016 = vmatpush2.msra.mxu0 0.0
    %5017 = vmatprep.subr.mxu0 0.0
    %5018 = vmatpush2.msra.mxu0 0.0
    %5019 = vmatprep.subr.mxu0 0.0
    %5020 = vmatpush2.msra.mxu0 0.0
    %5021 = vmatprep.mubr.f32.mxu0 0.0
    %5022 = vmatmul.mubr.f32.gmra.mxu0 0.0
    %v5023 = vpop.f32.mrf.mxu0
    %v5024 = vadd.f32 0.0, %v5023
    %v5025 = vpop.f32.mrf.mxu0
    %v5026 = vadd.f32 0.0, %v5025
    %5027 = vdwg.mxu0
    %5028 = vmatprep.subr.mxu0 %v4775
    %5029 = vmatpush1.msra.mxu0 %v4774
    %5030 = vmatprep.subr.mxu0 %v4771
    %5031 = vmatpush1.msra.mxu0 %v4770
    %5032 = vmatprep.subr.mxu0 %v4767
    %5033 = vmatpush1.msra.mxu0 %v4766
    %5034 = vmatprep.subr.mxu0 %v4763
    %5035 = vmatpush1.msra.mxu0 %v4762
    %5036 = vmatprep.subr.mxu0 %v4759
    %5037 = vmatpush1.msra.mxu0 %v4758
    %5038 = vmatprep.subr.mxu0 %v4755
    %5039 = vmatpush1.msra.mxu0 %v4754
    %5040 = vmatprep.subr.mxu0 %v4751
    %5041 = vmatpush1.msra.mxu0 %v4750
    %5042 = vmatprep.subr.mxu0 %v4747
    %5043 = vmatpush1.msra.mxu0 %v4746
    %5044 = vmatprep.subr.mxu0 %v4743
    %5045 = vmatpush1.msra.mxu0 %v4742
    %5046 = vmatprep.subr.mxu0 %v4739
    %5047 = vmatpush1.msra.mxu0 %v4738
    %5048 = vmatprep.subr.mxu0 %v4735
    %5049 = vmatpush1.msra.mxu0 %v4734
    %5050 = vmatprep.subr.mxu0 %v4731
    %5051 = vmatpush1.msra.mxu0 %v4730
    %5052 = vmatprep.subr.mxu0 %v4727
    %5053 = vmatpush1.msra.mxu0 %v4726
    %5054 = vmatprep.subr.mxu0 %v4723
    %5055 = vmatpush1.msra.mxu0 %v4722
    %5056 = vmatprep.subr.mxu0 %v4719
    %5057 = vmatpush1.msra.mxu0 %v4718
    %5058 = vmatprep.subr.mxu0 %v4715
    %5059 = vmatpush1.msra.mxu0 %v4714
    %5060 = vmatprep.subr.mxu0 0.0
    %5061 = vmatpush2.msra.mxu0 0.0
    %5062 = vmatprep.subr.mxu0 0.0
    %5063 = vmatpush2.msra.mxu0 0.0
    %5064 = vmatprep.subr.mxu0 0.0
    %5065 = vmatpush2.msra.mxu0 0.0
    %5066 = vmatprep.subr.mxu0 0.0
    %5067 = vmatpush2.msra.mxu0 0.0
    %5068 = vmatprep.subr.mxu0 0.0
    %5069 = vmatpush2.msra.mxu0 0.0
    %5070 = vmatprep.subr.mxu0 0.0
    %5071 = vmatpush2.msra.mxu0 0.0
    %5072 = vmatprep.subr.mxu0 0.0
    %5073 = vmatpush2.msra.mxu0 0.0
    %5074 = vmatprep.subr.mxu0 0.0
    %5075 = vmatpush2.msra.mxu0 0.0
    %5076 = vmatprep.subr.mxu0 0.0
    %5077 = vmatpush2.msra.mxu0 0.0
    %5078 = vmatprep.subr.mxu0 0.0
    %5079 = vmatpush2.msra.mxu0 0.0
    %5080 = vmatprep.subr.mxu0 0.0
    %5081 = vmatpush2.msra.mxu0 0.0
    %5082 = vmatprep.subr.mxu0 0.0
    %5083 = vmatpush2.msra.mxu0 0.0
    %5084 = vmatprep.subr.mxu0 0.0
    %5085 = vmatpush2.msra.mxu0 0.0
    %5086 = vmatprep.subr.mxu0 0.0
    %5087 = vmatpush2.msra.mxu0 0.0
    %5088 = vmatprep.subr.mxu0 0.0
    %5089 = vmatpush2.msra.mxu0 0.0
    %5090 = vmatprep.subr.mxu0 0.0
    %5091 = vmatpush2.msra.mxu0 0.0
    %5092 = vmatprep.mubr.f32.mxu0 0.0
    %5093 = vmatmul.mubr.f32.gmra.mxu0 0.0
    %v5094 = vpop.f32.mrf.mxu0
    %v5095 = vadd.f32 0.0, %v5094
    %v5096 = vpop.f32.mrf.mxu0
    %v5097 = vadd.f32 0.0, %v5096
    %5098 = vdwg.mxu0
    %v5099 = vadd.f32 %v4953, %v5024
    %v5100 = vadd.f32 %v4954, %v5026
    %v5101 = vadd.f32 %v4955, %v5095
    %v5102 = vadd.f32 %v4956, %v5097
    %v5103 = vxor.u32 %v5099, 2147483648
    %v5104 = vmul.f32 %v5103, 1.442695
    %v5105 = vpow.pop %v5104
    %v5106 = vadd.f32 %v5105, 1.0
    %v5107 = vrcp.pop %v5106
    %v5108 = vmul.f32 1.0, %v5107
    %v5109 = vxor.u32 %v5100, 2147483648
    %v5110 = vmul.f32 %v5109, 1.442695
    %v5111 = vpow.pop %v5110
    %v5112 = vadd.f32 %v5111, 1.0
    %v5113 = vrcp.pop %v5112
    %v5114 = vmul.f32 1.0, %v5113
    %v5115 = vtanh.pop %v5101
    %v5116 = vxor.u32 %v5102, 2147483648
    %v5117 = vmul.f32 %v5116, 1.442695
    %v5118 = vpow.pop %v5117
    %v5119 = vadd.f32 %v5118, 1.0
    %v5120 = vrcp.pop %v5119
    %v5121 = vmul.f32 1.0, %v5120
    %v5122 = vmul.f32 %v5114, 0.0
    %v5123 = vmul.f32 %v5108, %v5115
    %v5124 = vadd.f32 %v5122, %v5123
    %v5125 = vtanh.pop %v5124
    %v5126 = vmul.f32 %v5121, %v5125
    %v5127 = vsel %vm1293, %v5126, 0.0
    %v5128 = vsel %vm1293, %v5124, 0.0
    %5129 = vst [vmem:[%s1296] sm:$0xff] %v5127
    %v5130 = vld [vmem:[%s1298] sm:$0xff]
    %v5131 = vld [vmem:[%s1298 + $0x8] sm:$0xff]
    %v5132 = vld [vmem:[%s1298 + $0x10] sm:$0xff]
    %v5133 = vld [vmem:[%s1298 + $0x18] sm:$0xff]
    %5134 = vmatprep.subr.mxu0 %v4709
    %5135 = vmatpush1.msra.mxu0 %v4708
    %5136 = vmatprep.subr.mxu0 %v4705
    %5137 = vmatpush1.msra.mxu0 %v4704
    %5138 = vmatprep.subr.mxu0 %v4701
    %5139 = vmatpush1.msra.mxu0 %v4700
    %5140 = vmatprep.subr.mxu0 %v4697
    %5141 = vmatpush1.msra.mxu0 %v4696
    %5142 = vmatprep.subr.mxu0 %v4693
    %5143 = vmatpush1.msra.mxu0 %v4692
    %5144 = vmatprep.subr.mxu0 %v4689
    %5145 = vmatpush1.msra.mxu0 %v4688
    %5146 = vmatprep.subr.mxu0 %v4685
    %5147 = vmatpush1.msra.mxu0 %v4684
    %5148 = vmatprep.subr.mxu0 %v4681
    %5149 = vmatpush1.msra.mxu0 %v4680
    %5150 = vmatprep.subr.mxu0 %v4677
    %5151 = vmatpush1.msra.mxu0 %v4676
    %5152 = vmatprep.subr.mxu0 %v4673
    %5153 = vmatpush1.msra.mxu0 %v4672
    %5154 = vmatprep.subr.mxu0 %v4669
    %5155 = vmatpush1.msra.mxu0 %v4668
    %5156 = vmatprep.subr.mxu0 %v4665
    %5157 = vmatpush1.msra.mxu0 %v4664
    %5158 = vmatprep.subr.mxu0 %v4661
    %5159 = vmatpush1.msra.mxu0 %v4660
    %5160 = vmatprep.subr.mxu0 %v4657
    %5161 = vmatpush1.msra.mxu0 %v4656
    %5162 = vmatprep.subr.mxu0 %v4653
    %5163 = vmatpush1.msra.mxu0 %v4652
    %5164 = vmatprep.subr.mxu0 %v4649
    %5165 = vmatpush1.msra.mxu0 %v4648
    %5166 = vmatprep.subr.mxu0 0.0
    %5167 = vmatpush2.msra.mxu0 0.0
    %5168 = vmatprep.subr.mxu0 0.0
    %5169 = vmatpush2.msra.mxu0 0.0
    %5170 = vmatprep.subr.mxu0 0.0
    %5171 = vmatpush2.msra.mxu0 0.0
    %5172 = vmatprep.subr.mxu0 0.0
    %5173 = vmatpush2.msra.mxu0 0.0
    %5174 = vmatprep.subr.mxu0 0.0
    %5175 = vmatpush2.msra.mxu0 0.0
    %5176 = vmatprep.subr.mxu0 0.0
    %5177 = vmatpush2.msra.mxu0 0.0
    %5178 = vmatprep.subr.mxu0 0.0
    %5179 = vmatpush2.msra.mxu0 0.0
    %5180 = vmatprep.subr.mxu0 0.0
    %5181 = vmatpush2.msra.mxu0 0.0
    %5182 = vmatprep.subr.mxu0 0.0
    %5183 = vmatpush2.msra.mxu0 0.0
    %5184 = vmatprep.subr.mxu0 0.0
    %5185 = vmatpush2.msra.mxu0 0.0
    %5186 = vmatprep.subr.mxu0 0.0
    %5187 = vmatpush2.msra.mxu0 0.0
    %5188 = vmatprep.subr.mxu0 0.0
    %5189 = vmatpush2.msra.mxu0 0.0
    %5190 = vmatprep.subr.mxu0 0.0
    %5191 = vmatpush2.msra.mxu0 0.0
    %5192 = vmatprep.subr.mxu0 0.0
    %5193 = vmatpush2.msra.mxu0 0.0
    %5194 = vmatprep.subr.mxu0 0.0
    %5195 = vmatpush2.msra.mxu0 0.0
    %5196 = vmatprep.subr.mxu0 0.0
    %5197 = vmatpush2.msra.mxu0 0.0
    %5198 = vmatprep.mubr.f32.mxu0 0.0
    %5199 = vmatmul.mubr.f32.gmra.mxu0 %v4950
    %v5200 = vpop.f32.mrf.mxu0
    %v5201 = vadd.f32 0.0, %v5200
    %v5202 = vpop.f32.mrf.mxu0
    %v5203 = vadd.f32 0.0, %v5202
    %5204 = vdwg.mxu0
    %5205 = vmatprep.subr.mxu0 %v4711
    %5206 = vmatpush1.msra.mxu0 %v4710
    %5207 = vmatprep.subr.mxu0 %v4707
    %5208 = vmatpush1.msra.mxu0 %v4706
    %5209 = vmatprep.subr.mxu0 %v4703
    %5210 = vmatpush1.msra.mxu0 %v4702
    %5211 = vmatprep.subr.mxu0 %v4699
    %5212 = vmatpush1.msra.mxu0 %v4698
    %5213 = vmatprep.subr.mxu0 %v4695
    %5214 = vmatpush1.msra.mxu0 %v4694
    %5215 = vmatprep.subr.mxu0 %v4691
    %5216 = vmatpush1.msra.mxu0 %v4690
    %5217 = vmatprep.subr.mxu0 %v4687
    %5218 = vmatpush1.msra.mxu0 %v4686
    %5219 = vmatprep.subr.mxu0 %v4683
    %5220 = vmatpush1.msra.mxu0 %v4682
    %5221 = vmatprep.subr.mxu0 %v4679
    %5222 = vmatpush1.msra.mxu0 %v4678
    %5223 = vmatprep.subr.mxu0 %v4675
    %5224 = vmatpush1.msra.mxu0 %v4674
    %5225 = vmatprep.subr.mxu0 %v4671
    %5226 = vmatpush1.msra.mxu0 %v4670
    %5227 = vmatprep.subr.mxu0 %v4667
    %5228 = vmatpush1.msra.mxu0 %v4666
    %5229 = vmatprep.subr.mxu0 %v4663
    %5230 = vmatpush1.msra.mxu0 %v4662
    %5231 = vmatprep.subr.mxu0 %v4659
    %5232 = vmatpush1.msra.mxu0 %v4658
    %5233 = vmatprep.subr.mxu0 %v4655
    %5234 = vmatpush1.msra.mxu0 %v4654
    %5235 = vmatprep.subr.mxu0 %v4651
    %5236 = vmatpush1.msra.mxu0 %v4650
    %5237 = vmatprep.subr.mxu0 0.0
    %5238 = vmatpush2.msra.mxu0 0.0
    %5239 = vmatprep.subr.mxu0 0.0
    %5240 = vmatpush2.msra.mxu0 0.0
    %5241 = vmatprep.subr.mxu0 0.0
    %5242 = vmatpush2.msra.mxu0 0.0
    %5243 = vmatprep.subr.mxu0 0.0
    %5244 = vmatpush2.msra.mxu0 0.0
    %5245 = vmatprep.subr.mxu0 0.0
    %5246 = vmatpush2.msra.mxu0 0.0
    %5247 = vmatprep.subr.mxu0 0.0
    %5248 = vmatpush2.msra.mxu0 0.0
    %5249 = vmatprep.subr.mxu0 0.0
    %5250 = vmatpush2.msra.mxu0 0.0
    %5251 = vmatprep.subr.mxu0 0.0
    %5252 = vmatpush2.msra.mxu0 0.0
    %5253 = vmatprep.subr.mxu0 0.0
    %5254 = vmatpush2.msra.mxu0 0.0
    %5255 = vmatprep.subr.mxu0 0.0
    %5256 = vmatpush2.msra.mxu0 0.0
    %5257 = vmatprep.subr.mxu0 0.0
    %5258 = vmatpush2.msra.mxu0 0.0
    %5259 = vmatprep.subr.mxu0 0.0
    %5260 = vmatpush2.msra.mxu0 0.0
    %5261 = vmatprep.subr.mxu0 0.0
    %5262 = vmatpush2.msra.mxu0 0.0
    %5263 = vmatprep.subr.mxu0 0.0
    %5264 = vmatpush2.msra.mxu0 0.0
    %5265 = vmatprep.subr.mxu0 0.0
    %5266 = vmatpush2.msra.mxu0 0.0
    %5267 = vmatprep.subr.mxu0 0.0
    %5268 = vmatpush2.msra.mxu0 0.0
    %5269 = vmatprep.mubr.f32.mxu0 0.0
    %5270 = vmatmul.mubr.f32.gmra.mxu0 %v4950
    %v5271 = vpop.f32.mrf.mxu0
    %v5272 = vadd.f32 0.0, %v5271
    %v5273 = vpop.f32.mrf.mxu0
    %v5274 = vadd.f32 0.0, %v5273
    %5275 = vdwg.mxu0
    %v5276 = vadd.f32 %v5130, %v5201
    %v5277 = vadd.f32 %v5131, %v5203
    %v5278 = vadd.f32 %v5132, %v5272
    %v5279 = vadd.f32 %v5133, %v5274
    %v5280 = vxor.u32 %v5276, 2147483648
    %v5281 = vmul.f32 %v5280, 1.442695
    %v5282 = vpow.pop %v5281
    %v5283 = vadd.f32 %v5282, 1.0
    %v5284 = vrcp.pop %v5283
    %v5285 = vmul.f32 1.0, %v5284
    %v5286 = vxor.u32 %v5277, 2147483648
    %v5287 = vmul.f32 %v5286, 1.442695
    %v5288 = vpow.pop %v5287
    %v5289 = vadd.f32 %v5288, 1.0
    %v5290 = vrcp.pop %v5289
    %v5291 = vmul.f32 1.0, %v5290
    %v5292 = vtanh.pop %v5278
    %v5293 = vxor.u32 %v5279, 2147483648
    %v5294 = vmul.f32 %v5293, 1.442695
    %v5295 = vpow.pop %v5294
    %v5296 = vadd.f32 %v5295, 1.0
    %v5297 = vrcp.pop %v5296
    %v5298 = vmul.f32 1.0, %v5297
    %v5299 = vmul.f32 %v5291, %v4951
    %v5300 = vmul.f32 %v5285, %v5292
    %v5301 = vadd.f32 %v5299, %v5300
    %v5302 = vtanh.pop %v5301
    %v5303 = vmul.f32 %v5298, %v5302
    %v5304 = vsel %vm1473, %v5303, %v4950
    %v5305 = vsel %vm1473, %v5301, %v4951
    %v5306 = vsel %vm1473, %v5303, 0.0
    %5307 = vst [vmem:[%s1477] sm:$0xff] %v5306
    %v5308 = vld [vmem:[%s1479] sm:$0xff]
    %v5309 = vld [vmem:[%s1479 + $0x8] sm:$0xff]
    %v5310 = vld [vmem:[%s1479 + $0x10] sm:$0xff]
    %v5311 = vld [vmem:[%s1479 + $0x18] sm:$0xff]
    %5312 = vmatprep.subr.mxu0 %v4773
    %5313 = vmatpush1.msra.mxu0 %v4772
    %5314 = vmatprep.subr.mxu0 %v4769
    %5315 = vmatpush1.msra.mxu0 %v4768
    %5316 = vmatprep.subr.mxu0 %v4765
    %5317 = vmatpush1.msra.mxu0 %v4764
    %5318 = vmatprep.subr.mxu0 %v4761
    %5319 = vmatpush1.msra.mxu0 %v4760
    %5320 = vmatprep.subr.mxu0 %v4757
    %5321 = vmatpush1.msra.mxu0 %v4756
    %5322 = vmatprep.subr.mxu0 %v4753
    %5323 = vmatpush1.msra.mxu0 %v4752
    %5324 = vmatprep.subr.mxu0 %v4749
    %5325 = vmatpush1.msra.mxu0 %v4748
    %5326 = vmatprep.subr.mxu0 %v4745
    %5327 = vmatpush1.msra.mxu0 %v4744
    %5328 = vmatprep.subr.mxu0 %v4741
    %5329 = vmatpush1.msra.mxu0 %v4740
    %5330 = vmatprep.subr.mxu0 %v4737
    %5331 = vmatpush1.msra.mxu0 %v4736
    %5332 = vmatprep.subr.mxu0 %v4733
    %5333 = vmatpush1.msra.mxu0 %v4732
    %5334 = vmatprep.subr.mxu0 %v4729
    %5335 = vmatpush1.msra.mxu0 %v4728
    %5336 = vmatprep.subr.mxu0 %v4725
    %5337 = vmatpush1.msra.mxu0 %v4724
    %5338 = vmatprep.subr.mxu0 %v4721
    %5339 = vmatpush1.msra.mxu0 %v4720
    %5340 = vmatprep.subr.mxu0 %v4717
    %5341 = vmatpush1.msra.mxu0 %v4716
    %5342 = vmatprep.subr.mxu0 %v4713
    %5343 = vmatpush1.msra.mxu0 %v4712
    %5344 = vmatprep.subr.mxu0 0.0
    %5345 = vmatpush2.msra.mxu0 0.0
    %5346 = vmatprep.subr.mxu0 0.0
    %5347 = vmatpush2.msra.mxu0 0.0
    %5348 = vmatprep.subr.mxu0 0.0
    %5349 = vmatpush2.msra.mxu0 0.0
    %5350 = vmatprep.subr.mxu0 0.0
    %5351 = vmatpush2.msra.mxu0 0.0
    %5352 = vmatprep.subr.mxu0 0.0
    %5353 = vmatpush2.msra.mxu0 0.0
    %5354 = vmatprep.subr.mxu0 0.0
    %5355 = vmatpush2.msra.mxu0 0.0
    %5356 = vmatprep.subr.mxu0 0.0
    %5357 = vmatpush2.msra.mxu0 0.0
    %5358 = vmatprep.subr.mxu0 0.0
    %5359 = vmatpush2.msra.mxu0 0.0
    %5360 = vmatprep.subr.mxu0 0.0
    %5361 = vmatpush2.msra.mxu0 0.0
    %5362 = vmatprep.subr.mxu0 0.0
    %5363 = vmatpush2.msra.mxu0 0.0
    %5364 = vmatprep.subr.mxu0 0.0
    %5365 = vmatpush2.msra.mxu0 0.0
    %5366 = vmatprep.subr.mxu0 0.0
    %5367 = vmatpush2.msra.mxu0 0.0
    %5368 = vmatprep.subr.mxu0 0.0
    %5369 = vmatpush2.msra.mxu0 0.0
    %5370 = vmatprep.subr.mxu0 0.0
    %5371 = vmatpush2.msra.mxu0 0.0
    %5372 = vmatprep.subr.mxu0 0.0
    %5373 = vmatpush2.msra.mxu0 0.0
    %5374 = vmatprep.subr.mxu0 0.0
    %5375 = vmatpush2.msra.mxu0 0.0
    %5376 = vmatprep.mubr.f32.mxu0 0.0
    %5377 = vmatmul.mubr.f32.gmra.mxu0 %v5127
    %v5378 = vpop.f32.mrf.mxu0
    %v5379 = vadd.f32 0.0, %v5378
    %v5380 = vpop.f32.mrf.mxu0
    %v5381 = vadd.f32 0.0, %v5380
    %5382 = vdwg.mxu0
    %5383 = vmatprep.subr.mxu0 %v4775
    %5384 = vmatpush1.msra.mxu0 %v4774
    %5385 = vmatprep.subr.mxu0 %v4771
    %5386 = vmatpush1.msra.mxu0 %v4770
    %5387 = vmatprep.subr.mxu0 %v4767
    %5388 = vmatpush1.msra.mxu0 %v4766
    %5389 = vmatprep.subr.mxu0 %v4763
    %5390 = vmatpush1.msra.mxu0 %v4762
    %5391 = vmatprep.subr.mxu0 %v4759
    %5392 = vmatpush1.msra.mxu0 %v4758
    %5393 = vmatprep.subr.mxu0 %v4755
    %5394 = vmatpush1.msra.mxu0 %v4754
    %5395 = vmatprep.subr.mxu0 %v4751
    %5396 = vmatpush1.msra.mxu0 %v4750
    %5397 = vmatprep.subr.mxu0 %v4747
    %5398 = vmatpush1.msra.mxu0 %v4746
    %5399 = vmatprep.subr.mxu0 %v4743
    %5400 = vmatpush1.msra.mxu0 %v4742
    %5401 = vmatprep.subr.mxu0 %v4739
    %5402 = vmatpush1.msra.mxu0 %v4738
    %5403 = vmatprep.subr.mxu0 %v4735
    %5404 = vmatpush1.msra.mxu0 %v4734
    %5405 = vmatprep.subr.mxu0 %v4731
    %5406 = vmatpush1.msra.mxu0 %v4730
    %5407 = vmatprep.subr.mxu0 %v4727
    %5408 = vmatpush1.msra.mxu0 %v4726
    %5409 = vmatprep.subr.mxu0 %v4723
    %5410 = vmatpush1.msra.mxu0 %v4722
    %5411 = vmatprep.subr.mxu0 %v4719
    %5412 = vmatpush1.msra.mxu0 %v4718
    %5413 = vmatprep.subr.mxu0 %v4715
    %5414 = vmatpush1.msra.mxu0 %v4714
    %5415 = vmatprep.subr.mxu0 0.0
    %5416 = vmatpush2.msra.mxu0 0.0
    %5417 = vmatprep.subr.mxu0 0.0
    %5418 = vmatpush2.msra.mxu0 0.0
    %5419 = vmatprep.subr.mxu0 0.0
    %5420 = vmatpush2.msra.mxu0 0.0
    %5421 = vmatprep.subr.mxu0 0.0
    %5422 = vmatpush2.msra.mxu0 0.0
    %5423 = vmatprep.subr.mxu0 0.0
    %5424 = vmatpush2.msra.mxu0 0.0
    %5425 = vmatprep.subr.mxu0 0.0
    %5426 = vmatpush2.msra.mxu0 0.0
    %5427 = vmatprep.subr.mxu0 0.0
    %5428 = vmatpush2.msra.mxu0 0.0
    %5429 = vmatprep.subr.mxu0 0.0
    %5430 = vmatpush2.msra.mxu0 0.0
    %5431 = vmatprep.subr.mxu0 0.0
    %5432 = vmatpush2.msra.mxu0 0.0
    %5433 = vmatprep.subr.mxu0 0.0
    %5434 = vmatpush2.msra.mxu0 0.0
    %5435 = vmatprep.subr.mxu0 0.0
    %5436 = vmatpush2.msra.mxu0 0.0
    %5437 = vmatprep.subr.mxu0 0.0
    %5438 = vmatpush2.msra.mxu0 0.0
    %5439 = vmatprep.subr.mxu0 0.0
    %5440 = vmatpush2.msra.mxu0 0.0
    %5441 = vmatprep.subr.mxu0 0.0
    %5442 = vmatpush2.msra.mxu0 0.0
    %5443 = vmatprep.subr.mxu0 0.0
    %5444 = vmatpush2.msra.mxu0 0.0
    %5445 = vmatprep.subr.mxu0 0.0
    %5446 = vmatpush2.msra.mxu0 0.0
    %5447 = vmatprep.mubr.f32.mxu0 0.0
    %5448 = vmatmul.mubr.f32.gmra.mxu0 %v5127
    %v5449 = vpop.f32.mrf.mxu0
    %v5450 = vadd.f32 0.0, %v5449
    %v5451 = vpop.f32.mrf.mxu0
    %v5452 = vadd.f32 0.0, %v5451
    %5453 = vdwg.mxu0
    %v5454 = vadd.f32 %v5308, %v5379
    %v5455 = vadd.f32 %v5309, %v5381
    %v5456 = vadd.f32 %v5310, %v5450
    %v5457 = vadd.f32 %v5311, %v5452
    %v5458 = vxor.u32 %v5454, 2147483648
    %v5459 = vmul.f32 %v5458, 1.442695
    %v5460 = vpow.pop %v5459
    %v5461 = vadd.f32 %v5460, 1.0
    %v5462 = vrcp.pop %v5461
    %v5463 = vmul.f32 1.0, %v5462
    %v5464 = vxor.u32 %v5455, 2147483648
    %v5465 = vmul.f32 %v5464, 1.442695
    %v5466 = vpow.pop %v5465
    %v5467 = vadd.f32 %v5466, 1.0
    %v5468 = vrcp.pop %v5467
    %v5469 = vmul.f32 1.0, %v5468
    %v5470 = vtanh.pop %v5456
    %v5471 = vxor.u32 %v5457, 2147483648
    %v5472 = vmul.f32 %v5471, 1.442695
    %v5473 = vpow.pop %v5472
    %v5474 = vadd.f32 %v5473, 1.0
    %v5475 = vrcp.pop %v5474
    %v5476 = vmul.f32 1.0, %v5475
    %v5477 = vmul.f32 %v5469, %v5128
    %v5478 = vmul.f32 %v5463, %v5470
    %v5479 = vadd.f32 %v5477, %v5478
    %v5480 = vtanh.pop %v5479
    %v5481 = vmul.f32 %v5476, %v5480
    %v5482 = vsel %vm1654, %v5481, %v5127
    %v5483 = vsel %vm1654, %v5479, %v5128
    %v5484 = vsel %vm1654, %v5481, 0.0
    %5485 = vst [vmem:[%s1658] sm:$0xff] %v5484
    %v5486 = vld [vmem:[%s1660] sm:$0xff]
    %v5487 = vld [vmem:[%s1660 + $0x8] sm:$0xff]
    %v5488 = vld [vmem:[%s1660 + $0x10] sm:$0xff]
    %v5489 = vld [vmem:[%s1660 + $0x18] sm:$0xff]
    %5490 = vmatprep.subr.mxu0 %v4709
    %5491 = vmatpush1.msra.mxu0 %v4708
    %5492 = vmatprep.subr.mxu0 %v4705
    %5493 = vmatpush1.msra.mxu0 %v4704
    %5494 = vmatprep.subr.mxu0 %v4701
    %5495 = vmatpush1.msra.mxu0 %v4700
    %5496 = vmatprep.subr.mxu0 %v4697
    %5497 = vmatpush1.msra.mxu0 %v4696
    %5498 = vmatprep.subr.mxu0 %v4693
    %5499 = vmatpush1.msra.mxu0 %v4692
    %5500 = vmatprep.subr.mxu0 %v4689
    %5501 = vmatpush1.msra.mxu0 %v4688
    %5502 = vmatprep.subr.mxu0 %v4685
    %5503 = vmatpush1.msra.mxu0 %v4684
    %5504 = vmatprep.subr.mxu0 %v4681
    %5505 = vmatpush1.msra.mxu0 %v4680
    %5506 = vmatprep.subr.mxu0 %v4677
    %5507 = vmatpush1.msra.mxu0 %v4676
    %5508 = vmatprep.subr.mxu0 %v4673
    %5509 = vmatpush1.msra.mxu0 %v4672
    %5510 = vmatprep.subr.mxu0 %v4669
    %5511 = vmatpush1.msra.mxu0 %v4668
    %5512 = vmatprep.subr.mxu0 %v4665
    %5513 = vmatpush1.msra.mxu0 %v4664
    %5514 = vmatprep.subr.mxu0 %v4661
    %5515 = vmatpush1.msra.mxu0 %v4660
    %5516 = vmatprep.subr.mxu0 %v4657
    %5517 = vmatpush1.msra.mxu0 %v4656
    %5518 = vmatprep.subr.mxu0 %v4653
    %5519 = vmatpush1.msra.mxu0 %v4652
    %5520 = vmatprep.subr.mxu0 %v4649
    %5521 = vmatpush1.msra.mxu0 %v4648
    %5522 = vmatprep.subr.mxu0 0.0
    %5523 = vmatpush2.msra.mxu0 0.0
    %5524 = vmatprep.subr.mxu0 0.0
    %5525 = vmatpush2.msra.mxu0 0.0
    %5526 = vmatprep.subr.mxu0 0.0
    %5527 = vmatpush2.msra.mxu0 0.0
    %5528 = vmatprep.subr.mxu0 0.0
    %5529 = vmatpush2.msra.mxu0 0.0
    %5530 = vmatprep.subr.mxu0 0.0
    %5531 = vmatpush2.msra.mxu0 0.0
    %5532 = vmatprep.subr.mxu0 0.0
    %5533 = vmatpush2.msra.mxu0 0.0
    %5534 = vmatprep.subr.mxu0 0.0
    %5535 = vmatpush2.msra.mxu0 0.0
    %5536 = vmatprep.subr.mxu0 0.0
    %5537 = vmatpush2.msra.mxu0 0.0
    %5538 = vmatprep.subr.mxu0 0.0
    %5539 = vmatpush2.msra.mxu0 0.0
    %5540 = vmatprep.subr.mxu0 0.0
    %5541 = vmatpush2.msra.mxu0 0.0
    %5542 = vmatprep.subr.mxu0 0.0
    %5543 = vmatpush2.msra.mxu0 0.0
    %5544 = vmatprep.subr.mxu0 0.0
    %5545 = vmatpush2.msra.mxu0 0.0
    %5546 = vmatprep.subr.mxu0 0.0
    %5547 = vmatpush2.msra.mxu0 0.0
    %5548 = vmatprep.subr.mxu0 0.0
    %5549 = vmatpush2.msra.mxu0 0.0
    %5550 = vmatprep.subr.mxu0 0.0
    %5551 = vmatpush2.msra.mxu0 0.0
    %5552 = vmatprep.subr.mxu0 0.0
    %5553 = vmatpush2.msra.mxu0 0.0
    %5554 = vmatprep.mubr.f32.mxu0 0.0
    %5555 = vmatmul.mubr.f32.gmra.mxu0 %v5304
    %v5556 = vpop.f32.mrf.mxu0
    %v5557 = vadd.f32 0.0, %v5556
    %v5558 = vpop.f32.mrf.mxu0
    %v5559 = vadd.f32 0.0, %v5558
    %5560 = vdwg.mxu0
    %5561 = vmatprep.subr.mxu0 %v4711
    %5562 = vmatpush1.msra.mxu0 %v4710
    %5563 = vmatprep.subr.mxu0 %v4707
    %5564 = vmatpush1.msra.mxu0 %v4706
    %5565 = vmatprep.subr.mxu0 %v4703
    %5566 = vmatpush1.msra.mxu0 %v4702
    %5567 = vmatprep.subr.mxu0 %v4699
    %5568 = vmatpush1.msra.mxu0 %v4698
    %5569 = vmatprep.subr.mxu0 %v4695
    %5570 = vmatpush1.msra.mxu0 %v4694
    %5571 = vmatprep.subr.mxu0 %v4691
    %5572 = vmatpush1.msra.mxu0 %v4690
    %5573 = vmatprep.subr.mxu0 %v4687
    %5574 = vmatpush1.msra.mxu0 %v4686
    %5575 = vmatprep.subr.mxu0 %v4683
    %5576 = vmatpush1.msra.mxu0 %v4682
    %5577 = vmatprep.subr.mxu0 %v4679
    %5578 = vmatpush1.msra.mxu0 %v4678
    %5579 = vmatprep.subr.mxu0 %v4675
    %5580 = vmatpush1.msra.mxu0 %v4674
    %5581 = vmatprep.subr.mxu0 %v4671
    %5582 = vmatpush1.msra.mxu0 %v4670
    %5583 = vmatprep.subr.mxu0 %v4667
    %5584 = vmatpush1.msra.mxu0 %v4666
    %5585 = vmatprep.subr.mxu0 %v4663
    %5586 = vmatpush1.msra.mxu0 %v4662
    %5587 = vmatprep.subr.mxu0 %v4659
    %5588 = vmatpush1.msra.mxu0 %v4658
    %5589 = vmatprep.subr.mxu0 %v4655
    %5590 = vmatpush1.msra.mxu0 %v4654
    %5591 = vmatprep.subr.mxu0 %v4651
    %5592 = vmatpush1.msra.mxu0 %v4650
    %5593 = vmatprep.subr.mxu0 0.0
    %5594 = vmatpush2.msra.mxu0 0.0
    %5595 = vmatprep.subr.mxu0 0.0
    %5596 = vmatpush2.msra.mxu0 0.0
    %5597 = vmatprep.subr.mxu0 0.0
    %5598 = vmatpush2.msra.mxu0 0.0
    %5599 = vmatprep.subr.mxu0 0.0
    %5600 = vmatpush2.msra.mxu0 0.0
    %5601 = vmatprep.subr.mxu0 0.0
    %5602 = vmatpush2.msra.mxu0 0.0
    %5603 = vmatprep.subr.mxu0 0.0
    %5604 = vmatpush2.msra.mxu0 0.0
    %5605 = vmatprep.subr.mxu0 0.0
    %5606 = vmatpush2.msra.mxu0 0.0
    %5607 = vmatprep.subr.mxu0 0.0
    %5608 = vmatpush2.msra.mxu0 0.0
    %5609 = vmatprep.subr.mxu0 0.0
    %5610 = vmatpush2.msra.mxu0 0.0
    %5611 = vmatprep.subr.mxu0 0.0
    %5612 = vmatpush2.msra.mxu0 0.0
    %5613 = vmatprep.subr.mxu0 0.0
    %5614 = vmatpush2.msra.mxu0 0.0
    %5615 = vmatprep.subr.mxu0 0.0
    %5616 = vmatpush2.msra.mxu0 0.0
    %5617 = vmatprep.subr.mxu0 0.0
    %5618 = vmatpush2.msra.mxu0 0.0
    %5619 = vmatprep.subr.mxu0 0.0
    %5620 = vmatpush2.msra.mxu0 0.0
    %5621 = vmatprep.subr.mxu0 0.0
    %5622 = vmatpush2.msra.mxu0 0.0
    %5623 = vmatprep.subr.mxu0 0.0
    %5624 = vmatpush2.msra.mxu0 0.0
    %5625 = vmatprep.mubr.f32.mxu0 0.0
    %5626 = vmatmul.mubr.f32.gmra.mxu0 %v5304
    %v5627 = vpop.f32.mrf.mxu0
    %v5628 = vadd.f32 0.0, %v5627
    %v5629 = vpop.f32.mrf.mxu0
    %v5630 = vadd.f32 0.0, %v5629
    %5631 = vdwg.mxu0
    %v5632 = vadd.f32 %v5486, %v5557
    %v5633 = vadd.f32 %v5487, %v5559
    %v5634 = vadd.f32 %v5488, %v5628
    %v5635 = vadd.f32 %v5489, %v5630
    %v5636 = vxor.u32 %v5632, 2147483648
    %v5637 = vmul.f32 %v5636, 1.442695
    %v5638 = vpow.pop %v5637
    %v5639 = vadd.f32 %v5638, 1.0
    %v5640 = vrcp.pop %v5639
    %v5641 = vmul.f32 1.0, %v5640
    %v5642 = vxor.u32 %v5633, 2147483648
    %v5643 = vmul.f32 %v5642, 1.442695
    %v5644 = vpow.pop %v5643
    %v5645 = vadd.f32 %v5644, 1.0
    %v5646 = vrcp.pop %v5645
    %v5647 = vmul.f32 1.0, %v5646
    %v5648 = vtanh.pop %v5634
    %v5649 = vxor.u32 %v5635, 2147483648
    %v5650 = vmul.f32 %v5649, 1.442695
    %v5651 = vpow.pop %v5650
    %v5652 = vadd.f32 %v5651, 1.0
    %v5653 = vrcp.pop %v5652
    %v5654 = vmul.f32 1.0, %v5653
    %v5655 = vmul.f32 %v5647, %v5305
    %v5656 = vmul.f32 %v5641, %v5648
    %v5657 = vadd.f32 %v5655, %v5656
    %v5658 = vtanh.pop %v5657
    %v5659 = vmul.f32 %v5654, %v5658
    %v5660 = vsel %vm1835, %v5659, %v5304
    %v5661 = vsel %vm1835, %v5657, %v5305
    %v5662 = vsel %vm1835, %v5659, 0.0
    %5663 = vst [vmem:[%s1839] sm:$0xff] %v5662
    %v5664 = vld [vmem:[%s1841] sm:$0xff]
    %v5665 = vld [vmem:[%s1841 + $0x8] sm:$0xff]
    %v5666 = vld [vmem:[%s1841 + $0x10] sm:$0xff]
    %v5667 = vld [vmem:[%s1841 + $0x18] sm:$0xff]
    %5668 = vmatprep.subr.mxu0 %v4773
    %5669 = vmatpush1.msra.mxu0 %v4772
    %5670 = vmatprep.subr.mxu0 %v4769
    %5671 = vmatpush1.msra.mxu0 %v4768
    %5672 = vmatprep.subr.mxu0 %v4765
    %5673 = vmatpush1.msra.mxu0 %v4764
    %5674 = vmatprep.subr.mxu0 %v4761
    %5675 = vmatpush1.msra.mxu0 %v4760
    %5676 = vmatprep.subr.mxu0 %v4757
    %5677 = vmatpush1.msra.mxu0 %v4756
    %5678 = vmatprep.subr.mxu0 %v4753
    %5679 = vmatpush1.msra.mxu0 %v4752
    %5680 = vmatprep.subr.mxu0 %v4749
    %5681 = vmatpush1.msra.mxu0 %v4748
    %5682 = vmatprep.subr.mxu0 %v4745
    %5683 = vmatpush1.msra.mxu0 %v4744
    %5684 = vmatprep.subr.mxu0 %v4741
    %5685 = vmatpush1.msra.mxu0 %v4740
    %5686 = vmatprep.subr.mxu0 %v4737
    %5687 = vmatpush1.msra.mxu0 %v4736
    %5688 = vmatprep.subr.mxu0 %v4733
    %5689 = vmatpush1.msra.mxu0 %v4732
    %5690 = vmatprep.subr.mxu0 %v4729
    %5691 = vmatpush1.msra.mxu0 %v4728
    %5692 = vmatprep.subr.mxu0 %v4725
    %5693 = vmatpush1.msra.mxu0 %v4724
    %5694 = vmatprep.subr.mxu0 %v4721
    %5695 = vmatpush1.msra.mxu0 %v4720
    %5696 = vmatprep.subr.mxu0 %v4717
    %5697 = vmatpush1.msra.mxu0 %v4716
    %5698 = vmatprep.subr.mxu0 %v4713
    %5699 = vmatpush1.msra.mxu0 %v4712
    %5700 = vmatprep.subr.mxu0 0.0
    %5701 = vmatpush2.msra.mxu0 0.0
    %5702 = vmatprep.subr.mxu0 0.0
    %5703 = vmatpush2.msra.mxu0 0.0
    %5704 = vmatprep.subr.mxu0 0.0
    %5705 = vmatpush2.msra.mxu0 0.0
    %5706 = vmatprep.subr.mxu0 0.0
    %5707 = vmatpush2.msra.mxu0 0.0
    %5708 = vmatprep.subr.mxu0 0.0
    %5709 = vmatpush2.msra.mxu0 0.0
    %5710 = vmatprep.subr.mxu0 0.0
    %5711 = vmatpush2.msra.mxu0 0.0
    %5712 = vmatprep.subr.mxu0 0.0
    %5713 = vmatpush2.msra.mxu0 0.0
    %5714 = vmatprep.subr.mxu0 0.0
    %5715 = vmatpush2.msra.mxu0 0.0
    %5716 = vmatprep.subr.mxu0 0.0
    %5717 = vmatpush2.msra.mxu0 0.0
    %5718 = vmatprep.subr.mxu0 0.0
    %5719 = vmatpush2.msra.mxu0 0.0
    %5720 = vmatprep.subr.mxu0 0.0
    %5721 = vmatpush2.msra.mxu0 0.0
    %5722 = vmatprep.subr.mxu0 0.0
    %5723 = vmatpush2.msra.mxu0 0.0
    %5724 = vmatprep.subr.mxu0 0.0
    %5725 = vmatpush2.msra.mxu0 0.0
    %5726 = vmatprep.subr.mxu0 0.0
    %5727 = vmatpush2.msra.mxu0 0.0
    %5728 = vmatprep.subr.mxu0 0.0
    %5729 = vmatpush2.msra.mxu0 0.0
    %5730 = vmatprep.subr.mxu0 0.0
    %5731 = vmatpush2.msra.mxu0 0.0
    %5732 = vmatprep.mubr.f32.mxu0 0.0
    %5733 = vmatmul.mubr.f32.gmra.mxu0 %v5482
    %v5734 = vpop.f32.mrf.mxu0
    %v5735 = vadd.f32 0.0, %v5734
    %v5736 = vpop.f32.mrf.mxu0
    %v5737 = vadd.f32 0.0, %v5736
    %5738 = vdwg.mxu0
    %5739 = vmatprep.subr.mxu0 %v4775
    %5740 = vmatpush1.msra.mxu0 %v4774
    %5741 = vmatprep.subr.mxu0 %v4771
    %5742 = vmatpush1.msra.mxu0 %v4770
    %5743 = vmatprep.subr.mxu0 %v4767
    %5744 = vmatpush1.msra.mxu0 %v4766
    %5745 = vmatprep.subr.mxu0 %v4763
    %5746 = vmatpush1.msra.mxu0 %v4762
    %5747 = vmatprep.subr.mxu0 %v4759
    %5748 = vmatpush1.msra.mxu0 %v4758
    %5749 = vmatprep.subr.mxu0 %v4755
    %5750 = vmatpush1.msra.mxu0 %v4754
    %5751 = vmatprep.subr.mxu0 %v4751
    %5752 = vmatpush1.msra.mxu0 %v4750
    %5753 = vmatprep.subr.mxu0 %v4747
    %5754 = vmatpush1.msra.mxu0 %v4746
    %5755 = vmatprep.subr.mxu0 %v4743
    %5756 = vmatpush1.msra.mxu0 %v4742
    %5757 = vmatprep.subr.mxu0 %v4739
    %5758 = vmatpush1.msra.mxu0 %v4738
    %5759 = vmatprep.subr.mxu0 %v4735
    %5760 = vmatpush1.msra.mxu0 %v4734
    %5761 = vmatprep.subr.mxu0 %v4731
    %5762 = vmatpush1.msra.mxu0 %v4730
    %5763 = vmatprep.subr.mxu0 %v4727
    %5764 = vmatpush1.msra.mxu0 %v4726
    %5765 = vmatprep.subr.mxu0 %v4723
    %5766 = vmatpush1.msra.mxu0 %v4722
    %5767 = vmatprep.subr.mxu0 %v4719
    %5768 = vmatpush1.msra.mxu0 %v4718
    %5769 = vmatprep.subr.mxu0 %v4715
    %5770 = vmatpush1.msra.mxu0 %v4714
    %5771 = vmatprep.subr.mxu0 0.0
    %5772 = vmatpush2.msra.mxu0 0.0
    %5773 = vmatprep.subr.mxu0 0.0
    %5774 = vmatpush2.msra.mxu0 0.0
    %5775 = vmatprep.subr.mxu0 0.0
    %5776 = vmatpush2.msra.mxu0 0.0
    %5777 = vmatprep.subr.mxu0 0.0
    %5778 = vmatpush2.msra.mxu0 0.0
    %5779 = vmatprep.subr.mxu0 0.0
    %5780 = vmatpush2.msra.mxu0 0.0
    %5781 = vmatprep.subr.mxu0 0.0
    %5782 = vmatpush2.msra.mxu0 0.0
    %5783 = vmatprep.subr.mxu0 0.0
    %5784 = vmatpush2.msra.mxu0 0.0
    %5785 = vmatprep.subr.mxu0 0.0
    %5786 = vmatpush2.msra.mxu0 0.0
    %5787 = vmatprep.subr.mxu0 0.0
    %5788 = vmatpush2.msra.mxu0 0.0
    %5789 = vmatprep.subr.mxu0 0.0
    %5790 = vmatpush2.msra.mxu0 0.0
    %5791 = vmatprep.subr.mxu0 0.0
    %5792 = vmatpush2.msra.mxu0 0.0
    %5793 = vmatprep.subr.mxu0 0.0
    %5794 = vmatpush2.msra.mxu0 0.0
    %5795 = vmatprep.subr.mxu0 0.0
    %5796 = vmatpush2.msra.mxu0 0.0
    %5797 = vmatprep.subr.mxu0 0.0
    %5798 = vmatpush2.msra.mxu0 0.0
    %5799 = vmatprep.subr.mxu0 0.0
    %5800 = vmatpush2.msra.mxu0 0.0
    %5801 = vmatprep.subr.mxu0 0.0
    %5802 = vmatpush2.msra.mxu0 0.0
    %5803 = vmatprep.mubr.f32.mxu0 0.0
    %5804 = vmatmul.mubr.f32.gmra.mxu0 %v5482
    %v5805 = vpop.f32.mrf.mxu0
    %v5806 = vadd.f32 0.0, %v5805
    %v5807 = vpop.f32.mrf.mxu0
    %v5808 = vadd.f32 0.0, %v5807
    %5809 = vdwg.mxu0
    %v5810 = vadd.f32 %v5664, %v5735
    %v5811 = vadd.f32 %v5665, %v5737
    %v5812 = vadd.f32 %v5666, %v5806
    %v5813 = vadd.f32 %v5667, %v5808
    %v5814 = vxor.u32 %v5810, 2147483648
    %v5815 = vmul.f32 %v5814, 1.442695
    %v5816 = vpow.pop %v5815
    %v5817 = vadd.f32 %v5816, 1.0
    %v5818 = vrcp.pop %v5817
    %v5819 = vmul.f32 1.0, %v5818
    %v5820 = vxor.u32 %v5811, 2147483648
    %v5821 = vmul.f32 %v5820, 1.442695
    %v5822 = vpow.pop %v5821
    %v5823 = vadd.f32 %v5822, 1.0
    %v5824 = vrcp.pop %v5823
    %v5825 = vmul.f32 1.0, %v5824
    %v5826 = vtanh.pop %v5812
    %v5827 = vxor.u32 %v5813, 2147483648
    %v5828 = vmul.f32 %v5827, 1.442695
    %v5829 = vpow.pop %v5828
    %v5830 = vadd.f32 %v5829, 1.0
    %v5831 = vrcp.pop %v5830
    %v5832 = vmul.f32 1.0, %v5831
    %v5833 = vmul.f32 %v5825, %v5483
    %v5834 = vmul.f32 %v5819, %v5826
    %v5835 = vadd.f32 %v5833, %v5834
    %v5836 = vtanh.pop %v5835
    %v5837 = vmul.f32 %v5832, %v5836
    %v5838 = vsel %vm2016, %v5837, %v5482
    %v5839 = vsel %vm2016, %v5835, %v5483
    %v5840 = vsel %vm2016, %v5837, 0.0
    %5841 = vst [vmem:[%s2020] sm:$0xff] %v5840
    %v5842 = vld [vmem:[%s2022] sm:$0xff]
    %v5843 = vld [vmem:[%s2022 + $0x8] sm:$0xff]
    %v5844 = vld [vmem:[%s2022 + $0x10] sm:$0xff]
    %v5845 = vld [vmem:[%s2022 + $0x18] sm:$0xff]
    %5846 = vmatprep.subr.mxu0 %v4709
    %5847 = vmatpush1.msra.mxu0 %v4708
    %5848 = vmatprep.subr.mxu0 %v4705
    %5849 = vmatpush1.msra.mxu0 %v4704
    %5850 = vmatprep.subr.mxu0 %v4701
    %5851 = vmatpush1.msra.mxu0 %v4700
    %5852 = vmatprep.subr.mxu0 %v4697
    %5853 = vmatpush1.msra.mxu0 %v4696
    %5854 = vmatprep.subr.mxu0 %v4693
    %5855 = vmatpush1.msra.mxu0 %v4692
    %5856 = vmatprep.subr.mxu0 %v4689
    %5857 = vmatpush1.msra.mxu0 %v4688
    %5858 = vmatprep.subr.mxu0 %v4685
    %5859 = vmatpush1.msra.mxu0 %v4684
    %5860 = vmatprep.subr.mxu0 %v4681
    %5861 = vmatpush1.msra.mxu0 %v4680
    %5862 = vmatprep.subr.mxu0 %v4677
    %5863 = vmatpush1.msra.mxu0 %v4676
    %5864 = vmatprep.subr.mxu0 %v4673
    %5865 = vmatpush1.msra.mxu0 %v4672
    %5866 = vmatprep.subr.mxu0 %v4669
    %5867 = vmatpush1.msra.mxu0 %v4668
    %5868 = vmatprep.subr.mxu0 %v4665
    %5869 = vmatpush1.msra.mxu0 %v4664
    %5870 = vmatprep.subr.mxu0 %v4661
    %5871 = vmatpush1.msra.mxu0 %v4660
    %5872 = vmatprep.subr.mxu0 %v4657
    %5873 = vmatpush1.msra.mxu0 %v4656
    %5874 = vmatprep.subr.mxu0 %v4653
    %5875 = vmatpush1.msra.mxu0 %v4652
    %5876 = vmatprep.subr.mxu0 %v4649
    %5877 = vmatpush1.msra.mxu0 %v4648
    %5878 = vmatprep.subr.mxu0 0.0
    %5879 = vmatpush2.msra.mxu0 0.0
    %5880 = vmatprep.subr.mxu0 0.0
    %5881 = vmatpush2.msra.mxu0 0.0
    %5882 = vmatprep.subr.mxu0 0.0
    %5883 = vmatpush2.msra.mxu0 0.0
    %5884 = vmatprep.subr.mxu0 0.0
    %5885 = vmatpush2.msra.mxu0 0.0
    %5886 = vmatprep.subr.mxu0 0.0
    %5887 = vmatpush2.msra.mxu0 0.0
    %5888 = vmatprep.subr.mxu0 0.0
    %5889 = vmatpush2.msra.mxu0 0.0
    %5890 = vmatprep.subr.mxu0 0.0
    %5891 = vmatpush2.msra.mxu0 0.0
    %5892 = vmatprep.subr.mxu0 0.0
    %5893 = vmatpush2.msra.mxu0 0.0
    %5894 = vmatprep.subr.mxu0 0.0
    %5895 = vmatpush2.msra.mxu0 0.0
    %5896 = vmatprep.subr.mxu0 0.0
    %5897 = vmatpush2.msra.mxu0 0.0
    %5898 = vmatprep.subr.mxu0 0.0
    %5899 = vmatpush2.msra.mxu0 0.0
    %5900 = vmatprep.subr.mxu0 0.0
    %5901 = vmatpush2.msra.mxu0 0.0
    %5902 = vmatprep.subr.mxu0 0.0
    %5903 = vmatpush2.msra.mxu0 0.0
    %5904 = vmatprep.subr.mxu0 0.0
    %5905 = vmatpush2.msra.mxu0 0.0
    %5906 = vmatprep.subr.mxu0 0.0
    %5907 = vmatpush2.msra.mxu0 0.0
    %5908 = vmatprep.subr.mxu0 0.0
    %5909 = vmatpush2.msra.mxu0 0.0
    %5910 = vmatprep.mubr.f32.mxu0 0.0
    %5911 = vmatmul.mubr.f32.gmra.mxu0 %v5660
    %v5912 = vpop.f32.mrf.mxu0
    %v5913 = vadd.f32 0.0, %v5912
    %v5914 = vpop.f32.mrf.mxu0
    %v5915 = vadd.f32 0.0, %v5914
    %5916 = vdwg.mxu0
    %5917 = vmatprep.subr.mxu0 %v4711
    %5918 = vmatpush1.msra.mxu0 %v4710
    %5919 = vmatprep.subr.mxu0 %v4707
    %5920 = vmatpush1.msra.mxu0 %v4706
    %5921 = vmatprep.subr.mxu0 %v4703
    %5922 = vmatpush1.msra.mxu0 %v4702
    %5923 = vmatprep.subr.mxu0 %v4699
    %5924 = vmatpush1.msra.mxu0 %v4698
    %5925 = vmatprep.subr.mxu0 %v4695
    %5926 = vmatpush1.msra.mxu0 %v4694
    %5927 = vmatprep.subr.mxu0 %v4691
    %5928 = vmatpush1.msra.mxu0 %v4690
    %5929 = vmatprep.subr.mxu0 %v4687
    %5930 = vmatpush1.msra.mxu0 %v4686
    %5931 = vmatprep.subr.mxu0 %v4683
    %5932 = vmatpush1.msra.mxu0 %v4682
    %5933 = vmatprep.subr.mxu0 %v4679
    %5934 = vmatpush1.msra.mxu0 %v4678
    %5935 = vmatprep.subr.mxu0 %v4675
    %5936 = vmatpush1.msra.mxu0 %v4674
    %5937 = vmatprep.subr.mxu0 %v4671
    %5938 = vmatpush1.msra.mxu0 %v4670
    %5939 = vmatprep.subr.mxu0 %v4667
    %5940 = vmatpush1.msra.mxu0 %v4666
    %5941 = vmatprep.subr.mxu0 %v4663
    %5942 = vmatpush1.msra.mxu0 %v4662
    %5943 = vmatprep.subr.mxu0 %v4659
    %5944 = vmatpush1.msra.mxu0 %v4658
    %5945 = vmatprep.subr.mxu0 %v4655
    %5946 = vmatpush1.msra.mxu0 %v4654
    %5947 = vmatprep.subr.mxu0 %v4651
    %5948 = vmatpush1.msra.mxu0 %v4650
    %5949 = vmatprep.subr.mxu0 0.0
    %5950 = vmatpush2.msra.mxu0 0.0
    %5951 = vmatprep.subr.mxu0 0.0
    %5952 = vmatpush2.msra.mxu0 0.0
    %5953 = vmatprep.subr.mxu0 0.0
    %5954 = vmatpush2.msra.mxu0 0.0
    %5955 = vmatprep.subr.mxu0 0.0
    %5956 = vmatpush2.msra.mxu0 0.0
    %5957 = vmatprep.subr.mxu0 0.0
    %5958 = vmatpush2.msra.mxu0 0.0
    %5959 = vmatprep.subr.mxu0 0.0
    %5960 = vmatpush2.msra.mxu0 0.0
    %5961 = vmatprep.subr.mxu0 0.0
    %5962 = vmatpush2.msra.mxu0 0.0
    %5963 = vmatprep.subr.mxu0 0.0
    %5964 = vmatpush2.msra.mxu0 0.0
    %5965 = vmatprep.subr.mxu0 0.0
    %5966 = vmatpush2.msra.mxu0 0.0
    %5967 = vmatprep.subr.mxu0 0.0
    %5968 = vmatpush2.msra.mxu0 0.0
    %5969 = vmatprep.subr.mxu0 0.0
    %5970 = vmatpush2.msra.mxu0 0.0
    %5971 = vmatprep.subr.mxu0 0.0
    %5972 = vmatpush2.msra.mxu0 0.0
    %5973 = vmatprep.subr.mxu0 0.0
    %5974 = vmatpush2.msra.mxu0 0.0
    %5975 = vmatprep.subr.mxu0 0.0
    %5976 = vmatpush2.msra.mxu0 0.0
    %5977 = vmatprep.subr.mxu0 0.0
    %5978 = vmatpush2.msra.mxu0 0.0
    %5979 = vmatprep.subr.mxu0 0.0
    %5980 = vmatpush2.msra.mxu0 0.0
    %5981 = vmatprep.mubr.f32.mxu0 0.0
    %5982 = vmatmul.mubr.f32.gmra.mxu0 %v5660
    %v5983 = vpop.f32.mrf.mxu0
    %v5984 = vadd.f32 0.0, %v5983
    %v5985 = vpop.f32.mrf.mxu0
    %v5986 = vadd.f32 0.0, %v5985
    %5987 = vdwg.mxu0
    %v5988 = vadd.f32 %v5842, %v5913
    %v5989 = vadd.f32 %v5843, %v5915
    %v5990 = vadd.f32 %v5844, %v5984
    %v5991 = vadd.f32 %v5845, %v5986
    %v5992 = vxor.u32 %v5988, 2147483648
    %v5993 = vmul.f32 %v5992, 1.442695
    %v5994 = vpow.pop %v5993
    %v5995 = vadd.f32 %v5994, 1.0
    %v5996 = vrcp.pop %v5995
    %v5997 = vmul.f32 1.0, %v5996
    %v5998 = vxor.u32 %v5989, 2147483648
    %v5999 = vmul.f32 %v5998, 1.442695
    %v6000 = vpow.pop %v5999
    %v6001 = vadd.f32 %v6000, 1.0
    %v6002 = vrcp.pop %v6001
    %v6003 = vmul.f32 1.0, %v6002
    %v6004 = vtanh.pop %v5990
    %v6005 = vxor.u32 %v5991, 2147483648
    %v6006 = vmul.f32 %v6005, 1.442695
    %v6007 = vpow.pop %v6006
    %v6008 = vadd.f32 %v6007, 1.0
    %v6009 = vrcp.pop %v6008
    %v6010 = vmul.f32 1.0, %v6009
    %v6011 = vmul.f32 %v6003, %v5661
    %v6012 = vmul.f32 %v5997, %v6004
    %v6013 = vadd.f32 %v6011, %v6012
    %v6014 = vtanh.pop %v6013
    %v6015 = vmul.f32 %v6010, %v6014
    %v6016 = vsel %vm2197, %v6015, %v5660
    %v6017 = vsel %vm2197, %v6013, %v5661
    %v6018 = vsel %vm2197, %v6015, 0.0
    %6019 = vst [vmem:[%s2201] sm:$0xff] %v6018
    %v6020 = vld [vmem:[%s2203] sm:$0xff]
    %v6021 = vld [vmem:[%s2203 + $0x8] sm:$0xff]
    %v6022 = vld [vmem:[%s2203 + $0x10] sm:$0xff]
    %v6023 = vld [vmem:[%s2203 + $0x18] sm:$0xff]
    %6024 = vmatprep.subr.mxu0 %v4773
    %6025 = vmatpush1.msra.mxu0 %v4772
    %6026 = vmatprep.subr.mxu0 %v4769
    %6027 = vmatpush1.msra.mxu0 %v4768
    %6028 = vmatprep.subr.mxu0 %v4765
    %6029 = vmatpush1.msra.mxu0 %v4764
    %6030 = vmatprep.subr.mxu0 %v4761
    %6031 = vmatpush1.msra.mxu0 %v4760
    %6032 = vmatprep.subr.mxu0 %v4757
    %6033 = vmatpush1.msra.mxu0 %v4756
    %6034 = vmatprep.subr.mxu0 %v4753
    %6035 = vmatpush1.msra.mxu0 %v4752
    %6036 = vmatprep.subr.mxu0 %v4749
    %6037 = vmatpush1.msra.mxu0 %v4748
    %6038 = vmatprep.subr.mxu0 %v4745
    %6039 = vmatpush1.msra.mxu0 %v4744
    %6040 = vmatprep.subr.mxu0 %v4741
    %6041 = vmatpush1.msra.mxu0 %v4740
    %6042 = vmatprep.subr.mxu0 %v4737
    %6043 = vmatpush1.msra.mxu0 %v4736
    %6044 = vmatprep.subr.mxu0 %v4733
    %6045 = vmatpush1.msra.mxu0 %v4732
    %6046 = vmatprep.subr.mxu0 %v4729
    %6047 = vmatpush1.msra.mxu0 %v4728
    %6048 = vmatprep.subr.mxu0 %v4725
    %6049 = vmatpush1.msra.mxu0 %v4724
    %6050 = vmatprep.subr.mxu0 %v4721
    %6051 = vmatpush1.msra.mxu0 %v4720
    %6052 = vmatprep.subr.mxu0 %v4717
    %6053 = vmatpush1.msra.mxu0 %v4716
    %6054 = vmatprep.subr.mxu0 %v4713
    %6055 = vmatpush1.msra.mxu0 %v4712
    %6056 = vmatprep.subr.mxu0 0.0
    %6057 = vmatpush2.msra.mxu0 0.0
    %6058 = vmatprep.subr.mxu0 0.0
    %6059 = vmatpush2.msra.mxu0 0.0
    %6060 = vmatprep.subr.mxu0 0.0
    %6061 = vmatpush2.msra.mxu0 0.0
    %6062 = vmatprep.subr.mxu0 0.0
    %6063 = vmatpush2.msra.mxu0 0.0
    %6064 = vmatprep.subr.mxu0 0.0
    %6065 = vmatpush2.msra.mxu0 0.0
    %6066 = vmatprep.subr.mxu0 0.0
    %6067 = vmatpush2.msra.mxu0 0.0
    %6068 = vmatprep.subr.mxu0 0.0
    %6069 = vmatpush2.msra.mxu0 0.0
    %6070 = vmatprep.subr.mxu0 0.0
    %6071 = vmatpush2.msra.mxu0 0.0
    %6072 = vmatprep.subr.mxu0 0.0
    %6073 = vmatpush2.msra.mxu0 0.0
    %6074 = vmatprep.subr.mxu0 0.0
    %6075 = vmatpush2.msra.mxu0 0.0
    %6076 = vmatprep.subr.mxu0 0.0
    %6077 = vmatpush2.msra.mxu0 0.0
    %6078 = vmatprep.subr.mxu0 0.0
    %6079 = vmatpush2.msra.mxu0 0.0
    %6080 = vmatprep.subr.mxu0 0.0
    %6081 = vmatpush2.msra.mxu0 0.0
    %6082 = vmatprep.subr.mxu0 0.0
    %6083 = vmatpush2.msra.mxu0 0.0
    %6084 = vmatprep.subr.mxu0 0.0
    %6085 = vmatpush2.msra.mxu0 0.0
    %6086 = vmatprep.subr.mxu0 0.0
    %6087 = vmatpush2.msra.mxu0 0.0
    %6088 = vmatprep.mubr.f32.mxu0 0.0
    %6089 = vmatmul.mubr.f32.gmra.mxu0 %v5838
    %v6090 = vpop.f32.mrf.mxu0
    %v6091 = vadd.f32 0.0, %v6090
    %v6092 = vpop.f32.mrf.mxu0
    %v6093 = vadd.f32 0.0, %v6092
    %6094 = vdwg.mxu0
    %6095 = vmatprep.subr.mxu0 %v4775
    %6096 = vmatpush1.msra.mxu0 %v4774
    %6097 = vmatprep.subr.mxu0 %v4771
    %6098 = vmatpush1.msra.mxu0 %v4770
    %6099 = vmatprep.subr.mxu0 %v4767
    %6100 = vmatpush1.msra.mxu0 %v4766
    %6101 = vmatprep.subr.mxu0 %v4763
    %6102 = vmatpush1.msra.mxu0 %v4762
    %6103 = vmatprep.subr.mxu0 %v4759
    %6104 = vmatpush1.msra.mxu0 %v4758
    %6105 = vmatprep.subr.mxu0 %v4755
    %6106 = vmatpush1.msra.mxu0 %v4754
    %6107 = vmatprep.subr.mxu0 %v4751
    %6108 = vmatpush1.msra.mxu0 %v4750
    %6109 = vmatprep.subr.mxu0 %v4747
    %6110 = vmatpush1.msra.mxu0 %v4746
    %6111 = vmatprep.subr.mxu0 %v4743
    %6112 = vmatpush1.msra.mxu0 %v4742
    %6113 = vmatprep.subr.mxu0 %v4739
    %6114 = vmatpush1.msra.mxu0 %v4738
    %6115 = vmatprep.subr.mxu0 %v4735
    %6116 = vmatpush1.msra.mxu0 %v4734
    %6117 = vmatprep.subr.mxu0 %v4731
    %6118 = vmatpush1.msra.mxu0 %v4730
    %6119 = vmatprep.subr.mxu0 %v4727
    %6120 = vmatpush1.msra.mxu0 %v4726
    %6121 = vmatprep.subr.mxu0 %v4723
    %6122 = vmatpush1.msra.mxu0 %v4722
    %6123 = vmatprep.subr.mxu0 %v4719
    %6124 = vmatpush1.msra.mxu0 %v4718
    %6125 = vmatprep.subr.mxu0 %v4715
    %6126 = vmatpush1.msra.mxu0 %v4714
    %6127 = vmatprep.subr.mxu0 0.0
    %6128 = vmatpush2.msra.mxu0 0.0
    %6129 = vmatprep.subr.mxu0 0.0
    %6130 = vmatpush2.msra.mxu0 0.0
    %6131 = vmatprep.subr.mxu0 0.0
    %6132 = vmatpush2.msra.mxu0 0.0
    %6133 = vmatprep.subr.mxu0 0.0
    %6134 = vmatpush2.msra.mxu0 0.0
    %6135 = vmatprep.subr.mxu0 0.0
    %6136 = vmatpush2.msra.mxu0 0.0
    %6137 = vmatprep.subr.mxu0 0.0
    %6138 = vmatpush2.msra.mxu0 0.0
    %6139 = vmatprep.subr.mxu0 0.0
    %6140 = vmatpush2.msra.mxu0 0.0
    %6141 = vmatprep.subr.mxu0 0.0
    %6142 = vmatpush2.msra.mxu0 0.0
    %6143 = vmatprep.subr.mxu0 0.0
    %6144 = vmatpush2.msra.mxu0 0.0
    %6145 = vmatprep.subr.mxu0 0.0
    %6146 = vmatpush2.msra.mxu0 0.0
    %6147 = vmatprep.subr.mxu0 0.0
    %6148 = vmatpush2.msra.mxu0 0.0
    %6149 = vmatprep.subr.mxu0 0.0
    %6150 = vmatpush2.msra.mxu0 0.0
    %6151 = vmatprep.subr.mxu0 0.0
    %6152 = vmatpush2.msra.mxu0 0.0
    %6153 = vmatprep.subr.mxu0 0.0
    %6154 = vmatpush2.msra.mxu0 0.0
    %6155 = vmatprep.subr.mxu0 0.0
    %6156 = vmatpush2.msra.mxu0 0.0
    %6157 = vmatprep.subr.mxu0 0.0
    %6158 = vmatpush2.msra.mxu0 0.0
    %6159 = vmatprep.mubr.f32.mxu0 0.0
    %6160 = vmatmul.mubr.f32.gmra.mxu0 %v5838
    %v6161 = vpop.f32.mrf.mxu0
    %v6162 = vadd.f32 0.0, %v6161
    %v6163 = vpop.f32.mrf.mxu0
    %v6164 = vadd.f32 0.0, %v6163
    %6165 = vdwg.mxu0
    %v6166 = vadd.f32 %v6020, %v6091
    %v6167 = vadd.f32 %v6021, %v6093
    %v6168 = vadd.f32 %v6022, %v6162
    %v6169 = vadd.f32 %v6023, %v6164
    %v6170 = vxor.u32 %v6166, 2147483648
    %v6171 = vmul.f32 %v6170, 1.442695
    %v6172 = vpow.pop %v6171
    %v6173 = vadd.f32 %v6172, 1.0
    %v6174 = vrcp.pop %v6173
    %v6175 = vmul.f32 1.0, %v6174
    %v6176 = vxor.u32 %v6167, 2147483648
    %v6177 = vmul.f32 %v6176, 1.442695
    %v6178 = vpow.pop %v6177
    %v6179 = vadd.f32 %v6178, 1.0
    %v6180 = vrcp.pop %v6179
    %v6181 = vmul.f32 1.0, %v6180
    %v6182 = vtanh.pop %v6168
    %v6183 = vxor.u32 %v6169, 2147483648
    %v6184 = vmul.f32 %v6183, 1.442695
    %v6185 = vpow.pop %v6184
    %v6186 = vadd.f32 %v6185, 1.0
    %v6187 = vrcp.pop %v6186
    %v6188 = vmul.f32 1.0, %v6187
    %v6189 = vmul.f32 %v6181, %v5839
    %v6190 = vmul.f32 %v6175, %v6182
    %v6191 = vadd.f32 %v6189, %v6190
    %v6192 = vtanh.pop %v6191
    %v6193 = vmul.f32 %v6188, %v6192
    %v6194 = vsel %vm2378, %v6193, %v5838
    %v6195 = vsel %vm2378, %v6191, %v5839
    %v6196 = vsel %vm2378, %v6193, 0.0
    %6197 = vst [vmem:[%s2382] sm:$0xff] %v6196
    %v6198 = vld [vmem:[%s2384] sm:$0xff]
    %v6199 = vld [vmem:[%s2384 + $0x8] sm:$0xff]
    %v6200 = vld [vmem:[%s2384 + $0x10] sm:$0xff]
    %v6201 = vld [vmem:[%s2384 + $0x18] sm:$0xff]
    %6202 = vmatprep.subr.mxu0 %v4709
    %6203 = vmatpush1.msra.mxu0 %v4708
    %6204 = vmatprep.subr.mxu0 %v4705
    %6205 = vmatpush1.msra.mxu0 %v4704
    %6206 = vmatprep.subr.mxu0 %v4701
    %6207 = vmatpush1.msra.mxu0 %v4700
    %6208 = vmatprep.subr.mxu0 %v4697
    %6209 = vmatpush1.msra.mxu0 %v4696
    %6210 = vmatprep.subr.mxu0 %v4693
    %6211 = vmatpush1.msra.mxu0 %v4692
    %6212 = vmatprep.subr.mxu0 %v4689
    %6213 = vmatpush1.msra.mxu0 %v4688
    %6214 = vmatprep.subr.mxu0 %v4685
    %6215 = vmatpush1.msra.mxu0 %v4684
    %6216 = vmatprep.subr.mxu0 %v4681
    %6217 = vmatpush1.msra.mxu0 %v4680
    %6218 = vmatprep.subr.mxu0 %v4677
    %6219 = vmatpush1.msra.mxu0 %v4676
    %6220 = vmatprep.subr.mxu0 %v4673
    %6221 = vmatpush1.msra.mxu0 %v4672
    %6222 = vmatprep.subr.mxu0 %v4669
    %6223 = vmatpush1.msra.mxu0 %v4668
    %6224 = vmatprep.subr.mxu0 %v4665
    %6225 = vmatpush1.msra.mxu0 %v4664
    %6226 = vmatprep.subr.mxu0 %v4661
    %6227 = vmatpush1.msra.mxu0 %v4660
    %6228 = vmatprep.subr.mxu0 %v4657
    %6229 = vmatpush1.msra.mxu0 %v4656
    %6230 = vmatprep.subr.mxu0 %v4653
    %6231 = vmatpush1.msra.mxu0 %v4652
    %6232 = vmatprep.subr.mxu0 %v4649
    %6233 = vmatpush1.msra.mxu0 %v4648
    %6234 = vmatprep.subr.mxu0 0.0
    %6235 = vmatpush2.msra.mxu0 0.0
    %6236 = vmatprep.subr.mxu0 0.0
    %6237 = vmatpush2.msra.mxu0 0.0
    %6238 = vmatprep.subr.mxu0 0.0
    %6239 = vmatpush2.msra.mxu0 0.0
    %6240 = vmatprep.subr.mxu0 0.0
    %6241 = vmatpush2.msra.mxu0 0.0
    %6242 = vmatprep.subr.mxu0 0.0
    %6243 = vmatpush2.msra.mxu0 0.0
    %6244 = vmatprep.subr.mxu0 0.0
    %6245 = vmatpush2.msra.mxu0 0.0
    %6246 = vmatprep.subr.mxu0 0.0
    %6247 = vmatpush2.msra.mxu0 0.0
    %6248 = vmatprep.subr.mxu0 0.0
    %6249 = vmatpush2.msra.mxu0 0.0
    %6250 = vmatprep.subr.mxu0 0.0
    %6251 = vmatpush2.msra.mxu0 0.0
    %6252 = vmatprep.subr.mxu0 0.0
    %6253 = vmatpush2.msra.mxu0 0.0
    %6254 = vmatprep.subr.mxu0 0.0
    %6255 = vmatpush2.msra.mxu0 0.0
    %6256 = vmatprep.subr.mxu0 0.0
    %6257 = vmatpush2.msra.mxu0 0.0
    %6258 = vmatprep.subr.mxu0 0.0
    %6259 = vmatpush2.msra.mxu0 0.0
    %6260 = vmatprep.subr.mxu0 0.0
    %6261 = vmatpush2.msra.mxu0 0.0
    %6262 = vmatprep.subr.mxu0 0.0
    %6263 = vmatpush2.msra.mxu0 0.0
    %6264 = vmatprep.subr.mxu0 0.0
    %6265 = vmatpush2.msra.mxu0 0.0
    %6266 = vmatprep.mubr.f32.mxu0 0.0
    %6267 = vmatmul.mubr.f32.gmra.mxu0 %v6016
    %v6268 = vpop.f32.mrf.mxu0
    %v6269 = vadd.f32 0.0, %v6268
    %v6270 = vpop.f32.mrf.mxu0
    %v6271 = vadd.f32 0.0, %v6270
    %6272 = vdwg.mxu0
    %6273 = vmatprep.subr.mxu0 %v4711
    %6274 = vmatpush1.msra.mxu0 %v4710
    %6275 = vmatprep.subr.mxu0 %v4707
    %6276 = vmatpush1.msra.mxu0 %v4706
    %6277 = vmatprep.subr.mxu0 %v4703
    %6278 = vmatpush1.msra.mxu0 %v4702
    %6279 = vmatprep.subr.mxu0 %v4699
    %6280 = vmatpush1.msra.mxu0 %v4698
    %6281 = vmatprep.subr.mxu0 %v4695
    %6282 = vmatpush1.msra.mxu0 %v4694
    %6283 = vmatprep.subr.mxu0 %v4691
    %6284 = vmatpush1.msra.mxu0 %v4690
    %6285 = vmatprep.subr.mxu0 %v4687
    %6286 = vmatpush1.msra.mxu0 %v4686
    %6287 = vmatprep.subr.mxu0 %v4683
    %6288 = vmatpush1.msra.mxu0 %v4682
    %6289 = vmatprep.subr.mxu0 %v4679
    %6290 = vmatpush1.msra.mxu0 %v4678
    %6291 = vmatprep.subr.mxu0 %v4675
    %6292 = vmatpush1.msra.mxu0 %v4674
    %6293 = vmatprep.subr.mxu0 %v4671
    %6294 = vmatpush1.msra.mxu0 %v4670
    %6295 = vmatprep.subr.mxu0 %v4667
    %6296 = vmatpush1.msra.mxu0 %v4666
    %6297 = vmatprep.subr.mxu0 %v4663
    %6298 = vmatpush1.msra.mxu0 %v4662
    %6299 = vmatprep.subr.mxu0 %v4659
    %6300 = vmatpush1.msra.mxu0 %v4658
    %6301 = vmatprep.subr.mxu0 %v4655
    %6302 = vmatpush1.msra.mxu0 %v4654
    %6303 = vmatprep.subr.mxu0 %v4651
    %6304 = vmatpush1.msra.mxu0 %v4650
    %6305 = vmatprep.subr.mxu0 0.0
    %6306 = vmatpush2.msra.mxu0 0.0
    %6307 = vmatprep.subr.mxu0 0.0
    %6308 = vmatpush2.msra.mxu0 0.0
    %6309 = vmatprep.subr.mxu0 0.0
    %6310 = vmatpush2.msra.mxu0 0.0
    %6311 = vmatprep.subr.mxu0 0.0
    %6312 = vmatpush2.msra.mxu0 0.0
    %6313 = vmatprep.subr.mxu0 0.0
    %6314 = vmatpush2.msra.mxu0 0.0
    %6315 = vmatprep.subr.mxu0 0.0
    %6316 = vmatpush2.msra.mxu0 0.0
    %6317 = vmatprep.subr.mxu0 0.0
    %6318 = vmatpush2.msra.mxu0 0.0
    %6319 = vmatprep.subr.mxu0 0.0
    %6320 = vmatpush2.msra.mxu0 0.0
    %6321 = vmatprep.subr.mxu0 0.0
    %6322 = vmatpush2.msra.mxu0 0.0
    %6323 = vmatprep.subr.mxu0 0.0
    %6324 = vmatpush2.msra.mxu0 0.0
    %6325 = vmatprep.subr.mxu0 0.0
    %6326 = vmatpush2.msra.mxu0 0.0
    %6327 = vmatprep.subr.mxu0 0.0
    %6328 = vmatpush2.msra.mxu0 0.0
    %6329 = vmatprep.subr.mxu0 0.0
    %6330 = vmatpush2.msra.mxu0 0.0
    %6331 = vmatprep.subr.mxu0 0.0
    %6332 = vmatpush2.msra.mxu0 0.0
    %6333 = vmatprep.subr.mxu0 0.0
    %6334 = vmatpush2.msra.mxu0 0.0
    %6335 = vmatprep.subr.mxu0 0.0
    %6336 = vmatpush2.msra.mxu0 0.0
    %6337 = vmatprep.mubr.f32.mxu0 0.0
    %6338 = vmatmul.mubr.f32.gmra.mxu0 %v6016
    %v6339 = vpop.f32.mrf.mxu0
    %v6340 = vadd.f32 0.0, %v6339
    %v6341 = vpop.f32.mrf.mxu0
    %v6342 = vadd.f32 0.0, %v6341
    %6343 = vdwg.mxu0
    %v6344 = vadd.f32 %v6198, %v6269
    %v6345 = vadd.f32 %v6199, %v6271
    %v6346 = vadd.f32 %v6200, %v6340
    %v6347 = vadd.f32 %v6201, %v6342
    %v6348 = vxor.u32 %v6344, 2147483648
    %v6349 = vmul.f32 %v6348, 1.442695
    %v6350 = vpow.pop %v6349
    %v6351 = vadd.f32 %v6350, 1.0
    %v6352 = vrcp.pop %v6351
    %v6353 = vmul.f32 1.0, %v6352
    %v6354 = vxor.u32 %v6345, 2147483648
    %v6355 = vmul.f32 %v6354, 1.442695
    %v6356 = vpow.pop %v6355
    %v6357 = vadd.f32 %v6356, 1.0
    %v6358 = vrcp.pop %v6357
    %v6359 = vmul.f32 1.0, %v6358
    %v6360 = vtanh.pop %v6346
    %v6361 = vxor.u32 %v6347, 2147483648
    %v6362 = vmul.f32 %v6361, 1.442695
    %v6363 = vpow.pop %v6362
    %v6364 = vadd.f32 %v6363, 1.0
    %v6365 = vrcp.pop %v6364
    %v6366 = vmul.f32 1.0, %v6365
    %v6367 = vmul.f32 %v6359, %v6017
    %v6368 = vmul.f32 %v6353, %v6360
    %v6369 = vadd.f32 %v6367, %v6368
    %v6370 = vtanh.pop %v6369
    %v6371 = vmul.f32 %v6366, %v6370
    %v6372 = vsel %vm2378, %v6371, %v6016
    %v6373 = vsel %vm2378, %v6369, %v6017
    %v6374 = vsel %vm2378, %v6371, 0.0
    %6375 = vst [vmem:[%s2562] sm:$0xff] %v6374
    %v6376 = vld [vmem:[%s2564] sm:$0xff]
    %v6377 = vld [vmem:[%s2564 + $0x8] sm:$0xff]
    %v6378 = vld [vmem:[%s2564 + $0x10] sm:$0xff]
    %v6379 = vld [vmem:[%s2564 + $0x18] sm:$0xff]
    %6380 = vmatprep.subr.mxu0 %v4773
    %6381 = vmatpush1.msra.mxu0 %v4772
    %6382 = vmatprep.subr.mxu0 %v4769
    %6383 = vmatpush1.msra.mxu0 %v4768
    %6384 = vmatprep.subr.mxu0 %v4765
    %6385 = vmatpush1.msra.mxu0 %v4764
    %6386 = vmatprep.subr.mxu0 %v4761
    %6387 = vmatpush1.msra.mxu0 %v4760
    %6388 = vmatprep.subr.mxu0 %v4757
    %6389 = vmatpush1.msra.mxu0 %v4756
    %6390 = vmatprep.subr.mxu0 %v4753
    %6391 = vmatpush1.msra.mxu0 %v4752
    %6392 = vmatprep.subr.mxu0 %v4749
    %6393 = vmatpush1.msra.mxu0 %v4748
    %6394 = vmatprep.subr.mxu0 %v4745
    %6395 = vmatpush1.msra.mxu0 %v4744
    %6396 = vmatprep.subr.mxu0 %v4741
    %6397 = vmatpush1.msra.mxu0 %v4740
    %6398 = vmatprep.subr.mxu0 %v4737
    %6399 = vmatpush1.msra.mxu0 %v4736
    %6400 = vmatprep.subr.mxu0 %v4733
    %6401 = vmatpush1.msra.mxu0 %v4732
    %6402 = vmatprep.subr.mxu0 %v4729
    %6403 = vmatpush1.msra.mxu0 %v4728
    %6404 = vmatprep.subr.mxu0 %v4725
    %6405 = vmatpush1.msra.mxu0 %v4724
    %6406 = vmatprep.subr.mxu0 %v4721
    %6407 = vmatpush1.msra.mxu0 %v4720
    %6408 = vmatprep.subr.mxu0 %v4717
    %6409 = vmatpush1.msra.mxu0 %v4716
    %6410 = vmatprep.subr.mxu0 %v4713
    %6411 = vmatpush1.msra.mxu0 %v4712
    %6412 = vmatprep.subr.mxu0 0.0
    %6413 = vmatpush2.msra.mxu0 0.0
    %6414 = vmatprep.subr.mxu0 0.0
    %6415 = vmatpush2.msra.mxu0 0.0
    %6416 = vmatprep.subr.mxu0 0.0
    %6417 = vmatpush2.msra.mxu0 0.0
    %6418 = vmatprep.subr.mxu0 0.0
    %6419 = vmatpush2.msra.mxu0 0.0
    %6420 = vmatprep.subr.mxu0 0.0
    %6421 = vmatpush2.msra.mxu0 0.0
    %6422 = vmatprep.subr.mxu0 0.0
    %6423 = vmatpush2.msra.mxu0 0.0
    %6424 = vmatprep.subr.mxu0 0.0
    %6425 = vmatpush2.msra.mxu0 0.0
    %6426 = vmatprep.subr.mxu0 0.0
    %6427 = vmatpush2.msra.mxu0 0.0
    %6428 = vmatprep.subr.mxu0 0.0
    %6429 = vmatpush2.msra.mxu0 0.0
    %6430 = vmatprep.subr.mxu0 0.0
    %6431 = vmatpush2.msra.mxu0 0.0
    %6432 = vmatprep.subr.mxu0 0.0
    %6433 = vmatpush2.msra.mxu0 0.0
    %6434 = vmatprep.subr.mxu0 0.0
    %6435 = vmatpush2.msra.mxu0 0.0
    %6436 = vmatprep.subr.mxu0 0.0
    %6437 = vmatpush2.msra.mxu0 0.0
    %6438 = vmatprep.subr.mxu0 0.0
    %6439 = vmatpush2.msra.mxu0 0.0
    %6440 = vmatprep.subr.mxu0 0.0
    %6441 = vmatpush2.msra.mxu0 0.0
    %6442 = vmatprep.subr.mxu0 0.0
    %6443 = vmatpush2.msra.mxu0 0.0
    %6444 = vmatprep.mubr.f32.mxu0 0.0
    %6445 = vmatmul.mubr.f32.gmra.mxu0 %v6194
    %v6446 = vpop.f32.mrf.mxu0
    %v6447 = vadd.f32 0.0, %v6446
    %v6448 = vpop.f32.mrf.mxu0
    %v6449 = vadd.f32 0.0, %v6448
    %6450 = vdwg.mxu0
    %6451 = vmatprep.subr.mxu0 %v4775
    %6452 = vmatpush1.msra.mxu0 %v4774
    %6453 = vmatprep.subr.mxu0 %v4771
    %6454 = vmatpush1.msra.mxu0 %v4770
    %6455 = vmatprep.subr.mxu0 %v4767
    %6456 = vmatpush1.msra.mxu0 %v4766
    %6457 = vmatprep.subr.mxu0 %v4763
    %6458 = vmatpush1.msra.mxu0 %v4762
    %6459 = vmatprep.subr.mxu0 %v4759
    %6460 = vmatpush1.msra.mxu0 %v4758
    %6461 = vmatprep.subr.mxu0 %v4755
    %6462 = vmatpush1.msra.mxu0 %v4754
    %6463 = vmatprep.subr.mxu0 %v4751
    %6464 = vmatpush1.msra.mxu0 %v4750
    %6465 = vmatprep.subr.mxu0 %v4747
    %6466 = vmatpush1.msra.mxu0 %v4746
    %6467 = vmatprep.subr.mxu0 %v4743
    %6468 = vmatpush1.msra.mxu0 %v4742
    %6469 = vmatprep.subr.mxu0 %v4739
    %6470 = vmatpush1.msra.mxu0 %v4738
    %6471 = vmatprep.subr.mxu0 %v4735
    %6472 = vmatpush1.msra.mxu0 %v4734
    %6473 = vmatprep.subr.mxu0 %v4731
    %6474 = vmatpush1.msra.mxu0 %v4730
    %6475 = vmatprep.subr.mxu0 %v4727
    %6476 = vmatpush1.msra.mxu0 %v4726
    %6477 = vmatprep.subr.mxu0 %v4723
    %6478 = vmatpush1.msra.mxu0 %v4722
    %6479 = vmatprep.subr.mxu0 %v4719
    %6480 = vmatpush1.msra.mxu0 %v4718
    %6481 = vmatprep.subr.mxu0 %v4715
    %6482 = vmatpush1.msra.mxu0 %v4714
    %6483 = vmatprep.subr.mxu0 0.0
    %6484 = vmatpush2.msra.mxu0 0.0
    %6485 = vmatprep.subr.mxu0 0.0
    %6486 = vmatpush2.msra.mxu0 0.0
    %6487 = vmatprep.subr.mxu0 0.0
    %6488 = vmatpush2.msra.mxu0 0.0
    %6489 = vmatprep.subr.mxu0 0.0
    %6490 = vmatpush2.msra.mxu0 0.0
    %6491 = vmatprep.subr.mxu0 0.0
    %6492 = vmatpush2.msra.mxu0 0.0
    %6493 = vmatprep.subr.mxu0 0.0
    %6494 = vmatpush2.msra.mxu0 0.0
    %6495 = vmatprep.subr.mxu0 0.0
    %6496 = vmatpush2.msra.mxu0 0.0
    %6497 = vmatprep.subr.mxu0 0.0
    %6498 = vmatpush2.msra.mxu0 0.0
    %6499 = vmatprep.subr.mxu0 0.0
    %6500 = vmatpush2.msra.mxu0 0.0
    %6501 = vmatprep.subr.mxu0 0.0
    %6502 = vmatpush2.msra.mxu0 0.0
    %6503 = vmatprep.subr.mxu0 0.0
    %6504 = vmatpush2.msra.mxu0 0.0
    %6505 = vmatprep.subr.mxu0 0.0
    %6506 = vmatpush2.msra.mxu0 0.0
    %6507 = vmatprep.subr.mxu0 0.0
    %6508 = vmatpush2.msra.mxu0 0.0
    %6509 = vmatprep.subr.mxu0 0.0
    %6510 = vmatpush2.msra.mxu0 0.0
    %6511 = vmatprep.subr.mxu0 0.0
    %6512 = vmatpush2.msra.mxu0 0.0
    %6513 = vmatprep.subr.mxu0 0.0
    %6514 = vmatpush2.msra.mxu0 0.0
    %6515 = vmatprep.mubr.f32.mxu0 0.0
    %6516 = vmatmul.mubr.f32.gmra.mxu0 %v6194
    %v6517 = vpop.f32.mrf.mxu0
    %v6518 = vadd.f32 0.0, %v6517
    %v6519 = vpop.f32.mrf.mxu0
    %v6520 = vadd.f32 0.0, %v6519
    %6521 = vdwg.mxu0
    %v6522 = vadd.f32 %v6376, %v6447
    %v6523 = vadd.f32 %v6377, %v6449
    %v6524 = vadd.f32 %v6378, %v6518
    %v6525 = vadd.f32 %v6379, %v6520
    %v6526 = vxor.u32 %v6522, 2147483648
    %v6527 = vmul.f32 %v6526, 1.442695
    %v6528 = vpow.pop %v6527
    %v6529 = vadd.f32 %v6528, 1.0
    %v6530 = vrcp.pop %v6529
    %v6531 = vmul.f32 1.0, %v6530
    %v6532 = vxor.u32 %v6523, 2147483648
    %v6533 = vmul.f32 %v6532, 1.442695
    %v6534 = vpow.pop %v6533
    %v6535 = vadd.f32 %v6534, 1.0
    %v6536 = vrcp.pop %v6535
    %v6537 = vmul.f32 1.0, %v6536
    %v6538 = vtanh.pop %v6524
    %v6539 = vxor.u32 %v6525, 2147483648
    %v6540 = vmul.f32 %v6539, 1.442695
    %v6541 = vpow.pop %v6540
    %v6542 = vadd.f32 %v6541, 1.0
    %v6543 = vrcp.pop %v6542
    %v6544 = vmul.f32 1.0, %v6543
    %v6545 = vmul.f32 %v6537, %v6195
    %v6546 = vmul.f32 %v6531, %v6538
    %v6547 = vadd.f32 %v6545, %v6546
    %v6548 = vtanh.pop %v6547
    %v6549 = vmul.f32 %v6544, %v6548
    %v6550 = vsel %vm2197, %v6549, %v6194
    %v6551 = vsel %vm2197, %v6547, %v6195
    %v6552 = vsel %vm2197, %v6549, 0.0
    %6553 = vst [vmem:[%s2742] sm:$0xff] %v6552
    %v6554 = vld [vmem:[%s2744] sm:$0xff]
    %v6555 = vld [vmem:[%s2744 + $0x8] sm:$0xff]
    %v6556 = vld [vmem:[%s2744 + $0x10] sm:$0xff]
    %v6557 = vld [vmem:[%s2744 + $0x18] sm:$0xff]
    %6558 = vmatprep.subr.mxu0 %v4709
    %6559 = vmatpush1.msra.mxu0 %v4708
    %6560 = vmatprep.subr.mxu0 %v4705
    %6561 = vmatpush1.msra.mxu0 %v4704
    %6562 = vmatprep.subr.mxu0 %v4701
    %6563 = vmatpush1.msra.mxu0 %v4700
    %6564 = vmatprep.subr.mxu0 %v4697
    %6565 = vmatpush1.msra.mxu0 %v4696
    %6566 = vmatprep.subr.mxu0 %v4693
    %6567 = vmatpush1.msra.mxu0 %v4692
    %6568 = vmatprep.subr.mxu0 %v4689
    %6569 = vmatpush1.msra.mxu0 %v4688
    %6570 = vmatprep.subr.mxu0 %v4685
    %6571 = vmatpush1.msra.mxu0 %v4684
    %6572 = vmatprep.subr.mxu0 %v4681
    %6573 = vmatpush1.msra.mxu0 %v4680
    %6574 = vmatprep.subr.mxu0 %v4677
    %6575 = vmatpush1.msra.mxu0 %v4676
    %6576 = vmatprep.subr.mxu0 %v4673
    %6577 = vmatpush1.msra.mxu0 %v4672
    %6578 = vmatprep.subr.mxu0 %v4669
    %6579 = vmatpush1.msra.mxu0 %v4668
    %6580 = vmatprep.subr.mxu0 %v4665
    %6581 = vmatpush1.msra.mxu0 %v4664
    %6582 = vmatprep.subr.mxu0 %v4661
    %6583 = vmatpush1.msra.mxu0 %v4660
    %6584 = vmatprep.subr.mxu0 %v4657
    %6585 = vmatpush1.msra.mxu0 %v4656
    %6586 = vmatprep.subr.mxu0 %v4653
    %6587 = vmatpush1.msra.mxu0 %v4652
    %6588 = vmatprep.subr.mxu0 %v4649
    %6589 = vmatpush1.msra.mxu0 %v4648
    %6590 = vmatprep.subr.mxu0 0.0
    %6591 = vmatpush2.msra.mxu0 0.0
    %6592 = vmatprep.subr.mxu0 0.0
    %6593 = vmatpush2.msra.mxu0 0.0
    %6594 = vmatprep.subr.mxu0 0.0
    %6595 = vmatpush2.msra.mxu0 0.0
    %6596 = vmatprep.subr.mxu0 0.0
    %6597 = vmatpush2.msra.mxu0 0.0
    %6598 = vmatprep.subr.mxu0 0.0
    %6599 = vmatpush2.msra.mxu0 0.0
    %6600 = vmatprep.subr.mxu0 0.0
    %6601 = vmatpush2.msra.mxu0 0.0
    %6602 = vmatprep.subr.mxu0 0.0
    %6603 = vmatpush2.msra.mxu0 0.0
    %6604 = vmatprep.subr.mxu0 0.0
    %6605 = vmatpush2.msra.mxu0 0.0
    %6606 = vmatprep.subr.mxu0 0.0
    %6607 = vmatpush2.msra.mxu0 0.0
    %6608 = vmatprep.subr.mxu0 0.0
    %6609 = vmatpush2.msra.mxu0 0.0
    %6610 = vmatprep.subr.mxu0 0.0
    %6611 = vmatpush2.msra.mxu0 0.0
    %6612 = vmatprep.subr.mxu0 0.0
    %6613 = vmatpush2.msra.mxu0 0.0
    %6614 = vmatprep.subr.mxu0 0.0
    %6615 = vmatpush2.msra.mxu0 0.0
    %6616 = vmatprep.subr.mxu0 0.0
    %6617 = vmatpush2.msra.mxu0 0.0
    %6618 = vmatprep.subr.mxu0 0.0
    %6619 = vmatpush2.msra.mxu0 0.0
    %6620 = vmatprep.subr.mxu0 0.0
    %6621 = vmatpush2.msra.mxu0 0.0
    %6622 = vmatprep.mubr.f32.mxu0 0.0
    %6623 = vmatmul.mubr.f32.gmra.mxu0 %v6372
    %v6624 = vpop.f32.mrf.mxu0
    %v6625 = vadd.f32 0.0, %v6624
    %v6626 = vpop.f32.mrf.mxu0
    %v6627 = vadd.f32 0.0, %v6626
    %6628 = vdwg.mxu0
    %6629 = vmatprep.subr.mxu0 %v4711
    %6630 = vmatpush1.msra.mxu0 %v4710
    %6631 = vmatprep.subr.mxu0 %v4707
    %6632 = vmatpush1.msra.mxu0 %v4706
    %6633 = vmatprep.subr.mxu0 %v4703
    %6634 = vmatpush1.msra.mxu0 %v4702
    %6635 = vmatprep.subr.mxu0 %v4699
    %6636 = vmatpush1.msra.mxu0 %v4698
    %6637 = vmatprep.subr.mxu0 %v4695
    %6638 = vmatpush1.msra.mxu0 %v4694
    %6639 = vmatprep.subr.mxu0 %v4691
    %6640 = vmatpush1.msra.mxu0 %v4690
    %6641 = vmatprep.subr.mxu0 %v4687
    %6642 = vmatpush1.msra.mxu0 %v4686
    %6643 = vmatprep.subr.mxu0 %v4683
    %6644 = vmatpush1.msra.mxu0 %v4682
    %6645 = vmatprep.subr.mxu0 %v4679
    %6646 = vmatpush1.msra.mxu0 %v4678
    %6647 = vmatprep.subr.mxu0 %v4675
    %6648 = vmatpush1.msra.mxu0 %v4674
    %6649 = vmatprep.subr.mxu0 %v4671
    %6650 = vmatpush1.msra.mxu0 %v4670
    %6651 = vmatprep.subr.mxu0 %v4667
    %6652 = vmatpush1.msra.mxu0 %v4666
    %6653 = vmatprep.subr.mxu0 %v4663
    %6654 = vmatpush1.msra.mxu0 %v4662
    %6655 = vmatprep.subr.mxu0 %v4659
    %6656 = vmatpush1.msra.mxu0 %v4658
    %6657 = vmatprep.subr.mxu0 %v4655
    %6658 = vmatpush1.msra.mxu0 %v4654
    %6659 = vmatprep.subr.mxu0 %v4651
    %6660 = vmatpush1.msra.mxu0 %v4650
    %6661 = vmatprep.subr.mxu0 0.0
    %6662 = vmatpush2.msra.mxu0 0.0
    %6663 = vmatprep.subr.mxu0 0.0
    %6664 = vmatpush2.msra.mxu0 0.0
    %6665 = vmatprep.subr.mxu0 0.0
    %6666 = vmatpush2.msra.mxu0 0.0
    %6667 = vmatprep.subr.mxu0 0.0
    %6668 = vmatpush2.msra.mxu0 0.0
    %6669 = vmatprep.subr.mxu0 0.0
    %6670 = vmatpush2.msra.mxu0 0.0
    %6671 = vmatprep.subr.mxu0 0.0
    %6672 = vmatpush2.msra.mxu0 0.0
    %6673 = vmatprep.subr.mxu0 0.0
    %6674 = vmatpush2.msra.mxu0 0.0
    %6675 = vmatprep.subr.mxu0 0.0
    %6676 = vmatpush2.msra.mxu0 0.0
    %6677 = vmatprep.subr.mxu0 0.0
    %6678 = vmatpush2.msra.mxu0 0.0
    %6679 = vmatprep.subr.mxu0 0.0
    %6680 = vmatpush2.msra.mxu0 0.0
    %6681 = vmatprep.subr.mxu0 0.0
    %6682 = vmatpush2.msra.mxu0 0.0
    %6683 = vmatprep.subr.mxu0 0.0
    %6684 = vmatpush2.msra.mxu0 0.0
    %6685 = vmatprep.subr.mxu0 0.0
    %6686 = vmatpush2.msra.mxu0 0.0
    %6687 = vmatprep.subr.mxu0 0.0
    %6688 = vmatpush2.msra.mxu0 0.0
    %6689 = vmatprep.subr.mxu0 0.0
    %6690 = vmatpush2.msra.mxu0 0.0
    %6691 = vmatprep.subr.mxu0 0.0
    %6692 = vmatpush2.msra.mxu0 0.0
    %6693 = vmatprep.mubr.f32.mxu0 0.0
    %6694 = vmatmul.mubr.f32.gmra.mxu0 %v6372
    %v6695 = vpop.f32.mrf.mxu0
    %v6696 = vadd.f32 0.0, %v6695
    %v6697 = vpop.f32.mrf.mxu0
    %v6698 = vadd.f32 0.0, %v6697
    %6699 = vdwg.mxu0
    %v6700 = vadd.f32 %v6554, %v6625
    %v6701 = vadd.f32 %v6555, %v6627
    %v6702 = vadd.f32 %v6556, %v6696
    %v6703 = vadd.f32 %v6557, %v6698
    %v6704 = vxor.u32 %v6700, 2147483648
    %v6705 = vmul.f32 %v6704, 1.442695
    %v6706 = vpow.pop %v6705
    %v6707 = vadd.f32 %v6706, 1.0
    %v6708 = vrcp.pop %v6707
    %v6709 = vmul.f32 1.0, %v6708
    %v6710 = vxor.u32 %v6701, 2147483648
    %v6711 = vmul.f32 %v6710, 1.442695
    %v6712 = vpow.pop %v6711
    %v6713 = vadd.f32 %v6712, 1.0
    %v6714 = vrcp.pop %v6713
    %v6715 = vmul.f32 1.0, %v6714
    %v6716 = vtanh.pop %v6702
    %v6717 = vxor.u32 %v6703, 2147483648
    %v6718 = vmul.f32 %v6717, 1.442695
    %v6719 = vpow.pop %v6718
    %v6720 = vadd.f32 %v6719, 1.0
    %v6721 = vrcp.pop %v6720
    %v6722 = vmul.f32 1.0, %v6721
    %v6723 = vmul.f32 %v6715, %v6373
    %v6724 = vmul.f32 %v6709, %v6716
    %v6725 = vadd.f32 %v6723, %v6724
    %v6726 = vtanh.pop %v6725
    %v6727 = vmul.f32 %v6722, %v6726
    %v6728 = vsel %vm2016, %v6727, %v6372
    %v6729 = vsel %vm2016, %v6725, %v6373
    %v6730 = vsel %vm2016, %v6727, 0.0
    %6731 = vst [vmem:[%s2922] sm:$0xff] %v6730
    %v6732 = vld [vmem:[%s2924] sm:$0xff]
    %v6733 = vld [vmem:[%s2924 + $0x8] sm:$0xff]
    %v6734 = vld [vmem:[%s2924 + $0x10] sm:$0xff]
    %v6735 = vld [vmem:[%s2924 + $0x18] sm:$0xff]
    %6736 = vmatprep.subr.mxu0 %v4773
    %6737 = vmatpush1.msra.mxu0 %v4772
    %6738 = vmatprep.subr.mxu0 %v4769
    %6739 = vmatpush1.msra.mxu0 %v4768
    %6740 = vmatprep.subr.mxu0 %v4765
    %6741 = vmatpush1.msra.mxu0 %v4764
    %6742 = vmatprep.subr.mxu0 %v4761
    %6743 = vmatpush1.msra.mxu0 %v4760
    %6744 = vmatprep.subr.mxu0 %v4757
    %6745 = vmatpush1.msra.mxu0 %v4756
    %6746 = vmatprep.subr.mxu0 %v4753
    %6747 = vmatpush1.msra.mxu0 %v4752
    %6748 = vmatprep.subr.mxu0 %v4749
    %6749 = vmatpush1.msra.mxu0 %v4748
    %6750 = vmatprep.subr.mxu0 %v4745
    %6751 = vmatpush1.msra.mxu0 %v4744
    %6752 = vmatprep.subr.mxu0 %v4741
    %6753 = vmatpush1.msra.mxu0 %v4740
    %6754 = vmatprep.subr.mxu0 %v4737
    %6755 = vmatpush1.msra.mxu0 %v4736
    %6756 = vmatprep.subr.mxu0 %v4733
    %6757 = vmatpush1.msra.mxu0 %v4732
    %6758 = vmatprep.subr.mxu0 %v4729
    %6759 = vmatpush1.msra.mxu0 %v4728
    %6760 = vmatprep.subr.mxu0 %v4725
    %6761 = vmatpush1.msra.mxu0 %v4724
    %6762 = vmatprep.subr.mxu0 %v4721
    %6763 = vmatpush1.msra.mxu0 %v4720
    %6764 = vmatprep.subr.mxu0 %v4717
    %6765 = vmatpush1.msra.mxu0 %v4716
    %6766 = vmatprep.subr.mxu0 %v4713
    %6767 = vmatpush1.msra.mxu0 %v4712
    %6768 = vmatprep.subr.mxu0 0.0
    %6769 = vmatpush2.msra.mxu0 0.0
    %6770 = vmatprep.subr.mxu0 0.0
    %6771 = vmatpush2.msra.mxu0 0.0
    %6772 = vmatprep.subr.mxu0 0.0
    %6773 = vmatpush2.msra.mxu0 0.0
    %6774 = vmatprep.subr.mxu0 0.0
    %6775 = vmatpush2.msra.mxu0 0.0
    %6776 = vmatprep.subr.mxu0 0.0
    %6777 = vmatpush2.msra.mxu0 0.0
    %6778 = vmatprep.subr.mxu0 0.0
    %6779 = vmatpush2.msra.mxu0 0.0
    %6780 = vmatprep.subr.mxu0 0.0
    %6781 = vmatpush2.msra.mxu0 0.0
    %6782 = vmatprep.subr.mxu0 0.0
    %6783 = vmatpush2.msra.mxu0 0.0
    %6784 = vmatprep.subr.mxu0 0.0
    %6785 = vmatpush2.msra.mxu0 0.0
    %6786 = vmatprep.subr.mxu0 0.0
    %6787 = vmatpush2.msra.mxu0 0.0
    %6788 = vmatprep.subr.mxu0 0.0
    %6789 = vmatpush2.msra.mxu0 0.0
    %6790 = vmatprep.subr.mxu0 0.0
    %6791 = vmatpush2.msra.mxu0 0.0
    %6792 = vmatprep.subr.mxu0 0.0
    %6793 = vmatpush2.msra.mxu0 0.0
    %6794 = vmatprep.subr.mxu0 0.0
    %6795 = vmatpush2.msra.mxu0 0.0
    %6796 = vmatprep.subr.mxu0 0.0
    %6797 = vmatpush2.msra.mxu0 0.0
    %6798 = vmatprep.subr.mxu0 0.0
    %6799 = vmatpush2.msra.mxu0 0.0
    %6800 = vmatprep.mubr.f32.mxu0 0.0
    %6801 = vmatmul.mubr.f32.gmra.mxu0 %v6550
    %v6802 = vpop.f32.mrf.mxu0
    %v6803 = vadd.f32 0.0, %v6802
    %v6804 = vpop.f32.mrf.mxu0
    %v6805 = vadd.f32 0.0, %v6804
    %6806 = vdwg.mxu0
    %6807 = vmatprep.subr.mxu0 %v4775
    %6808 = vmatpush1.msra.mxu0 %v4774
    %6809 = vmatprep.subr.mxu0 %v4771
    %6810 = vmatpush1.msra.mxu0 %v4770
    %6811 = vmatprep.subr.mxu0 %v4767
    %6812 = vmatpush1.msra.mxu0 %v4766
    %6813 = vmatprep.subr.mxu0 %v4763
    %6814 = vmatpush1.msra.mxu0 %v4762
    %6815 = vmatprep.subr.mxu0 %v4759
    %6816 = vmatpush1.msra.mxu0 %v4758
    %6817 = vmatprep.subr.mxu0 %v4755
    %6818 = vmatpush1.msra.mxu0 %v4754
    %6819 = vmatprep.subr.mxu0 %v4751
    %6820 = vmatpush1.msra.mxu0 %v4750
    %6821 = vmatprep.subr.mxu0 %v4747
    %6822 = vmatpush1.msra.mxu0 %v4746
    %6823 = vmatprep.subr.mxu0 %v4743
    %6824 = vmatpush1.msra.mxu0 %v4742
    %6825 = vmatprep.subr.mxu0 %v4739
    %6826 = vmatpush1.msra.mxu0 %v4738
    %6827 = vmatprep.subr.mxu0 %v4735
    %6828 = vmatpush1.msra.mxu0 %v4734
    %6829 = vmatprep.subr.mxu0 %v4731
    %6830 = vmatpush1.msra.mxu0 %v4730
    %6831 = vmatprep.subr.mxu0 %v4727
    %6832 = vmatpush1.msra.mxu0 %v4726
    %6833 = vmatprep.subr.mxu0 %v4723
    %6834 = vmatpush1.msra.mxu0 %v4722
    %6835 = vmatprep.subr.mxu0 %v4719
    %6836 = vmatpush1.msra.mxu0 %v4718
    %6837 = vmatprep.subr.mxu0 %v4715
    %6838 = vmatpush1.msra.mxu0 %v4714
    %6839 = vmatprep.subr.mxu0 0.0
    %6840 = vmatpush2.msra.mxu0 0.0
    %6841 = vmatprep.subr.mxu0 0.0
    %6842 = vmatpush2.msra.mxu0 0.0
    %6843 = vmatprep.subr.mxu0 0.0
    %6844 = vmatpush2.msra.mxu0 0.0
    %6845 = vmatprep.subr.mxu0 0.0
    %6846 = vmatpush2.msra.mxu0 0.0
    %6847 = vmatprep.subr.mxu0 0.0
    %6848 = vmatpush2.msra.mxu0 0.0
    %6849 = vmatprep.subr.mxu0 0.0
    %6850 = vmatpush2.msra.mxu0 0.0
    %6851 = vmatprep.subr.mxu0 0.0
    %6852 = vmatpush2.msra.mxu0 0.0
    %6853 = vmatprep.subr.mxu0 0.0
    %6854 = vmatpush2.msra.mxu0 0.0
    %6855 = vmatprep.subr.mxu0 0.0
    %6856 = vmatpush2.msra.mxu0 0.0
    %6857 = vmatprep.subr.mxu0 0.0
    %6858 = vmatpush2.msra.mxu0 0.0
    %6859 = vmatprep.subr.mxu0 0.0
    %6860 = vmatpush2.msra.mxu0 0.0
    %6861 = vmatprep.subr.mxu0 0.0
    %6862 = vmatpush2.msra.mxu0 0.0
    %6863 = vmatprep.subr.mxu0 0.0
    %6864 = vmatpush2.msra.mxu0 0.0
    %6865 = vmatprep.subr.mxu0 0.0
    %6866 = vmatpush2.msra.mxu0 0.0
    %6867 = vmatprep.subr.mxu0 0.0
    %6868 = vmatpush2.msra.mxu0 0.0
    %6869 = vmatprep.subr.mxu0 0.0
    %6870 = vmatpush2.msra.mxu0 0.0
    %6871 = vmatprep.mubr.f32.mxu0 0.0
    %6872 = vmatmul.mubr.f32.gmra.mxu0 %v6550
    %v6873 = vpop.f32.mrf.mxu0
    %v6874 = vadd.f32 0.0, %v6873
    %v6875 = vpop.f32.mrf.mxu0
    %v6876 = vadd.f32 0.0, %v6875
    %6877 = vdwg.mxu0
    %v6878 = vadd.f32 %v6732, %v6803
    %v6879 = vadd.f32 %v6733, %v6805
    %v6880 = vadd.f32 %v6734, %v6874
    %v6881 = vadd.f32 %v6735, %v6876
    %v6882 = vxor.u32 %v6878, 2147483648
    %v6883 = vmul.f32 %v6882, 1.442695
    %v6884 = vpow.pop %v6883
    %v6885 = vadd.f32 %v6884, 1.0
    %v6886 = vrcp.pop %v6885
    %v6887 = vmul.f32 1.0, %v6886
    %v6888 = vxor.u32 %v6879, 2147483648
    %v6889 = vmul.f32 %v6888, 1.442695
    %v6890 = vpow.pop %v6889
    %v6891 = vadd.f32 %v6890, 1.0
    %v6892 = vrcp.pop %v6891
    %v6893 = vmul.f32 1.0, %v6892
    %v6894 = vtanh.pop %v6880
    %v6895 = vxor.u32 %v6881, 2147483648
    %v6896 = vmul.f32 %v6895, 1.442695
    %v6897 = vpow.pop %v6896
    %v6898 = vadd.f32 %v6897, 1.0
    %v6899 = vrcp.pop %v6898
    %v6900 = vmul.f32 1.0, %v6899
    %v6901 = vmul.f32 %v6893, %v6551
    %v6902 = vmul.f32 %v6887, %v6894
    %v6903 = vadd.f32 %v6901, %v6902
    %v6904 = vtanh.pop %v6903
    %v6905 = vmul.f32 %v6900, %v6904
    %v6906 = vsel %vm1835, %v6905, %v6550
    %v6907 = vsel %vm1835, %v6903, %v6551
    %v6908 = vsel %vm1835, %v6905, 0.0
    %6909 = vst [vmem:[%s3102] sm:$0xff] %v6908
    %v6910 = vld [vmem:[%s3104] sm:$0xff]
    %v6911 = vld [vmem:[%s3104 + $0x8] sm:$0xff]
    %v6912 = vld [vmem:[%s3104 + $0x10] sm:$0xff]
    %v6913 = vld [vmem:[%s3104 + $0x18] sm:$0xff]
    %6914 = vmatprep.subr.mxu0 %v4709
    %6915 = vmatpush1.msra.mxu0 %v4708
    %6916 = vmatprep.subr.mxu0 %v4705
    %6917 = vmatpush1.msra.mxu0 %v4704
    %6918 = vmatprep.subr.mxu0 %v4701
    %6919 = vmatpush1.msra.mxu0 %v4700
    %6920 = vmatprep.subr.mxu0 %v4697
    %6921 = vmatpush1.msra.mxu0 %v4696
    %6922 = vmatprep.subr.mxu0 %v4693
    %6923 = vmatpush1.msra.mxu0 %v4692
    %6924 = vmatprep.subr.mxu0 %v4689
    %6925 = vmatpush1.msra.mxu0 %v4688
    %6926 = vmatprep.subr.mxu0 %v4685
    %6927 = vmatpush1.msra.mxu0 %v4684
    %6928 = vmatprep.subr.mxu0 %v4681
    %6929 = vmatpush1.msra.mxu0 %v4680
    %6930 = vmatprep.subr.mxu0 %v4677
    %6931 = vmatpush1.msra.mxu0 %v4676
    %6932 = vmatprep.subr.mxu0 %v4673
    %6933 = vmatpush1.msra.mxu0 %v4672
    %6934 = vmatprep.subr.mxu0 %v4669
    %6935 = vmatpush1.msra.mxu0 %v4668
    %6936 = vmatprep.subr.mxu0 %v4665
    %6937 = vmatpush1.msra.mxu0 %v4664
    %6938 = vmatprep.subr.mxu0 %v4661
    %6939 = vmatpush1.msra.mxu0 %v4660
    %6940 = vmatprep.subr.mxu0 %v4657
    %6941 = vmatpush1.msra.mxu0 %v4656
    %6942 = vmatprep.subr.mxu0 %v4653
    %6943 = vmatpush1.msra.mxu0 %v4652
    %6944 = vmatprep.subr.mxu0 %v4649
    %6945 = vmatpush1.msra.mxu0 %v4648
    %6946 = vmatprep.subr.mxu0 0.0
    %6947 = vmatpush2.msra.mxu0 0.0
    %6948 = vmatprep.subr.mxu0 0.0
    %6949 = vmatpush2.msra.mxu0 0.0
    %6950 = vmatprep.subr.mxu0 0.0
    %6951 = vmatpush2.msra.mxu0 0.0
    %6952 = vmatprep.subr.mxu0 0.0
    %6953 = vmatpush2.msra.mxu0 0.0
    %6954 = vmatprep.subr.mxu0 0.0
    %6955 = vmatpush2.msra.mxu0 0.0
    %6956 = vmatprep.subr.mxu0 0.0
    %6957 = vmatpush2.msra.mxu0 0.0
    %6958 = vmatprep.subr.mxu0 0.0
    %6959 = vmatpush2.msra.mxu0 0.0
    %6960 = vmatprep.subr.mxu0 0.0
    %6961 = vmatpush2.msra.mxu0 0.0
    %6962 = vmatprep.subr.mxu0 0.0
    %6963 = vmatpush2.msra.mxu0 0.0
    %6964 = vmatprep.subr.mxu0 0.0
    %6965 = vmatpush2.msra.mxu0 0.0
    %6966 = vmatprep.subr.mxu0 0.0
    %6967 = vmatpush2.msra.mxu0 0.0
    %6968 = vmatprep.subr.mxu0 0.0
    %6969 = vmatpush2.msra.mxu0 0.0
    %6970 = vmatprep.subr.mxu0 0.0
    %6971 = vmatpush2.msra.mxu0 0.0
    %6972 = vmatprep.subr.mxu0 0.0
    %6973 = vmatpush2.msra.mxu0 0.0
    %6974 = vmatprep.subr.mxu0 0.0
    %6975 = vmatpush2.msra.mxu0 0.0
    %6976 = vmatprep.subr.mxu0 0.0
    %6977 = vmatpush2.msra.mxu0 0.0
    %6978 = vmatprep.mubr.f32.mxu0 0.0
    %6979 = vmatmul.mubr.f32.gmra.mxu0 %v6728
    %v6980 = vpop.f32.mrf.mxu0
    %v6981 = vadd.f32 0.0, %v6980
    %v6982 = vpop.f32.mrf.mxu0
    %v6983 = vadd.f32 0.0, %v6982
    %6984 = vdwg.mxu0
    %6985 = vmatprep.subr.mxu0 %v4711
    %6986 = vmatpush1.msra.mxu0 %v4710
    %6987 = vmatprep.subr.mxu0 %v4707
    %6988 = vmatpush1.msra.mxu0 %v4706
    %6989 = vmatprep.subr.mxu0 %v4703
    %6990 = vmatpush1.msra.mxu0 %v4702
    %6991 = vmatprep.subr.mxu0 %v4699
    %6992 = vmatpush1.msra.mxu0 %v4698
    %6993 = vmatprep.subr.mxu0 %v4695
    %6994 = vmatpush1.msra.mxu0 %v4694
    %6995 = vmatprep.subr.mxu0 %v4691
    %6996 = vmatpush1.msra.mxu0 %v4690
    %6997 = vmatprep.subr.mxu0 %v4687
    %6998 = vmatpush1.msra.mxu0 %v4686
    %6999 = vmatprep.subr.mxu0 %v4683
    %7000 = vmatpush1.msra.mxu0 %v4682
    %7001 = vmatprep.subr.mxu0 %v4679
    %7002 = vmatpush1.msra.mxu0 %v4678
    %7003 = vmatprep.subr.mxu0 %v4675
    %7004 = vmatpush1.msra.mxu0 %v4674
    %7005 = vmatprep.subr.mxu0 %v4671
    %7006 = vmatpush1.msra.mxu0 %v4670
    %7007 = vmatprep.subr.mxu0 %v4667
    %7008 = vmatpush1.msra.mxu0 %v4666
    %7009 = vmatprep.subr.mxu0 %v4663
    %7010 = vmatpush1.msra.mxu0 %v4662
    %7011 = vmatprep.subr.mxu0 %v4659
    %7012 = vmatpush1.msra.mxu0 %v4658
    %7013 = vmatprep.subr.mxu0 %v4655
    %7014 = vmatpush1.msra.mxu0 %v4654
    %7015 = vmatprep.subr.mxu0 %v4651
    %7016 = vmatpush1.msra.mxu0 %v4650
    %7017 = vmatprep.subr.mxu0 0.0
    %7018 = vmatpush2.msra.mxu0 0.0
    %7019 = vmatprep.subr.mxu0 0.0
    %7020 = vmatpush2.msra.mxu0 0.0
    %7021 = vmatprep.subr.mxu0 0.0
    %7022 = vmatpush2.msra.mxu0 0.0
    %7023 = vmatprep.subr.mxu0 0.0
    %7024 = vmatpush2.msra.mxu0 0.0
    %7025 = vmatprep.subr.mxu0 0.0
    %7026 = vmatpush2.msra.mxu0 0.0
    %7027 = vmatprep.subr.mxu0 0.0
    %7028 = vmatpush2.msra.mxu0 0.0
    %7029 = vmatprep.subr.mxu0 0.0
    %7030 = vmatpush2.msra.mxu0 0.0
    %7031 = vmatprep.subr.mxu0 0.0
    %7032 = vmatpush2.msra.mxu0 0.0
    %7033 = vmatprep.subr.mxu0 0.0
    %7034 = vmatpush2.msra.mxu0 0.0
    %7035 = vmatprep.subr.mxu0 0.0
    %7036 = vmatpush2.msra.mxu0 0.0
    %7037 = vmatprep.subr.mxu0 0.0
    %7038 = vmatpush2.msra.mxu0 0.0
    %7039 = vmatprep.subr.mxu0 0.0
    %7040 = vmatpush2.msra.mxu0 0.0
    %7041 = vmatprep.subr.mxu0 0.0
    %7042 = vmatpush2.msra.mxu0 0.0
    %7043 = vmatprep.subr.mxu0 0.0
    %7044 = vmatpush2.msra.mxu0 0.0
    %7045 = vmatprep.subr.mxu0 0.0
    %7046 = vmatpush2.msra.mxu0 0.0
    %7047 = vmatprep.subr.mxu0 0.0
    %7048 = vmatpush2.msra.mxu0 0.0
    %7049 = vmatprep.mubr.f32.mxu0 0.0
    %7050 = vmatmul.mubr.f32.gmra.mxu0 %v6728
    %v7051 = vpop.f32.mrf.mxu0
    %v7052 = vadd.f32 0.0, %v7051
    %v7053 = vpop.f32.mrf.mxu0
    %v7054 = vadd.f32 0.0, %v7053
    %7055 = vdwg.mxu0
    %v7056 = vadd.f32 %v6910, %v6981
    %v7057 = vadd.f32 %v6911, %v6983
    %v7058 = vadd.f32 %v6912, %v7052
    %v7059 = vadd.f32 %v6913, %v7054
    %v7060 = vxor.u32 %v7056, 2147483648
    %v7061 = vmul.f32 %v7060, 1.442695
    %v7062 = vpow.pop %v7061
    %v7063 = vadd.f32 %v7062, 1.0
    %v7064 = vrcp.pop %v7063
    %v7065 = vmul.f32 1.0, %v7064
    %v7066 = vxor.u32 %v7057, 2147483648
    %v7067 = vmul.f32 %v7066, 1.442695
    %v7068 = vpow.pop %v7067
    %v7069 = vadd.f32 %v7068, 1.0
    %v7070 = vrcp.pop %v7069
    %v7071 = vmul.f32 1.0, %v7070
    %v7072 = vtanh.pop %v7058
    %v7073 = vxor.u32 %v7059, 2147483648
    %v7074 = vmul.f32 %v7073, 1.442695
    %v7075 = vpow.pop %v7074
    %v7076 = vadd.f32 %v7075, 1.0
    %v7077 = vrcp.pop %v7076
    %v7078 = vmul.f32 1.0, %v7077
    %v7079 = vmul.f32 %v7071, %v6729
    %v7080 = vmul.f32 %v7065, %v7072
    %v7081 = vadd.f32 %v7079, %v7080
    %v7082 = vtanh.pop %v7081
    %v7083 = vmul.f32 %v7078, %v7082
    %v7084 = vsel %vm1654, %v7083, %v6728
    %v7085 = vsel %vm1654, %v7081, %v6729
    %v7086 = vsel %vm1654, %v7083, 0.0
    %7087 = vst [vmem:[%s3282] sm:$0xff] %v7086
    %v7088 = vld [vmem:[%s3284] sm:$0xff]
    %v7089 = vld [vmem:[%s3284 + $0x8] sm:$0xff]
    %v7090 = vld [vmem:[%s3284 + $0x10] sm:$0xff]
    %v7091 = vld [vmem:[%s3284 + $0x18] sm:$0xff]
    %7092 = vmatprep.subr.mxu0 %v4773
    %7093 = vmatpush1.msra.mxu0 %v4772
    %7094 = vmatprep.subr.mxu0 %v4769
    %7095 = vmatpush1.msra.mxu0 %v4768
    %7096 = vmatprep.subr.mxu0 %v4765
    %7097 = vmatpush1.msra.mxu0 %v4764
    %7098 = vmatprep.subr.mxu0 %v4761
    %7099 = vmatpush1.msra.mxu0 %v4760
    %7100 = vmatprep.subr.mxu0 %v4757
    %7101 = vmatpush1.msra.mxu0 %v4756
    %7102 = vmatprep.subr.mxu0 %v4753
    %7103 = vmatpush1.msra.mxu0 %v4752
    %7104 = vmatprep.subr.mxu0 %v4749
    %7105 = vmatpush1.msra.mxu0 %v4748
    %7106 = vmatprep.subr.mxu0 %v4745
    %7107 = vmatpush1.msra.mxu0 %v4744
    %7108 = vmatprep.subr.mxu0 %v4741
    %7109 = vmatpush1.msra.mxu0 %v4740
    %7110 = vmatprep.subr.mxu0 %v4737
    %7111 = vmatpush1.msra.mxu0 %v4736
    %7112 = vmatprep.subr.mxu0 %v4733
    %7113 = vmatpush1.msra.mxu0 %v4732
    %7114 = vmatprep.subr.mxu0 %v4729
    %7115 = vmatpush1.msra.mxu0 %v4728
    %7116 = vmatprep.subr.mxu0 %v4725
    %7117 = vmatpush1.msra.mxu0 %v4724
    %7118 = vmatprep.subr.mxu0 %v4721
    %7119 = vmatpush1.msra.mxu0 %v4720
    %7120 = vmatprep.subr.mxu0 %v4717
    %7121 = vmatpush1.msra.mxu0 %v4716
    %7122 = vmatprep.subr.mxu0 %v4713
    %7123 = vmatpush1.msra.mxu0 %v4712
    %7124 = vmatprep.subr.mxu0 0.0
    %7125 = vmatpush2.msra.mxu0 0.0
    %7126 = vmatprep.subr.mxu0 0.0
    %7127 = vmatpush2.msra.mxu0 0.0
    %7128 = vmatprep.subr.mxu0 0.0
    %7129 = vmatpush2.msra.mxu0 0.0
    %7130 = vmatprep.subr.mxu0 0.0
    %7131 = vmatpush2.msra.mxu0 0.0
    %7132 = vmatprep.subr.mxu0 0.0
    %7133 = vmatpush2.msra.mxu0 0.0
    %7134 = vmatprep.subr.mxu0 0.0
    %7135 = vmatpush2.msra.mxu0 0.0
    %7136 = vmatprep.subr.mxu0 0.0
    %7137 = vmatpush2.msra.mxu0 0.0
    %7138 = vmatprep.subr.mxu0 0.0
    %7139 = vmatpush2.msra.mxu0 0.0
    %7140 = vmatprep.subr.mxu0 0.0
    %7141 = vmatpush2.msra.mxu0 0.0
    %7142 = vmatprep.subr.mxu0 0.0
    %7143 = vmatpush2.msra.mxu0 0.0
    %7144 = vmatprep.subr.mxu0 0.0
    %7145 = vmatpush2.msra.mxu0 0.0
    %7146 = vmatprep.subr.mxu0 0.0
    %7147 = vmatpush2.msra.mxu0 0.0
    %7148 = vmatprep.subr.mxu0 0.0
    %7149 = vmatpush2.msra.mxu0 0.0
    %7150 = vmatprep.subr.mxu0 0.0
    %7151 = vmatpush2.msra.mxu0 0.0
    %7152 = vmatprep.subr.mxu0 0.0
    %7153 = vmatpush2.msra.mxu0 0.0
    %7154 = vmatprep.subr.mxu0 0.0
    %7155 = vmatpush2.msra.mxu0 0.0
    %7156 = vmatprep.mubr.f32.mxu0 0.0
    %7157 = vmatmul.mubr.f32.gmra.mxu0 %v6906
    %v7158 = vpop.f32.mrf.mxu0
    %v7159 = vadd.f32 0.0, %v7158
    %v7160 = vpop.f32.mrf.mxu0
    %v7161 = vadd.f32 0.0, %v7160
    %7162 = vdwg.mxu0
    %7163 = vmatprep.subr.mxu0 %v4775
    %7164 = vmatpush1.msra.mxu0 %v4774
    %7165 = vmatprep.subr.mxu0 %v4771
    %7166 = vmatpush1.msra.mxu0 %v4770
    %7167 = vmatprep.subr.mxu0 %v4767
    %7168 = vmatpush1.msra.mxu0 %v4766
    %7169 = vmatprep.subr.mxu0 %v4763
    %7170 = vmatpush1.msra.mxu0 %v4762
    %7171 = vmatprep.subr.mxu0 %v4759
    %7172 = vmatpush1.msra.mxu0 %v4758
    %7173 = vmatprep.subr.mxu0 %v4755
    %7174 = vmatpush1.msra.mxu0 %v4754
    %7175 = vmatprep.subr.mxu0 %v4751
    %7176 = vmatpush1.msra.mxu0 %v4750
    %7177 = vmatprep.subr.mxu0 %v4747
    %7178 = vmatpush1.msra.mxu0 %v4746
    %7179 = vmatprep.subr.mxu0 %v4743
    %7180 = vmatpush1.msra.mxu0 %v4742
    %7181 = vmatprep.subr.mxu0 %v4739
    %7182 = vmatpush1.msra.mxu0 %v4738
    %7183 = vmatprep.subr.mxu0 %v4735
    %7184 = vmatpush1.msra.mxu0 %v4734
    %7185 = vmatprep.subr.mxu0 %v4731
    %7186 = vmatpush1.msra.mxu0 %v4730
    %7187 = vmatprep.subr.mxu0 %v4727
    %7188 = vmatpush1.msra.mxu0 %v4726
    %7189 = vmatprep.subr.mxu0 %v4723
    %7190 = vmatpush1.msra.mxu0 %v4722
    %7191 = vmatprep.subr.mxu0 %v4719
    %7192 = vmatpush1.msra.mxu0 %v4718
    %7193 = vmatprep.subr.mxu0 %v4715
    %7194 = vmatpush1.msra.mxu0 %v4714
    %7195 = vmatprep.subr.mxu0 0.0
    %7196 = vmatpush2.msra.mxu0 0.0
    %7197 = vmatprep.subr.mxu0 0.0
    %7198 = vmatpush2.msra.mxu0 0.0
    %7199 = vmatprep.subr.mxu0 0.0
    %7200 = vmatpush2.msra.mxu0 0.0
    %7201 = vmatprep.subr.mxu0 0.0
    %7202 = vmatpush2.msra.mxu0 0.0
    %7203 = vmatprep.subr.mxu0 0.0
    %7204 = vmatpush2.msra.mxu0 0.0
    %7205 = vmatprep.subr.mxu0 0.0
    %7206 = vmatpush2.msra.mxu0 0.0
    %7207 = vmatprep.subr.mxu0 0.0
    %7208 = vmatpush2.msra.mxu0 0.0
    %7209 = vmatprep.subr.mxu0 0.0
    %7210 = vmatpush2.msra.mxu0 0.0
    %7211 = vmatprep.subr.mxu0 0.0
    %7212 = vmatpush2.msra.mxu0 0.0
    %7213 = vmatprep.subr.mxu0 0.0
    %7214 = vmatpush2.msra.mxu0 0.0
    %7215 = vmatprep.subr.mxu0 0.0
    %7216 = vmatpush2.msra.mxu0 0.0
    %7217 = vmatprep.subr.mxu0 0.0
    %7218 = vmatpush2.msra.mxu0 0.0
    %7219 = vmatprep.subr.mxu0 0.0
    %7220 = vmatpush2.msra.mxu0 0.0
    %7221 = vmatprep.subr.mxu0 0.0
    %7222 = vmatpush2.msra.mxu0 0.0
    %7223 = vmatprep.subr.mxu0 0.0
    %7224 = vmatpush2.msra.mxu0 0.0
    %7225 = vmatprep.subr.mxu0 0.0
    %7226 = vmatpush2.msra.mxu0 0.0
    %7227 = vmatprep.mubr.f32.mxu0 0.0
    %7228 = vmatmul.mubr.f32.gmra.mxu0 %v6906
    %v7229 = vpop.f32.mrf.mxu0
    %v7230 = vadd.f32 0.0, %v7229
    %v7231 = vpop.f32.mrf.mxu0
    %v7232 = vadd.f32 0.0, %v7231
    %7233 = vdwg.mxu0
    %v7234 = vadd.f32 %v7088, %v7159
    %v7235 = vadd.f32 %v7089, %v7161
    %v7236 = vadd.f32 %v7090, %v7230
    %v7237 = vadd.f32 %v7091, %v7232
    %v7238 = vxor.u32 %v7234, 2147483648
    %v7239 = vmul.f32 %v7238, 1.442695
    %v7240 = vpow.pop %v7239
    %v7241 = vadd.f32 %v7240, 1.0
    %v7242 = vrcp.pop %v7241
    %v7243 = vmul.f32 1.0, %v7242
    %v7244 = vxor.u32 %v7235, 2147483648
    %v7245 = vmul.f32 %v7244, 1.442695
    %v7246 = vpow.pop %v7245
    %v7247 = vadd.f32 %v7246, 1.0
    %v7248 = vrcp.pop %v7247
    %v7249 = vmul.f32 1.0, %v7248
    %v7250 = vtanh.pop %v7236
    %v7251 = vxor.u32 %v7237, 2147483648
    %v7252 = vmul.f32 %v7251, 1.442695
    %v7253 = vpow.pop %v7252
    %v7254 = vadd.f32 %v7253, 1.0
    %v7255 = vrcp.pop %v7254
    %v7256 = vmul.f32 1.0, %v7255
    %v7257 = vmul.f32 %v7249, %v6907
    %v7258 = vmul.f32 %v7243, %v7250
    %v7259 = vadd.f32 %v7257, %v7258
    %v7260 = vtanh.pop %v7259
    %v7261 = vmul.f32 %v7256, %v7260
    %v7262 = vsel %vm1473, %v7261, %v6906
    %v7263 = vsel %vm1473, %v7259, %v6907
    %v7264 = vsel %vm1473, %v7261, 0.0
    %7265 = vst [vmem:[%s3462] sm:$0xff] %v7264
    %v7266 = vld [vmem:[%s3464] sm:$0xff]
    %v7267 = vld [vmem:[%s3464 + $0x8] sm:$0xff]
    %v7268 = vld [vmem:[%s3464 + $0x10] sm:$0xff]
    %v7269 = vld [vmem:[%s3464 + $0x18] sm:$0xff]
    %7270 = vmatprep.subr.mxu0 %v4709
    %7271 = vmatpush1.msra.mxu0 %v4708
    %7272 = vmatprep.subr.mxu0 %v4705
    %7273 = vmatpush1.msra.mxu0 %v4704
    %7274 = vmatprep.subr.mxu0 %v4701
    %7275 = vmatpush1.msra.mxu0 %v4700
    %7276 = vmatprep.subr.mxu0 %v4697
    %7277 = vmatpush1.msra.mxu0 %v4696
    %7278 = vmatprep.subr.mxu0 %v4693
    %7279 = vmatpush1.msra.mxu0 %v4692
    %7280 = vmatprep.subr.mxu0 %v4689
    %7281 = vmatpush1.msra.mxu0 %v4688
    %7282 = vmatprep.subr.mxu0 %v4685
    %7283 = vmatpush1.msra.mxu0 %v4684
    %7284 = vmatprep.subr.mxu0 %v4681
    %7285 = vmatpush1.msra.mxu0 %v4680
    %7286 = vmatprep.subr.mxu0 %v4677
    %7287 = vmatpush1.msra.mxu0 %v4676
    %7288 = vmatprep.subr.mxu0 %v4673
    %7289 = vmatpush1.msra.mxu0 %v4672
    %7290 = vmatprep.subr.mxu0 %v4669
    %7291 = vmatpush1.msra.mxu0 %v4668
    %7292 = vmatprep.subr.mxu0 %v4665
    %7293 = vmatpush1.msra.mxu0 %v4664
    %7294 = vmatprep.subr.mxu0 %v4661
    %7295 = vmatpush1.msra.mxu0 %v4660
    %7296 = vmatprep.subr.mxu0 %v4657
    %7297 = vmatpush1.msra.mxu0 %v4656
    %7298 = vmatprep.subr.mxu0 %v4653
    %7299 = vmatpush1.msra.mxu0 %v4652
    %7300 = vmatprep.subr.mxu0 %v4649
    %7301 = vmatpush1.msra.mxu0 %v4648
    %7302 = vmatprep.subr.mxu0 0.0
    %7303 = vmatpush2.msra.mxu0 0.0
    %7304 = vmatprep.subr.mxu0 0.0
    %7305 = vmatpush2.msra.mxu0 0.0
    %7306 = vmatprep.subr.mxu0 0.0
    %7307 = vmatpush2.msra.mxu0 0.0
    %7308 = vmatprep.subr.mxu0 0.0
    %7309 = vmatpush2.msra.mxu0 0.0
    %7310 = vmatprep.subr.mxu0 0.0
    %7311 = vmatpush2.msra.mxu0 0.0
    %7312 = vmatprep.subr.mxu0 0.0
    %7313 = vmatpush2.msra.mxu0 0.0
    %7314 = vmatprep.subr.mxu0 0.0
    %7315 = vmatpush2.msra.mxu0 0.0
    %7316 = vmatprep.subr.mxu0 0.0
    %7317 = vmatpush2.msra.mxu0 0.0
    %7318 = vmatprep.subr.mxu0 0.0
    %7319 = vmatpush2.msra.mxu0 0.0
    %7320 = vmatprep.subr.mxu0 0.0
    %7321 = vmatpush2.msra.mxu0 0.0
    %7322 = vmatprep.subr.mxu0 0.0
    %7323 = vmatpush2.msra.mxu0 0.0
    %7324 = vmatprep.subr.mxu0 0.0
    %7325 = vmatpush2.msra.mxu0 0.0
    %7326 = vmatprep.subr.mxu0 0.0
    %7327 = vmatpush2.msra.mxu0 0.0
    %7328 = vmatprep.subr.mxu0 0.0
    %7329 = vmatpush2.msra.mxu0 0.0
    %7330 = vmatprep.subr.mxu0 0.0
    %7331 = vmatpush2.msra.mxu0 0.0
    %7332 = vmatprep.subr.mxu0 0.0
    %7333 = vmatpush2.msra.mxu0 0.0
    %7334 = vmatprep.mubr.f32.mxu0 0.0
    %7335 = vmatmul.mubr.f32.gmra.mxu0 %v7084
    %v7336 = vpop.f32.mrf.mxu0
    %v7337 = vadd.f32 0.0, %v7336
    %v7338 = vpop.f32.mrf.mxu0
    %v7339 = vadd.f32 0.0, %v7338
    %7340 = vdwg.mxu0
    %7341 = vmatprep.subr.mxu0 %v4711
    %7342 = vmatpush1.msra.mxu0 %v4710
    %7343 = vmatprep.subr.mxu0 %v4707
    %7344 = vmatpush1.msra.mxu0 %v4706
    %7345 = vmatprep.subr.mxu0 %v4703
    %7346 = vmatpush1.msra.mxu0 %v4702
    %7347 = vmatprep.subr.mxu0 %v4699
    %7348 = vmatpush1.msra.mxu0 %v4698
    %7349 = vmatprep.subr.mxu0 %v4695
    %7350 = vmatpush1.msra.mxu0 %v4694
    %7351 = vmatprep.subr.mxu0 %v4691
    %7352 = vmatpush1.msra.mxu0 %v4690
    %7353 = vmatprep.subr.mxu0 %v4687
    %7354 = vmatpush1.msra.mxu0 %v4686
    %7355 = vmatprep.subr.mxu0 %v4683
    %7356 = vmatpush1.msra.mxu0 %v4682
    %7357 = vmatprep.subr.mxu0 %v4679
    %7358 = vmatpush1.msra.mxu0 %v4678
    %7359 = vmatprep.subr.mxu0 %v4675
    %7360 = vmatpush1.msra.mxu0 %v4674
    %7361 = vmatprep.subr.mxu0 %v4671
    %7362 = vmatpush1.msra.mxu0 %v4670
    %7363 = vmatprep.subr.mxu0 %v4667
    %7364 = vmatpush1.msra.mxu0 %v4666
    %7365 = vmatprep.subr.mxu0 %v4663
    %7366 = vmatpush1.msra.mxu0 %v4662
    %7367 = vmatprep.subr.mxu0 %v4659
    %7368 = vmatpush1.msra.mxu0 %v4658
    %7369 = vmatprep.subr.mxu0 %v4655
    %7370 = vmatpush1.msra.mxu0 %v4654
    %7371 = vmatprep.subr.mxu0 %v4651
    %7372 = vmatpush1.msra.mxu0 %v4650
    %7373 = vmatprep.subr.mxu0 0.0
    %7374 = vmatpush2.msra.mxu0 0.0
    %7375 = vmatprep.subr.mxu0 0.0
    %7376 = vmatpush2.msra.mxu0 0.0
    %7377 = vmatprep.subr.mxu0 0.0
    %7378 = vmatpush2.msra.mxu0 0.0
    %7379 = vmatprep.subr.mxu0 0.0
    %7380 = vmatpush2.msra.mxu0 0.0
    %7381 = vmatprep.subr.mxu0 0.0
    %7382 = vmatpush2.msra.mxu0 0.0
    %7383 = vmatprep.subr.mxu0 0.0
    %7384 = vmatpush2.msra.mxu0 0.0
    %7385 = vmatprep.subr.mxu0 0.0
    %7386 = vmatpush2.msra.mxu0 0.0
    %7387 = vmatprep.subr.mxu0 0.0
    %7388 = vmatpush2.msra.mxu0 0.0
    %7389 = vmatprep.subr.mxu0 0.0
    %7390 = vmatpush2.msra.mxu0 0.0
    %7391 = vmatprep.subr.mxu0 0.0
    %7392 = vmatpush2.msra.mxu0 0.0
    %7393 = vmatprep.subr.mxu0 0.0
    %7394 = vmatpush2.msra.mxu0 0.0
    %7395 = vmatprep.subr.mxu0 0.0
    %7396 = vmatpush2.msra.mxu0 0.0
    %7397 = vmatprep.subr.mxu0 0.0
    %7398 = vmatpush2.msra.mxu0 0.0
    %7399 = vmatprep.subr.mxu0 0.0
    %7400 = vmatpush2.msra.mxu0 0.0
    %7401 = vmatprep.subr.mxu0 0.0
    %7402 = vmatpush2.msra.mxu0 0.0
    %7403 = vmatprep.subr.mxu0 0.0
    %7404 = vmatpush2.msra.mxu0 0.0
    %7405 = vmatprep.mubr.f32.mxu0 0.0
    %7406 = vmatmul.mubr.f32.gmra.mxu0 %v7084
    %v7407 = vpop.f32.mrf.mxu0
    %v7408 = vadd.f32 0.0, %v7407
    %v7409 = vpop.f32.mrf.mxu0
    %v7410 = vadd.f32 0.0, %v7409
    %7411 = vdwg.mxu0
    %v7412 = vadd.f32 %v7266, %v7337
    %v7413 = vadd.f32 %v7267, %v7339
    %v7414 = vadd.f32 %v7268, %v7408
    %v7415 = vadd.f32 %v7269, %v7410
    %v7416 = vxor.u32 %v7412, 2147483648
    %v7417 = vmul.f32 %v7416, 1.442695
    %v7418 = vpow.pop %v7417
    %v7419 = vadd.f32 %v7418, 1.0
    %v7420 = vrcp.pop %v7419
    %v7421 = vmul.f32 1.0, %v7420
    %v7422 = vxor.u32 %v7413, 2147483648
    %v7423 = vmul.f32 %v7422, 1.442695
    %v7424 = vpow.pop %v7423
    %v7425 = vadd.f32 %v7424, 1.0
    %v7426 = vrcp.pop %v7425
    %v7427 = vmul.f32 1.0, %v7426
    %v7428 = vtanh.pop %v7414
    %v7429 = vxor.u32 %v7415, 2147483648
    %v7430 = vmul.f32 %v7429, 1.442695
    %v7431 = vpow.pop %v7430
    %v7432 = vadd.f32 %v7431, 1.0
    %v7433 = vrcp.pop %v7432
    %v7434 = vmul.f32 1.0, %v7433
    %v7435 = vmul.f32 %v7427, %v7085
    %v7436 = vmul.f32 %v7421, %v7428
    %v7437 = vadd.f32 %v7435, %v7436
    %v7438 = vtanh.pop %v7437
    %v7439 = vmul.f32 %v7434, %v7438
    %v7440 = vsel %vm1293, %v7439, 0.0
    %7441 = vst [vmem:[%s3640] sm:$0xff] %v7440
    %v7442 = vld [vmem:[#allocation3] sm:$0xff]
    %v7443 = vld [vmem:[#allocation3 + $0x8] sm:$0xff]
    %v7444 = vld [vmem:[#allocation3 + $0x10] sm:$0xff]
    %v7445 = vld [vmem:[#allocation3 + $0x18] sm:$0xff]
    %7446 = vmatprep.subr.mxu0 %v4773
    %7447 = vmatpush1.msra.mxu0 %v4772
    %7448 = vmatprep.subr.mxu0 %v4769
    %7449 = vmatpush1.msra.mxu0 %v4768
    %7450 = vmatprep.subr.mxu0 %v4765
    %7451 = vmatpush1.msra.mxu0 %v4764
    %7452 = vmatprep.subr.mxu0 %v4761
    %7453 = vmatpush1.msra.mxu0 %v4760
    %7454 = vmatprep.subr.mxu0 %v4757
    %7455 = vmatpush1.msra.mxu0 %v4756
    %7456 = vmatprep.subr.mxu0 %v4753
    %7457 = vmatpush1.msra.mxu0 %v4752
    %7458 = vmatprep.subr.mxu0 %v4749
    %7459 = vmatpush1.msra.mxu0 %v4748
    %7460 = vmatprep.subr.mxu0 %v4745
    %7461 = vmatpush1.msra.mxu0 %v4744
    %7462 = vmatprep.subr.mxu0 %v4741
    %7463 = vmatpush1.msra.mxu0 %v4740
    %7464 = vmatprep.subr.mxu0 %v4737
    %7465 = vmatpush1.msra.mxu0 %v4736
    %7466 = vmatprep.subr.mxu0 %v4733
    %7467 = vmatpush1.msra.mxu0 %v4732
    %7468 = vmatprep.subr.mxu0 %v4729
    %7469 = vmatpush1.msra.mxu0 %v4728
    %7470 = vmatprep.subr.mxu0 %v4725
    %7471 = vmatpush1.msra.mxu0 %v4724
    %7472 = vmatprep.subr.mxu0 %v4721
    %7473 = vmatpush1.msra.mxu0 %v4720
    %7474 = vmatprep.subr.mxu0 %v4717
    %7475 = vmatpush1.msra.mxu0 %v4716
    %7476 = vmatprep.subr.mxu0 %v4713
    %7477 = vmatpush1.msra.mxu0 %v4712
    %7478 = vmatprep.subr.mxu0 0.0
    %7479 = vmatpush2.msra.mxu0 0.0
    %7480 = vmatprep.subr.mxu0 0.0
    %7481 = vmatpush2.msra.mxu0 0.0
    %7482 = vmatprep.subr.mxu0 0.0
    %7483 = vmatpush2.msra.mxu0 0.0
    %7484 = vmatprep.subr.mxu0 0.0
    %7485 = vmatpush2.msra.mxu0 0.0
    %7486 = vmatprep.subr.mxu0 0.0
    %7487 = vmatpush2.msra.mxu0 0.0
    %7488 = vmatprep.subr.mxu0 0.0
    %7489 = vmatpush2.msra.mxu0 0.0
    %7490 = vmatprep.subr.mxu0 0.0
    %7491 = vmatpush2.msra.mxu0 0.0
    %7492 = vmatprep.subr.mxu0 0.0
    %7493 = vmatpush2.msra.mxu0 0.0
    %7494 = vmatprep.subr.mxu0 0.0
    %7495 = vmatpush2.msra.mxu0 0.0
    %7496 = vmatprep.subr.mxu0 0.0
    %7497 = vmatpush2.msra.mxu0 0.0
    %7498 = vmatprep.subr.mxu0 0.0
    %7499 = vmatpush2.msra.mxu0 0.0
    %7500 = vmatprep.subr.mxu0 0.0
    %7501 = vmatpush2.msra.mxu0 0.0
    %7502 = vmatprep.subr.mxu0 0.0
    %7503 = vmatpush2.msra.mxu0 0.0
    %7504 = vmatprep.subr.mxu0 0.0
    %7505 = vmatpush2.msra.mxu0 0.0
    %7506 = vmatprep.subr.mxu0 0.0
    %7507 = vmatpush2.msra.mxu0 0.0
    %7508 = vmatprep.subr.mxu0 0.0
    %7509 = vmatpush2.msra.mxu0 0.0
    %7510 = vmatprep.mubr.f32.mxu0 0.0
    %7511 = vmatmul.mubr.f32.gmra.mxu0 %v7262
    %v7512 = vpop.f32.mrf.mxu0
    %v7513 = vadd.f32 0.0, %v7512
    %v7514 = vpop.f32.mrf.mxu0
    %v7515 = vadd.f32 0.0, %v7514
    %7516 = vdwg.mxu0
    %7517 = vmatprep.subr.mxu0 %v4775
    %7518 = vmatpush1.msra.mxu0 %v4774
    %7519 = vmatprep.subr.mxu0 %v4771
    %7520 = vmatpush1.msra.mxu0 %v4770
    %7521 = vmatprep.subr.mxu0 %v4767
    %7522 = vmatpush1.msra.mxu0 %v4766
    %7523 = vmatprep.subr.mxu0 %v4763
    %7524 = vmatpush1.msra.mxu0 %v4762
    %7525 = vmatprep.subr.mxu0 %v4759
    %7526 = vmatpush1.msra.mxu0 %v4758
    %7527 = vmatprep.subr.mxu0 %v4755
    %7528 = vmatpush1.msra.mxu0 %v4754
    %7529 = vmatprep.subr.mxu0 %v4751
    %7530 = vmatpush1.msra.mxu0 %v4750
    %7531 = vmatprep.subr.mxu0 %v4747
    %7532 = vmatpush1.msra.mxu0 %v4746
    %7533 = vmatprep.subr.mxu0 %v4743
    %7534 = vmatpush1.msra.mxu0 %v4742
    %7535 = vmatprep.subr.mxu0 %v4739
    %7536 = vmatpush1.msra.mxu0 %v4738
    %7537 = vmatprep.subr.mxu0 %v4735
    %7538 = vmatpush1.msra.mxu0 %v4734
    %7539 = vmatprep.subr.mxu0 %v4731
    %7540 = vmatpush1.msra.mxu0 %v4730
    %7541 = vmatprep.subr.mxu0 %v4727
    %7542 = vmatpush1.msra.mxu0 %v4726
    %7543 = vmatprep.subr.mxu0 %v4723
    %7544 = vmatpush1.msra.mxu0 %v4722
    %7545 = vmatprep.subr.mxu0 %v4719
    %7546 = vmatpush1.msra.mxu0 %v4718
    %7547 = vmatprep.subr.mxu0 %v4715
    %7548 = vmatpush1.msra.mxu0 %v4714
    %7549 = vmatprep.subr.mxu0 0.0
    %7550 = vmatpush2.msra.mxu0 0.0
    %7551 = vmatprep.subr.mxu0 0.0
    %7552 = vmatpush2.msra.mxu0 0.0
    %7553 = vmatprep.subr.mxu0 0.0
    %7554 = vmatpush2.msra.mxu0 0.0
    %7555 = vmatprep.subr.mxu0 0.0
    %7556 = vmatpush2.msra.mxu0 0.0
    %7557 = vmatprep.subr.mxu0 0.0
    %7558 = vmatpush2.msra.mxu0 0.0
    %7559 = vmatprep.subr.mxu0 0.0
    %7560 = vmatpush2.msra.mxu0 0.0
    %7561 = vmatprep.subr.mxu0 0.0
    %7562 = vmatpush2.msra.mxu0 0.0
    %7563 = vmatprep.subr.mxu0 0.0
    %7564 = vmatpush2.msra.mxu0 0.0
    %7565 = vmatprep.subr.mxu0 0.0
    %7566 = vmatpush2.msra.mxu0 0.0
    %7567 = vmatprep.subr.mxu0 0.0
    %7568 = vmatpush2.msra.mxu0 0.0
    %7569 = vmatprep.subr.mxu0 0.0
    %7570 = vmatpush2.msra.mxu0 0.0
    %7571 = vmatprep.subr.mxu0 0.0
    %7572 = vmatpush2.msra.mxu0 0.0
    %7573 = vmatprep.subr.mxu0 0.0
    %7574 = vmatpush2.msra.mxu0 0.0
    %7575 = vmatprep.subr.mxu0 0.0
    %7576 = vmatpush2.msra.mxu0 0.0
    %7577 = vmatprep.subr.mxu0 0.0
    %7578 = vmatpush2.msra.mxu0 0.0
    %7579 = vmatprep.subr.mxu0 0.0
    %7580 = vmatpush2.msra.mxu0 0.0
    %7581 = vmatprep.mubr.f32.mxu0 0.0
    %7582 = vmatmul.mubr.f32.gmra.mxu0 %v7262
    %v7583 = vpop.f32.mrf.mxu0
    %v7584 = vadd.f32 0.0, %v7583
    %v7585 = vpop.f32.mrf.mxu0
    %v7586 = vadd.f32 0.0, %v7585
    %7587 = vdwg.mxu0
    %v7588 = vadd.f32 %v7442, %v7513
    %v7589 = vadd.f32 %v7443, %v7515
    %v7590 = vadd.f32 %v7444, %v7584
    %v7591 = vadd.f32 %v7445, %v7586
    %v7592 = vxor.u32 %v7588, 2147483648
    %v7593 = vmul.f32 %v7592, 1.442695
    %v7594 = vpow.pop %v7593
    %v7595 = vadd.f32 %v7594, 1.0
    %v7596 = vrcp.pop %v7595
    %v7597 = vmul.f32 1.0, %v7596
    %v7598 = vxor.u32 %v7589, 2147483648
    %v7599 = vmul.f32 %v7598, 1.442695
    %v7600 = vpow.pop %v7599
    %v7601 = vadd.f32 %v7600, 1.0
    %v7602 = vrcp.pop %v7601
    %v7603 = vmul.f32 1.0, %v7602
    %v7604 = vtanh.pop %v7590
    %v7605 = vxor.u32 %v7591, 2147483648
    %v7606 = vmul.f32 %v7605, 1.442695
    %v7607 = vpow.pop %v7606
    %v7608 = vadd.f32 %v7607, 1.0
    %v7609 = vrcp.pop %v7608
    %v7610 = vmul.f32 1.0, %v7609
    %v7611 = vmul.f32 %v7603, %v7263
    %v7612 = vmul.f32 %v7597, %v7604
    %v7613 = vadd.f32 %v7611, %v7612
    %v7614 = vtanh.pop %v7613
    %v7615 = vmul.f32 %v7610, %v7614
    %v7616 = vsel %vm1114, %v7615, 0.0
    %7617 = vst [vmem:[#allocation5] sm:$0xff] %v7616
    %v7618 = vld [vmem:[#allocation4] sm:$0xff]
    %v7619 = vld [vmem:[#allocation4 + $0x8] sm:$0xff]
    %v7620 = vld [vmem:[#allocation4 + $0x10] sm:$0xff]
    %v7621 = vld [vmem:[#allocation4 + $0x18] sm:$0xff]
    %v7622 = vld [vmem:[#allocation4 + $0x20] sm:$0xff]
    %v7623 = vld [vmem:[#allocation4 + $0x28] sm:$0xff]
    %v7624 = vld [vmem:[#allocation4 + $0x30] sm:$0xff]
    %v7625 = vld [vmem:[#allocation4 + $0x38] sm:$0xff]
    %v7626 = vld [vmem:[#allocation5] sm:$0xff]
    %v7627 = vld [vmem:[#allocation5 + $0x8] sm:$0xff]
    %v7628 = vld [vmem:[#allocation5 + $0x10] sm:$0xff]
    %v7629 = vld [vmem:[#allocation5 + $0x18] sm:$0xff]
    %v7630 = vld [vmem:[#allocation5 + $0x20] sm:$0xff]
    %v7631 = vld [vmem:[#allocation5 + $0x28] sm:$0xff]
    %v7632 = vld [vmem:[#allocation5 + $0x30] sm:$0xff]
    %v7633 = vld [vmem:[#allocation5 + $0x38] sm:$0xff]
    %7634 = vst [vmem:[%s10] sm:$0xff] %v7618
    %7635 = vst [vmem:[%s10 + $0x8] sm:$0xff] %v7626
    %7636 = vst [vmem:[%s10 + $0x10] sm:$0xff] %v7619
    %7637 = vst [vmem:[%s10 + $0x18] sm:$0xff] %v7627
    %7638 = vst [vmem:[%s10 + $0x20] sm:$0xff] %v7620
    %7639 = vst [vmem:[%s10 + $0x28] sm:$0xff] %v7628
    %7640 = vst [vmem:[%s10 + $0x30] sm:$0xff] %v7621
    %7641 = vst [vmem:[%s10 + $0x38] sm:$0xff] %v7629
    %7642 = vst [vmem:[%s10 + $0x40] sm:$0xff] %v7622
    %7643 = vst [vmem:[%s10 + $0x48] sm:$0xff] %v7630
    %7644 = vst [vmem:[%s10 + $0x50] sm:$0xff] %v7623
    %7645 = vst [vmem:[%s10 + $0x58] sm:$0xff] %v7631
    %7646 = vst [vmem:[%s10 + $0x60] sm:$0xff] %v7624
    %7647 = vst [vmem:[%s10 + $0x68] sm:$0xff] %v7632
    %7648 = vst [vmem:[%s10 + $0x70] sm:$0xff] %v7625
    %7649 = vst [vmem:[%s10 + $0x78] sm:$0xff] %v7633
    // Predicated region
    $region66: #{lstm_forward.1} parent=1 // pred_check
      _
    $region67: #{lstm_forward.1} parent=1 // pred_check_branch
      %7651 = sbr.rel (0) target = $region69
    $region68: #{lstm_forward.1} parent=1 // pred_region
      _
    $region69: #{lstm_forward.1} parent=1 // pred_fallthru
      _
    // Predicated region
    $region70: #{lstm_forward.1} parent=1 // pred_check
      _
    $region71: #{lstm_forward.1} parent=1 // pred_check_branch
      %7653 = sbr.rel (0) target = $region73
    $region72: #{lstm_forward.1} parent=1 // pred_region
      _
    $region73: #{lstm_forward.1} parent=1 // pred_fallthru
      _
    %7654 = vsyncpa [#allocation7], 1
    %7655 = vsyncpa [#allocation9], 1
    %7656 = vsyncpa [#allocation12], 1
    %7657 = vsyncpa [#allocation15], 1

</llo_original>
